<compile_context>
chip_gen: v6e
topology: v6e:2x2x1
jax: 0.10.0
libtpu: 0.0.40
codegen_flags: <defaults>
</compile_context>

<pallas_src>
import functools

import jax
import jax.numpy as jnp
from jax.experimental import pallas as pl
from jax.experimental.pallas import tpu as pltpu

D_IN, D1, D2, D_OUT = 3197, 5000, 250, 1            # logical sizes from the module
D_IN_P, D1_P, D2_P, D_OUT_P = 3200, 5120, 256, 128  # lane-padded (multiples of 128)
TN = 1024                                           # W1 column tile (divides 5120)


def _round_up(x, m):
    return (x + m - 1) // m * m


# ---------------- fully fused forward kernel ----------------
def _fused_kernel(n_ref,                                   # SMEM: [1] valid batch rows
                  x_ref, w1_ref, b1_ref, g_ref, bt_ref,    # inputs
                  w2_ref, b2_ref, w3_ref, b3_ref,
                  o_ref,                                   # output
                  acc_ref,                                 # VMEM scratch [B_p, D2_P]
                  *, eps):
    j = pl.program_id(0)

    @pl.when(j == 0)
    def _():
        acc_ref[...] = jnp.zeros_like(acc_ref)

    # ---- layer 1, column tile j: relu(x @ W1[:, tile] + b1[tile]) ----
    x = x_ref[...].astype(jnp.bfloat16)
    h = jnp.dot(x, w1_ref[...], preferred_element_type=jnp.float32) + b1_ref[...]
    h = jnp.maximum(h, 0.0)

    # ---- BatchNorm1d (training/batch statistics, per-feature) + relu ----
    n_valid = n_ref[0]
    row = jax.lax.broadcasted_iota(jnp.int32, h.shape, 0)
    mask = (row < n_valid).astype(jnp.float32)             # ignore padded batch rows
    cnt = n_valid.astype(jnp.float32)
    mean = jnp.sum(h * mask, axis=0, keepdims=True) / cnt
    diff = (h - mean) * mask
    var = jnp.sum(diff * diff, axis=0, keepdims=True) / cnt  # biased var (torch BN train)
    inv = jax.lax.rsqrt(var + eps)
    h = (h - mean) * inv * g_ref[...] + bt_ref[...]
    h = jnp.maximum(h, 0.0)

    # ---- layer 2, partial: accumulate h1_j @ W2[tile_rows, :] ----
    acc_ref[...] += jnp.dot(h.astype(jnp.bfloat16), w2_ref[...],
                            preferred_element_type=jnp.float32)

    # ---- finalize on the last tile: relu -> layer 3 -> sigmoid ----
    @pl.when(j == pl.num_programs(0) - 1)
    def _():
        h2 = jnp.maximum(acc_ref[...] + b2_ref[...], 0.0)
        y = jnp.dot(h2.astype(jnp.bfloat16), w3_ref[...],
                    preferred_element_type=jnp.float32) + b3_ref[...]
        o_ref[...] = jax.nn.sigmoid(y)


def fused_forward(x_p, n_valid, p, *, eps=1e-5, tn=TN):
    B_p, K = x_p.shape
    assert K == D_IN_P and D1_P % tn == 0
    return pl.pallas_call(
        functools.partial(_fused_kernel, eps=eps),
        out_shape=jax.ShapeDtypeStruct((B_p, D_OUT_P), jnp.float32),
        grid_spec=pltpu.PrefetchScalarGridSpec(
            num_scalar_prefetch=1,
            grid=(D1_P // tn,),
            in_specs=[
                pl.BlockSpec((B_p, D_IN_P), lambda j, n: (0, 0)),    # x (loop-invariant)
                pl.BlockSpec((D_IN_P, tn), lambda j, n: (0, j)),     # W1 column tile (bf16)
                pl.BlockSpec((1, tn), lambda j, n: (0, j)),          # b1 tile
                pl.BlockSpec((1, tn), lambda j, n: (0, j)),          # gamma tile
                pl.BlockSpec((1, tn), lambda j, n: (0, j)),          # beta tile
                pl.BlockSpec((tn, D2_P), lambda j, n: (j, 0)),       # W2 row tile (bf16)
                pl.BlockSpec((1, D2_P), lambda j, n: (0, 0)),        # b2
                pl.BlockSpec((D2_P, D_OUT_P), lambda j, n: (0, 0)),  # W3 (bf16)
                pl.BlockSpec((1, D_OUT_P), lambda j, n: (0, 0)),     # b3
            ],
            out_specs=pl.BlockSpec((B_p, D_OUT_P), lambda j, n: (0, 0)),
            scratch_shapes=[pltpu.VMEM((B_p, D2_P), jnp.float32)],   # h2 accumulator
        ),
        compiler_params=pltpu.CompilerParams(
            # Grid axis is a reduction over W1 column tiles (accumulator carried in
            # scratch), so it must be "arbitrary".
            dimension_semantics=("arbitrary",),
            # bf16 tn=1024 double-buffered tiles ~= 14 MiB total; lift above the v5e
            # 16 MiB default scoped limit while staying well under v7x's 64 MiB VMEM.
            vmem_limit_bytes=32 * 1024 * 1024,
        ),
    )(n_valid, x_p, p["w1"], p["b1"], p["gamma"], p["beta"],
      p["w2"], p["b2"], p["w3"], p["b3"])


# ---------------- parameters (deterministic, nn.Linear-style init) ----------------
def init_params(key):
    ks = jax.random.split(key, 6)

    def linear(kw, kb, fi, fo, fip, fop):
        bound = 1.0 / jnp.sqrt(jnp.float32(fi))
        w = jax.random.uniform(kw, (fi, fo), jnp.float32, -bound, bound)
        b = jax.random.uniform(kb, (1, fo), jnp.float32, -bound, bound)
        w_p = jnp.zeros((fip, fop), jnp.float32).at[:fi, :fo].set(w)
        b_p = jnp.zeros((1, fop), jnp.float32).at[:, :fo].set(b)
        return w_p.astype(jnp.bfloat16), b_p   # bf16 weights halve the HBM stream

    w1, b1 = linear(ks[0], ks[1], D_IN, D1, D_IN_P, D1_P)
    w2, b2 = linear(ks[2], ks[3], D1, D2, D1_P, D2_P)
    w3, b3 = linear(ks[4], ks[5], D2, D_OUT, D2_P, D_OUT_P)
    gamma = jnp.zeros((1, D1_P), jnp.float32).at[:, :D1].set(1.0)  # BN weight default 1
    beta = jnp.zeros((1, D1_P), jnp.float32)                       # BN bias default 0
    return dict(w1=w1, b1=b1, gamma=gamma, beta=beta, w2=w2, b2=b2, w3=w3, b3=b3)


# ---------------- full forward ----------------
def forward(params, x):
    B = x.shape[0]
    B_p = max(_round_up(B, 8), 8)
    x_p = jnp.zeros((B_p, D_IN_P), jnp.float32).at[:B, :D_IN].set(x.astype(jnp.float32))
    n_valid = jnp.array([B], jnp.int32)        # SMEM scalar: no recompile per batch size
    out = fused_forward(x_p, n_valid, params)  # [B_p, 128]
    return out[:B, :D_OUT]                     # [B, 1]


if __name__ == "__main__":
    key = jax.random.PRNGKey(0)
    k_param, k_x = jax.random.split(key)
    params = init_params(k_param)
    x = jax.random.normal(k_x, (4, D_IN), jnp.float32)  # batch=4, input dim fixed by module

    y = forward(params, x)
    jax.block_until_ready(y)
    assert y.shape == (4, 1)
    assert bool(jnp.all(jnp.isfinite(y)))
    assert bool(jnp.all((y >= 0.0) & (y <= 1.0)))
    print("KERNEL_OK")
</pallas_src>

<mosaic_0001>
module attributes {stable_mosaic.version = 11 : i64} {
  func.func @_fused_kernel(%arg0: i32, %arg1: memref<1xi32, #tpu.memory_space<smem>>, %arg2: memref<8x3200xf32, #tpu.memory_space<vmem>>, %arg3: memref<3200x1024xbf16, #tpu.memory_space<vmem>>, %arg4: memref<1x1024xf32, #tpu.memory_space<vmem>>, %arg5: memref<1x1024xf32, #tpu.memory_space<vmem>>, %arg6: memref<1x1024xf32, #tpu.memory_space<vmem>>, %arg7: memref<1024x256xbf16, #tpu.memory_space<vmem>>, %arg8: memref<1x256xf32, #tpu.memory_space<vmem>>, %arg9: memref<256x128xbf16, #tpu.memory_space<vmem>>, %arg10: memref<1x128xf32, #tpu.memory_space<vmem>>, %arg11: memref<8x128xf32, #tpu.memory_space<vmem>>, %arg12: memref<8x256xf32, #tpu.memory_space<vmem>>) attributes {dimension_semantics = [#tpu.dimension_semantics<arbitrary>], iteration_bounds = array<i64: 5>, scalar_prefetch = 1 : i64, scratch_operands = 1 : i64, tpu.core_type = #tpu.core_type<tc>, window_params = [{pipeline_mode = #tpu.pipeline_mode<synchronous>, transform_indices = @transform_0, window_bounds = array<i64: 8, 3200>}, {transform_indices = @transform_1, window_bounds = array<i64: 3200, 1024>}, {transform_indices = @transform_2, window_bounds = array<i64: 1, 1024>}, {transform_indices = @transform_3, window_bounds = array<i64: 1, 1024>}, {transform_indices = @transform_4, window_bounds = array<i64: 1, 1024>}, {transform_indices = @transform_5, window_bounds = array<i64: 1024, 256>}, {pipeline_mode = #tpu.pipeline_mode<synchronous>, transform_indices = @transform_6, window_bounds = array<i64: 1, 256>}, {pipeline_mode = #tpu.pipeline_mode<synchronous>, transform_indices = @transform_7, window_bounds = array<i64: 256, 128>}, {pipeline_mode = #tpu.pipeline_mode<synchronous>, transform_indices = @transform_8, window_bounds = array<i64: 1, 128>}, {pipeline_mode = #tpu.pipeline_mode<synchronous>, transform_indices = @transform_9, window_bounds = array<i64: 8, 128>}]} {
    %c0_i32 = arith.constant 0 : i32
    %0 = arith.cmpi eq, %arg0, %c0_i32 : i32
    %1 = arith.extui %0 : i1 to i32
    %c0_i32_0 = arith.constant 0 : i32
    %2 = arith.cmpi ne, %1, %c0_i32_0 : i32
    scf.if %2 {
      %cst_24 = arith.constant 0.000000e+00 : f32
      %56 = vector.broadcast %cst_24 : f32 to vector<8x256xf32>
      %c0_25 = arith.constant 0 : index
      %c0_26 = arith.constant 0 : index
      %57 = vector.load %arg12[%c0_25, %c0_26] : memref<8x256xf32, #tpu.memory_space<vmem>>, vector<8x256xf32>
      tpu.vector_store %arg12[%c0_25, %c0_26], %56 {strides = array<i32>} : memref<8x256xf32, #tpu.memory_space<vmem>>, vector<8x256xf32>,
    } else {
    }
    %c0 = arith.constant 0 : index
    %c0_1 = arith.constant 0 : index
    %3 = vector.load %arg2[%c0, %c0_1] : memref<8x3200xf32, #tpu.memory_space<vmem>>, vector<8x3200xf32>
    %4 = arith.truncf %3 : vector<8x3200xf32> to vector<8x3200xbf16>
    %c0_2 = arith.constant 0 : index
    %c0_3 = arith.constant 0 : index
    %5 = vector.load %arg3[%c0_2, %c0_3] : memref<3200x1024xbf16, #tpu.memory_space<vmem>>, vector<3200x1024xbf16>
    %cst = arith.constant dense<0.000000e+00> : vector<8x1024xf32>
    %6 = tpu.matmul %4, %5, %cst {dimension_numbers = #tpu.dot_dimension_numbers<[1], [0], [0], [1], [0, 0, 1, 1], [], []>} : vector<8x3200xbf16>, vector<3200x1024xbf16>, vector<8x1024xf32> -> vector<8x1024xf32>
    %c0_4 = arith.constant 0 : index
    %c0_5 = arith.constant 0 : index
    %7 = vector.load %arg4[%c0_4, %c0_5] : memref<1x1024xf32, #tpu.memory_space<vmem>>, vector<1x1024xf32>
    %8 = vector.broadcast %7 : vector<1x1024xf32> to vector<8x1024xf32>
    %9 = arith.addf %6, %8 : vector<8x1024xf32>
    %cst_6 = arith.constant 0.000000e+00 : f32
    %10 = vector.broadcast %cst_6 : f32 to vector<8x1024xf32>
    %11 = arith.maximumf %9, %10 : vector<8x1024xf32>
    %c0_7 = arith.constant 0 : index
    %12 = memref.load %arg1[%c0_7] : memref<1xi32, #tpu.memory_space<smem>>
    %13 = tpu.iota {dimensions = array<i32: 0>} : vector<8x1024xi32>
    %14 = vector.broadcast %12 : i32 to vector<8x1024xi32>
    %15 = arith.cmpi slt, %13, %14 : vector<8x1024xi32>
    %16 = arith.extui %15 : vector<8x1024xi1> to vector<8x1024xi32>
    %17 = arith.sitofp %16 : vector<8x1024xi32> to vector<8x1024xf32>
    %18 = arith.sitofp %12 : i32 to f32
    %19 = arith.mulf %11, %17 : vector<8x1024xf32>
    %cst_8 = arith.constant dense<0.000000e+00> : vector<1024xf32>
    %20 = vector.multi_reduction <add>, %19, %cst_8 [0] : vector<8x1024xf32> to vector<1024xf32>
    %21 = vector.shape_cast %20 : vector<1024xf32> to vector<1x1024xf32>
    %22 = vector.broadcast %18 : f32 to vector<1x1024xf32>
    %23 = arith.divf %21, %22 : vector<1x1024xf32>
    %24 = vector.broadcast %23 : vector<1x1024xf32> to vector<8x1024xf32>
    %25 = arith.subf %11, %24 : vector<8x1024xf32>
    %26 = arith.mulf %25, %17 : vector<8x1024xf32>
    %27 = arith.mulf %26, %26 : vector<8x1024xf32>
    %cst_9 = arith.constant dense<0.000000e+00> : vector<1024xf32>
    %28 = vector.multi_reduction <add>, %27, %cst_9 [0] : vector<8x1024xf32> to vector<1024xf32>
    %29 = vector.shape_cast %28 : vector<1024xf32> to vector<1x1024xf32>
    %30 = vector.broadcast %18 : f32 to vector<1x1024xf32>
    %31 = arith.divf %29, %30 : vector<1x1024xf32>
    %cst_10 = arith.constant 9.99999974E-6 : f32
    %32 = vector.broadcast %cst_10 : f32 to vector<1x1024xf32>
    %33 = arith.addf %31, %32 : vector<1x1024xf32>
    %34 = math.rsqrt %33 : vector<1x1024xf32>
    %35 = vector.broadcast %23 : vector<1x1024xf32> to vector<8x1024xf32>
    %36 = arith.subf %11, %35 : vector<8x1024xf32>
    %37 = vector.broadcast %34 : vector<1x1024xf32> to vector<8x1024xf32>
    %38 = arith.mulf %36, %37 : vector<8x1024xf32>
    %c0_11 = arith.constant 0 : index
    %c0_12 = arith.constant 0 : index
    %39 = vector.load %arg5[%c0_11, %c0_12] : memref<1x1024xf32, #tpu.memory_space<vmem>>, vector<1x1024xf32>
    %40 = vector.broadcast %39 : vector<1x1024xf32> to vector<8x1024xf32>
    %41 = arith.mulf %38, %40 : vector<8x1024xf32>
    %c0_13 = arith.constant 0 : index
    %c0_14 = arith.constant 0 : index
    %42 = vector.load %arg6[%c0_13, %c0_14] : memref<1x1024xf32, #tpu.memory_space<vmem>>, vector<1x1024xf32>
    %43 = vector.broadcast %42 : vector<1x1024xf32> to vector<8x1024xf32>
    %44 = arith.addf %41, %43 : vector<8x1024xf32>
    %cst_15 = arith.constant 0.000000e+00 : f32
    %45 = vector.broadcast %cst_15 : f32 to vector<8x1024xf32>
    %46 = arith.maximumf %44, %45 : vector<8x1024xf32>
    %c0_16 = arith.constant 0 : index
    %c0_17 = arith.constant 0 : index
    %47 = vector.load %arg12[%c0_16, %c0_17] : memref<8x256xf32, #tpu.memory_space<vmem>>, vector<8x256xf32>
    %48 = arith.truncf %46 : vector<8x1024xf32> to vector<8x1024xbf16>
    %c0_18 = arith.constant 0 : index
    %c0_19 = arith.constant 0 : index
    %49 = vector.load %arg7[%c0_18, %c0_19] : memref<1024x256xbf16, #tpu.memory_space<vmem>>, vector<1024x256xbf16>
    %cst_20 = arith.constant dense<0.000000e+00> : vector<8x256xf32>
    %50 = tpu.matmul %48, %49, %cst_20 {dimension_numbers = #tpu.dot_dimension_numbers<[1], [0], [0], [1], [0, 0, 1, 1], [], []>} : vector<8x1024xbf16>, vector<1024x256xbf16>, vector<8x256xf32> -> vector<8x256xf32>
    %51 = arith.addf %47, %50 : vector<8x256xf32>
    %c0_21 = arith.constant 0 : index
    %c0_22 = arith.constant 0 : index
    %52 = vector.load %arg12[%c0_21, %c0_22] : memref<8x256xf32, #tpu.memory_space<vmem>>, vector<8x256xf32>
    tpu.vector_store %arg12[%c0_21, %c0_22], %51 {strides = array<i32>} : memref<8x256xf32, #tpu.memory_space<vmem>>, vector<8x256xf32>,
    %c4_i32 = arith.constant 4 : i32
    %53 = arith.cmpi eq, %arg0, %c4_i32 : i32
    %54 = arith.extui %53 : i1 to i32
    %c0_i32_23 = arith.constant 0 : i32
    %55 = arith.cmpi ne, %54, %c0_i32_23 : i32
    scf.if %55 {
      %c0_24 = arith.constant 0 : index
      %c0_25 = arith.constant 0 : index
      %56 = vector.load %arg12[%c0_24, %c0_25] : memref<8x256xf32, #tpu.memory_space<vmem>>, vector<8x256xf32>
      %c0_26 = arith.constant 0 : index
      %c0_27 = arith.constant 0 : index
      %57 = vector.load %arg8[%c0_26, %c0_27] : memref<1x256xf32, #tpu.memory_space<vmem>>, vector<1x256xf32>
      %58 = vector.broadcast %57 : vector<1x256xf32> to vector<8x256xf32>
      %59 = arith.addf %56, %58 : vector<8x256xf32>
      %cst_28 = arith.constant 0.000000e+00 : f32
      %60 = vector.broadcast %cst_28 : f32 to vector<8x256xf32>
      %61 = arith.maximumf %59, %60 : vector<8x256xf32>
      %62 = arith.truncf %61 : vector<8x256xf32> to vector<8x256xbf16>
      %c0_29 = arith.constant 0 : index
      %c0_30 = arith.constant 0 : index
      %63 = vector.load %arg9[%c0_29, %c0_30] : memref<256x128xbf16, #tpu.memory_space<vmem>>, vector<256x128xbf16>
      %cst_31 = arith.constant dense<0.000000e+00> : vector<8x128xf32>
      %64 = tpu.matmul %62, %63, %cst_31 {dimension_numbers = #tpu.dot_dimension_numbers<[1], [0], [0], [1], [0, 0, 1, 1], [], []>} : vector<8x256xbf16>, vector<256x128xbf16>, vector<8x128xf32> -> vector<8x128xf32>
      %c0_32 = arith.constant 0 : index
      %c0_33 = arith.constant 0 : index
      %65 = vector.load %arg10[%c0_32, %c0_33] : memref<1x128xf32, #tpu.memory_space<vmem>>, vector<1x128xf32>
      %66 = vector.broadcast %65 : vector<1x128xf32> to vector<8x128xf32>
      %67 = arith.addf %64, %66 : vector<8x128xf32>
      %68 = arith.negf %67 : vector<8x128xf32>
      %69 = math.exp %68 : vector<8x128xf32>
      %cst_34 = arith.constant 1.000000e+00 : f32
      %70 = vector.broadcast %cst_34 : f32 to vector<8x128xf32>
      %71 = arith.addf %70, %69 : vector<8x128xf32>
      %72 = arith.divf %70, %71 : vector<8x128xf32>
      %c0_35 = arith.constant 0 : index
      %c0_36 = arith.constant 0 : index
      %73 = vector.load %arg11[%c0_35, %c0_36] : memref<8x128xf32, #tpu.memory_space<vmem>>, vector<8x128xf32>
      tpu.vector_store %arg11[%c0_35, %c0_36], %72 {strides = array<i32>} : memref<8x128xf32, #tpu.memory_space<vmem>>, vector<8x128xf32>,
    } else {
    }
    return
  }
  func.func @transform_0(%arg0: i32, %arg1: memref<1xi32, #tpu.memory_space<smem>>) -> (i32, i32) {
    %c0_i32 = arith.constant 0 : i32
    %c0_i32_0 = arith.constant 0 : i32
    %c0_i32_1 = arith.constant 0 : i32
    return %c0_i32, %c0_i32_0 : i32, i32
  }
  func.func @transform_1(%arg0: i32, %arg1: memref<1xi32, #tpu.memory_space<smem>>) -> (i32, i32) {
    %c0_i32 = arith.constant 0 : i32
    %c0_i32_0 = arith.constant 0 : i32
    return %c0_i32, %arg0 : i32, i32
  }
  func.func @transform_2(%arg0: i32, %arg1: memref<1xi32, #tpu.memory_space<smem>>) -> (i32, i32) {
    %c0_i32 = arith.constant 0 : i32
    %c0_i32_0 = arith.constant 0 : i32
    return %c0_i32, %arg0 : i32, i32
  }
  func.func @transform_3(%arg0: i32, %arg1: memref<1xi32, #tpu.memory_space<smem>>) -> (i32, i32) {
    %c0_i32 = arith.constant 0 : i32
    %c0_i32_0 = arith.constant 0 : i32
    return %c0_i32, %arg0 : i32, i32
  }
  func.func @transform_4(%arg0: i32, %arg1: memref<1xi32, #tpu.memory_space<smem>>) -> (i32, i32) {
    %c0_i32 = arith.constant 0 : i32
    %c0_i32_0 = arith.constant 0 : i32
    return %c0_i32, %arg0 : i32, i32
  }
  func.func @transform_5(%arg0: i32, %arg1: memref<1xi32, #tpu.memory_space<smem>>) -> (i32, i32) {
    %c0_i32 = arith.constant 0 : i32
    %c0_i32_0 = arith.constant 0 : i32
    return %arg0, %c0_i32 : i32, i32
  }
  func.func @transform_6(%arg0: i32, %arg1: memref<1xi32, #tpu.memory_space<smem>>) -> (i32, i32) {
    %c0_i32 = arith.constant 0 : i32
    %c0_i32_0 = arith.constant 0 : i32
    %c0_i32_1 = arith.constant 0 : i32
    return %c0_i32, %c0_i32_0 : i32, i32
  }
  func.func @transform_7(%arg0: i32, %arg1: memref<1xi32, #tpu.memory_space<smem>>) -> (i32, i32) {
    %c0_i32 = arith.constant 0 : i32
    %c0_i32_0 = arith.constant 0 : i32
    %c0_i32_1 = arith.constant 0 : i32
    return %c0_i32, %c0_i32_0 : i32, i32
  }
  func.func @transform_8(%arg0: i32, %arg1: memref<1xi32, #tpu.memory_space<smem>>) -> (i32, i32) {
    %c0_i32 = arith.constant 0 : i32
    %c0_i32_0 = arith.constant 0 : i32
    %c0_i32_1 = arith.constant 0 : i32
    return %c0_i32, %c0_i32_0 : i32, i32
  }
  func.func @transform_9(%arg0: i32, %arg1: memref<1xi32, #tpu.memory_space<smem>>) -> (i32, i32) {
    %c0_i32 = arith.constant 0 : i32
    %c0_i32_0 = arith.constant 0 : i32
    %c0_i32_1 = arith.constant 0 : i32
    return %c0_i32, %c0_i32_0 : i32, i32
  }
}

</mosaic_0001>

<llo_original>
// kernel: tpu_custom_call.1
$region0: #{tpu_custom_call.1}
  #allocation0 [shape = 'u32[]', space=smem, size = 0x4, offset = 0x4, fixed_abs, tag = 'smem constant byte address 0x4 - core index']
  #allocation1 [shape = 'u32[144,128]{1,0:T(1,128)}', space=vmem, size = 0x12000, scoped, tag = 'internal scratch']
  #allocation2 [shape = 'f32[8,256]{1,0:T(8,128)}', space=vmem, size = 0x2000, scoped, tag = 'scratch operand']
  #allocation3 [shape = 's32[1]{0}', space=sflag, size = 0x4, scoped, tag = 'scoped memory for tpu_custom_call.1']
  #allocation4 [shape = 's32[1]{0:T(128)S(6)}', space=smem, size = 0x200, scoped, tag = 'prefetched SMEM operand 0']
  %s0 = inlined_call_operand.<no memory space> [shape: s32[1], index: 0, kind: input, shape index: {}]
  %s1 = inlined_call_operand.hbm [shape: f32[8,3200], index: 1, kind: input, shape index: {}]
  %s2 = inlined_call_operand.hbm [shape: bf16[3200,5120], index: 2, kind: input, shape index: {}]
  %s3 = inlined_call_operand.hbm [shape: f32[1,5120], index: 3, kind: input, shape index: {}]
  %s4 = inlined_call_operand.hbm [shape: f32[1,5120], index: 4, kind: input, shape index: {}]
  %s5 = inlined_call_operand.hbm [shape: f32[1,5120], index: 5, kind: input, shape index: {}]
  %s6 = inlined_call_operand.hbm [shape: bf16[5120,256], index: 6, kind: input, shape index: {}]
  %s7 = inlined_call_operand.hbm [shape: f32[1,256], index: 7, kind: input, shape index: {}]
  %s8 = inlined_call_operand.hbm [shape: bf16[256,128], index: 8, kind: input, shape index: {}]
  %s9 = inlined_call_operand.hbm [shape: f32[1,128], index: 9, kind: input, shape index: {}]
  %s10 = inlined_call_operand.hbm [shape: f32[8,128], index: 10, kind: output, shape index: {}]
  %s11 = sld [smem:[#allocation0]]
  $region113: #{tpu_custom_call.1} parent=0
    _
  %s13 = ssub.s32 1, %s11
  %s14 = scalar_select 0, %s13, %s11
  %15 = sst [smem:[#allocation4]] %s0
  $region1: #{tpu_custom_call.1} parent=0
    #allocation5 [shape = 'u8[102400]{0}', space=vmem, size = 0x19000, scoped, tag = 'input window, operand 1, single buffered']
    #allocation6 [shape = 's32[2]{0}', space=sflag, size = 0x8, scoped, tag = 'scoped memory for tpu_custom_call.1']
    #allocation7 [shape = 's32[2]{0}', space=sflag, size = 0x8, scoped, tag = 'scoped memory for tpu_custom_call.1']
    #allocation8 [shape = 'u8[13107200]{0}', space=vmem, size = 0xc80000, scoped, tag = 'input window, operand 2']
    #allocation9 [shape = 's32[2]{0}', space=sflag, size = 0x8, scoped, tag = 'scoped memory for tpu_custom_call.1']
    #allocation10 [shape = 'u8[8192]{0}', space=vmem, size = 0x2000, scoped, tag = 'input window, operand 3']
    #allocation11 [shape = 'u8[8192]{0}', space=vmem, size = 0x2000, scoped, tag = 'input window, operand 4']
    #allocation12 [shape = 's32[2]{0}', space=sflag, size = 0x8, scoped, tag = 'scoped memory for tpu_custom_call.1']
    #allocation13 [shape = 'u8[8192]{0}', space=vmem, size = 0x2000, scoped, tag = 'input window, operand 5']
    #allocation14 [shape = 'u8[1048576]{0}', space=vmem, size = 0x100000, scoped, tag = 'input window, operand 6']
    #allocation15 [shape = 's32[2]{0}', space=sflag, size = 0x8, scoped, tag = 'scoped memory for tpu_custom_call.1']
    #allocation16 [shape = 'u8[1024]{0}', space=vmem, size = 0x400, scoped, tag = 'input window, operand 7, single buffered']
    #allocation17 [shape = 'u8[65536]{0}', space=vmem, size = 0x10000, scoped, tag = 'input window, operand 8, single buffered']
    #allocation18 [shape = 's32[1]{0}', space=sflag, size = 0x4, scoped, tag = 'scoped memory for tpu_custom_call.1']
    #allocation19 [shape = 'u8[512]{0}', space=vmem, size = 0x400, scoped, tag = 'input window, operand 9, single buffered']
    #allocation20 [shape = 'u8[4096]{0}', space=vmem, size = 0x1000, scoped, tag = 'output window, operand 0, single buffered']
    %16 = vsyncpa [#allocation6], 0
    %17 = vsyncpa [#allocation9], 0
    %s18 = scalar_lea.sflag [#allocation9], 1
    %19 = vsyncpa %s18, 0
    %20 = vsyncpa [#allocation12], 0
    %s21 = scalar_lea.sflag [#allocation12], 1
    %22 = vsyncpa %s21, 0
    %23 = vsyncpa [#allocation15], 0
    %s24 = scalar_lea.sflag [#allocation15], 1
    %25 = vsyncpa %s24, 0
    %26 = vsyncpa [#allocation18], 0
    %27 = vsyncpa [#allocation7], 0
    loop: start=0, step=1, limit=7
    $region2: #{tpu_custom_call.1} parent=1 // loop_pre_header
      _
    $region3: #{tpu_custom_call.1} parent=1 // loop_header
      %s29 = sphi 0, %s33
      %p30 = scmp.ge.s32.totalorder %s29, 7
      %s37 = sphi 0, %s37
      %s39 = sphi 0, %s37
      %s40 = sphi 0, %s39
      %s54 = sphi 0, %s40
      %s60 = sphi 0, %s62
      %s63 = sphi 0, %s60
      %s64 = sphi 0, %s63
      %s80 = sphi 0, %s64
      %s86 = sphi 0, %s88
      %s89 = sphi 0, %s86
      %s90 = sphi 0, %s89
      %s106 = sphi 0, %s90
      %s112 = sphi 0, %s114
      %s115 = sphi 0, %s112
      %s116 = sphi 0, %s115
      %s132 = sphi 0, %s116
      %s138 = sphi 0, %s140
      %s141 = sphi 0, %s138
      %s142 = sphi 0, %s141
      %s158 = sphi 0, %s142
      %s164 = sphi 0, %s166
      %s167 = sphi 0, %s164
      %s168 = sphi 0, %s167
      %s184 = sphi 0, %s168
      %s188 = sphi 0, %s188
      %s190 = sphi 0, %s188
      %s191 = sphi 0, %s190
      %s205 = sphi 0, %s191
      %s209 = sphi 0, %s209
      %s211 = sphi 0, %s209
      %s212 = sphi 0, %s211
      %s226 = sphi 0, %s212
      %s230 = sphi 0, %s230
      %s232 = sphi 0, %s230
      %s233 = sphi 0, %s232
      %s247 = sphi 0, %s233
      %s251 = sphi 0, %s251
      %s253 = sphi 0, %s251
      %s254 = sphi 0, %s253
      %s268 = sphi 0, %s254
    $region4: #{tpu_custom_call.1} parent=1 // loop_header_branch
      %32 = sbr.rel (%p30) target = $region8
    $region5: #{tpu_custom_call.1} parent=1 // loop_body
      %s34 = ssub.s32 %s29, 1
      %s35 = ssub.s32 %s29, 2
      %s36 = sadd.s32 %s29, 1
      %s38 = sadd.s32 %s37, 1
      %p41 = scmp.eq.s32.totalorder %s29, 4
      %p42 = scmp.ne.s32.totalorder %s37, %s39
      %p43 = scmp.eq.s32.totalorder %s29, 0
      %p44 = por %p42, %p43
      %p45 = scmp.ne.s32.totalorder %s37, %s39
      %p46 = scmp.eq.s32.totalorder %s34, 4
      %p47 = por %p45, %p46
      %p48 = scmp.ne.s32.totalorder %s39, %s40
      %p49 = scmp.eq.s32.totalorder %s34, 0
      %p50 = por %p48, %p49
      %p51 = scmp.ne.s32.totalorder %s39, %s40
      %p52 = scmp.eq.s32.totalorder %s35, 4
      %p53 = por %p51, %p52
      %p55 = scmp.ne.s32.totalorder %s40, %s54
      %p56 = scmp.eq.s32.totalorder %s35, 0
      %p57 = por %p55, %p56
      %s58 = ssub.s32 %s29, %s36
      %p59 = scmp.eq.s32.totalorder %s58, 0
      %s61 = sadd.s32 %s60, 1
      %s62 = scalar_select %p59, %s60, %s61
      %p65 = pneg %p59
      %p66 = scmp.eq.s32.totalorder %s29, 4
      %p67 = por %p65, %p66
      %p68 = scmp.ne.s32.totalorder %s60, %s63
      %p69 = scmp.eq.s32.totalorder %s29, 0
      %p70 = por %p68, %p69
      %p71 = scmp.ne.s32.totalorder %s60, %s63
      %p72 = scmp.eq.s32.totalorder %s34, 4
      %p73 = por %p71, %p72
      %p74 = scmp.ne.s32.totalorder %s63, %s64
      %p75 = scmp.eq.s32.totalorder %s34, 0
      %p76 = por %p74, %p75
      %p77 = scmp.ne.s32.totalorder %s63, %s64
      %p78 = scmp.eq.s32.totalorder %s35, 4
      %p79 = por %p77, %p78
      %p81 = scmp.ne.s32.totalorder %s64, %s80
      %p82 = scmp.eq.s32.totalorder %s35, 0
      %p83 = por %p81, %p82
      %s84 = ssub.s32 %s29, %s36
      %p85 = scmp.eq.s32.totalorder %s84, 0
      %s87 = sadd.s32 %s86, 1
      %s88 = scalar_select %p85, %s86, %s87
      %p91 = pneg %p85
      %p92 = scmp.eq.s32.totalorder %s29, 4
      %p93 = por %p91, %p92
      %p94 = scmp.ne.s32.totalorder %s86, %s89
      %p95 = scmp.eq.s32.totalorder %s29, 0
      %p96 = por %p94, %p95
      %p97 = scmp.ne.s32.totalorder %s86, %s89
      %p98 = scmp.eq.s32.totalorder %s34, 4
      %p99 = por %p97, %p98
      %p100 = scmp.ne.s32.totalorder %s89, %s90
      %p101 = scmp.eq.s32.totalorder %s34, 0
      %p102 = por %p100, %p101
      %p103 = scmp.ne.s32.totalorder %s89, %s90
      %p104 = scmp.eq.s32.totalorder %s35, 4
      %p105 = por %p103, %p104
      %p107 = scmp.ne.s32.totalorder %s90, %s106
      %p108 = scmp.eq.s32.totalorder %s35, 0
      %p109 = por %p107, %p108
      %s110 = ssub.s32 %s29, %s36
      %p111 = scmp.eq.s32.totalorder %s110, 0
      %s113 = sadd.s32 %s112, 1
      %s114 = scalar_select %p111, %s112, %s113
      %p117 = pneg %p111
      %p118 = scmp.eq.s32.totalorder %s29, 4
      %p119 = por %p117, %p118
      %p120 = scmp.ne.s32.totalorder %s112, %s115
      %p121 = scmp.eq.s32.totalorder %s29, 0
      %p122 = por %p120, %p121
      %p123 = scmp.ne.s32.totalorder %s112, %s115
      %p124 = scmp.eq.s32.totalorder %s34, 4
      %p125 = por %p123, %p124
      %p126 = scmp.ne.s32.totalorder %s115, %s116
      %p127 = scmp.eq.s32.totalorder %s34, 0
      %p128 = por %p126, %p127
      %p129 = scmp.ne.s32.totalorder %s115, %s116
      %p130 = scmp.eq.s32.totalorder %s35, 4
      %p131 = por %p129, %p130
      %p133 = scmp.ne.s32.totalorder %s116, %s132
      %p134 = scmp.eq.s32.totalorder %s35, 0
      %p135 = por %p133, %p134
      %s136 = ssub.s32 %s29, %s36
      %p137 = scmp.eq.s32.totalorder %s136, 0
      %s139 = sadd.s32 %s138, 1
      %s140 = scalar_select %p137, %s138, %s139
      %p143 = pneg %p137
      %p144 = scmp.eq.s32.totalorder %s29, 4
      %p145 = por %p143, %p144
      %p146 = scmp.ne.s32.totalorder %s138, %s141
      %p147 = scmp.eq.s32.totalorder %s29, 0
      %p148 = por %p146, %p147
      %p149 = scmp.ne.s32.totalorder %s138, %s141
      %p150 = scmp.eq.s32.totalorder %s34, 4
      %p151 = por %p149, %p150
      %p152 = scmp.ne.s32.totalorder %s141, %s142
      %p153 = scmp.eq.s32.totalorder %s34, 0
      %p154 = por %p152, %p153
      %p155 = scmp.ne.s32.totalorder %s141, %s142
      %p156 = scmp.eq.s32.totalorder %s35, 4
      %p157 = por %p155, %p156
      %p159 = scmp.ne.s32.totalorder %s142, %s158
      %p160 = scmp.eq.s32.totalorder %s35, 0
      %p161 = por %p159, %p160
      %s162 = ssub.s32 %s29, %s36
      %p163 = scmp.eq.s32.totalorder %s162, 0
      %s165 = sadd.s32 %s164, 1
      %s166 = scalar_select %p163, %s164, %s165
      %p169 = pneg %p163
      %p170 = scmp.eq.s32.totalorder %s29, 4
      %p171 = por %p169, %p170
      %p172 = scmp.ne.s32.totalorder %s164, %s167
      %p173 = scmp.eq.s32.totalorder %s29, 0
      %p174 = por %p172, %p173
      %p175 = scmp.ne.s32.totalorder %s164, %s167
      %p176 = scmp.eq.s32.totalorder %s34, 4
      %p177 = por %p175, %p176
      %p178 = scmp.ne.s32.totalorder %s167, %s168
      %p179 = scmp.eq.s32.totalorder %s34, 0
      %p180 = por %p178, %p179
      %p181 = scmp.ne.s32.totalorder %s167, %s168
      %p182 = scmp.eq.s32.totalorder %s35, 4
      %p183 = por %p181, %p182
      %p185 = scmp.ne.s32.totalorder %s168, %s184
      %p186 = scmp.eq.s32.totalorder %s35, 0
      %p187 = por %p185, %p186
      %s189 = sadd.s32 %s188, 1
      %p192 = scmp.eq.s32.totalorder %s29, 4
      %p193 = scmp.ne.s32.totalorder %s188, %s190
      %p194 = scmp.eq.s32.totalorder %s29, 0
      %p195 = por %p193, %p194
      %p196 = scmp.ne.s32.totalorder %s188, %s190
      %p197 = scmp.eq.s32.totalorder %s34, 4
      %p198 = por %p196, %p197
      %p199 = scmp.ne.s32.totalorder %s190, %s191
      %p200 = scmp.eq.s32.totalorder %s34, 0
      %p201 = por %p199, %p200
      %p202 = scmp.ne.s32.totalorder %s190, %s191
      %p203 = scmp.eq.s32.totalorder %s35, 4
      %p204 = por %p202, %p203
      %p206 = scmp.ne.s32.totalorder %s191, %s205
      %p207 = scmp.eq.s32.totalorder %s35, 0
      %p208 = por %p206, %p207
      %s210 = sadd.s32 %s209, 1
      %p213 = scmp.eq.s32.totalorder %s29, 4
      %p214 = scmp.ne.s32.totalorder %s209, %s211
      %p215 = scmp.eq.s32.totalorder %s29, 0
      %p216 = por %p214, %p215
      %p217 = scmp.ne.s32.totalorder %s209, %s211
      %p218 = scmp.eq.s32.totalorder %s34, 4
      %p219 = por %p217, %p218
      %p220 = scmp.ne.s32.totalorder %s211, %s212
      %p221 = scmp.eq.s32.totalorder %s34, 0
      %p222 = por %p220, %p221
      %p223 = scmp.ne.s32.totalorder %s211, %s212
      %p224 = scmp.eq.s32.totalorder %s35, 4
      %p225 = por %p223, %p224
      %p227 = scmp.ne.s32.totalorder %s212, %s226
      %p228 = scmp.eq.s32.totalorder %s35, 0
      %p229 = por %p227, %p228
      %s231 = sadd.s32 %s230, 1
      %p234 = scmp.eq.s32.totalorder %s29, 4
      %p235 = scmp.ne.s32.totalorder %s230, %s232
      %p236 = scmp.eq.s32.totalorder %s29, 0
      %p237 = por %p235, %p236
      %p238 = scmp.ne.s32.totalorder %s230, %s232
      %p239 = scmp.eq.s32.totalorder %s34, 4
      %p240 = por %p238, %p239
      %p241 = scmp.ne.s32.totalorder %s232, %s233
      %p242 = scmp.eq.s32.totalorder %s34, 0
      %p243 = por %p241, %p242
      %p244 = scmp.ne.s32.totalorder %s232, %s233
      %p245 = scmp.eq.s32.totalorder %s35, 4
      %p246 = por %p244, %p245
      %p248 = scmp.ne.s32.totalorder %s233, %s247
      %p249 = scmp.eq.s32.totalorder %s35, 0
      %p250 = por %p248, %p249
      %s252 = sadd.s32 %s251, 1
      %p255 = scmp.eq.s32.totalorder %s29, 4
      %p256 = scmp.ne.s32.totalorder %s251, %s253
      %p257 = scmp.eq.s32.totalorder %s29, 0
      %p258 = por %p256, %p257
      %p259 = scmp.ne.s32.totalorder %s251, %s253
      %p260 = scmp.eq.s32.totalorder %s34, 4
      %p261 = por %p259, %p260
      %p262 = scmp.ne.s32.totalorder %s253, %s254
      %p263 = scmp.eq.s32.totalorder %s34, 0
      %p264 = por %p262, %p263
      %p265 = scmp.ne.s32.totalorder %s253, %s254
      %p266 = scmp.eq.s32.totalorder %s35, 4
      %p267 = por %p265, %p266
      %p269 = scmp.ne.s32.totalorder %s254, %s268
      %p270 = scmp.eq.s32.totalorder %s35, 0
      %p271 = por %p269, %p270
      %p272 = scmp.le.s32.totalorder 1, %s29
      %p273 = scmp.lt.s32.totalorder %s29, 6
      %p274 = pnand %p272, %p273
      %p275 = pneg %p274
      // Predicated region
      $region9: #{tpu_custom_call.1} parent=5 // pred_check
        _
      $region10: #{tpu_custom_call.1} parent=5 // pred_check_branch
        %277 = sbr.rel (%p274) target = $region12
      $region11: #{tpu_custom_call.1} parent=5 // pred_region
        %s278 = ssub.s32 %s29, 1
        // Predicated region
        $region13: #{tpu_custom_call.1} parent=11 // pred_check
          %p279 = pneg %p50
        $region14: #{tpu_custom_call.1} parent=11 // pred_check_branch
          %281 = sbr.rel (%p279) target = $region16
        $region15: #{tpu_custom_call.1} parent=11 // pred_region
          %s283 = ssub.s32 3200, 3200
          %284 = vsyncadd [#allocation6], %s283
          %s286 = sshll.u32 [#allocation5], 4
          %s287 = int_to_ptr.vmem [resolvable:$true] %s286
          %289 = dma.hbm_to_vmem [thread:$0]  %s1, 3200, %s287, [#allocation6]
        $region16: #{tpu_custom_call.1} parent=11 // pred_fallthru
          _
        // Predicated region
        $region17: #{tpu_custom_call.1} parent=11 // pred_check
          %p290 = pneg %p201
        $region18: #{tpu_custom_call.1} parent=11 // pred_check_branch
          %292 = sbr.rel (%p290) target = $region20
        $region19: #{tpu_custom_call.1} parent=11 // pred_region
          %s294 = ssub.s32 32, 32
          %295 = vsyncadd [#allocation15], %s294
          %s297 = sshll.u32 [#allocation16], 4
          %s298 = int_to_ptr.vmem [resolvable:$true] %s297
          %300 = dma.hbm_to_vmem [thread:$0]  %s7, 32, %s298, [#allocation15]
        $region20: #{tpu_custom_call.1} parent=11 // pred_fallthru
          _
        // Predicated region
        $region21: #{tpu_custom_call.1} parent=11 // pred_check
          %p301 = pneg %p222
        $region22: #{tpu_custom_call.1} parent=11 // pred_check_branch
          %303 = sbr.rel (%p301) target = $region24
        $region23: #{tpu_custom_call.1} parent=11 // pred_region
          %s305 = ssub.s32 2048, 2048
          %306 = vsyncadd [#allocation18], %s305
          %s307 = sshll.u32 [#allocation17], 4
          %s308 = int_to_ptr.vmem [resolvable:$true] %s307
          %313 = dma.hbm_to_vmem [thread:$0]  %s8, 2048, %s308, [#allocation18], 64, 64, 4
        $region24: #{tpu_custom_call.1} parent=11 // pred_fallthru
          _
        // Predicated region
        $region25: #{tpu_custom_call.1} parent=11 // pred_check
          %p314 = pneg %p243
        $region26: #{tpu_custom_call.1} parent=11 // pred_check_branch
          %316 = sbr.rel (%p314) target = $region28
        $region27: #{tpu_custom_call.1} parent=11 // pred_region
          %s318 = ssub.s32 16, 16
          %319 = vsyncadd [#allocation18], %s318
          %s321 = sshll.u32 [#allocation19], 4
          %s322 = int_to_ptr.vmem [resolvable:$true] %s321
          %324 = dma.hbm_to_vmem [thread:$0]  %s9, 16, %s322, [#allocation18]
        $region28: #{tpu_custom_call.1} parent=11 // pred_fallthru
          _
      $region12: #{tpu_custom_call.1} parent=5 // pred_fallthru
        _
      %p325 = scmp.lt.s32.totalorder %s29, 5
      // Predicated region
      $region29: #{tpu_custom_call.1} parent=5 // pred_check
        %p326 = pneg %p325
      $region30: #{tpu_custom_call.1} parent=5 // pred_check_branch
        %328 = sbr.rel (%p326) target = $region32
      $region31: #{tpu_custom_call.1} parent=5 // pred_region
        // Predicated region
        $region33: #{tpu_custom_call.1} parent=31 // pred_check
          %p329 = pneg %p70
        $region34: #{tpu_custom_call.1} parent=31 // pred_check_branch
          %331 = sbr.rel (%p329) target = $region36
        $region35: #{tpu_custom_call.1} parent=31 // pred_region
          %s332 = sand.u32 %s29, 1
          %s333 = scalar_lea.sflag [#allocation9], %s332
          %s334 = sand.u32 %s60, 1
          %s335 = smul.addr %s334, 12800
          %s336 = scalar_lea.vmem [#allocation8], %s335
          %s337 = smul.u32 8, %s29
          %s339 = ssub.s32 204800, 204800
          %340 = vsyncadd %s333, %s339
          %s341 = smul.addr %s337, 64
          %s342 = scalar_lea.hbm %s2, %s341
          %s343 = sshll.u32 %s336, 4
          %s344 = int_to_ptr.vmem [resolvable:$true] %s343
          %349 = dma.hbm_to_vmem [thread:$0]  %s342, 204800, %s344, %s333, 2560, 512, 32
        $region36: #{tpu_custom_call.1} parent=31 // pred_fallthru
          _
        // Predicated region
        $region37: #{tpu_custom_call.1} parent=31 // pred_check
          %p350 = pneg %p96
        $region38: #{tpu_custom_call.1} parent=31 // pred_check_branch
          %352 = sbr.rel (%p350) target = $region40
        $region39: #{tpu_custom_call.1} parent=31 // pred_region
          %s353 = sand.u32 %s29, 1
          %s354 = scalar_lea.sflag [#allocation9], %s353
          %s355 = sand.u32 %s86, 1
          %s356 = smul.addr %s355, 8
          %s357 = scalar_lea.vmem [#allocation10], %s356
          %s358 = smul.u32 8, %s29
          %s360 = ssub.s32 128, 128
          %361 = vsyncadd %s354, %s360
          %s362 = smul.addr %s358, 16
          %s363 = scalar_lea.hbm %s3, %s362
          %s365 = sshll.u32 %s357, 4
          %s366 = int_to_ptr.vmem [resolvable:$true] %s365
          %368 = dma.hbm_to_vmem [thread:$0]  %s363, 128, %s366, %s354
        $region40: #{tpu_custom_call.1} parent=31 // pred_fallthru
          _
        // Predicated region
        $region41: #{tpu_custom_call.1} parent=31 // pred_check
          %p369 = pneg %p122
        $region42: #{tpu_custom_call.1} parent=31 // pred_check_branch
          %371 = sbr.rel (%p369) target = $region44
        $region43: #{tpu_custom_call.1} parent=31 // pred_region
          %s372 = sand.u32 %s29, 1
          %s373 = scalar_lea.sflag [#allocation12], %s372
          %s374 = sand.u32 %s112, 1
          %s375 = smul.addr %s374, 8
          %s376 = scalar_lea.vmem [#allocation11], %s375
          %s377 = smul.u32 8, %s29
          %s379 = ssub.s32 128, 128
          %380 = vsyncadd %s373, %s379
          %s381 = smul.addr %s377, 16
          %s382 = scalar_lea.hbm %s4, %s381
          %s384 = sshll.u32 %s376, 4
          %s385 = int_to_ptr.vmem [resolvable:$true] %s384
          %387 = dma.hbm_to_vmem [thread:$0]  %s382, 128, %s385, %s373
        $region44: #{tpu_custom_call.1} parent=31 // pred_fallthru
          _
        // Predicated region
        $region45: #{tpu_custom_call.1} parent=31 // pred_check
          %p388 = pneg %p148
        $region46: #{tpu_custom_call.1} parent=31 // pred_check_branch
          %390 = sbr.rel (%p388) target = $region48
        $region47: #{tpu_custom_call.1} parent=31 // pred_region
          %s391 = sand.u32 %s29, 1
          %s392 = scalar_lea.sflag [#allocation12], %s391
          %s393 = sand.u32 %s138, 1
          %s394 = smul.addr %s393, 8
          %s395 = scalar_lea.vmem [#allocation13], %s394
          %s396 = smul.u32 8, %s29
          %s398 = ssub.s32 128, 128
          %399 = vsyncadd %s392, %s398
          %s400 = smul.addr %s396, 16
          %s401 = scalar_lea.hbm %s5, %s400
          %s403 = sshll.u32 %s395, 4
          %s404 = int_to_ptr.vmem [resolvable:$true] %s403
          %406 = dma.hbm_to_vmem [thread:$0]  %s401, 128, %s404, %s392
        $region48: #{tpu_custom_call.1} parent=31 // pred_fallthru
          _
        // Predicated region
        $region49: #{tpu_custom_call.1} parent=31 // pred_check
          %p407 = pneg %p174
        $region50: #{tpu_custom_call.1} parent=31 // pred_check_branch
          %409 = sbr.rel (%p407) target = $region52
        $region51: #{tpu_custom_call.1} parent=31 // pred_region
          %s410 = sand.u32 %s29, 1
          %s411 = scalar_lea.sflag [#allocation15], %s410
          %s412 = sand.u32 %s164, 1
          %s413 = smul.addr %s412, 1024
          %s414 = scalar_lea.vmem [#allocation14], %s413
          %s415 = smul.u32 128, %s29
          %s417 = ssub.s32 16384, 16384
          %418 = vsyncadd %s411, %s417
          %s419 = smul.addr %s415, 2
          %s420 = smul.addr %s419, 64
          %s421 = scalar_lea.hbm %s6, %s420
          %s422 = sshll.u32 %s414, 4
          %s423 = int_to_ptr.vmem [resolvable:$true] %s422
          %428 = dma.hbm_to_vmem [thread:$0]  %s421, 16384, %s423, %s411, 128, 128, 8
        $region52: #{tpu_custom_call.1} parent=31 // pred_fallthru
          _
      $region32: #{tpu_custom_call.1} parent=5 // pred_fallthru
        _
      %p429 = scmp.le.s32.totalorder 1, %s29
      %p430 = scmp.lt.s32.totalorder %s29, 6
      %p431 = pnand %p429, %p430
      %p432 = pneg %p431
      // Predicated region
      $region53: #{tpu_custom_call.1} parent=5 // pred_check
        _
      $region54: #{tpu_custom_call.1} parent=5 // pred_check_branch
        %434 = sbr.rel (%p431) target = $region56
      $region55: #{tpu_custom_call.1} parent=5 // pred_region
        %s435 = ssub.s32 %s29, 1
        // Predicated region
        $region57: #{tpu_custom_call.1} parent=55 // pred_check
          %p436 = pneg %p50
        $region58: #{tpu_custom_call.1} parent=55 // pred_check_branch
          %438 = sbr.rel (%p436) target = $region60
        $region59: #{tpu_custom_call.1} parent=55 // pred_region
          %439 = dma.done [#allocation6], 3200
        $region60: #{tpu_custom_call.1} parent=55 // pred_fallthru
          _
        %s440 = sand.u32 %s34, 1
        %s441 = scalar_lea.sflag [#allocation9], %s440
        %s442 = sand.u32 %s63, 1
        %s443 = smul.addr %s442, 12800
        %s444 = scalar_lea.vmem [#allocation8], %s443
        // Predicated region
        $region61: #{tpu_custom_call.1} parent=55 // pred_check
          %p445 = pneg %p76
        $region62: #{tpu_custom_call.1} parent=55 // pred_check_branch
          %447 = sbr.rel (%p445) target = $region64
        $region63: #{tpu_custom_call.1} parent=55 // pred_region
          %448 = dma.done %s441, 204800
        $region64: #{tpu_custom_call.1} parent=55 // pred_fallthru
          _
        %s449 = sand.u32 %s34, 1
        %s450 = scalar_lea.sflag [#allocation9], %s449
        %s451 = sand.u32 %s89, 1
        %s452 = smul.addr %s451, 8
        %s453 = scalar_lea.vmem [#allocation10], %s452
        // Predicated region
        $region65: #{tpu_custom_call.1} parent=55 // pred_check
          %p454 = pneg %p102
        $region66: #{tpu_custom_call.1} parent=55 // pred_check_branch
          %456 = sbr.rel (%p454) target = $region68
        $region67: #{tpu_custom_call.1} parent=55 // pred_region
          %457 = dma.done %s450, 128
        $region68: #{tpu_custom_call.1} parent=55 // pred_fallthru
          _
        %s458 = sand.u32 %s34, 1
        %s459 = scalar_lea.sflag [#allocation12], %s458
        %s460 = sand.u32 %s115, 1
        %s461 = smul.addr %s460, 8
        %s462 = scalar_lea.vmem [#allocation11], %s461
        // Predicated region
        $region69: #{tpu_custom_call.1} parent=55 // pred_check
          %p463 = pneg %p128
        $region70: #{tpu_custom_call.1} parent=55 // pred_check_branch
          %465 = sbr.rel (%p463) target = $region72
        $region71: #{tpu_custom_call.1} parent=55 // pred_region
          %466 = dma.done %s459, 128
        $region72: #{tpu_custom_call.1} parent=55 // pred_fallthru
          _
        %s467 = sand.u32 %s34, 1
        %s468 = scalar_lea.sflag [#allocation12], %s467
        %s469 = sand.u32 %s141, 1
        %s470 = smul.addr %s469, 8
        %s471 = scalar_lea.vmem [#allocation13], %s470
        // Predicated region
        $region73: #{tpu_custom_call.1} parent=55 // pred_check
          %p472 = pneg %p154
        $region74: #{tpu_custom_call.1} parent=55 // pred_check_branch
          %474 = sbr.rel (%p472) target = $region76
        $region75: #{tpu_custom_call.1} parent=55 // pred_region
          %475 = dma.done %s468, 128
        $region76: #{tpu_custom_call.1} parent=55 // pred_fallthru
          _
        %s476 = sand.u32 %s34, 1
        %s477 = scalar_lea.sflag [#allocation15], %s476
        %s478 = sand.u32 %s167, 1
        %s479 = smul.addr %s478, 1024
        %s480 = scalar_lea.vmem [#allocation14], %s479
        // Predicated region
        $region77: #{tpu_custom_call.1} parent=55 // pred_check
          %p481 = pneg %p180
        $region78: #{tpu_custom_call.1} parent=55 // pred_check_branch
          %483 = sbr.rel (%p481) target = $region80
        $region79: #{tpu_custom_call.1} parent=55 // pred_region
          %484 = dma.done %s477, 16384
        $region80: #{tpu_custom_call.1} parent=55 // pred_fallthru
          _
        // Predicated region
        $region81: #{tpu_custom_call.1} parent=55 // pred_check
          %p485 = pneg %p201
        $region82: #{tpu_custom_call.1} parent=55 // pred_check_branch
          %487 = sbr.rel (%p485) target = $region84
        $region83: #{tpu_custom_call.1} parent=55 // pred_region
          %488 = dma.done [#allocation15], 32
        $region84: #{tpu_custom_call.1} parent=55 // pred_fallthru
          _
        // Predicated region
        $region85: #{tpu_custom_call.1} parent=55 // pred_check
          %p489 = pneg %p222
        $region86: #{tpu_custom_call.1} parent=55 // pred_check_branch
          %491 = sbr.rel (%p489) target = $region88
        $region87: #{tpu_custom_call.1} parent=55 // pred_region
          %492 = dma.done [#allocation18], 2048
        $region88: #{tpu_custom_call.1} parent=55 // pred_fallthru
          _
        // Predicated region
        $region89: #{tpu_custom_call.1} parent=55 // pred_check
          %p493 = pneg %p243
        $region90: #{tpu_custom_call.1} parent=55 // pred_check_branch
          %495 = sbr.rel (%p493) target = $region92
        $region91: #{tpu_custom_call.1} parent=55 // pred_region
          %496 = dma.done [#allocation18], 16
        $region92: #{tpu_custom_call.1} parent=55 // pred_fallthru
          _
        %p497 = pneg %p50
        %p498 = pneg %p47
        %s499 = sand.u32 %s34, 1
        %s500 = scalar_lea.sflag [#allocation9], %s499
        %s501 = sand.u32 %s63, 1
        %s502 = smul.addr %s501, 12800
        %s503 = scalar_lea.vmem [#allocation8], %s502
        %p504 = pneg %p76
        %p505 = pneg %p73
        %s506 = sand.u32 %s34, 1
        %s507 = scalar_lea.sflag [#allocation9], %s506
        %s508 = sand.u32 %s89, 1
        %s509 = smul.addr %s508, 8
        %s510 = scalar_lea.vmem [#allocation10], %s509
        %p511 = pneg %p102
        %p512 = pneg %p99
        %s513 = sand.u32 %s34, 1
        %s514 = scalar_lea.sflag [#allocation12], %s513
        %s515 = sand.u32 %s115, 1
        %s516 = smul.addr %s515, 8
        %s517 = scalar_lea.vmem [#allocation11], %s516
        %p518 = pneg %p128
        %p519 = pneg %p125
        %s520 = sand.u32 %s34, 1
        %s521 = scalar_lea.sflag [#allocation12], %s520
        %s522 = sand.u32 %s141, 1
        %s523 = smul.addr %s522, 8
        %s524 = scalar_lea.vmem [#allocation13], %s523
        %p525 = pneg %p154
        %p526 = pneg %p151
        %s527 = sand.u32 %s34, 1
        %s528 = scalar_lea.sflag [#allocation15], %s527
        %s529 = sand.u32 %s167, 1
        %s530 = smul.addr %s529, 1024
        %s531 = scalar_lea.vmem [#allocation14], %s530
        %p532 = pneg %p180
        %p533 = pneg %p177
        %p534 = pneg %p201
        %p535 = pneg %p198
        %p536 = pneg %p222
        %p537 = pneg %p219
        %p538 = pneg %p243
        %p539 = pneg %p240
        %p540 = pneg %p264
        %p541 = pneg %p261
        %s542 = smul.u32 8, %s34
        %s543 = smul.u32 8, %s34
        %s544 = smul.u32 8, %s34
        %s545 = smul.u32 8, %s34
        %s546 = smul.u32 128, %s34
        %p548 = scmp.eq.s32.totalorder %s34, 0
        // Predicated region
        $region93: #{tpu_custom_call.1} parent=55 // pred_check
          %p549 = pneg %p548
        $region94: #{tpu_custom_call.1} parent=55 // pred_check_branch
          %551 = sbr.rel (%p549) target = $region96
        $region95: #{tpu_custom_call.1} parent=55 // pred_region
          %552 = vst [vmem:[#allocation2] sm:$0xff] 0.0
          %553 = vst [vmem:[#allocation2 + $0x8] sm:$0xff] 0.0
        $region96: #{tpu_custom_call.1} parent=55 // pred_fallthru
          _
        %v554 = vld [vmem:[#allocation5] sm:$0xff]
        %v555 = vld [vmem:[#allocation5 + $0x8] sm:$0xff]
        %v556 = vld [vmem:[#allocation5 + $0x10] sm:$0xff]
        %v557 = vld [vmem:[#allocation5 + $0x18] sm:$0xff]
        %v558 = vld [vmem:[#allocation5 + $0x20] sm:$0xff]
        %v559 = vld [vmem:[#allocation5 + $0x28] sm:$0xff]
        %v560 = vld [vmem:[#allocation5 + $0x30] sm:$0xff]
        %v561 = vld [vmem:[#allocation5 + $0x38] sm:$0xff]
        %v562 = vld [vmem:[#allocation5 + $0x40] sm:$0xff]
        %v563 = vld [vmem:[#allocation5 + $0x48] sm:$0xff]
        %v564 = vld [vmem:[#allocation5 + $0x50] sm:$0xff]
        %v565 = vld [vmem:[#allocation5 + $0x58] sm:$0xff]
        %v566 = vld [vmem:[#allocation5 + $0x60] sm:$0xff]
        %v567 = vld [vmem:[#allocation5 + $0x68] sm:$0xff]
        %v568 = vld [vmem:[#allocation5 + $0x70] sm:$0xff]
        %v569 = vld [vmem:[#allocation5 + $0x78] sm:$0xff]
        %v570 = vld [vmem:[#allocation5 + $0x80] sm:$0xff]
        %v571 = vld [vmem:[#allocation5 + $0x88] sm:$0xff]
        %v572 = vld [vmem:[#allocation5 + $0x90] sm:$0xff]
        %v573 = vld [vmem:[#allocation5 + $0x98] sm:$0xff]
        %v574 = vld [vmem:[#allocation5 + $0xa0] sm:$0xff]
        %v575 = vld [vmem:[#allocation5 + $0xa8] sm:$0xff]
        %v576 = vld [vmem:[#allocation5 + $0xb0] sm:$0xff]
        %v577 = vld [vmem:[#allocation5 + $0xb8] sm:$0xff]
        %v578 = vld [vmem:[#allocation5 + $0xc0] sm:$0xff]
        %v579 = vpack.c.bf16 %v554, %v554
        %v580 = vpack.c.bf16 %v555, %v555
        %v581 = vpack.c.bf16 %v556, %v556
        %v582 = vpack.c.bf16 %v557, %v557
        %v583 = vpack.c.bf16 %v558, %v558
        %v584 = vpack.c.bf16 %v559, %v559
        %v585 = vpack.c.bf16 %v560, %v560
        %v586 = vpack.c.bf16 %v561, %v561
        %v587 = vpack.c.bf16 %v562, %v562
        %v588 = vpack.c.bf16 %v563, %v563
        %v589 = vpack.c.bf16 %v564, %v564
        %v590 = vpack.c.bf16 %v565, %v565
        %v591 = vpack.c.bf16 %v566, %v566
        %v592 = vpack.c.bf16 %v567, %v567
        %v593 = vpack.c.bf16 %v568, %v568
        %v594 = vpack.c.bf16 %v569, %v569
        %v595 = vpack.c.bf16 %v570, %v570
        %v596 = vpack.c.bf16 %v571, %v571
        %v597 = vpack.c.bf16 %v572, %v572
        %v598 = vpack.c.bf16 %v573, %v573
        %v599 = vpack.c.bf16 %v574, %v574
        %v600 = vpack.c.bf16 %v575, %v575
        %v601 = vpack.c.bf16 %v576, %v576
        %v602 = vpack.c.bf16 %v577, %v577
        %v603 = vpack.c.bf16 %v578, %v578
        %v604 = vld [vmem:[%s444] sm:$0xff]
        %v605 = vld [vmem:[%s444 + $0x8] sm:$0xff]
        %v606 = vld [vmem:[%s444 + $0x10] sm:$0xff]
        %v607 = vld [vmem:[%s444 + $0x18] sm:$0xff]
        %v608 = vld [vmem:[%s444 + $0x20] sm:$0xff]
        %v609 = vld [vmem:[%s444 + $0x28] sm:$0xff]
        %v610 = vld [vmem:[%s444 + $0x30] sm:$0xff]
        %v611 = vld [vmem:[%s444 + $0x38] sm:$0xff]
        %v612 = vld [vmem:[%s444 + $0x40] sm:$0xff]
        %v613 = vld [vmem:[%s444 + $0x48] sm:$0xff]
        %v614 = vld [vmem:[%s444 + $0x50] sm:$0xff]
        %v615 = vld [vmem:[%s444 + $0x58] sm:$0xff]
        %v616 = vld [vmem:[%s444 + $0x60] sm:$0xff]
        %v617 = vld [vmem:[%s444 + $0x68] sm:$0xff]
        %v618 = vld [vmem:[%s444 + $0x70] sm:$0xff]
        %v619 = vld [vmem:[%s444 + $0x78] sm:$0xff]
        %v620 = vld [vmem:[%s444 + $0x80] sm:$0xff]
        %v621 = vld [vmem:[%s444 + $0x88] sm:$0xff]
        %v622 = vld [vmem:[%s444 + $0x90] sm:$0xff]
        %v623 = vld [vmem:[%s444 + $0x98] sm:$0xff]
        %v624 = vld [vmem:[%s444 + $0xa0] sm:$0xff]
        %v625 = vld [vmem:[%s444 + $0xa8] sm:$0xff]
        %v626 = vld [vmem:[%s444 + $0xb0] sm:$0xff]
        %v627 = vld [vmem:[%s444 + $0xb8] sm:$0xff]
        %v628 = vld [vmem:[%s444 + $0xc0] sm:$0xff]
        %v629 = vld [vmem:[%s444 + $0xc8] sm:$0xff]
        %v630 = vld [vmem:[%s444 + $0xd0] sm:$0xff]
        %v631 = vld [vmem:[%s444 + $0xd8] sm:$0xff]
        %v632 = vld [vmem:[%s444 + $0xe0] sm:$0xff]
        %v633 = vld [vmem:[%s444 + $0xe8] sm:$0xff]
        %v634 = vld [vmem:[%s444 + $0xf0] sm:$0xff]
        %v635 = vld [vmem:[%s444 + $0xf8] sm:$0xff]
        %v636 = vld [vmem:[%s444 + $0x100] sm:$0xff]
        %v637 = vld [vmem:[%s444 + $0x108] sm:$0xff]
        %v638 = vld [vmem:[%s444 + $0x110] sm:$0xff]
        %v639 = vld [vmem:[%s444 + $0x118] sm:$0xff]
        %v640 = vld [vmem:[%s444 + $0x120] sm:$0xff]
        %v641 = vld [vmem:[%s444 + $0x128] sm:$0xff]
        %v642 = vld [vmem:[%s444 + $0x130] sm:$0xff]
        %v643 = vld [vmem:[%s444 + $0x138] sm:$0xff]
        %v644 = vld [vmem:[%s444 + $0x140] sm:$0xff]
        %v645 = vld [vmem:[%s444 + $0x148] sm:$0xff]
        %v646 = vld [vmem:[%s444 + $0x150] sm:$0xff]
        %v647 = vld [vmem:[%s444 + $0x158] sm:$0xff]
        %v648 = vld [vmem:[%s444 + $0x160] sm:$0xff]
        %v649 = vld [vmem:[%s444 + $0x168] sm:$0xff]
        %v650 = vld [vmem:[%s444 + $0x170] sm:$0xff]
        %v651 = vld [vmem:[%s444 + $0x178] sm:$0xff]
        %v652 = vld [vmem:[%s444 + $0x180] sm:$0xff]
        %v653 = vld [vmem:[%s444 + $0x188] sm:$0xff]
        %v654 = vld [vmem:[%s444 + $0x190] sm:$0xff]
        %v655 = vld [vmem:[%s444 + $0x198] sm:$0xff]
        %v656 = vld [vmem:[%s444 + $0x1a0] sm:$0xff]
        %v657 = vld [vmem:[%s444 + $0x1a8] sm:$0xff]
        %v658 = vld [vmem:[%s444 + $0x1b0] sm:$0xff]
        %v659 = vld [vmem:[%s444 + $0x1b8] sm:$0xff]
        %v660 = vld [vmem:[%s444 + $0x1c0] sm:$0xff]
        %v661 = vld [vmem:[%s444 + $0x1c8] sm:$0xff]
        %v662 = vld [vmem:[%s444 + $0x1d0] sm:$0xff]
        %v663 = vld [vmem:[%s444 + $0x1d8] sm:$0xff]
        %v664 = vld [vmem:[%s444 + $0x1e0] sm:$0xff]
        %v665 = vld [vmem:[%s444 + $0x1e8] sm:$0xff]
        %v666 = vld [vmem:[%s444 + $0x1f0] sm:$0xff]
        %v667 = vld [vmem:[%s444 + $0x1f8] sm:$0xff]
        %v668 = vld [vmem:[%s444 + $0x200] sm:$0xff]
        %v669 = vld [vmem:[%s444 + $0x208] sm:$0xff]
        %v670 = vld [vmem:[%s444 + $0x210] sm:$0xff]
        %v671 = vld [vmem:[%s444 + $0x218] sm:$0xff]
        %v672 = vld [vmem:[%s444 + $0x220] sm:$0xff]
        %v673 = vld [vmem:[%s444 + $0x228] sm:$0xff]
        %v674 = vld [vmem:[%s444 + $0x230] sm:$0xff]
        %v675 = vld [vmem:[%s444 + $0x238] sm:$0xff]
        %v676 = vld [vmem:[%s444 + $0x240] sm:$0xff]
        %v677 = vld [vmem:[%s444 + $0x248] sm:$0xff]
        %v678 = vld [vmem:[%s444 + $0x250] sm:$0xff]
        %v679 = vld [vmem:[%s444 + $0x258] sm:$0xff]
        %v680 = vld [vmem:[%s444 + $0x260] sm:$0xff]
        %v681 = vld [vmem:[%s444 + $0x268] sm:$0xff]
        %v682 = vld [vmem:[%s444 + $0x270] sm:$0xff]
        %v683 = vld [vmem:[%s444 + $0x278] sm:$0xff]
        %v684 = vld [vmem:[%s444 + $0x280] sm:$0xff]
        %v685 = vld [vmem:[%s444 + $0x288] sm:$0xff]
        %v686 = vld [vmem:[%s444 + $0x290] sm:$0xff]
        %v687 = vld [vmem:[%s444 + $0x298] sm:$0xff]
        %v688 = vld [vmem:[%s444 + $0x2a0] sm:$0xff]
        %v689 = vld [vmem:[%s444 + $0x2a8] sm:$0xff]
        %v690 = vld [vmem:[%s444 + $0x2b0] sm:$0xff]
        %v691 = vld [vmem:[%s444 + $0x2b8] sm:$0xff]
        %v692 = vld [vmem:[%s444 + $0x2c0] sm:$0xff]
        %v693 = vld [vmem:[%s444 + $0x2c8] sm:$0xff]
        %v694 = vld [vmem:[%s444 + $0x2d0] sm:$0xff]
        %v695 = vld [vmem:[%s444 + $0x2d8] sm:$0xff]
        %v696 = vld [vmem:[%s444 + $0x2e0] sm:$0xff]
        %v697 = vld [vmem:[%s444 + $0x2e8] sm:$0xff]
        %v698 = vld [vmem:[%s444 + $0x2f0] sm:$0xff]
        %v699 = vld [vmem:[%s444 + $0x2f8] sm:$0xff]
        %v700 = vld [vmem:[%s444 + $0x300] sm:$0xff]
        %v701 = vld [vmem:[%s444 + $0x308] sm:$0xff]
        %v702 = vld [vmem:[%s444 + $0x310] sm:$0xff]
        %v703 = vld [vmem:[%s444 + $0x318] sm:$0xff]
        %v704 = vld [vmem:[%s444 + $0x320] sm:$0xff]
        %v705 = vld [vmem:[%s444 + $0x328] sm:$0xff]
        %v706 = vld [vmem:[%s444 + $0x330] sm:$0xff]
        %v707 = vld [vmem:[%s444 + $0x338] sm:$0xff]
        %v708 = vld [vmem:[%s444 + $0x340] sm:$0xff]
        %v709 = vld [vmem:[%s444 + $0x348] sm:$0xff]
        %v710 = vld [vmem:[%s444 + $0x350] sm:$0xff]
        %v711 = vld [vmem:[%s444 + $0x358] sm:$0xff]
        %v712 = vld [vmem:[%s444 + $0x360] sm:$0xff]
        %v713 = vld [vmem:[%s444 + $0x368] sm:$0xff]
        %v714 = vld [vmem:[%s444 + $0x370] sm:$0xff]
        %v715 = vld [vmem:[%s444 + $0x378] sm:$0xff]
        %v716 = vld [vmem:[%s444 + $0x380] sm:$0xff]
        %v717 = vld [vmem:[%s444 + $0x388] sm:$0xff]
        %v718 = vld [vmem:[%s444 + $0x390] sm:$0xff]
        %v719 = vld [vmem:[%s444 + $0x398] sm:$0xff]
        %v720 = vld [vmem:[%s444 + $0x3a0] sm:$0xff]
        %v721 = vld [vmem:[%s444 + $0x3a8] sm:$0xff]
        %v722 = vld [vmem:[%s444 + $0x3b0] sm:$0xff]
        %v723 = vld [vmem:[%s444 + $0x3b8] sm:$0xff]
        %v724 = vld [vmem:[%s444 + $0x3c0] sm:$0xff]
        %v725 = vld [vmem:[%s444 + $0x3c8] sm:$0xff]
        %v726 = vld [vmem:[%s444 + $0x3d0] sm:$0xff]
        %v727 = vld [vmem:[%s444 + $0x3d8] sm:$0xff]
        %v728 = vld [vmem:[%s444 + $0x3e0] sm:$0xff]
        %v729 = vld [vmem:[%s444 + $0x3e8] sm:$0xff]
        %v730 = vld [vmem:[%s444 + $0x3f0] sm:$0xff]
        %v731 = vld [vmem:[%s444 + $0x3f8] sm:$0xff]
        %v732 = vld [vmem:[%s444 + $0x400] sm:$0xff]
        %v733 = vld [vmem:[%s444 + $0x408] sm:$0xff]
        %v734 = vld [vmem:[%s444 + $0x410] sm:$0xff]
        %v735 = vld [vmem:[%s444 + $0x418] sm:$0xff]
        %v736 = vld [vmem:[%s444 + $0x420] sm:$0xff]
        %v737 = vld [vmem:[%s444 + $0x428] sm:$0xff]
        %v738 = vld [vmem:[%s444 + $0x430] sm:$0xff]
        %v739 = vld [vmem:[%s444 + $0x438] sm:$0xff]
        %v740 = vld [vmem:[%s444 + $0x440] sm:$0xff]
        %v741 = vld [vmem:[%s444 + $0x448] sm:$0xff]
        %v742 = vld [vmem:[%s444 + $0x450] sm:$0xff]
        %v743 = vld [vmem:[%s444 + $0x458] sm:$0xff]
        %v744 = vld [vmem:[%s444 + $0x460] sm:$0xff]
        %v745 = vld [vmem:[%s444 + $0x468] sm:$0xff]
        %v746 = vld [vmem:[%s444 + $0x470] sm:$0xff]
        %v747 = vld [vmem:[%s444 + $0x478] sm:$0xff]
        %v748 = vld [vmem:[%s444 + $0x480] sm:$0xff]
        %v749 = vld [vmem:[%s444 + $0x488] sm:$0xff]
        %v750 = vld [vmem:[%s444 + $0x490] sm:$0xff]
        %v751 = vld [vmem:[%s444 + $0x498] sm:$0xff]
        %v752 = vld [vmem:[%s444 + $0x4a0] sm:$0xff]
        %v753 = vld [vmem:[%s444 + $0x4a8] sm:$0xff]
        %v754 = vld [vmem:[%s444 + $0x4b0] sm:$0xff]
        %v755 = vld [vmem:[%s444 + $0x4b8] sm:$0xff]
        %v756 = vld [vmem:[%s444 + $0x4c0] sm:$0xff]
        %v757 = vld [vmem:[%s444 + $0x4c8] sm:$0xff]
        %v758 = vld [vmem:[%s444 + $0x4d0] sm:$0xff]
        %v759 = vld [vmem:[%s444 + $0x4d8] sm:$0xff]
        %v760 = vld [vmem:[%s444 + $0x4e0] sm:$0xff]
        %v761 = vld [vmem:[%s444 + $0x4e8] sm:$0xff]
        %v762 = vld [vmem:[%s444 + $0x4f0] sm:$0xff]
        %v763 = vld [vmem:[%s444 + $0x4f8] sm:$0xff]
        %v764 = vld [vmem:[%s444 + $0x500] sm:$0xff]
        %v765 = vld [vmem:[%s444 + $0x508] sm:$0xff]
        %v766 = vld [vmem:[%s444 + $0x510] sm:$0xff]
        %v767 = vld [vmem:[%s444 + $0x518] sm:$0xff]
        %v768 = vld [vmem:[%s444 + $0x520] sm:$0xff]
        %v769 = vld [vmem:[%s444 + $0x528] sm:$0xff]
        %v770 = vld [vmem:[%s444 + $0x530] sm:$0xff]
        %v771 = vld [vmem:[%s444 + $0x538] sm:$0xff]
        %v772 = vld [vmem:[%s444 + $0x540] sm:$0xff]
        %v773 = vld [vmem:[%s444 + $0x548] sm:$0xff]
        %v774 = vld [vmem:[%s444 + $0x550] sm:$0xff]
        %v775 = vld [vmem:[%s444 + $0x558] sm:$0xff]
        %v776 = vld [vmem:[%s444 + $0x560] sm:$0xff]
        %v777 = vld [vmem:[%s444 + $0x568] sm:$0xff]
        %v778 = vld [vmem:[%s444 + $0x570] sm:$0xff]
        %v779 = vld [vmem:[%s444 + $0x578] sm:$0xff]
        %v780 = vld [vmem:[%s444 + $0x580] sm:$0xff]
        %v781 = vld [vmem:[%s444 + $0x588] sm:$0xff]
        %v782 = vld [vmem:[%s444 + $0x590] sm:$0xff]
        %v783 = vld [vmem:[%s444 + $0x598] sm:$0xff]
        %v784 = vld [vmem:[%s444 + $0x5a0] sm:$0xff]
        %v785 = vld [vmem:[%s444 + $0x5a8] sm:$0xff]
        %v786 = vld [vmem:[%s444 + $0x5b0] sm:$0xff]
        %v787 = vld [vmem:[%s444 + $0x5b8] sm:$0xff]
        %v788 = vld [vmem:[%s444 + $0x5c0] sm:$0xff]
        %v789 = vld [vmem:[%s444 + $0x5c8] sm:$0xff]
        %v790 = vld [vmem:[%s444 + $0x5d0] sm:$0xff]
        %v791 = vld [vmem:[%s444 + $0x5d8] sm:$0xff]
        %v792 = vld [vmem:[%s444 + $0x5e0] sm:$0xff]
        %v793 = vld [vmem:[%s444 + $0x5e8] sm:$0xff]
        %v794 = vld [vmem:[%s444 + $0x5f0] sm:$0xff]
        %v795 = vld [vmem:[%s444 + $0x5f8] sm:$0xff]
        %v796 = vld [vmem:[%s444 + $0x600] sm:$0xff]
        %v797 = vld [vmem:[%s444 + $0x608] sm:$0xff]
        %v798 = vld [vmem:[%s444 + $0x610] sm:$0xff]
        %v799 = vld [vmem:[%s444 + $0x618] sm:$0xff]
        %v800 = vld [vmem:[%s444 + $0x620] sm:$0xff]
        %v801 = vld [vmem:[%s444 + $0x628] sm:$0xff]
        %v802 = vld [vmem:[%s444 + $0x630] sm:$0xff]
        %v803 = vld [vmem:[%s444 + $0x638] sm:$0xff]
        %v804 = vld [vmem:[%s444 + $0x640] sm:$0xff]
        %v805 = vld [vmem:[%s444 + $0x648] sm:$0xff]
        %v806 = vld [vmem:[%s444 + $0x650] sm:$0xff]
        %v807 = vld [vmem:[%s444 + $0x658] sm:$0xff]
        %v808 = vld [vmem:[%s444 + $0x660] sm:$0xff]
        %v809 = vld [vmem:[%s444 + $0x668] sm:$0xff]
        %v810 = vld [vmem:[%s444 + $0x670] sm:$0xff]
        %v811 = vld [vmem:[%s444 + $0x678] sm:$0xff]
        %v812 = vld [vmem:[%s444 + $0x680] sm:$0xff]
        %v813 = vld [vmem:[%s444 + $0x688] sm:$0xff]
        %v814 = vld [vmem:[%s444 + $0x690] sm:$0xff]
        %v815 = vld [vmem:[%s444 + $0x698] sm:$0xff]
        %v816 = vld [vmem:[%s444 + $0x6a0] sm:$0xff]
        %v817 = vld [vmem:[%s444 + $0x6a8] sm:$0xff]
        %v818 = vld [vmem:[%s444 + $0x6b0] sm:$0xff]
        %v819 = vld [vmem:[%s444 + $0x6b8] sm:$0xff]
        %v820 = vld [vmem:[%s444 + $0x6c0] sm:$0xff]
        %v821 = vld [vmem:[%s444 + $0x6c8] sm:$0xff]
        %v822 = vld [vmem:[%s444 + $0x6d0] sm:$0xff]
        %v823 = vld [vmem:[%s444 + $0x6d8] sm:$0xff]
        %v824 = vld [vmem:[%s444 + $0x6e0] sm:$0xff]
        %v825 = vld [vmem:[%s444 + $0x6e8] sm:$0xff]
        %v826 = vld [vmem:[%s444 + $0x6f0] sm:$0xff]
        %v827 = vld [vmem:[%s444 + $0x6f8] sm:$0xff]
        %v828 = vld [vmem:[%s444 + $0x700] sm:$0xff]
        %v829 = vld [vmem:[%s444 + $0x708] sm:$0xff]
        %v830 = vld [vmem:[%s444 + $0x710] sm:$0xff]
        %v831 = vld [vmem:[%s444 + $0x718] sm:$0xff]
        %v832 = vld [vmem:[%s444 + $0x720] sm:$0xff]
        %v833 = vld [vmem:[%s444 + $0x728] sm:$0xff]
        %v834 = vld [vmem:[%s444 + $0x730] sm:$0xff]
        %v835 = vld [vmem:[%s444 + $0x738] sm:$0xff]
        %v836 = vld [vmem:[%s444 + $0x740] sm:$0xff]
        %v837 = vld [vmem:[%s444 + $0x748] sm:$0xff]
        %v838 = vld [vmem:[%s444 + $0x750] sm:$0xff]
        %v839 = vld [vmem:[%s444 + $0x758] sm:$0xff]
        %v840 = vld [vmem:[%s444 + $0x760] sm:$0xff]
        %v841 = vld [vmem:[%s444 + $0x768] sm:$0xff]
        %v842 = vld [vmem:[%s444 + $0x770] sm:$0xff]
        %v843 = vld [vmem:[%s444 + $0x778] sm:$0xff]
        %v844 = vld [vmem:[%s444 + $0x780] sm:$0xff]
        %v845 = vld [vmem:[%s444 + $0x788] sm:$0xff]
        %v846 = vld [vmem:[%s444 + $0x790] sm:$0xff]
        %v847 = vld [vmem:[%s444 + $0x798] sm:$0xff]
        %v848 = vld [vmem:[%s444 + $0x7a0] sm:$0xff]
        %v849 = vld [vmem:[%s444 + $0x7a8] sm:$0xff]
        %v850 = vld [vmem:[%s444 + $0x7b0] sm:$0xff]
        %v851 = vld [vmem:[%s444 + $0x7b8] sm:$0xff]
        %v852 = vld [vmem:[%s444 + $0x7c0] sm:$0xff]
        %v853 = vld [vmem:[%s444 + $0x7c8] sm:$0xff]
        %v854 = vld [vmem:[%s444 + $0x7d0] sm:$0xff]
        %v855 = vld [vmem:[%s444 + $0x7d8] sm:$0xff]
        %v856 = vld [vmem:[%s444 + $0x7e0] sm:$0xff]
        %v857 = vld [vmem:[%s444 + $0x7e8] sm:$0xff]
        %v858 = vld [vmem:[%s444 + $0x7f0] sm:$0xff]
        %v859 = vld [vmem:[%s444 + $0x7f8] sm:$0xff]
        %v860 = vld [vmem:[%s444 + $0x800] sm:$0xff]
        %v861 = vld [vmem:[%s444 + $0x808] sm:$0xff]
        %v862 = vld [vmem:[%s444 + $0x810] sm:$0xff]
        %v863 = vld [vmem:[%s444 + $0x818] sm:$0xff]
        %v864 = vld [vmem:[%s444 + $0x820] sm:$0xff]
        %v865 = vld [vmem:[%s444 + $0x828] sm:$0xff]
        %v866 = vld [vmem:[%s444 + $0x830] sm:$0xff]
        %v867 = vld [vmem:[%s444 + $0x838] sm:$0xff]
        %v868 = vld [vmem:[%s444 + $0x840] sm:$0xff]
        %v869 = vld [vmem:[%s444 + $0x848] sm:$0xff]
        %v870 = vld [vmem:[%s444 + $0x850] sm:$0xff]
        %v871 = vld [vmem:[%s444 + $0x858] sm:$0xff]
        %v872 = vld [vmem:[%s444 + $0x860] sm:$0xff]
        %v873 = vld [vmem:[%s444 + $0x868] sm:$0xff]
        %v874 = vld [vmem:[%s444 + $0x870] sm:$0xff]
        %v875 = vld [vmem:[%s444 + $0x878] sm:$0xff]
        %v876 = vld [vmem:[%s444 + $0x880] sm:$0xff]
        %v877 = vld [vmem:[%s444 + $0x888] sm:$0xff]
        %v878 = vld [vmem:[%s444 + $0x890] sm:$0xff]
        %v879 = vld [vmem:[%s444 + $0x898] sm:$0xff]
        %v880 = vld [vmem:[%s444 + $0x8a0] sm:$0xff]
        %v881 = vld [vmem:[%s444 + $0x8a8] sm:$0xff]
        %v882 = vld [vmem:[%s444 + $0x8b0] sm:$0xff]
        %v883 = vld [vmem:[%s444 + $0x8b8] sm:$0xff]
        %v884 = vld [vmem:[%s444 + $0x8c0] sm:$0xff]
        %v885 = vld [vmem:[%s444 + $0x8c8] sm:$0xff]
        %v886 = vld [vmem:[%s444 + $0x8d0] sm:$0xff]
        %v887 = vld [vmem:[%s444 + $0x8d8] sm:$0xff]
        %v888 = vld [vmem:[%s444 + $0x8e0] sm:$0xff]
        %v889 = vld [vmem:[%s444 + $0x8e8] sm:$0xff]
        %v890 = vld [vmem:[%s444 + $0x8f0] sm:$0xff]
        %v891 = vld [vmem:[%s444 + $0x8f8] sm:$0xff]
        %v892 = vld [vmem:[%s444 + $0x900] sm:$0xff]
        %v893 = vld [vmem:[%s444 + $0x908] sm:$0xff]
        %v894 = vld [vmem:[%s444 + $0x910] sm:$0xff]
        %v895 = vld [vmem:[%s444 + $0x918] sm:$0xff]
        %v896 = vld [vmem:[%s444 + $0x920] sm:$0xff]
        %v897 = vld [vmem:[%s444 + $0x928] sm:$0xff]
        %v898 = vld [vmem:[%s444 + $0x930] sm:$0xff]
        %v899 = vld [vmem:[%s444 + $0x938] sm:$0xff]
        %v900 = vld [vmem:[%s444 + $0x940] sm:$0xff]
        %v901 = vld [vmem:[%s444 + $0x948] sm:$0xff]
        %v902 = vld [vmem:[%s444 + $0x950] sm:$0xff]
        %v903 = vld [vmem:[%s444 + $0x958] sm:$0xff]
        %v904 = vld [vmem:[%s444 + $0x960] sm:$0xff]
        %v905 = vld [vmem:[%s444 + $0x968] sm:$0xff]
        %v906 = vld [vmem:[%s444 + $0x970] sm:$0xff]
        %v907 = vld [vmem:[%s444 + $0x978] sm:$0xff]
        %v908 = vld [vmem:[%s444 + $0x980] sm:$0xff]
        %v909 = vld [vmem:[%s444 + $0x988] sm:$0xff]
        %v910 = vld [vmem:[%s444 + $0x990] sm:$0xff]
        %v911 = vld [vmem:[%s444 + $0x998] sm:$0xff]
        %v912 = vld [vmem:[%s444 + $0x9a0] sm:$0xff]
        %v913 = vld [vmem:[%s444 + $0x9a8] sm:$0xff]
        %v914 = vld [vmem:[%s444 + $0x9b0] sm:$0xff]
        %v915 = vld [vmem:[%s444 + $0x9b8] sm:$0xff]
        %v916 = vld [vmem:[%s444 + $0x9c0] sm:$0xff]
        %v917 = vld [vmem:[%s444 + $0x9c8] sm:$0xff]
        %v918 = vld [vmem:[%s444 + $0x9d0] sm:$0xff]
        %v919 = vld [vmem:[%s444 + $0x9d8] sm:$0xff]
        %v920 = vld [vmem:[%s444 + $0x9e0] sm:$0xff]
        %v921 = vld [vmem:[%s444 + $0x9e8] sm:$0xff]
        %v922 = vld [vmem:[%s444 + $0x9f0] sm:$0xff]
        %v923 = vld [vmem:[%s444 + $0x9f8] sm:$0xff]
        %v924 = vld [vmem:[%s444 + $0xa00] sm:$0xff]
        %v925 = vld [vmem:[%s444 + $0xa08] sm:$0xff]
        %v926 = vld [vmem:[%s444 + $0xa10] sm:$0xff]
        %v927 = vld [vmem:[%s444 + $0xa18] sm:$0xff]
        %v928 = vld [vmem:[%s444 + $0xa20] sm:$0xff]
        %v929 = vld [vmem:[%s444 + $0xa28] sm:$0xff]
        %v930 = vld [vmem:[%s444 + $0xa30] sm:$0xff]
        %v931 = vld [vmem:[%s444 + $0xa38] sm:$0xff]
        %v932 = vld [vmem:[%s444 + $0xa40] sm:$0xff]
        %v933 = vld [vmem:[%s444 + $0xa48] sm:$0xff]
        %v934 = vld [vmem:[%s444 + $0xa50] sm:$0xff]
        %v935 = vld [vmem:[%s444 + $0xa58] sm:$0xff]
        %v936 = vld [vmem:[%s444 + $0xa60] sm:$0xff]
        %v937 = vld [vmem:[%s444 + $0xa68] sm:$0xff]
        %v938 = vld [vmem:[%s444 + $0xa70] sm:$0xff]
        %v939 = vld [vmem:[%s444 + $0xa78] sm:$0xff]
        %v940 = vld [vmem:[%s444 + $0xa80] sm:$0xff]
        %v941 = vld [vmem:[%s444 + $0xa88] sm:$0xff]
        %v942 = vld [vmem:[%s444 + $0xa90] sm:$0xff]
        %v943 = vld [vmem:[%s444 + $0xa98] sm:$0xff]
        %v944 = vld [vmem:[%s444 + $0xaa0] sm:$0xff]
        %v945 = vld [vmem:[%s444 + $0xaa8] sm:$0xff]
        %v946 = vld [vmem:[%s444 + $0xab0] sm:$0xff]
        %v947 = vld [vmem:[%s444 + $0xab8] sm:$0xff]
        %v948 = vld [vmem:[%s444 + $0xac0] sm:$0xff]
        %v949 = vld [vmem:[%s444 + $0xac8] sm:$0xff]
        %v950 = vld [vmem:[%s444 + $0xad0] sm:$0xff]
        %v951 = vld [vmem:[%s444 + $0xad8] sm:$0xff]
        %v952 = vld [vmem:[%s444 + $0xae0] sm:$0xff]
        %v953 = vld [vmem:[%s444 + $0xae8] sm:$0xff]
        %v954 = vld [vmem:[%s444 + $0xaf0] sm:$0xff]
        %v955 = vld [vmem:[%s444 + $0xaf8] sm:$0xff]
        %v956 = vld [vmem:[%s444 + $0xb00] sm:$0xff]
        %v957 = vld [vmem:[%s444 + $0xb08] sm:$0xff]
        %v958 = vld [vmem:[%s444 + $0xb10] sm:$0xff]
        %v959 = vld [vmem:[%s444 + $0xb18] sm:$0xff]
        %v960 = vld [vmem:[%s444 + $0xb20] sm:$0xff]
        %v961 = vld [vmem:[%s444 + $0xb28] sm:$0xff]
        %v962 = vld [vmem:[%s444 + $0xb30] sm:$0xff]
        %v963 = vld [vmem:[%s444 + $0xb38] sm:$0xff]
        %v964 = vld [vmem:[%s444 + $0xb40] sm:$0xff]
        %v965 = vld [vmem:[%s444 + $0xb48] sm:$0xff]
        %v966 = vld [vmem:[%s444 + $0xb50] sm:$0xff]
        %v967 = vld [vmem:[%s444 + $0xb58] sm:$0xff]
        %v968 = vld [vmem:[%s444 + $0xb60] sm:$0xff]
        %v969 = vld [vmem:[%s444 + $0xb68] sm:$0xff]
        %v970 = vld [vmem:[%s444 + $0xb70] sm:$0xff]
        %v971 = vld [vmem:[%s444 + $0xb78] sm:$0xff]
        %v972 = vld [vmem:[%s444 + $0xb80] sm:$0xff]
        %v973 = vld [vmem:[%s444 + $0xb88] sm:$0xff]
        %v974 = vld [vmem:[%s444 + $0xb90] sm:$0xff]
        %v975 = vld [vmem:[%s444 + $0xb98] sm:$0xff]
        %v976 = vld [vmem:[%s444 + $0xba0] sm:$0xff]
        %v977 = vld [vmem:[%s444 + $0xba8] sm:$0xff]
        %v978 = vld [vmem:[%s444 + $0xbb0] sm:$0xff]
        %v979 = vld [vmem:[%s444 + $0xbb8] sm:$0xff]
        %v980 = vld [vmem:[%s444 + $0xbc0] sm:$0xff]
        %v981 = vld [vmem:[%s444 + $0xbc8] sm:$0xff]
        %v982 = vld [vmem:[%s444 + $0xbd0] sm:$0xff]
        %v983 = vld [vmem:[%s444 + $0xbd8] sm:$0xff]
        %v984 = vld [vmem:[%s444 + $0xbe0] sm:$0xff]
        %v985 = vld [vmem:[%s444 + $0xbe8] sm:$0xff]
        %v986 = vld [vmem:[%s444 + $0xbf0] sm:$0xff]
        %v987 = vld [vmem:[%s444 + $0xbf8] sm:$0xff]
        %v988 = vld [vmem:[%s444 + $0xc00] sm:$0xff]
        %v989 = vld [vmem:[%s444 + $0xc08] sm:$0xff]
        %v990 = vld [vmem:[%s444 + $0xc10] sm:$0xff]
        %v991 = vld [vmem:[%s444 + $0xc18] sm:$0xff]
        %v992 = vld [vmem:[%s444 + $0xc20] sm:$0xff]
        %v993 = vld [vmem:[%s444 + $0xc28] sm:$0xff]
        %v994 = vld [vmem:[%s444 + $0xc30] sm:$0xff]
        %v995 = vld [vmem:[%s444 + $0xc38] sm:$0xff]
        %v996 = vld [vmem:[%s444 + $0xc40] sm:$0xff]
        %v997 = vld [vmem:[%s444 + $0xc48] sm:$0xff]
        %v998 = vld [vmem:[%s444 + $0xc50] sm:$0xff]
        %v999 = vld [vmem:[%s444 + $0xc58] sm:$0xff]
        %v1000 = vld [vmem:[%s444 + $0xc60] sm:$0xff]
        %v1001 = vld [vmem:[%s444 + $0xc68] sm:$0xff]
        %v1002 = vld [vmem:[%s444 + $0xc70] sm:$0xff]
        %v1003 = vld [vmem:[%s444 + $0xc78] sm:$0xff]
        %v1004 = vld [vmem:[%s444 + $0xc80] sm:$0xff]
        %v1005 = vld [vmem:[%s444 + $0xc88] sm:$0xff]
        %v1006 = vld [vmem:[%s444 + $0xc90] sm:$0xff]
        %v1007 = vld [vmem:[%s444 + $0xc98] sm:$0xff]
        %v1008 = vld [vmem:[%s444 + $0xca0] sm:$0xff]
        %v1009 = vld [vmem:[%s444 + $0xca8] sm:$0xff]
        %v1010 = vld [vmem:[%s444 + $0xcb0] sm:$0xff]
        %v1011 = vld [vmem:[%s444 + $0xcb8] sm:$0xff]
        %v1012 = vld [vmem:[%s444 + $0xcc0] sm:$0xff]
        %v1013 = vld [vmem:[%s444 + $0xcc8] sm:$0xff]
        %v1014 = vld [vmem:[%s444 + $0xcd0] sm:$0xff]
        %v1015 = vld [vmem:[%s444 + $0xcd8] sm:$0xff]
        %v1016 = vld [vmem:[%s444 + $0xce0] sm:$0xff]
        %v1017 = vld [vmem:[%s444 + $0xce8] sm:$0xff]
        %v1018 = vld [vmem:[%s444 + $0xcf0] sm:$0xff]
        %v1019 = vld [vmem:[%s444 + $0xcf8] sm:$0xff]
        %v1020 = vld [vmem:[%s444 + $0xd00] sm:$0xff]
        %v1021 = vld [vmem:[%s444 + $0xd08] sm:$0xff]
        %v1022 = vld [vmem:[%s444 + $0xd10] sm:$0xff]
        %v1023 = vld [vmem:[%s444 + $0xd18] sm:$0xff]
        %v1024 = vld [vmem:[%s444 + $0xd20] sm:$0xff]
        %v1025 = vld [vmem:[%s444 + $0xd28] sm:$0xff]
        %v1026 = vld [vmem:[%s444 + $0xd30] sm:$0xff]
        %v1027 = vld [vmem:[%s444 + $0xd38] sm:$0xff]
        %v1028 = vld [vmem:[%s444 + $0xd40] sm:$0xff]
        %v1029 = vld [vmem:[%s444 + $0xd48] sm:$0xff]
        %v1030 = vld [vmem:[%s444 + $0xd50] sm:$0xff]
        %v1031 = vld [vmem:[%s444 + $0xd58] sm:$0xff]
        %v1032 = vld [vmem:[%s444 + $0xd60] sm:$0xff]
        %v1033 = vld [vmem:[%s444 + $0xd68] sm:$0xff]
        %v1034 = vld [vmem:[%s444 + $0xd70] sm:$0xff]
        %v1035 = vld [vmem:[%s444 + $0xd78] sm:$0xff]
        %v1036 = vld [vmem:[%s444 + $0xd80] sm:$0xff]
        %v1037 = vld [vmem:[%s444 + $0xd88] sm:$0xff]
        %v1038 = vld [vmem:[%s444 + $0xd90] sm:$0xff]
        %v1039 = vld [vmem:[%s444 + $0xd98] sm:$0xff]
        %v1040 = vld [vmem:[%s444 + $0xda0] sm:$0xff]
        %v1041 = vld [vmem:[%s444 + $0xda8] sm:$0xff]
        %v1042 = vld [vmem:[%s444 + $0xdb0] sm:$0xff]
        %v1043 = vld [vmem:[%s444 + $0xdb8] sm:$0xff]
        %v1044 = vld [vmem:[%s444 + $0xdc0] sm:$0xff]
        %v1045 = vld [vmem:[%s444 + $0xdc8] sm:$0xff]
        %v1046 = vld [vmem:[%s444 + $0xdd0] sm:$0xff]
        %v1047 = vld [vmem:[%s444 + $0xdd8] sm:$0xff]
        %v1048 = vld [vmem:[%s444 + $0xde0] sm:$0xff]
        %v1049 = vld [vmem:[%s444 + $0xde8] sm:$0xff]
        %v1050 = vld [vmem:[%s444 + $0xdf0] sm:$0xff]
        %v1051 = vld [vmem:[%s444 + $0xdf8] sm:$0xff]
        %v1052 = vld [vmem:[%s444 + $0xe00] sm:$0xff]
        %v1053 = vld [vmem:[%s444 + $0xe08] sm:$0xff]
        %v1054 = vld [vmem:[%s444 + $0xe10] sm:$0xff]
        %v1055 = vld [vmem:[%s444 + $0xe18] sm:$0xff]
        %v1056 = vld [vmem:[%s444 + $0xe20] sm:$0xff]
        %v1057 = vld [vmem:[%s444 + $0xe28] sm:$0xff]
        %v1058 = vld [vmem:[%s444 + $0xe30] sm:$0xff]
        %v1059 = vld [vmem:[%s444 + $0xe38] sm:$0xff]
        %v1060 = vld [vmem:[%s444 + $0xe40] sm:$0xff]
        %v1061 = vld [vmem:[%s444 + $0xe48] sm:$0xff]
        %v1062 = vld [vmem:[%s444 + $0xe50] sm:$0xff]
        %v1063 = vld [vmem:[%s444 + $0xe58] sm:$0xff]
        %v1064 = vld [vmem:[%s444 + $0xe60] sm:$0xff]
        %v1065 = vld [vmem:[%s444 + $0xe68] sm:$0xff]
        %v1066 = vld [vmem:[%s444 + $0xe70] sm:$0xff]
        %v1067 = vld [vmem:[%s444 + $0xe78] sm:$0xff]
        %v1068 = vld [vmem:[%s444 + $0xe80] sm:$0xff]
        %v1069 = vld [vmem:[%s444 + $0xe88] sm:$0xff]
        %v1070 = vld [vmem:[%s444 + $0xe90] sm:$0xff]
        %v1071 = vld [vmem:[%s444 + $0xe98] sm:$0xff]
        %v1072 = vld [vmem:[%s444 + $0xea0] sm:$0xff]
        %v1073 = vld [vmem:[%s444 + $0xea8] sm:$0xff]
        %v1074 = vld [vmem:[%s444 + $0xeb0] sm:$0xff]
        %v1075 = vld [vmem:[%s444 + $0xeb8] sm:$0xff]
        %v1076 = vld [vmem:[%s444 + $0xec0] sm:$0xff]
        %v1077 = vld [vmem:[%s444 + $0xec8] sm:$0xff]
        %v1078 = vld [vmem:[%s444 + $0xed0] sm:$0xff]
        %v1079 = vld [vmem:[%s444 + $0xed8] sm:$0xff]
        %v1080 = vld [vmem:[%s444 + $0xee0] sm:$0xff]
        %v1081 = vld [vmem:[%s444 + $0xee8] sm:$0xff]
        %v1082 = vld [vmem:[%s444 + $0xef0] sm:$0xff]
        %v1083 = vld [vmem:[%s444 + $0xef8] sm:$0xff]
        %v1084 = vld [vmem:[%s444 + $0xf00] sm:$0xff]
        %v1085 = vld [vmem:[%s444 + $0xf08] sm:$0xff]
        %v1086 = vld [vmem:[%s444 + $0xf10] sm:$0xff]
        %v1087 = vld [vmem:[%s444 + $0xf18] sm:$0xff]
        %v1088 = vld [vmem:[%s444 + $0xf20] sm:$0xff]
        %v1089 = vld [vmem:[%s444 + $0xf28] sm:$0xff]
        %v1090 = vld [vmem:[%s444 + $0xf30] sm:$0xff]
        %v1091 = vld [vmem:[%s444 + $0xf38] sm:$0xff]
        %v1092 = vld [vmem:[%s444 + $0xf40] sm:$0xff]
        %v1093 = vld [vmem:[%s444 + $0xf48] sm:$0xff]
        %v1094 = vld [vmem:[%s444 + $0xf50] sm:$0xff]
        %v1095 = vld [vmem:[%s444 + $0xf58] sm:$0xff]
        %v1096 = vld [vmem:[%s444 + $0xf60] sm:$0xff]
        %v1097 = vld [vmem:[%s444 + $0xf68] sm:$0xff]
        %v1098 = vld [vmem:[%s444 + $0xf70] sm:$0xff]
        %v1099 = vld [vmem:[%s444 + $0xf78] sm:$0xff]
        %v1100 = vld [vmem:[%s444 + $0xf80] sm:$0xff]
        %v1101 = vld [vmem:[%s444 + $0xf88] sm:$0xff]
        %v1102 = vld [vmem:[%s444 + $0xf90] sm:$0xff]
        %v1103 = vld [vmem:[%s444 + $0xf98] sm:$0xff]
        %v1104 = vld [vmem:[%s444 + $0xfa0] sm:$0xff]
        %v1105 = vld [vmem:[%s444 + $0xfa8] sm:$0xff]
        %v1106 = vld [vmem:[%s444 + $0xfb0] sm:$0xff]
        %v1107 = vld [vmem:[%s444 + $0xfb8] sm:$0xff]
        %v1108 = vld [vmem:[%s444 + $0xfc0] sm:$0xff]
        %v1109 = vld [vmem:[%s444 + $0xfc8] sm:$0xff]
        %v1110 = vld [vmem:[%s444 + $0xfd0] sm:$0xff]
        %v1111 = vld [vmem:[%s444 + $0xfd8] sm:$0xff]
        %v1112 = vld [vmem:[%s444 + $0xfe0] sm:$0xff]
        %v1113 = vld [vmem:[%s444 + $0xfe8] sm:$0xff]
        %v1114 = vld [vmem:[%s444 + $0xff0] sm:$0xff]
        %v1115 = vld [vmem:[%s444 + $0xff8] sm:$0xff]
        %v1116 = vld [vmem:[%s444 + $0x1000] sm:$0xff]
        %v1117 = vld [vmem:[%s444 + $0x1008] sm:$0xff]
        %v1118 = vld [vmem:[%s444 + $0x1010] sm:$0xff]
        %v1119 = vld [vmem:[%s444 + $0x1018] sm:$0xff]
        %v1120 = vld [vmem:[%s444 + $0x1020] sm:$0xff]
        %v1121 = vld [vmem:[%s444 + $0x1028] sm:$0xff]
        %v1122 = vld [vmem:[%s444 + $0x1030] sm:$0xff]
        %v1123 = vld [vmem:[%s444 + $0x1038] sm:$0xff]
        %v1124 = vld [vmem:[%s444 + $0x1040] sm:$0xff]
        %v1125 = vld [vmem:[%s444 + $0x1048] sm:$0xff]
        %v1126 = vld [vmem:[%s444 + $0x1050] sm:$0xff]
        %v1127 = vld [vmem:[%s444 + $0x1058] sm:$0xff]
        %v1128 = vld [vmem:[%s444 + $0x1060] sm:$0xff]
        %v1129 = vld [vmem:[%s444 + $0x1068] sm:$0xff]
        %v1130 = vld [vmem:[%s444 + $0x1070] sm:$0xff]
        %v1131 = vld [vmem:[%s444 + $0x1078] sm:$0xff]
        %v1132 = vld [vmem:[%s444 + $0x1080] sm:$0xff]
        %v1133 = vld [vmem:[%s444 + $0x1088] sm:$0xff]
        %v1134 = vld [vmem:[%s444 + $0x1090] sm:$0xff]
        %v1135 = vld [vmem:[%s444 + $0x1098] sm:$0xff]
        %v1136 = vld [vmem:[%s444 + $0x10a0] sm:$0xff]
        %v1137 = vld [vmem:[%s444 + $0x10a8] sm:$0xff]
        %v1138 = vld [vmem:[%s444 + $0x10b0] sm:$0xff]
        %v1139 = vld [vmem:[%s444 + $0x10b8] sm:$0xff]
        %v1140 = vld [vmem:[%s444 + $0x10c0] sm:$0xff]
        %v1141 = vld [vmem:[%s444 + $0x10c8] sm:$0xff]
        %v1142 = vld [vmem:[%s444 + $0x10d0] sm:$0xff]
        %v1143 = vld [vmem:[%s444 + $0x10d8] sm:$0xff]
        %v1144 = vld [vmem:[%s444 + $0x10e0] sm:$0xff]
        %v1145 = vld [vmem:[%s444 + $0x10e8] sm:$0xff]
        %v1146 = vld [vmem:[%s444 + $0x10f0] sm:$0xff]
        %v1147 = vld [vmem:[%s444 + $0x10f8] sm:$0xff]
        %v1148 = vld [vmem:[%s444 + $0x1100] sm:$0xff]
        %v1149 = vld [vmem:[%s444 + $0x1108] sm:$0xff]
        %v1150 = vld [vmem:[%s444 + $0x1110] sm:$0xff]
        %v1151 = vld [vmem:[%s444 + $0x1118] sm:$0xff]
        %v1152 = vld [vmem:[%s444 + $0x1120] sm:$0xff]
        %v1153 = vld [vmem:[%s444 + $0x1128] sm:$0xff]
        %v1154 = vld [vmem:[%s444 + $0x1130] sm:$0xff]
        %v1155 = vld [vmem:[%s444 + $0x1138] sm:$0xff]
        %v1156 = vld [vmem:[%s444 + $0x1140] sm:$0xff]
        %v1157 = vld [vmem:[%s444 + $0x1148] sm:$0xff]
        %v1158 = vld [vmem:[%s444 + $0x1150] sm:$0xff]
        %v1159 = vld [vmem:[%s444 + $0x1158] sm:$0xff]
        %v1160 = vld [vmem:[%s444 + $0x1160] sm:$0xff]
        %v1161 = vld [vmem:[%s444 + $0x1168] sm:$0xff]
        %v1162 = vld [vmem:[%s444 + $0x1170] sm:$0xff]
        %v1163 = vld [vmem:[%s444 + $0x1178] sm:$0xff]
        %v1164 = vld [vmem:[%s444 + $0x1180] sm:$0xff]
        %v1165 = vld [vmem:[%s444 + $0x1188] sm:$0xff]
        %v1166 = vld [vmem:[%s444 + $0x1190] sm:$0xff]
        %v1167 = vld [vmem:[%s444 + $0x1198] sm:$0xff]
        %v1168 = vld [vmem:[%s444 + $0x11a0] sm:$0xff]
        %v1169 = vld [vmem:[%s444 + $0x11a8] sm:$0xff]
        %v1170 = vld [vmem:[%s444 + $0x11b0] sm:$0xff]
        %v1171 = vld [vmem:[%s444 + $0x11b8] sm:$0xff]
        %v1172 = vld [vmem:[%s444 + $0x11c0] sm:$0xff]
        %v1173 = vld [vmem:[%s444 + $0x11c8] sm:$0xff]
        %v1174 = vld [vmem:[%s444 + $0x11d0] sm:$0xff]
        %v1175 = vld [vmem:[%s444 + $0x11d8] sm:$0xff]
        %v1176 = vld [vmem:[%s444 + $0x11e0] sm:$0xff]
        %v1177 = vld [vmem:[%s444 + $0x11e8] sm:$0xff]
        %v1178 = vld [vmem:[%s444 + $0x11f0] sm:$0xff]
        %v1179 = vld [vmem:[%s444 + $0x11f8] sm:$0xff]
        %v1180 = vld [vmem:[%s444 + $0x1200] sm:$0xff]
        %v1181 = vld [vmem:[%s444 + $0x1208] sm:$0xff]
        %v1182 = vld [vmem:[%s444 + $0x1210] sm:$0xff]
        %v1183 = vld [vmem:[%s444 + $0x1218] sm:$0xff]
        %v1184 = vld [vmem:[%s444 + $0x1220] sm:$0xff]
        %v1185 = vld [vmem:[%s444 + $0x1228] sm:$0xff]
        %v1186 = vld [vmem:[%s444 + $0x1230] sm:$0xff]
        %v1187 = vld [vmem:[%s444 + $0x1238] sm:$0xff]
        %v1188 = vld [vmem:[%s444 + $0x1240] sm:$0xff]
        %v1189 = vld [vmem:[%s444 + $0x1248] sm:$0xff]
        %v1190 = vld [vmem:[%s444 + $0x1250] sm:$0xff]
        %v1191 = vld [vmem:[%s444 + $0x1258] sm:$0xff]
        %v1192 = vld [vmem:[%s444 + $0x1260] sm:$0xff]
        %v1193 = vld [vmem:[%s444 + $0x1268] sm:$0xff]
        %v1194 = vld [vmem:[%s444 + $0x1270] sm:$0xff]
        %v1195 = vld [vmem:[%s444 + $0x1278] sm:$0xff]
        %v1196 = vld [vmem:[%s444 + $0x1280] sm:$0xff]
        %v1197 = vld [vmem:[%s444 + $0x1288] sm:$0xff]
        %v1198 = vld [vmem:[%s444 + $0x1290] sm:$0xff]
        %v1199 = vld [vmem:[%s444 + $0x1298] sm:$0xff]
        %v1200 = vld [vmem:[%s444 + $0x12a0] sm:$0xff]
        %v1201 = vld [vmem:[%s444 + $0x12a8] sm:$0xff]
        %v1202 = vld [vmem:[%s444 + $0x12b0] sm:$0xff]
        %v1203 = vld [vmem:[%s444 + $0x12b8] sm:$0xff]
        %v1204 = vld [vmem:[%s444 + $0x12c0] sm:$0xff]
        %v1205 = vld [vmem:[%s444 + $0x12c8] sm:$0xff]
        %v1206 = vld [vmem:[%s444 + $0x12d0] sm:$0xff]
        %v1207 = vld [vmem:[%s444 + $0x12d8] sm:$0xff]
        %v1208 = vld [vmem:[%s444 + $0x12e0] sm:$0xff]
        %v1209 = vld [vmem:[%s444 + $0x12e8] sm:$0xff]
        %v1210 = vld [vmem:[%s444 + $0x12f0] sm:$0xff]
        %v1211 = vld [vmem:[%s444 + $0x12f8] sm:$0xff]
        %v1212 = vld [vmem:[%s444 + $0x1300] sm:$0xff]
        %v1213 = vld [vmem:[%s444 + $0x1308] sm:$0xff]
        %v1214 = vld [vmem:[%s444 + $0x1310] sm:$0xff]
        %v1215 = vld [vmem:[%s444 + $0x1318] sm:$0xff]
        %v1216 = vld [vmem:[%s444 + $0x1320] sm:$0xff]
        %v1217 = vld [vmem:[%s444 + $0x1328] sm:$0xff]
        %v1218 = vld [vmem:[%s444 + $0x1330] sm:$0xff]
        %v1219 = vld [vmem:[%s444 + $0x1338] sm:$0xff]
        %v1220 = vld [vmem:[%s444 + $0x1340] sm:$0xff]
        %v1221 = vld [vmem:[%s444 + $0x1348] sm:$0xff]
        %v1222 = vld [vmem:[%s444 + $0x1350] sm:$0xff]
        %v1223 = vld [vmem:[%s444 + $0x1358] sm:$0xff]
        %v1224 = vld [vmem:[%s444 + $0x1360] sm:$0xff]
        %v1225 = vld [vmem:[%s444 + $0x1368] sm:$0xff]
        %v1226 = vld [vmem:[%s444 + $0x1370] sm:$0xff]
        %v1227 = vld [vmem:[%s444 + $0x1378] sm:$0xff]
        %v1228 = vld [vmem:[%s444 + $0x1380] sm:$0xff]
        %v1229 = vld [vmem:[%s444 + $0x1388] sm:$0xff]
        %v1230 = vld [vmem:[%s444 + $0x1390] sm:$0xff]
        %v1231 = vld [vmem:[%s444 + $0x1398] sm:$0xff]
        %v1232 = vld [vmem:[%s444 + $0x13a0] sm:$0xff]
        %v1233 = vld [vmem:[%s444 + $0x13a8] sm:$0xff]
        %v1234 = vld [vmem:[%s444 + $0x13b0] sm:$0xff]
        %v1235 = vld [vmem:[%s444 + $0x13b8] sm:$0xff]
        %v1236 = vld [vmem:[%s444 + $0x13c0] sm:$0xff]
        %v1237 = vld [vmem:[%s444 + $0x13c8] sm:$0xff]
        %v1238 = vld [vmem:[%s444 + $0x13d0] sm:$0xff]
        %v1239 = vld [vmem:[%s444 + $0x13d8] sm:$0xff]
        %v1240 = vld [vmem:[%s444 + $0x13e0] sm:$0xff]
        %v1241 = vld [vmem:[%s444 + $0x13e8] sm:$0xff]
        %v1242 = vld [vmem:[%s444 + $0x13f0] sm:$0xff]
        %v1243 = vld [vmem:[%s444 + $0x13f8] sm:$0xff]
        %v1244 = vld [vmem:[%s444 + $0x1400] sm:$0xff]
        %v1245 = vld [vmem:[%s444 + $0x1408] sm:$0xff]
        %v1246 = vld [vmem:[%s444 + $0x1410] sm:$0xff]
        %v1247 = vld [vmem:[%s444 + $0x1418] sm:$0xff]
        %v1248 = vld [vmem:[%s444 + $0x1420] sm:$0xff]
        %v1249 = vld [vmem:[%s444 + $0x1428] sm:$0xff]
        %v1250 = vld [vmem:[%s444 + $0x1430] sm:$0xff]
        %v1251 = vld [vmem:[%s444 + $0x1438] sm:$0xff]
        %v1252 = vld [vmem:[%s444 + $0x1440] sm:$0xff]
        %v1253 = vld [vmem:[%s444 + $0x1448] sm:$0xff]
        %v1254 = vld [vmem:[%s444 + $0x1450] sm:$0xff]
        %v1255 = vld [vmem:[%s444 + $0x1458] sm:$0xff]
        %v1256 = vld [vmem:[%s444 + $0x1460] sm:$0xff]
        %v1257 = vld [vmem:[%s444 + $0x1468] sm:$0xff]
        %v1258 = vld [vmem:[%s444 + $0x1470] sm:$0xff]
        %v1259 = vld [vmem:[%s444 + $0x1478] sm:$0xff]
        %v1260 = vld [vmem:[%s444 + $0x1480] sm:$0xff]
        %v1261 = vld [vmem:[%s444 + $0x1488] sm:$0xff]
        %v1262 = vld [vmem:[%s444 + $0x1490] sm:$0xff]
        %v1263 = vld [vmem:[%s444 + $0x1498] sm:$0xff]
        %v1264 = vld [vmem:[%s444 + $0x14a0] sm:$0xff]
        %v1265 = vld [vmem:[%s444 + $0x14a8] sm:$0xff]
        %v1266 = vld [vmem:[%s444 + $0x14b0] sm:$0xff]
        %v1267 = vld [vmem:[%s444 + $0x14b8] sm:$0xff]
        %v1268 = vld [vmem:[%s444 + $0x14c0] sm:$0xff]
        %v1269 = vld [vmem:[%s444 + $0x14c8] sm:$0xff]
        %v1270 = vld [vmem:[%s444 + $0x14d0] sm:$0xff]
        %v1271 = vld [vmem:[%s444 + $0x14d8] sm:$0xff]
        %v1272 = vld [vmem:[%s444 + $0x14e0] sm:$0xff]
        %v1273 = vld [vmem:[%s444 + $0x14e8] sm:$0xff]
        %v1274 = vld [vmem:[%s444 + $0x14f0] sm:$0xff]
        %v1275 = vld [vmem:[%s444 + $0x14f8] sm:$0xff]
        %v1276 = vld [vmem:[%s444 + $0x1500] sm:$0xff]
        %v1277 = vld [vmem:[%s444 + $0x1508] sm:$0xff]
        %v1278 = vld [vmem:[%s444 + $0x1510] sm:$0xff]
        %v1279 = vld [vmem:[%s444 + $0x1518] sm:$0xff]
        %v1280 = vld [vmem:[%s444 + $0x1520] sm:$0xff]
        %v1281 = vld [vmem:[%s444 + $0x1528] sm:$0xff]
        %v1282 = vld [vmem:[%s444 + $0x1530] sm:$0xff]
        %v1283 = vld [vmem:[%s444 + $0x1538] sm:$0xff]
        %v1284 = vld [vmem:[%s444 + $0x1540] sm:$0xff]
        %v1285 = vld [vmem:[%s444 + $0x1548] sm:$0xff]
        %v1286 = vld [vmem:[%s444 + $0x1550] sm:$0xff]
        %v1287 = vld [vmem:[%s444 + $0x1558] sm:$0xff]
        %v1288 = vld [vmem:[%s444 + $0x1560] sm:$0xff]
        %v1289 = vld [vmem:[%s444 + $0x1568] sm:$0xff]
        %v1290 = vld [vmem:[%s444 + $0x1570] sm:$0xff]
        %v1291 = vld [vmem:[%s444 + $0x1578] sm:$0xff]
        %v1292 = vld [vmem:[%s444 + $0x1580] sm:$0xff]
        %v1293 = vld [vmem:[%s444 + $0x1588] sm:$0xff]
        %v1294 = vld [vmem:[%s444 + $0x1590] sm:$0xff]
        %v1295 = vld [vmem:[%s444 + $0x1598] sm:$0xff]
        %v1296 = vld [vmem:[%s444 + $0x15a0] sm:$0xff]
        %v1297 = vld [vmem:[%s444 + $0x15a8] sm:$0xff]
        %v1298 = vld [vmem:[%s444 + $0x15b0] sm:$0xff]
        %v1299 = vld [vmem:[%s444 + $0x15b8] sm:$0xff]
        %v1300 = vld [vmem:[%s444 + $0x15c0] sm:$0xff]
        %v1301 = vld [vmem:[%s444 + $0x15c8] sm:$0xff]
        %v1302 = vld [vmem:[%s444 + $0x15d0] sm:$0xff]
        %v1303 = vld [vmem:[%s444 + $0x15d8] sm:$0xff]
        %v1304 = vld [vmem:[%s444 + $0x15e0] sm:$0xff]
        %v1305 = vld [vmem:[%s444 + $0x15e8] sm:$0xff]
        %v1306 = vld [vmem:[%s444 + $0x15f0] sm:$0xff]
        %v1307 = vld [vmem:[%s444 + $0x15f8] sm:$0xff]
        %v1308 = vld [vmem:[%s444 + $0x1600] sm:$0xff]
        %v1309 = vld [vmem:[%s444 + $0x1608] sm:$0xff]
        %v1310 = vld [vmem:[%s444 + $0x1610] sm:$0xff]
        %v1311 = vld [vmem:[%s444 + $0x1618] sm:$0xff]
        %v1312 = vld [vmem:[%s444 + $0x1620] sm:$0xff]
        %v1313 = vld [vmem:[%s444 + $0x1628] sm:$0xff]
        %v1314 = vld [vmem:[%s444 + $0x1630] sm:$0xff]
        %v1315 = vld [vmem:[%s444 + $0x1638] sm:$0xff]
        %v1316 = vld [vmem:[%s444 + $0x1640] sm:$0xff]
        %v1317 = vld [vmem:[%s444 + $0x1648] sm:$0xff]
        %v1318 = vld [vmem:[%s444 + $0x1650] sm:$0xff]
        %v1319 = vld [vmem:[%s444 + $0x1658] sm:$0xff]
        %v1320 = vld [vmem:[%s444 + $0x1660] sm:$0xff]
        %v1321 = vld [vmem:[%s444 + $0x1668] sm:$0xff]
        %v1322 = vld [vmem:[%s444 + $0x1670] sm:$0xff]
        %v1323 = vld [vmem:[%s444 + $0x1678] sm:$0xff]
        %v1324 = vld [vmem:[%s444 + $0x1680] sm:$0xff]
        %v1325 = vld [vmem:[%s444 + $0x1688] sm:$0xff]
        %v1326 = vld [vmem:[%s444 + $0x1690] sm:$0xff]
        %v1327 = vld [vmem:[%s444 + $0x1698] sm:$0xff]
        %v1328 = vld [vmem:[%s444 + $0x16a0] sm:$0xff]
        %v1329 = vld [vmem:[%s444 + $0x16a8] sm:$0xff]
        %v1330 = vld [vmem:[%s444 + $0x16b0] sm:$0xff]
        %v1331 = vld [vmem:[%s444 + $0x16b8] sm:$0xff]
        %v1332 = vld [vmem:[%s444 + $0x16c0] sm:$0xff]
        %v1333 = vld [vmem:[%s444 + $0x16c8] sm:$0xff]
        %v1334 = vld [vmem:[%s444 + $0x16d0] sm:$0xff]
        %v1335 = vld [vmem:[%s444 + $0x16d8] sm:$0xff]
        %v1336 = vld [vmem:[%s444 + $0x16e0] sm:$0xff]
        %v1337 = vld [vmem:[%s444 + $0x16e8] sm:$0xff]
        %v1338 = vld [vmem:[%s444 + $0x16f0] sm:$0xff]
        %v1339 = vld [vmem:[%s444 + $0x16f8] sm:$0xff]
        %v1340 = vld [vmem:[%s444 + $0x1700] sm:$0xff]
        %v1341 = vld [vmem:[%s444 + $0x1708] sm:$0xff]
        %v1342 = vld [vmem:[%s444 + $0x1710] sm:$0xff]
        %v1343 = vld [vmem:[%s444 + $0x1718] sm:$0xff]
        %v1344 = vld [vmem:[%s444 + $0x1720] sm:$0xff]
        %v1345 = vld [vmem:[%s444 + $0x1728] sm:$0xff]
        %v1346 = vld [vmem:[%s444 + $0x1730] sm:$0xff]
        %v1347 = vld [vmem:[%s444 + $0x1738] sm:$0xff]
        %v1348 = vld [vmem:[%s444 + $0x1740] sm:$0xff]
        %v1349 = vld [vmem:[%s444 + $0x1748] sm:$0xff]
        %v1350 = vld [vmem:[%s444 + $0x1750] sm:$0xff]
        %v1351 = vld [vmem:[%s444 + $0x1758] sm:$0xff]
        %v1352 = vld [vmem:[%s444 + $0x1760] sm:$0xff]
        %v1353 = vld [vmem:[%s444 + $0x1768] sm:$0xff]
        %v1354 = vld [vmem:[%s444 + $0x1770] sm:$0xff]
        %v1355 = vld [vmem:[%s444 + $0x1778] sm:$0xff]
        %v1356 = vld [vmem:[%s444 + $0x1780] sm:$0xff]
        %v1357 = vld [vmem:[%s444 + $0x1788] sm:$0xff]
        %v1358 = vld [vmem:[%s444 + $0x1790] sm:$0xff]
        %v1359 = vld [vmem:[%s444 + $0x1798] sm:$0xff]
        %v1360 = vld [vmem:[%s444 + $0x17a0] sm:$0xff]
        %v1361 = vld [vmem:[%s444 + $0x17a8] sm:$0xff]
        %v1362 = vld [vmem:[%s444 + $0x17b0] sm:$0xff]
        %v1363 = vld [vmem:[%s444 + $0x17b8] sm:$0xff]
        %v1364 = vld [vmem:[%s444 + $0x17c0] sm:$0xff]
        %v1365 = vld [vmem:[%s444 + $0x17c8] sm:$0xff]
        %v1366 = vld [vmem:[%s444 + $0x17d0] sm:$0xff]
        %v1367 = vld [vmem:[%s444 + $0x17d8] sm:$0xff]
        %v1368 = vld [vmem:[%s444 + $0x17e0] sm:$0xff]
        %v1369 = vld [vmem:[%s444 + $0x17e8] sm:$0xff]
        %v1370 = vld [vmem:[%s444 + $0x17f0] sm:$0xff]
        %v1371 = vld [vmem:[%s444 + $0x17f8] sm:$0xff]
        %v1372 = vld [vmem:[%s444 + $0x1800] sm:$0xff]
        %v1373 = vld [vmem:[%s444 + $0x1808] sm:$0xff]
        %v1374 = vld [vmem:[%s444 + $0x1810] sm:$0xff]
        %v1375 = vld [vmem:[%s444 + $0x1818] sm:$0xff]
        %v1376 = vld [vmem:[%s444 + $0x1820] sm:$0xff]
        %v1377 = vld [vmem:[%s444 + $0x1828] sm:$0xff]
        %v1378 = vld [vmem:[%s444 + $0x1830] sm:$0xff]
        %v1379 = vld [vmem:[%s444 + $0x1838] sm:$0xff]
        %v1380 = vld [vmem:[%s444 + $0x1840] sm:$0xff]
        %v1381 = vld [vmem:[%s444 + $0x1848] sm:$0xff]
        %v1382 = vld [vmem:[%s444 + $0x1850] sm:$0xff]
        %v1383 = vld [vmem:[%s444 + $0x1858] sm:$0xff]
        %v1384 = vld [vmem:[%s444 + $0x1860] sm:$0xff]
        %v1385 = vld [vmem:[%s444 + $0x1868] sm:$0xff]
        %v1386 = vld [vmem:[%s444 + $0x1870] sm:$0xff]
        %v1387 = vld [vmem:[%s444 + $0x1878] sm:$0xff]
        %v1388 = vld [vmem:[%s444 + $0x1880] sm:$0xff]
        %v1389 = vld [vmem:[%s444 + $0x1888] sm:$0xff]
        %v1390 = vld [vmem:[%s444 + $0x1890] sm:$0xff]
        %v1391 = vld [vmem:[%s444 + $0x1898] sm:$0xff]
        %v1392 = vld [vmem:[%s444 + $0x18a0] sm:$0xff]
        %v1393 = vld [vmem:[%s444 + $0x18a8] sm:$0xff]
        %v1394 = vld [vmem:[%s444 + $0x18b0] sm:$0xff]
        %v1395 = vld [vmem:[%s444 + $0x18b8] sm:$0xff]
        %v1396 = vld [vmem:[%s444 + $0x18c0] sm:$0xff]
        %v1397 = vld [vmem:[%s444 + $0x18c8] sm:$0xff]
        %v1398 = vld [vmem:[%s444 + $0x18d0] sm:$0xff]
        %v1399 = vld [vmem:[%s444 + $0x18d8] sm:$0xff]
        %v1400 = vld [vmem:[%s444 + $0x18e0] sm:$0xff]
        %v1401 = vld [vmem:[%s444 + $0x18e8] sm:$0xff]
        %v1402 = vld [vmem:[%s444 + $0x18f0] sm:$0xff]
        %v1403 = vld [vmem:[%s444 + $0x18f8] sm:$0xff]
        %v1404 = vld [vmem:[%s444 + $0x1900] sm:$0xff]
        %v1405 = vld [vmem:[%s444 + $0x1908] sm:$0xff]
        %v1406 = vld [vmem:[%s444 + $0x1910] sm:$0xff]
        %v1407 = vld [vmem:[%s444 + $0x1918] sm:$0xff]
        %v1408 = vld [vmem:[%s444 + $0x1920] sm:$0xff]
        %v1409 = vld [vmem:[%s444 + $0x1928] sm:$0xff]
        %v1410 = vld [vmem:[%s444 + $0x1930] sm:$0xff]
        %v1411 = vld [vmem:[%s444 + $0x1938] sm:$0xff]
        %v1412 = vld [vmem:[%s444 + $0x1940] sm:$0xff]
        %v1413 = vld [vmem:[%s444 + $0x1948] sm:$0xff]
        %v1414 = vld [vmem:[%s444 + $0x1950] sm:$0xff]
        %v1415 = vld [vmem:[%s444 + $0x1958] sm:$0xff]
        %v1416 = vld [vmem:[%s444 + $0x1960] sm:$0xff]
        %v1417 = vld [vmem:[%s444 + $0x1968] sm:$0xff]
        %v1418 = vld [vmem:[%s444 + $0x1970] sm:$0xff]
        %v1419 = vld [vmem:[%s444 + $0x1978] sm:$0xff]
        %v1420 = vld [vmem:[%s444 + $0x1980] sm:$0xff]
        %v1421 = vld [vmem:[%s444 + $0x1988] sm:$0xff]
        %v1422 = vld [vmem:[%s444 + $0x1990] sm:$0xff]
        %v1423 = vld [vmem:[%s444 + $0x1998] sm:$0xff]
        %v1424 = vld [vmem:[%s444 + $0x19a0] sm:$0xff]
        %v1425 = vld [vmem:[%s444 + $0x19a8] sm:$0xff]
        %v1426 = vld [vmem:[%s444 + $0x19b0] sm:$0xff]
        %v1427 = vld [vmem:[%s444 + $0x19b8] sm:$0xff]
        %v1428 = vld [vmem:[%s444 + $0x19c0] sm:$0xff]
        %v1429 = vld [vmem:[%s444 + $0x19c8] sm:$0xff]
        %v1430 = vld [vmem:[%s444 + $0x19d0] sm:$0xff]
        %v1431 = vld [vmem:[%s444 + $0x19d8] sm:$0xff]
        %v1432 = vld [vmem:[%s444 + $0x19e0] sm:$0xff]
        %v1433 = vld [vmem:[%s444 + $0x19e8] sm:$0xff]
        %v1434 = vld [vmem:[%s444 + $0x19f0] sm:$0xff]
        %v1435 = vld [vmem:[%s444 + $0x19f8] sm:$0xff]
        %v1436 = vld [vmem:[%s444 + $0x1a00] sm:$0xff]
        %v1437 = vld [vmem:[%s444 + $0x1a08] sm:$0xff]
        %v1438 = vld [vmem:[%s444 + $0x1a10] sm:$0xff]
        %v1439 = vld [vmem:[%s444 + $0x1a18] sm:$0xff]
        %v1440 = vld [vmem:[%s444 + $0x1a20] sm:$0xff]
        %v1441 = vld [vmem:[%s444 + $0x1a28] sm:$0xff]
        %v1442 = vld [vmem:[%s444 + $0x1a30] sm:$0xff]
        %v1443 = vld [vmem:[%s444 + $0x1a38] sm:$0xff]
        %v1444 = vld [vmem:[%s444 + $0x1a40] sm:$0xff]
        %v1445 = vld [vmem:[%s444 + $0x1a48] sm:$0xff]
        %v1446 = vld [vmem:[%s444 + $0x1a50] sm:$0xff]
        %v1447 = vld [vmem:[%s444 + $0x1a58] sm:$0xff]
        %v1448 = vld [vmem:[%s444 + $0x1a60] sm:$0xff]
        %v1449 = vld [vmem:[%s444 + $0x1a68] sm:$0xff]
        %v1450 = vld [vmem:[%s444 + $0x1a70] sm:$0xff]
        %v1451 = vld [vmem:[%s444 + $0x1a78] sm:$0xff]
        %v1452 = vld [vmem:[%s444 + $0x1a80] sm:$0xff]
        %v1453 = vld [vmem:[%s444 + $0x1a88] sm:$0xff]
        %v1454 = vld [vmem:[%s444 + $0x1a90] sm:$0xff]
        %v1455 = vld [vmem:[%s444 + $0x1a98] sm:$0xff]
        %v1456 = vld [vmem:[%s444 + $0x1aa0] sm:$0xff]
        %v1457 = vld [vmem:[%s444 + $0x1aa8] sm:$0xff]
        %v1458 = vld [vmem:[%s444 + $0x1ab0] sm:$0xff]
        %v1459 = vld [vmem:[%s444 + $0x1ab8] sm:$0xff]
        %v1460 = vld [vmem:[%s444 + $0x1ac0] sm:$0xff]
        %v1461 = vld [vmem:[%s444 + $0x1ac8] sm:$0xff]
        %v1462 = vld [vmem:[%s444 + $0x1ad0] sm:$0xff]
        %v1463 = vld [vmem:[%s444 + $0x1ad8] sm:$0xff]
        %v1464 = vld [vmem:[%s444 + $0x1ae0] sm:$0xff]
        %v1465 = vld [vmem:[%s444 + $0x1ae8] sm:$0xff]
        %v1466 = vld [vmem:[%s444 + $0x1af0] sm:$0xff]
        %v1467 = vld [vmem:[%s444 + $0x1af8] sm:$0xff]
        %v1468 = vld [vmem:[%s444 + $0x1b00] sm:$0xff]
        %v1469 = vld [vmem:[%s444 + $0x1b08] sm:$0xff]
        %v1470 = vld [vmem:[%s444 + $0x1b10] sm:$0xff]
        %v1471 = vld [vmem:[%s444 + $0x1b18] sm:$0xff]
        %v1472 = vld [vmem:[%s444 + $0x1b20] sm:$0xff]
        %v1473 = vld [vmem:[%s444 + $0x1b28] sm:$0xff]
        %v1474 = vld [vmem:[%s444 + $0x1b30] sm:$0xff]
        %v1475 = vld [vmem:[%s444 + $0x1b38] sm:$0xff]
        %v1476 = vld [vmem:[%s444 + $0x1b40] sm:$0xff]
        %v1477 = vld [vmem:[%s444 + $0x1b48] sm:$0xff]
        %v1478 = vld [vmem:[%s444 + $0x1b50] sm:$0xff]
        %v1479 = vld [vmem:[%s444 + $0x1b58] sm:$0xff]
        %v1480 = vld [vmem:[%s444 + $0x1b60] sm:$0xff]
        %v1481 = vld [vmem:[%s444 + $0x1b68] sm:$0xff]
        %v1482 = vld [vmem:[%s444 + $0x1b70] sm:$0xff]
        %v1483 = vld [vmem:[%s444 + $0x1b78] sm:$0xff]
        %v1484 = vld [vmem:[%s444 + $0x1b80] sm:$0xff]
        %v1485 = vld [vmem:[%s444 + $0x1b88] sm:$0xff]
        %v1486 = vld [vmem:[%s444 + $0x1b90] sm:$0xff]
        %v1487 = vld [vmem:[%s444 + $0x1b98] sm:$0xff]
        %v1488 = vld [vmem:[%s444 + $0x1ba0] sm:$0xff]
        %v1489 = vld [vmem:[%s444 + $0x1ba8] sm:$0xff]
        %v1490 = vld [vmem:[%s444 + $0x1bb0] sm:$0xff]
        %v1491 = vld [vmem:[%s444 + $0x1bb8] sm:$0xff]
        %v1492 = vld [vmem:[%s444 + $0x1bc0] sm:$0xff]
        %v1493 = vld [vmem:[%s444 + $0x1bc8] sm:$0xff]
        %v1494 = vld [vmem:[%s444 + $0x1bd0] sm:$0xff]
        %v1495 = vld [vmem:[%s444 + $0x1bd8] sm:$0xff]
        %v1496 = vld [vmem:[%s444 + $0x1be0] sm:$0xff]
        %v1497 = vld [vmem:[%s444 + $0x1be8] sm:$0xff]
        %v1498 = vld [vmem:[%s444 + $0x1bf0] sm:$0xff]
        %v1499 = vld [vmem:[%s444 + $0x1bf8] sm:$0xff]
        %v1500 = vld [vmem:[%s444 + $0x1c00] sm:$0xff]
        %v1501 = vld [vmem:[%s444 + $0x1c08] sm:$0xff]
        %v1502 = vld [vmem:[%s444 + $0x1c10] sm:$0xff]
        %v1503 = vld [vmem:[%s444 + $0x1c18] sm:$0xff]
        %v1504 = vld [vmem:[%s444 + $0x1c20] sm:$0xff]
        %v1505 = vld [vmem:[%s444 + $0x1c28] sm:$0xff]
        %v1506 = vld [vmem:[%s444 + $0x1c30] sm:$0xff]
        %v1507 = vld [vmem:[%s444 + $0x1c38] sm:$0xff]
        %v1508 = vld [vmem:[%s444 + $0x1c40] sm:$0xff]
        %v1509 = vld [vmem:[%s444 + $0x1c48] sm:$0xff]
        %v1510 = vld [vmem:[%s444 + $0x1c50] sm:$0xff]
        %v1511 = vld [vmem:[%s444 + $0x1c58] sm:$0xff]
        %v1512 = vld [vmem:[%s444 + $0x1c60] sm:$0xff]
        %v1513 = vld [vmem:[%s444 + $0x1c68] sm:$0xff]
        %v1514 = vld [vmem:[%s444 + $0x1c70] sm:$0xff]
        %v1515 = vld [vmem:[%s444 + $0x1c78] sm:$0xff]
        %v1516 = vld [vmem:[%s444 + $0x1c80] sm:$0xff]
        %v1517 = vld [vmem:[%s444 + $0x1c88] sm:$0xff]
        %v1518 = vld [vmem:[%s444 + $0x1c90] sm:$0xff]
        %v1519 = vld [vmem:[%s444 + $0x1c98] sm:$0xff]
        %v1520 = vld [vmem:[%s444 + $0x1ca0] sm:$0xff]
        %v1521 = vld [vmem:[%s444 + $0x1ca8] sm:$0xff]
        %v1522 = vld [vmem:[%s444 + $0x1cb0] sm:$0xff]
        %v1523 = vld [vmem:[%s444 + $0x1cb8] sm:$0xff]
        %v1524 = vld [vmem:[%s444 + $0x1cc0] sm:$0xff]
        %v1525 = vld [vmem:[%s444 + $0x1cc8] sm:$0xff]
        %v1526 = vld [vmem:[%s444 + $0x1cd0] sm:$0xff]
        %v1527 = vld [vmem:[%s444 + $0x1cd8] sm:$0xff]
        %v1528 = vld [vmem:[%s444 + $0x1ce0] sm:$0xff]
        %v1529 = vld [vmem:[%s444 + $0x1ce8] sm:$0xff]
        %v1530 = vld [vmem:[%s444 + $0x1cf0] sm:$0xff]
        %v1531 = vld [vmem:[%s444 + $0x1cf8] sm:$0xff]
        %v1532 = vld [vmem:[%s444 + $0x1d00] sm:$0xff]
        %v1533 = vld [vmem:[%s444 + $0x1d08] sm:$0xff]
        %v1534 = vld [vmem:[%s444 + $0x1d10] sm:$0xff]
        %v1535 = vld [vmem:[%s444 + $0x1d18] sm:$0xff]
        %v1536 = vld [vmem:[%s444 + $0x1d20] sm:$0xff]
        %v1537 = vld [vmem:[%s444 + $0x1d28] sm:$0xff]
        %v1538 = vld [vmem:[%s444 + $0x1d30] sm:$0xff]
        %v1539 = vld [vmem:[%s444 + $0x1d38] sm:$0xff]
        %v1540 = vld [vmem:[%s444 + $0x1d40] sm:$0xff]
        %v1541 = vld [vmem:[%s444 + $0x1d48] sm:$0xff]
        %v1542 = vld [vmem:[%s444 + $0x1d50] sm:$0xff]
        %v1543 = vld [vmem:[%s444 + $0x1d58] sm:$0xff]
        %v1544 = vld [vmem:[%s444 + $0x1d60] sm:$0xff]
        %v1545 = vld [vmem:[%s444 + $0x1d68] sm:$0xff]
        %v1546 = vld [vmem:[%s444 + $0x1d70] sm:$0xff]
        %v1547 = vld [vmem:[%s444 + $0x1d78] sm:$0xff]
        %v1548 = vld [vmem:[%s444 + $0x1d80] sm:$0xff]
        %v1549 = vld [vmem:[%s444 + $0x1d88] sm:$0xff]
        %v1550 = vld [vmem:[%s444 + $0x1d90] sm:$0xff]
        %v1551 = vld [vmem:[%s444 + $0x1d98] sm:$0xff]
        %v1552 = vld [vmem:[%s444 + $0x1da0] sm:$0xff]
        %v1553 = vld [vmem:[%s444 + $0x1da8] sm:$0xff]
        %v1554 = vld [vmem:[%s444 + $0x1db0] sm:$0xff]
        %v1555 = vld [vmem:[%s444 + $0x1db8] sm:$0xff]
        %v1556 = vld [vmem:[%s444 + $0x1dc0] sm:$0xff]
        %v1557 = vld [vmem:[%s444 + $0x1dc8] sm:$0xff]
        %v1558 = vld [vmem:[%s444 + $0x1dd0] sm:$0xff]
        %v1559 = vld [vmem:[%s444 + $0x1dd8] sm:$0xff]
        %v1560 = vld [vmem:[%s444 + $0x1de0] sm:$0xff]
        %v1561 = vld [vmem:[%s444 + $0x1de8] sm:$0xff]
        %v1562 = vld [vmem:[%s444 + $0x1df0] sm:$0xff]
        %v1563 = vld [vmem:[%s444 + $0x1df8] sm:$0xff]
        %v1564 = vld [vmem:[%s444 + $0x1e00] sm:$0xff]
        %v1565 = vld [vmem:[%s444 + $0x1e08] sm:$0xff]
        %v1566 = vld [vmem:[%s444 + $0x1e10] sm:$0xff]
        %v1567 = vld [vmem:[%s444 + $0x1e18] sm:$0xff]
        %v1568 = vld [vmem:[%s444 + $0x1e20] sm:$0xff]
        %v1569 = vld [vmem:[%s444 + $0x1e28] sm:$0xff]
        %v1570 = vld [vmem:[%s444 + $0x1e30] sm:$0xff]
        %v1571 = vld [vmem:[%s444 + $0x1e38] sm:$0xff]
        %v1572 = vld [vmem:[%s444 + $0x1e40] sm:$0xff]
        %v1573 = vld [vmem:[%s444 + $0x1e48] sm:$0xff]
        %v1574 = vld [vmem:[%s444 + $0x1e50] sm:$0xff]
        %v1575 = vld [vmem:[%s444 + $0x1e58] sm:$0xff]
        %v1576 = vld [vmem:[%s444 + $0x1e60] sm:$0xff]
        %v1577 = vld [vmem:[%s444 + $0x1e68] sm:$0xff]
        %v1578 = vld [vmem:[%s444 + $0x1e70] sm:$0xff]
        %v1579 = vld [vmem:[%s444 + $0x1e78] sm:$0xff]
        %v1580 = vld [vmem:[%s444 + $0x1e80] sm:$0xff]
        %v1581 = vld [vmem:[%s444 + $0x1e88] sm:$0xff]
        %v1582 = vld [vmem:[%s444 + $0x1e90] sm:$0xff]
        %v1583 = vld [vmem:[%s444 + $0x1e98] sm:$0xff]
        %v1584 = vld [vmem:[%s444 + $0x1ea0] sm:$0xff]
        %v1585 = vld [vmem:[%s444 + $0x1ea8] sm:$0xff]
        %v1586 = vld [vmem:[%s444 + $0x1eb0] sm:$0xff]
        %v1587 = vld [vmem:[%s444 + $0x1eb8] sm:$0xff]
        %v1588 = vld [vmem:[%s444 + $0x1ec0] sm:$0xff]
        %v1589 = vld [vmem:[%s444 + $0x1ec8] sm:$0xff]
        %v1590 = vld [vmem:[%s444 + $0x1ed0] sm:$0xff]
        %v1591 = vld [vmem:[%s444 + $0x1ed8] sm:$0xff]
        %v1592 = vld [vmem:[%s444 + $0x1ee0] sm:$0xff]
        %v1593 = vld [vmem:[%s444 + $0x1ee8] sm:$0xff]
        %v1594 = vld [vmem:[%s444 + $0x1ef0] sm:$0xff]
        %v1595 = vld [vmem:[%s444 + $0x1ef8] sm:$0xff]
        %v1596 = vld [vmem:[%s444 + $0x1f00] sm:$0xff]
        %v1597 = vld [vmem:[%s444 + $0x1f08] sm:$0xff]
        %v1598 = vld [vmem:[%s444 + $0x1f10] sm:$0xff]
        %v1599 = vld [vmem:[%s444 + $0x1f18] sm:$0xff]
        %v1600 = vld [vmem:[%s444 + $0x1f20] sm:$0xff]
        %v1601 = vld [vmem:[%s444 + $0x1f28] sm:$0xff]
        %v1602 = vld [vmem:[%s444 + $0x1f30] sm:$0xff]
        %v1603 = vld [vmem:[%s444 + $0x1f38] sm:$0xff]
        %v1604 = vld [vmem:[%s444 + $0x1f40] sm:$0xff]
        %v1605 = vld [vmem:[%s444 + $0x1f48] sm:$0xff]
        %v1606 = vld [vmem:[%s444 + $0x1f50] sm:$0xff]
        %v1607 = vld [vmem:[%s444 + $0x1f58] sm:$0xff]
        %v1608 = vld [vmem:[%s444 + $0x1f60] sm:$0xff]
        %v1609 = vld [vmem:[%s444 + $0x1f68] sm:$0xff]
        %v1610 = vld [vmem:[%s444 + $0x1f70] sm:$0xff]
        %v1611 = vld [vmem:[%s444 + $0x1f78] sm:$0xff]
        %v1612 = vld [vmem:[%s444 + $0x1f80] sm:$0xff]
        %v1613 = vld [vmem:[%s444 + $0x1f88] sm:$0xff]
        %v1614 = vld [vmem:[%s444 + $0x1f90] sm:$0xff]
        %v1615 = vld [vmem:[%s444 + $0x1f98] sm:$0xff]
        %v1616 = vld [vmem:[%s444 + $0x1fa0] sm:$0xff]
        %v1617 = vld [vmem:[%s444 + $0x1fa8] sm:$0xff]
        %v1618 = vld [vmem:[%s444 + $0x1fb0] sm:$0xff]
        %v1619 = vld [vmem:[%s444 + $0x1fb8] sm:$0xff]
        %v1620 = vld [vmem:[%s444 + $0x1fc0] sm:$0xff]
        %v1621 = vld [vmem:[%s444 + $0x1fc8] sm:$0xff]
        %v1622 = vld [vmem:[%s444 + $0x1fd0] sm:$0xff]
        %v1623 = vld [vmem:[%s444 + $0x1fd8] sm:$0xff]
        %v1624 = vld [vmem:[%s444 + $0x1fe0] sm:$0xff]
        %v1625 = vld [vmem:[%s444 + $0x1fe8] sm:$0xff]
        %v1626 = vld [vmem:[%s444 + $0x1ff0] sm:$0xff]
        %v1627 = vld [vmem:[%s444 + $0x1ff8] sm:$0xff]
        %v1628 = vld [vmem:[%s444 + $0x2000] sm:$0xff]
        %v1629 = vld [vmem:[%s444 + $0x2008] sm:$0xff]
        %v1630 = vld [vmem:[%s444 + $0x2010] sm:$0xff]
        %v1631 = vld [vmem:[%s444 + $0x2018] sm:$0xff]
        %v1632 = vld [vmem:[%s444 + $0x2020] sm:$0xff]
        %v1633 = vld [vmem:[%s444 + $0x2028] sm:$0xff]
        %v1634 = vld [vmem:[%s444 + $0x2030] sm:$0xff]
        %v1635 = vld [vmem:[%s444 + $0x2038] sm:$0xff]
        %v1636 = vld [vmem:[%s444 + $0x2040] sm:$0xff]
        %v1637 = vld [vmem:[%s444 + $0x2048] sm:$0xff]
        %v1638 = vld [vmem:[%s444 + $0x2050] sm:$0xff]
        %v1639 = vld [vmem:[%s444 + $0x2058] sm:$0xff]
        %v1640 = vld [vmem:[%s444 + $0x2060] sm:$0xff]
        %v1641 = vld [vmem:[%s444 + $0x2068] sm:$0xff]
        %v1642 = vld [vmem:[%s444 + $0x2070] sm:$0xff]
        %v1643 = vld [vmem:[%s444 + $0x2078] sm:$0xff]
        %v1644 = vld [vmem:[%s444 + $0x2080] sm:$0xff]
        %v1645 = vld [vmem:[%s444 + $0x2088] sm:$0xff]
        %v1646 = vld [vmem:[%s444 + $0x2090] sm:$0xff]
        %v1647 = vld [vmem:[%s444 + $0x2098] sm:$0xff]
        %v1648 = vld [vmem:[%s444 + $0x20a0] sm:$0xff]
        %v1649 = vld [vmem:[%s444 + $0x20a8] sm:$0xff]
        %v1650 = vld [vmem:[%s444 + $0x20b0] sm:$0xff]
        %v1651 = vld [vmem:[%s444 + $0x20b8] sm:$0xff]
        %v1652 = vld [vmem:[%s444 + $0x20c0] sm:$0xff]
        %v1653 = vld [vmem:[%s444 + $0x20c8] sm:$0xff]
        %v1654 = vld [vmem:[%s444 + $0x20d0] sm:$0xff]
        %v1655 = vld [vmem:[%s444 + $0x20d8] sm:$0xff]
        %v1656 = vld [vmem:[%s444 + $0x20e0] sm:$0xff]
        %v1657 = vld [vmem:[%s444 + $0x20e8] sm:$0xff]
        %v1658 = vld [vmem:[%s444 + $0x20f0] sm:$0xff]
        %v1659 = vld [vmem:[%s444 + $0x20f8] sm:$0xff]
        %v1660 = vld [vmem:[%s444 + $0x2100] sm:$0xff]
        %v1661 = vld [vmem:[%s444 + $0x2108] sm:$0xff]
        %v1662 = vld [vmem:[%s444 + $0x2110] sm:$0xff]
        %v1663 = vld [vmem:[%s444 + $0x2118] sm:$0xff]
        %v1664 = vld [vmem:[%s444 + $0x2120] sm:$0xff]
        %v1665 = vld [vmem:[%s444 + $0x2128] sm:$0xff]
        %v1666 = vld [vmem:[%s444 + $0x2130] sm:$0xff]
        %v1667 = vld [vmem:[%s444 + $0x2138] sm:$0xff]
        %v1668 = vld [vmem:[%s444 + $0x2140] sm:$0xff]
        %v1669 = vld [vmem:[%s444 + $0x2148] sm:$0xff]
        %v1670 = vld [vmem:[%s444 + $0x2150] sm:$0xff]
        %v1671 = vld [vmem:[%s444 + $0x2158] sm:$0xff]
        %v1672 = vld [vmem:[%s444 + $0x2160] sm:$0xff]
        %v1673 = vld [vmem:[%s444 + $0x2168] sm:$0xff]
        %v1674 = vld [vmem:[%s444 + $0x2170] sm:$0xff]
        %v1675 = vld [vmem:[%s444 + $0x2178] sm:$0xff]
        %v1676 = vld [vmem:[%s444 + $0x2180] sm:$0xff]
        %v1677 = vld [vmem:[%s444 + $0x2188] sm:$0xff]
        %v1678 = vld [vmem:[%s444 + $0x2190] sm:$0xff]
        %v1679 = vld [vmem:[%s444 + $0x2198] sm:$0xff]
        %v1680 = vld [vmem:[%s444 + $0x21a0] sm:$0xff]
        %v1681 = vld [vmem:[%s444 + $0x21a8] sm:$0xff]
        %v1682 = vld [vmem:[%s444 + $0x21b0] sm:$0xff]
        %v1683 = vld [vmem:[%s444 + $0x21b8] sm:$0xff]
        %v1684 = vld [vmem:[%s444 + $0x21c0] sm:$0xff]
        %v1685 = vld [vmem:[%s444 + $0x21c8] sm:$0xff]
        %v1686 = vld [vmem:[%s444 + $0x21d0] sm:$0xff]
        %v1687 = vld [vmem:[%s444 + $0x21d8] sm:$0xff]
        %v1688 = vld [vmem:[%s444 + $0x21e0] sm:$0xff]
        %v1689 = vld [vmem:[%s444 + $0x21e8] sm:$0xff]
        %v1690 = vld [vmem:[%s444 + $0x21f0] sm:$0xff]
        %v1691 = vld [vmem:[%s444 + $0x21f8] sm:$0xff]
        %v1692 = vld [vmem:[%s444 + $0x2200] sm:$0xff]
        %v1693 = vld [vmem:[%s444 + $0x2208] sm:$0xff]
        %v1694 = vld [vmem:[%s444 + $0x2210] sm:$0xff]
        %v1695 = vld [vmem:[%s444 + $0x2218] sm:$0xff]
        %v1696 = vld [vmem:[%s444 + $0x2220] sm:$0xff]
        %v1697 = vld [vmem:[%s444 + $0x2228] sm:$0xff]
        %v1698 = vld [vmem:[%s444 + $0x2230] sm:$0xff]
        %v1699 = vld [vmem:[%s444 + $0x2238] sm:$0xff]
        %v1700 = vld [vmem:[%s444 + $0x2240] sm:$0xff]
        %v1701 = vld [vmem:[%s444 + $0x2248] sm:$0xff]
        %v1702 = vld [vmem:[%s444 + $0x2250] sm:$0xff]
        %v1703 = vld [vmem:[%s444 + $0x2258] sm:$0xff]
        %v1704 = vld [vmem:[%s444 + $0x2260] sm:$0xff]
        %v1705 = vld [vmem:[%s444 + $0x2268] sm:$0xff]
        %v1706 = vld [vmem:[%s444 + $0x2270] sm:$0xff]
        %v1707 = vld [vmem:[%s444 + $0x2278] sm:$0xff]
        %v1708 = vld [vmem:[%s444 + $0x2280] sm:$0xff]
        %v1709 = vld [vmem:[%s444 + $0x2288] sm:$0xff]
        %v1710 = vld [vmem:[%s444 + $0x2290] sm:$0xff]
        %v1711 = vld [vmem:[%s444 + $0x2298] sm:$0xff]
        %v1712 = vld [vmem:[%s444 + $0x22a0] sm:$0xff]
        %v1713 = vld [vmem:[%s444 + $0x22a8] sm:$0xff]
        %v1714 = vld [vmem:[%s444 + $0x22b0] sm:$0xff]
        %v1715 = vld [vmem:[%s444 + $0x22b8] sm:$0xff]
        %v1716 = vld [vmem:[%s444 + $0x22c0] sm:$0xff]
        %v1717 = vld [vmem:[%s444 + $0x22c8] sm:$0xff]
        %v1718 = vld [vmem:[%s444 + $0x22d0] sm:$0xff]
        %v1719 = vld [vmem:[%s444 + $0x22d8] sm:$0xff]
        %v1720 = vld [vmem:[%s444 + $0x22e0] sm:$0xff]
        %v1721 = vld [vmem:[%s444 + $0x22e8] sm:$0xff]
        %v1722 = vld [vmem:[%s444 + $0x22f0] sm:$0xff]
        %v1723 = vld [vmem:[%s444 + $0x22f8] sm:$0xff]
        %v1724 = vld [vmem:[%s444 + $0x2300] sm:$0xff]
        %v1725 = vld [vmem:[%s444 + $0x2308] sm:$0xff]
        %v1726 = vld [vmem:[%s444 + $0x2310] sm:$0xff]
        %v1727 = vld [vmem:[%s444 + $0x2318] sm:$0xff]
        %v1728 = vld [vmem:[%s444 + $0x2320] sm:$0xff]
        %v1729 = vld [vmem:[%s444 + $0x2328] sm:$0xff]
        %v1730 = vld [vmem:[%s444 + $0x2330] sm:$0xff]
        %v1731 = vld [vmem:[%s444 + $0x2338] sm:$0xff]
        %v1732 = vld [vmem:[%s444 + $0x2340] sm:$0xff]
        %v1733 = vld [vmem:[%s444 + $0x2348] sm:$0xff]
        %v1734 = vld [vmem:[%s444 + $0x2350] sm:$0xff]
        %v1735 = vld [vmem:[%s444 + $0x2358] sm:$0xff]
        %v1736 = vld [vmem:[%s444 + $0x2360] sm:$0xff]
        %v1737 = vld [vmem:[%s444 + $0x2368] sm:$0xff]
        %v1738 = vld [vmem:[%s444 + $0x2370] sm:$0xff]
        %v1739 = vld [vmem:[%s444 + $0x2378] sm:$0xff]
        %v1740 = vld [vmem:[%s444 + $0x2380] sm:$0xff]
        %v1741 = vld [vmem:[%s444 + $0x2388] sm:$0xff]
        %v1742 = vld [vmem:[%s444 + $0x2390] sm:$0xff]
        %v1743 = vld [vmem:[%s444 + $0x2398] sm:$0xff]
        %v1744 = vld [vmem:[%s444 + $0x23a0] sm:$0xff]
        %v1745 = vld [vmem:[%s444 + $0x23a8] sm:$0xff]
        %v1746 = vld [vmem:[%s444 + $0x23b0] sm:$0xff]
        %v1747 = vld [vmem:[%s444 + $0x23b8] sm:$0xff]
        %v1748 = vld [vmem:[%s444 + $0x23c0] sm:$0xff]
        %v1749 = vld [vmem:[%s444 + $0x23c8] sm:$0xff]
        %v1750 = vld [vmem:[%s444 + $0x23d0] sm:$0xff]
        %v1751 = vld [vmem:[%s444 + $0x23d8] sm:$0xff]
        %v1752 = vld [vmem:[%s444 + $0x23e0] sm:$0xff]
        %v1753 = vld [vmem:[%s444 + $0x23e8] sm:$0xff]
        %v1754 = vld [vmem:[%s444 + $0x23f0] sm:$0xff]
        %v1755 = vld [vmem:[%s444 + $0x23f8] sm:$0xff]
        %v1756 = vld [vmem:[%s444 + $0x2400] sm:$0xff]
        %v1757 = vld [vmem:[%s444 + $0x2408] sm:$0xff]
        %v1758 = vld [vmem:[%s444 + $0x2410] sm:$0xff]
        %v1759 = vld [vmem:[%s444 + $0x2418] sm:$0xff]
        %v1760 = vld [vmem:[%s444 + $0x2420] sm:$0xff]
        %v1761 = vld [vmem:[%s444 + $0x2428] sm:$0xff]
        %v1762 = vld [vmem:[%s444 + $0x2430] sm:$0xff]
        %v1763 = vld [vmem:[%s444 + $0x2438] sm:$0xff]
        %v1764 = vld [vmem:[%s444 + $0x2440] sm:$0xff]
        %v1765 = vld [vmem:[%s444 + $0x2448] sm:$0xff]
        %v1766 = vld [vmem:[%s444 + $0x2450] sm:$0xff]
        %v1767 = vld [vmem:[%s444 + $0x2458] sm:$0xff]
        %v1768 = vld [vmem:[%s444 + $0x2460] sm:$0xff]
        %v1769 = vld [vmem:[%s444 + $0x2468] sm:$0xff]
        %v1770 = vld [vmem:[%s444 + $0x2470] sm:$0xff]
        %v1771 = vld [vmem:[%s444 + $0x2478] sm:$0xff]
        %v1772 = vld [vmem:[%s444 + $0x2480] sm:$0xff]
        %v1773 = vld [vmem:[%s444 + $0x2488] sm:$0xff]
        %v1774 = vld [vmem:[%s444 + $0x2490] sm:$0xff]
        %v1775 = vld [vmem:[%s444 + $0x2498] sm:$0xff]
        %v1776 = vld [vmem:[%s444 + $0x24a0] sm:$0xff]
        %v1777 = vld [vmem:[%s444 + $0x24a8] sm:$0xff]
        %v1778 = vld [vmem:[%s444 + $0x24b0] sm:$0xff]
        %v1779 = vld [vmem:[%s444 + $0x24b8] sm:$0xff]
        %v1780 = vld [vmem:[%s444 + $0x24c0] sm:$0xff]
        %v1781 = vld [vmem:[%s444 + $0x24c8] sm:$0xff]
        %v1782 = vld [vmem:[%s444 + $0x24d0] sm:$0xff]
        %v1783 = vld [vmem:[%s444 + $0x24d8] sm:$0xff]
        %v1784 = vld [vmem:[%s444 + $0x24e0] sm:$0xff]
        %v1785 = vld [vmem:[%s444 + $0x24e8] sm:$0xff]
        %v1786 = vld [vmem:[%s444 + $0x24f0] sm:$0xff]
        %v1787 = vld [vmem:[%s444 + $0x24f8] sm:$0xff]
        %v1788 = vld [vmem:[%s444 + $0x2500] sm:$0xff]
        %v1789 = vld [vmem:[%s444 + $0x2508] sm:$0xff]
        %v1790 = vld [vmem:[%s444 + $0x2510] sm:$0xff]
        %v1791 = vld [vmem:[%s444 + $0x2518] sm:$0xff]
        %v1792 = vld [vmem:[%s444 + $0x2520] sm:$0xff]
        %v1793 = vld [vmem:[%s444 + $0x2528] sm:$0xff]
        %v1794 = vld [vmem:[%s444 + $0x2530] sm:$0xff]
        %v1795 = vld [vmem:[%s444 + $0x2538] sm:$0xff]
        %v1796 = vld [vmem:[%s444 + $0x2540] sm:$0xff]
        %v1797 = vld [vmem:[%s444 + $0x2548] sm:$0xff]
        %v1798 = vld [vmem:[%s444 + $0x2550] sm:$0xff]
        %v1799 = vld [vmem:[%s444 + $0x2558] sm:$0xff]
        %v1800 = vld [vmem:[%s444 + $0x2560] sm:$0xff]
        %v1801 = vld [vmem:[%s444 + $0x2568] sm:$0xff]
        %v1802 = vld [vmem:[%s444 + $0x2570] sm:$0xff]
        %v1803 = vld [vmem:[%s444 + $0x2578] sm:$0xff]
        %v1804 = vld [vmem:[%s444 + $0x2580] sm:$0xff]
        %v1805 = vld [vmem:[%s444 + $0x2588] sm:$0xff]
        %v1806 = vld [vmem:[%s444 + $0x2590] sm:$0xff]
        %v1807 = vld [vmem:[%s444 + $0x2598] sm:$0xff]
        %v1808 = vld [vmem:[%s444 + $0x25a0] sm:$0xff]
        %v1809 = vld [vmem:[%s444 + $0x25a8] sm:$0xff]
        %v1810 = vld [vmem:[%s444 + $0x25b0] sm:$0xff]
        %v1811 = vld [vmem:[%s444 + $0x25b8] sm:$0xff]
        %v1812 = vld [vmem:[%s444 + $0x25c0] sm:$0xff]
        %v1813 = vld [vmem:[%s444 + $0x25c8] sm:$0xff]
        %v1814 = vld [vmem:[%s444 + $0x25d0] sm:$0xff]
        %v1815 = vld [vmem:[%s444 + $0x25d8] sm:$0xff]
        %v1816 = vld [vmem:[%s444 + $0x25e0] sm:$0xff]
        %v1817 = vld [vmem:[%s444 + $0x25e8] sm:$0xff]
        %v1818 = vld [vmem:[%s444 + $0x25f0] sm:$0xff]
        %v1819 = vld [vmem:[%s444 + $0x25f8] sm:$0xff]
        %v1820 = vld [vmem:[%s444 + $0x2600] sm:$0xff]
        %v1821 = vld [vmem:[%s444 + $0x2608] sm:$0xff]
        %v1822 = vld [vmem:[%s444 + $0x2610] sm:$0xff]
        %v1823 = vld [vmem:[%s444 + $0x2618] sm:$0xff]
        %v1824 = vld [vmem:[%s444 + $0x2620] sm:$0xff]
        %v1825 = vld [vmem:[%s444 + $0x2628] sm:$0xff]
        %v1826 = vld [vmem:[%s444 + $0x2630] sm:$0xff]
        %v1827 = vld [vmem:[%s444 + $0x2638] sm:$0xff]
        %v1828 = vld [vmem:[%s444 + $0x2640] sm:$0xff]
        %v1829 = vld [vmem:[%s444 + $0x2648] sm:$0xff]
        %v1830 = vld [vmem:[%s444 + $0x2650] sm:$0xff]
        %v1831 = vld [vmem:[%s444 + $0x2658] sm:$0xff]
        %v1832 = vld [vmem:[%s444 + $0x2660] sm:$0xff]
        %v1833 = vld [vmem:[%s444 + $0x2668] sm:$0xff]
        %v1834 = vld [vmem:[%s444 + $0x2670] sm:$0xff]
        %v1835 = vld [vmem:[%s444 + $0x2678] sm:$0xff]
        %v1836 = vld [vmem:[%s444 + $0x2680] sm:$0xff]
        %v1837 = vld [vmem:[%s444 + $0x2688] sm:$0xff]
        %v1838 = vld [vmem:[%s444 + $0x2690] sm:$0xff]
        %v1839 = vld [vmem:[%s444 + $0x2698] sm:$0xff]
        %v1840 = vld [vmem:[%s444 + $0x26a0] sm:$0xff]
        %v1841 = vld [vmem:[%s444 + $0x26a8] sm:$0xff]
        %v1842 = vld [vmem:[%s444 + $0x26b0] sm:$0xff]
        %v1843 = vld [vmem:[%s444 + $0x26b8] sm:$0xff]
        %v1844 = vld [vmem:[%s444 + $0x26c0] sm:$0xff]
        %v1845 = vld [vmem:[%s444 + $0x26c8] sm:$0xff]
        %v1846 = vld [vmem:[%s444 + $0x26d0] sm:$0xff]
        %v1847 = vld [vmem:[%s444 + $0x26d8] sm:$0xff]
        %v1848 = vld [vmem:[%s444 + $0x26e0] sm:$0xff]
        %v1849 = vld [vmem:[%s444 + $0x26e8] sm:$0xff]
        %v1850 = vld [vmem:[%s444 + $0x26f0] sm:$0xff]
        %v1851 = vld [vmem:[%s444 + $0x26f8] sm:$0xff]
        %v1852 = vld [vmem:[%s444 + $0x2700] sm:$0xff]
        %v1853 = vld [vmem:[%s444 + $0x2708] sm:$0xff]
        %v1854 = vld [vmem:[%s444 + $0x2710] sm:$0xff]
        %v1855 = vld [vmem:[%s444 + $0x2718] sm:$0xff]
        %v1856 = vld [vmem:[%s444 + $0x2720] sm:$0xff]
        %v1857 = vld [vmem:[%s444 + $0x2728] sm:$0xff]
        %v1858 = vld [vmem:[%s444 + $0x2730] sm:$0xff]
        %v1859 = vld [vmem:[%s444 + $0x2738] sm:$0xff]
        %v1860 = vld [vmem:[%s444 + $0x2740] sm:$0xff]
        %v1861 = vld [vmem:[%s444 + $0x2748] sm:$0xff]
        %v1862 = vld [vmem:[%s444 + $0x2750] sm:$0xff]
        %v1863 = vld [vmem:[%s444 + $0x2758] sm:$0xff]
        %v1864 = vld [vmem:[%s444 + $0x2760] sm:$0xff]
        %v1865 = vld [vmem:[%s444 + $0x2768] sm:$0xff]
        %v1866 = vld [vmem:[%s444 + $0x2770] sm:$0xff]
        %v1867 = vld [vmem:[%s444 + $0x2778] sm:$0xff]
        %v1868 = vld [vmem:[%s444 + $0x2780] sm:$0xff]
        %v1869 = vld [vmem:[%s444 + $0x2788] sm:$0xff]
        %v1870 = vld [vmem:[%s444 + $0x2790] sm:$0xff]
        %v1871 = vld [vmem:[%s444 + $0x2798] sm:$0xff]
        %v1872 = vld [vmem:[%s444 + $0x27a0] sm:$0xff]
        %v1873 = vld [vmem:[%s444 + $0x27a8] sm:$0xff]
        %v1874 = vld [vmem:[%s444 + $0x27b0] sm:$0xff]
        %v1875 = vld [vmem:[%s444 + $0x27b8] sm:$0xff]
        %v1876 = vld [vmem:[%s444 + $0x27c0] sm:$0xff]
        %v1877 = vld [vmem:[%s444 + $0x27c8] sm:$0xff]
        %v1878 = vld [vmem:[%s444 + $0x27d0] sm:$0xff]
        %v1879 = vld [vmem:[%s444 + $0x27d8] sm:$0xff]
        %v1880 = vld [vmem:[%s444 + $0x27e0] sm:$0xff]
        %v1881 = vld [vmem:[%s444 + $0x27e8] sm:$0xff]
        %v1882 = vld [vmem:[%s444 + $0x27f0] sm:$0xff]
        %v1883 = vld [vmem:[%s444 + $0x27f8] sm:$0xff]
        %v1884 = vld [vmem:[%s444 + $0x2800] sm:$0xff]
        %v1885 = vld [vmem:[%s444 + $0x2808] sm:$0xff]
        %v1886 = vld [vmem:[%s444 + $0x2810] sm:$0xff]
        %v1887 = vld [vmem:[%s444 + $0x2818] sm:$0xff]
        %v1888 = vld [vmem:[%s444 + $0x2820] sm:$0xff]
        %v1889 = vld [vmem:[%s444 + $0x2828] sm:$0xff]
        %v1890 = vld [vmem:[%s444 + $0x2830] sm:$0xff]
        %v1891 = vld [vmem:[%s444 + $0x2838] sm:$0xff]
        %v1892 = vld [vmem:[%s444 + $0x2840] sm:$0xff]
        %v1893 = vld [vmem:[%s444 + $0x2848] sm:$0xff]
        %v1894 = vld [vmem:[%s444 + $0x2850] sm:$0xff]
        %v1895 = vld [vmem:[%s444 + $0x2858] sm:$0xff]
        %v1896 = vld [vmem:[%s444 + $0x2860] sm:$0xff]
        %v1897 = vld [vmem:[%s444 + $0x2868] sm:$0xff]
        %v1898 = vld [vmem:[%s444 + $0x2870] sm:$0xff]
        %v1899 = vld [vmem:[%s444 + $0x2878] sm:$0xff]
        %v1900 = vld [vmem:[%s444 + $0x2880] sm:$0xff]
        %v1901 = vld [vmem:[%s444 + $0x2888] sm:$0xff]
        %v1902 = vld [vmem:[%s444 + $0x2890] sm:$0xff]
        %v1903 = vld [vmem:[%s444 + $0x2898] sm:$0xff]
        %v1904 = vld [vmem:[%s444 + $0x28a0] sm:$0xff]
        %v1905 = vld [vmem:[%s444 + $0x28a8] sm:$0xff]
        %v1906 = vld [vmem:[%s444 + $0x28b0] sm:$0xff]
        %v1907 = vld [vmem:[%s444 + $0x28b8] sm:$0xff]
        %v1908 = vld [vmem:[%s444 + $0x28c0] sm:$0xff]
        %v1909 = vld [vmem:[%s444 + $0x28c8] sm:$0xff]
        %v1910 = vld [vmem:[%s444 + $0x28d0] sm:$0xff]
        %v1911 = vld [vmem:[%s444 + $0x28d8] sm:$0xff]
        %v1912 = vld [vmem:[%s444 + $0x28e0] sm:$0xff]
        %v1913 = vld [vmem:[%s444 + $0x28e8] sm:$0xff]
        %v1914 = vld [vmem:[%s444 + $0x28f0] sm:$0xff]
        %v1915 = vld [vmem:[%s444 + $0x28f8] sm:$0xff]
        %v1916 = vld [vmem:[%s444 + $0x2900] sm:$0xff]
        %v1917 = vld [vmem:[%s444 + $0x2908] sm:$0xff]
        %v1918 = vld [vmem:[%s444 + $0x2910] sm:$0xff]
        %v1919 = vld [vmem:[%s444 + $0x2918] sm:$0xff]
        %v1920 = vld [vmem:[%s444 + $0x2920] sm:$0xff]
        %v1921 = vld [vmem:[%s444 + $0x2928] sm:$0xff]
        %v1922 = vld [vmem:[%s444 + $0x2930] sm:$0xff]
        %v1923 = vld [vmem:[%s444 + $0x2938] sm:$0xff]
        %v1924 = vld [vmem:[%s444 + $0x2940] sm:$0xff]
        %v1925 = vld [vmem:[%s444 + $0x2948] sm:$0xff]
        %v1926 = vld [vmem:[%s444 + $0x2950] sm:$0xff]
        %v1927 = vld [vmem:[%s444 + $0x2958] sm:$0xff]
        %v1928 = vld [vmem:[%s444 + $0x2960] sm:$0xff]
        %v1929 = vld [vmem:[%s444 + $0x2968] sm:$0xff]
        %v1930 = vld [vmem:[%s444 + $0x2970] sm:$0xff]
        %v1931 = vld [vmem:[%s444 + $0x2978] sm:$0xff]
        %v1932 = vld [vmem:[%s444 + $0x2980] sm:$0xff]
        %v1933 = vld [vmem:[%s444 + $0x2988] sm:$0xff]
        %v1934 = vld [vmem:[%s444 + $0x2990] sm:$0xff]
        %v1935 = vld [vmem:[%s444 + $0x2998] sm:$0xff]
        %v1936 = vld [vmem:[%s444 + $0x29a0] sm:$0xff]
        %v1937 = vld [vmem:[%s444 + $0x29a8] sm:$0xff]
        %v1938 = vld [vmem:[%s444 + $0x29b0] sm:$0xff]
        %v1939 = vld [vmem:[%s444 + $0x29b8] sm:$0xff]
        %v1940 = vld [vmem:[%s444 + $0x29c0] sm:$0xff]
        %v1941 = vld [vmem:[%s444 + $0x29c8] sm:$0xff]
        %v1942 = vld [vmem:[%s444 + $0x29d0] sm:$0xff]
        %v1943 = vld [vmem:[%s444 + $0x29d8] sm:$0xff]
        %v1944 = vld [vmem:[%s444 + $0x29e0] sm:$0xff]
        %v1945 = vld [vmem:[%s444 + $0x29e8] sm:$0xff]
        %v1946 = vld [vmem:[%s444 + $0x29f0] sm:$0xff]
        %v1947 = vld [vmem:[%s444 + $0x29f8] sm:$0xff]
        %v1948 = vld [vmem:[%s444 + $0x2a00] sm:$0xff]
        %v1949 = vld [vmem:[%s444 + $0x2a08] sm:$0xff]
        %v1950 = vld [vmem:[%s444 + $0x2a10] sm:$0xff]
        %v1951 = vld [vmem:[%s444 + $0x2a18] sm:$0xff]
        %v1952 = vld [vmem:[%s444 + $0x2a20] sm:$0xff]
        %v1953 = vld [vmem:[%s444 + $0x2a28] sm:$0xff]
        %v1954 = vld [vmem:[%s444 + $0x2a30] sm:$0xff]
        %v1955 = vld [vmem:[%s444 + $0x2a38] sm:$0xff]
        %v1956 = vld [vmem:[%s444 + $0x2a40] sm:$0xff]
        %v1957 = vld [vmem:[%s444 + $0x2a48] sm:$0xff]
        %v1958 = vld [vmem:[%s444 + $0x2a50] sm:$0xff]
        %v1959 = vld [vmem:[%s444 + $0x2a58] sm:$0xff]
        %v1960 = vld [vmem:[%s444 + $0x2a60] sm:$0xff]
        %v1961 = vld [vmem:[%s444 + $0x2a68] sm:$0xff]
        %v1962 = vld [vmem:[%s444 + $0x2a70] sm:$0xff]
        %v1963 = vld [vmem:[%s444 + $0x2a78] sm:$0xff]
        %v1964 = vld [vmem:[%s444 + $0x2a80] sm:$0xff]
        %v1965 = vld [vmem:[%s444 + $0x2a88] sm:$0xff]
        %v1966 = vld [vmem:[%s444 + $0x2a90] sm:$0xff]
        %v1967 = vld [vmem:[%s444 + $0x2a98] sm:$0xff]
        %v1968 = vld [vmem:[%s444 + $0x2aa0] sm:$0xff]
        %v1969 = vld [vmem:[%s444 + $0x2aa8] sm:$0xff]
        %v1970 = vld [vmem:[%s444 + $0x2ab0] sm:$0xff]
        %v1971 = vld [vmem:[%s444 + $0x2ab8] sm:$0xff]
        %v1972 = vld [vmem:[%s444 + $0x2ac0] sm:$0xff]
        %v1973 = vld [vmem:[%s444 + $0x2ac8] sm:$0xff]
        %v1974 = vld [vmem:[%s444 + $0x2ad0] sm:$0xff]
        %v1975 = vld [vmem:[%s444 + $0x2ad8] sm:$0xff]
        %v1976 = vld [vmem:[%s444 + $0x2ae0] sm:$0xff]
        %v1977 = vld [vmem:[%s444 + $0x2ae8] sm:$0xff]
        %v1978 = vld [vmem:[%s444 + $0x2af0] sm:$0xff]
        %v1979 = vld [vmem:[%s444 + $0x2af8] sm:$0xff]
        %v1980 = vld [vmem:[%s444 + $0x2b00] sm:$0xff]
        %v1981 = vld [vmem:[%s444 + $0x2b08] sm:$0xff]
        %v1982 = vld [vmem:[%s444 + $0x2b10] sm:$0xff]
        %v1983 = vld [vmem:[%s444 + $0x2b18] sm:$0xff]
        %v1984 = vld [vmem:[%s444 + $0x2b20] sm:$0xff]
        %v1985 = vld [vmem:[%s444 + $0x2b28] sm:$0xff]
        %v1986 = vld [vmem:[%s444 + $0x2b30] sm:$0xff]
        %v1987 = vld [vmem:[%s444 + $0x2b38] sm:$0xff]
        %v1988 = vld [vmem:[%s444 + $0x2b40] sm:$0xff]
        %v1989 = vld [vmem:[%s444 + $0x2b48] sm:$0xff]
        %v1990 = vld [vmem:[%s444 + $0x2b50] sm:$0xff]
        %v1991 = vld [vmem:[%s444 + $0x2b58] sm:$0xff]
        %v1992 = vld [vmem:[%s444 + $0x2b60] sm:$0xff]
        %v1993 = vld [vmem:[%s444 + $0x2b68] sm:$0xff]
        %v1994 = vld [vmem:[%s444 + $0x2b70] sm:$0xff]
        %v1995 = vld [vmem:[%s444 + $0x2b78] sm:$0xff]
        %v1996 = vld [vmem:[%s444 + $0x2b80] sm:$0xff]
        %v1997 = vld [vmem:[%s444 + $0x2b88] sm:$0xff]
        %v1998 = vld [vmem:[%s444 + $0x2b90] sm:$0xff]
        %v1999 = vld [vmem:[%s444 + $0x2b98] sm:$0xff]
        %v2000 = vld [vmem:[%s444 + $0x2ba0] sm:$0xff]
        %v2001 = vld [vmem:[%s444 + $0x2ba8] sm:$0xff]
        %v2002 = vld [vmem:[%s444 + $0x2bb0] sm:$0xff]
        %v2003 = vld [vmem:[%s444 + $0x2bb8] sm:$0xff]
        %v2004 = vld [vmem:[%s444 + $0x2bc0] sm:$0xff]
        %v2005 = vld [vmem:[%s444 + $0x2bc8] sm:$0xff]
        %v2006 = vld [vmem:[%s444 + $0x2bd0] sm:$0xff]
        %v2007 = vld [vmem:[%s444 + $0x2bd8] sm:$0xff]
        %v2008 = vld [vmem:[%s444 + $0x2be0] sm:$0xff]
        %v2009 = vld [vmem:[%s444 + $0x2be8] sm:$0xff]
        %v2010 = vld [vmem:[%s444 + $0x2bf0] sm:$0xff]
        %v2011 = vld [vmem:[%s444 + $0x2bf8] sm:$0xff]
        %v2012 = vld [vmem:[%s444 + $0x2c00] sm:$0xff]
        %v2013 = vld [vmem:[%s444 + $0x2c08] sm:$0xff]
        %v2014 = vld [vmem:[%s444 + $0x2c10] sm:$0xff]
        %v2015 = vld [vmem:[%s444 + $0x2c18] sm:$0xff]
        %v2016 = vld [vmem:[%s444 + $0x2c20] sm:$0xff]
        %v2017 = vld [vmem:[%s444 + $0x2c28] sm:$0xff]
        %v2018 = vld [vmem:[%s444 + $0x2c30] sm:$0xff]
        %v2019 = vld [vmem:[%s444 + $0x2c38] sm:$0xff]
        %v2020 = vld [vmem:[%s444 + $0x2c40] sm:$0xff]
        %v2021 = vld [vmem:[%s444 + $0x2c48] sm:$0xff]
        %v2022 = vld [vmem:[%s444 + $0x2c50] sm:$0xff]
        %v2023 = vld [vmem:[%s444 + $0x2c58] sm:$0xff]
        %v2024 = vld [vmem:[%s444 + $0x2c60] sm:$0xff]
        %v2025 = vld [vmem:[%s444 + $0x2c68] sm:$0xff]
        %v2026 = vld [vmem:[%s444 + $0x2c70] sm:$0xff]
        %v2027 = vld [vmem:[%s444 + $0x2c78] sm:$0xff]
        %v2028 = vld [vmem:[%s444 + $0x2c80] sm:$0xff]
        %v2029 = vld [vmem:[%s444 + $0x2c88] sm:$0xff]
        %v2030 = vld [vmem:[%s444 + $0x2c90] sm:$0xff]
        %v2031 = vld [vmem:[%s444 + $0x2c98] sm:$0xff]
        %v2032 = vld [vmem:[%s444 + $0x2ca0] sm:$0xff]
        %v2033 = vld [vmem:[%s444 + $0x2ca8] sm:$0xff]
        %v2034 = vld [vmem:[%s444 + $0x2cb0] sm:$0xff]
        %v2035 = vld [vmem:[%s444 + $0x2cb8] sm:$0xff]
        %v2036 = vld [vmem:[%s444 + $0x2cc0] sm:$0xff]
        %v2037 = vld [vmem:[%s444 + $0x2cc8] sm:$0xff]
        %v2038 = vld [vmem:[%s444 + $0x2cd0] sm:$0xff]
        %v2039 = vld [vmem:[%s444 + $0x2cd8] sm:$0xff]
        %v2040 = vld [vmem:[%s444 + $0x2ce0] sm:$0xff]
        %v2041 = vld [vmem:[%s444 + $0x2ce8] sm:$0xff]
        %v2042 = vld [vmem:[%s444 + $0x2cf0] sm:$0xff]
        %v2043 = vld [vmem:[%s444 + $0x2cf8] sm:$0xff]
        %v2044 = vld [vmem:[%s444 + $0x2d00] sm:$0xff]
        %v2045 = vld [vmem:[%s444 + $0x2d08] sm:$0xff]
        %v2046 = vld [vmem:[%s444 + $0x2d10] sm:$0xff]
        %v2047 = vld [vmem:[%s444 + $0x2d18] sm:$0xff]
        %v2048 = vld [vmem:[%s444 + $0x2d20] sm:$0xff]
        %v2049 = vld [vmem:[%s444 + $0x2d28] sm:$0xff]
        %v2050 = vld [vmem:[%s444 + $0x2d30] sm:$0xff]
        %v2051 = vld [vmem:[%s444 + $0x2d38] sm:$0xff]
        %v2052 = vld [vmem:[%s444 + $0x2d40] sm:$0xff]
        %v2053 = vld [vmem:[%s444 + $0x2d48] sm:$0xff]
        %v2054 = vld [vmem:[%s444 + $0x2d50] sm:$0xff]
        %v2055 = vld [vmem:[%s444 + $0x2d58] sm:$0xff]
        %v2056 = vld [vmem:[%s444 + $0x2d60] sm:$0xff]
        %v2057 = vld [vmem:[%s444 + $0x2d68] sm:$0xff]
        %v2058 = vld [vmem:[%s444 + $0x2d70] sm:$0xff]
        %v2059 = vld [vmem:[%s444 + $0x2d78] sm:$0xff]
        %v2060 = vld [vmem:[%s444 + $0x2d80] sm:$0xff]
        %v2061 = vld [vmem:[%s444 + $0x2d88] sm:$0xff]
        %v2062 = vld [vmem:[%s444 + $0x2d90] sm:$0xff]
        %v2063 = vld [vmem:[%s444 + $0x2d98] sm:$0xff]
        %v2064 = vld [vmem:[%s444 + $0x2da0] sm:$0xff]
        %v2065 = vld [vmem:[%s444 + $0x2da8] sm:$0xff]
        %v2066 = vld [vmem:[%s444 + $0x2db0] sm:$0xff]
        %v2067 = vld [vmem:[%s444 + $0x2db8] sm:$0xff]
        %v2068 = vld [vmem:[%s444 + $0x2dc0] sm:$0xff]
        %v2069 = vld [vmem:[%s444 + $0x2dc8] sm:$0xff]
        %v2070 = vld [vmem:[%s444 + $0x2dd0] sm:$0xff]
        %v2071 = vld [vmem:[%s444 + $0x2dd8] sm:$0xff]
        %v2072 = vld [vmem:[%s444 + $0x2de0] sm:$0xff]
        %v2073 = vld [vmem:[%s444 + $0x2de8] sm:$0xff]
        %v2074 = vld [vmem:[%s444 + $0x2df0] sm:$0xff]
        %v2075 = vld [vmem:[%s444 + $0x2df8] sm:$0xff]
        %v2076 = vld [vmem:[%s444 + $0x2e00] sm:$0xff]
        %v2077 = vld [vmem:[%s444 + $0x2e08] sm:$0xff]
        %v2078 = vld [vmem:[%s444 + $0x2e10] sm:$0xff]
        %v2079 = vld [vmem:[%s444 + $0x2e18] sm:$0xff]
        %v2080 = vld [vmem:[%s444 + $0x2e20] sm:$0xff]
        %v2081 = vld [vmem:[%s444 + $0x2e28] sm:$0xff]
        %v2082 = vld [vmem:[%s444 + $0x2e30] sm:$0xff]
        %v2083 = vld [vmem:[%s444 + $0x2e38] sm:$0xff]
        %v2084 = vld [vmem:[%s444 + $0x2e40] sm:$0xff]
        %v2085 = vld [vmem:[%s444 + $0x2e48] sm:$0xff]
        %v2086 = vld [vmem:[%s444 + $0x2e50] sm:$0xff]
        %v2087 = vld [vmem:[%s444 + $0x2e58] sm:$0xff]
        %v2088 = vld [vmem:[%s444 + $0x2e60] sm:$0xff]
        %v2089 = vld [vmem:[%s444 + $0x2e68] sm:$0xff]
        %v2090 = vld [vmem:[%s444 + $0x2e70] sm:$0xff]
        %v2091 = vld [vmem:[%s444 + $0x2e78] sm:$0xff]
        %v2092 = vld [vmem:[%s444 + $0x2e80] sm:$0xff]
        %v2093 = vld [vmem:[%s444 + $0x2e88] sm:$0xff]
        %v2094 = vld [vmem:[%s444 + $0x2e90] sm:$0xff]
        %v2095 = vld [vmem:[%s444 + $0x2e98] sm:$0xff]
        %v2096 = vld [vmem:[%s444 + $0x2ea0] sm:$0xff]
        %v2097 = vld [vmem:[%s444 + $0x2ea8] sm:$0xff]
        %v2098 = vld [vmem:[%s444 + $0x2eb0] sm:$0xff]
        %v2099 = vld [vmem:[%s444 + $0x2eb8] sm:$0xff]
        %v2100 = vld [vmem:[%s444 + $0x2ec0] sm:$0xff]
        %v2101 = vld [vmem:[%s444 + $0x2ec8] sm:$0xff]
        %v2102 = vld [vmem:[%s444 + $0x2ed0] sm:$0xff]
        %v2103 = vld [vmem:[%s444 + $0x2ed8] sm:$0xff]
        %v2104 = vld [vmem:[%s444 + $0x2ee0] sm:$0xff]
        %v2105 = vld [vmem:[%s444 + $0x2ee8] sm:$0xff]
        %v2106 = vld [vmem:[%s444 + $0x2ef0] sm:$0xff]
        %v2107 = vld [vmem:[%s444 + $0x2ef8] sm:$0xff]
        %v2108 = vld [vmem:[%s444 + $0x2f00] sm:$0xff]
        %v2109 = vld [vmem:[%s444 + $0x2f08] sm:$0xff]
        %v2110 = vld [vmem:[%s444 + $0x2f10] sm:$0xff]
        %v2111 = vld [vmem:[%s444 + $0x2f18] sm:$0xff]
        %v2112 = vld [vmem:[%s444 + $0x2f20] sm:$0xff]
        %v2113 = vld [vmem:[%s444 + $0x2f28] sm:$0xff]
        %v2114 = vld [vmem:[%s444 + $0x2f30] sm:$0xff]
        %v2115 = vld [vmem:[%s444 + $0x2f38] sm:$0xff]
        %v2116 = vld [vmem:[%s444 + $0x2f40] sm:$0xff]
        %v2117 = vld [vmem:[%s444 + $0x2f48] sm:$0xff]
        %v2118 = vld [vmem:[%s444 + $0x2f50] sm:$0xff]
        %v2119 = vld [vmem:[%s444 + $0x2f58] sm:$0xff]
        %v2120 = vld [vmem:[%s444 + $0x2f60] sm:$0xff]
        %v2121 = vld [vmem:[%s444 + $0x2f68] sm:$0xff]
        %v2122 = vld [vmem:[%s444 + $0x2f70] sm:$0xff]
        %v2123 = vld [vmem:[%s444 + $0x2f78] sm:$0xff]
        %v2124 = vld [vmem:[%s444 + $0x2f80] sm:$0xff]
        %v2125 = vld [vmem:[%s444 + $0x2f88] sm:$0xff]
        %v2126 = vld [vmem:[%s444 + $0x2f90] sm:$0xff]
        %v2127 = vld [vmem:[%s444 + $0x2f98] sm:$0xff]
        %v2128 = vld [vmem:[%s444 + $0x2fa0] sm:$0xff]
        %v2129 = vld [vmem:[%s444 + $0x2fa8] sm:$0xff]
        %v2130 = vld [vmem:[%s444 + $0x2fb0] sm:$0xff]
        %v2131 = vld [vmem:[%s444 + $0x2fb8] sm:$0xff]
        %v2132 = vld [vmem:[%s444 + $0x2fc0] sm:$0xff]
        %v2133 = vld [vmem:[%s444 + $0x2fc8] sm:$0xff]
        %v2134 = vld [vmem:[%s444 + $0x2fd0] sm:$0xff]
        %v2135 = vld [vmem:[%s444 + $0x2fd8] sm:$0xff]
        %v2136 = vld [vmem:[%s444 + $0x2fe0] sm:$0xff]
        %v2137 = vld [vmem:[%s444 + $0x2fe8] sm:$0xff]
        %v2138 = vld [vmem:[%s444 + $0x2ff0] sm:$0xff]
        %v2139 = vld [vmem:[%s444 + $0x2ff8] sm:$0xff]
        %v2140 = vld [vmem:[%s444 + $0x3000] sm:$0xff]
        %v2141 = vld [vmem:[%s444 + $0x3008] sm:$0xff]
        %v2142 = vld [vmem:[%s444 + $0x3010] sm:$0xff]
        %v2143 = vld [vmem:[%s444 + $0x3018] sm:$0xff]
        %v2144 = vld [vmem:[%s444 + $0x3020] sm:$0xff]
        %v2145 = vld [vmem:[%s444 + $0x3028] sm:$0xff]
        %v2146 = vld [vmem:[%s444 + $0x3030] sm:$0xff]
        %v2147 = vld [vmem:[%s444 + $0x3038] sm:$0xff]
        %v2148 = vld [vmem:[%s444 + $0x3040] sm:$0xff]
        %v2149 = vld [vmem:[%s444 + $0x3048] sm:$0xff]
        %v2150 = vld [vmem:[%s444 + $0x3050] sm:$0xff]
        %v2151 = vld [vmem:[%s444 + $0x3058] sm:$0xff]
        %v2152 = vld [vmem:[%s444 + $0x3060] sm:$0xff]
        %v2153 = vld [vmem:[%s444 + $0x3068] sm:$0xff]
        %v2154 = vld [vmem:[%s444 + $0x3070] sm:$0xff]
        %v2155 = vld [vmem:[%s444 + $0x3078] sm:$0xff]
        %v2156 = vld [vmem:[%s444 + $0x3080] sm:$0xff]
        %v2157 = vld [vmem:[%s444 + $0x3088] sm:$0xff]
        %v2158 = vld [vmem:[%s444 + $0x3090] sm:$0xff]
        %v2159 = vld [vmem:[%s444 + $0x3098] sm:$0xff]
        %v2160 = vld [vmem:[%s444 + $0x30a0] sm:$0xff]
        %v2161 = vld [vmem:[%s444 + $0x30a8] sm:$0xff]
        %v2162 = vld [vmem:[%s444 + $0x30b0] sm:$0xff]
        %v2163 = vld [vmem:[%s444 + $0x30b8] sm:$0xff]
        %v2164 = vld [vmem:[%s444 + $0x30c0] sm:$0xff]
        %v2165 = vld [vmem:[%s444 + $0x30c8] sm:$0xff]
        %v2166 = vld [vmem:[%s444 + $0x30d0] sm:$0xff]
        %v2167 = vld [vmem:[%s444 + $0x30d8] sm:$0xff]
        %v2168 = vld [vmem:[%s444 + $0x30e0] sm:$0xff]
        %v2169 = vld [vmem:[%s444 + $0x30e8] sm:$0xff]
        %v2170 = vld [vmem:[%s444 + $0x30f0] sm:$0xff]
        %v2171 = vld [vmem:[%s444 + $0x30f8] sm:$0xff]
        %v2172 = vld [vmem:[%s444 + $0x3100] sm:$0xff]
        %v2173 = vld [vmem:[%s444 + $0x3108] sm:$0xff]
        %v2174 = vld [vmem:[%s444 + $0x3110] sm:$0xff]
        %v2175 = vld [vmem:[%s444 + $0x3118] sm:$0xff]
        %v2176 = vld [vmem:[%s444 + $0x3120] sm:$0xff]
        %v2177 = vld [vmem:[%s444 + $0x3128] sm:$0xff]
        %v2178 = vld [vmem:[%s444 + $0x3130] sm:$0xff]
        %v2179 = vld [vmem:[%s444 + $0x3138] sm:$0xff]
        %v2180 = vld [vmem:[%s444 + $0x3140] sm:$0xff]
        %v2181 = vld [vmem:[%s444 + $0x3148] sm:$0xff]
        %v2182 = vld [vmem:[%s444 + $0x3150] sm:$0xff]
        %v2183 = vld [vmem:[%s444 + $0x3158] sm:$0xff]
        %v2184 = vld [vmem:[%s444 + $0x3160] sm:$0xff]
        %v2185 = vld [vmem:[%s444 + $0x3168] sm:$0xff]
        %v2186 = vld [vmem:[%s444 + $0x3170] sm:$0xff]
        %v2187 = vld [vmem:[%s444 + $0x3178] sm:$0xff]
        %v2188 = vld [vmem:[%s444 + $0x3180] sm:$0xff]
        %v2189 = vld [vmem:[%s444 + $0x3188] sm:$0xff]
        %v2190 = vld [vmem:[%s444 + $0x3190] sm:$0xff]
        %v2191 = vld [vmem:[%s444 + $0x3198] sm:$0xff]
        %v2192 = vld [vmem:[%s444 + $0x31a0] sm:$0xff]
        %v2193 = vld [vmem:[%s444 + $0x31a8] sm:$0xff]
        %v2194 = vld [vmem:[%s444 + $0x31b0] sm:$0xff]
        %v2195 = vld [vmem:[%s444 + $0x31b8] sm:$0xff]
        %v2196 = vld [vmem:[%s444 + $0x31c0] sm:$0xff]
        %v2197 = vld [vmem:[%s444 + $0x31c8] sm:$0xff]
        %v2198 = vld [vmem:[%s444 + $0x31d0] sm:$0xff]
        %v2199 = vld [vmem:[%s444 + $0x31d8] sm:$0xff]
        %v2200 = vld [vmem:[%s444 + $0x31e0] sm:$0xff]
        %v2201 = vld [vmem:[%s444 + $0x31e8] sm:$0xff]
        %v2202 = vld [vmem:[%s444 + $0x31f0] sm:$0xff]
        %v2203 = vld [vmem:[%s444 + $0x31f8] sm:$0xff]
        %v2204 = vld [vmem:[%s453] sm:$0xff]
        %v2206 = vlaneseq
        %v2207 = vshrl.u32 %v2206, 7
        %v2208 = vsub.s32 0, %v2207
        %v2209 = vrot.slane %v2204, %v2208
        %v2210 = vlaneseq
        %v2211 = vshrl.u32 %v2210, 7
        %v2212 = vsub.s32 1, %v2211
        %v2213 = vrot.slane %v2204, %v2212
        %v2214 = vlaneseq
        %v2215 = vshrl.u32 %v2214, 7
        %v2216 = vsub.s32 2, %v2215
        %v2217 = vrot.slane %v2204, %v2216
        %v2218 = vlaneseq
        %v2219 = vshrl.u32 %v2218, 7
        %v2220 = vsub.s32 3, %v2219
        %v2221 = vrot.slane %v2204, %v2220
        %v2222 = vlaneseq
        %v2223 = vshrl.u32 %v2222, 7
        %v2224 = vsub.s32 4, %v2223
        %v2225 = vrot.slane %v2204, %v2224
        %v2226 = vlaneseq
        %v2227 = vshrl.u32 %v2226, 7
        %v2228 = vsub.s32 5, %v2227
        %v2229 = vrot.slane %v2204, %v2228
        %v2230 = vlaneseq
        %v2231 = vshrl.u32 %v2230, 7
        %v2232 = vsub.s32 6, %v2231
        %v2233 = vrot.slane %v2204, %v2232
        %v2234 = vlaneseq
        %v2235 = vshrl.u32 %v2234, 7
        %v2236 = vsub.s32 7, %v2235
        %v2237 = vrot.slane %v2204, %v2236
        %v3846 = vunpack.c.l.b16 %v604
        %v3847 = vunpack.c.h.b16 %v604
        %v3848 = vunpack.c.l.b16 %v605
        %v3849 = vunpack.c.h.b16 %v605
        %v3850 = vunpack.c.l.b16 %v606
        %v3851 = vunpack.c.h.b16 %v606
        %v3852 = vunpack.c.l.b16 %v607
        %v3853 = vunpack.c.h.b16 %v607
        %v3854 = vunpack.c.l.b16 %v608
        %v3855 = vunpack.c.h.b16 %v608
        %v3856 = vunpack.c.l.b16 %v609
        %v3857 = vunpack.c.h.b16 %v609
        %v3858 = vunpack.c.l.b16 %v610
        %v3859 = vunpack.c.h.b16 %v610
        %v3860 = vunpack.c.l.b16 %v611
        %v3861 = vunpack.c.h.b16 %v611
        %v3862 = vunpack.c.l.b16 %v612
        %v3863 = vunpack.c.h.b16 %v612
        %v3864 = vunpack.c.l.b16 %v613
        %v3865 = vunpack.c.h.b16 %v613
        %v3866 = vunpack.c.l.b16 %v614
        %v3867 = vunpack.c.h.b16 %v614
        %v3868 = vunpack.c.l.b16 %v615
        %v3869 = vunpack.c.h.b16 %v615
        %v3870 = vunpack.c.l.b16 %v616
        %v3871 = vunpack.c.h.b16 %v616
        %v3872 = vunpack.c.l.b16 %v617
        %v3873 = vunpack.c.h.b16 %v617
        %v3874 = vunpack.c.l.b16 %v618
        %v3875 = vunpack.c.h.b16 %v618
        %v3876 = vunpack.c.l.b16 %v619
        %v3877 = vunpack.c.h.b16 %v619
        %v3878 = vunpack.c.l.b16 %v620
        %v3879 = vunpack.c.h.b16 %v620
        %v3880 = vunpack.c.l.b16 %v621
        %v3881 = vunpack.c.h.b16 %v621
        %v3882 = vunpack.c.l.b16 %v622
        %v3883 = vunpack.c.h.b16 %v622
        %v3884 = vunpack.c.l.b16 %v623
        %v3885 = vunpack.c.h.b16 %v623
        %v3886 = vunpack.c.l.b16 %v624
        %v3887 = vunpack.c.h.b16 %v624
        %v3888 = vunpack.c.l.b16 %v625
        %v3889 = vunpack.c.h.b16 %v625
        %v3890 = vunpack.c.l.b16 %v626
        %v3891 = vunpack.c.h.b16 %v626
        %v3892 = vunpack.c.l.b16 %v627
        %v3893 = vunpack.c.h.b16 %v627
        %v3894 = vunpack.c.l.b16 %v628
        %v3895 = vunpack.c.h.b16 %v628
        %v3896 = vunpack.c.l.b16 %v629
        %v3897 = vunpack.c.h.b16 %v629
        %v3898 = vunpack.c.l.b16 %v630
        %v3899 = vunpack.c.h.b16 %v630
        %v3900 = vunpack.c.l.b16 %v631
        %v3901 = vunpack.c.h.b16 %v631
        %v3902 = vunpack.c.l.b16 %v632
        %v3903 = vunpack.c.h.b16 %v632
        %v3904 = vunpack.c.l.b16 %v633
        %v3905 = vunpack.c.h.b16 %v633
        %v3906 = vunpack.c.l.b16 %v634
        %v3907 = vunpack.c.h.b16 %v634
        %v3908 = vunpack.c.l.b16 %v635
        %v3909 = vunpack.c.h.b16 %v635
        %v3910 = vunpack.c.l.b16 %v636
        %v3911 = vunpack.c.h.b16 %v636
        %v3912 = vunpack.c.l.b16 %v637
        %v3913 = vunpack.c.h.b16 %v637
        %v3914 = vunpack.c.l.b16 %v638
        %v3915 = vunpack.c.h.b16 %v638
        %v3916 = vunpack.c.l.b16 %v639
        %v3917 = vunpack.c.h.b16 %v639
        %v3918 = vunpack.c.l.b16 %v640
        %v3919 = vunpack.c.h.b16 %v640
        %v3920 = vunpack.c.l.b16 %v641
        %v3921 = vunpack.c.h.b16 %v641
        %v3922 = vunpack.c.l.b16 %v642
        %v3923 = vunpack.c.h.b16 %v642
        %v3924 = vunpack.c.l.b16 %v643
        %v3925 = vunpack.c.h.b16 %v643
        %v3926 = vunpack.c.l.b16 %v644
        %v3927 = vunpack.c.h.b16 %v644
        %v3928 = vunpack.c.l.b16 %v645
        %v3929 = vunpack.c.h.b16 %v645
        %v3930 = vunpack.c.l.b16 %v646
        %v3931 = vunpack.c.h.b16 %v646
        %v3932 = vunpack.c.l.b16 %v647
        %v3933 = vunpack.c.h.b16 %v647
        %v3934 = vunpack.c.l.b16 %v648
        %v3935 = vunpack.c.h.b16 %v648
        %v3936 = vunpack.c.l.b16 %v649
        %v3937 = vunpack.c.h.b16 %v649
        %v3938 = vunpack.c.l.b16 %v650
        %v3939 = vunpack.c.h.b16 %v650
        %v3940 = vunpack.c.l.b16 %v651
        %v3941 = vunpack.c.h.b16 %v651
        %v3942 = vunpack.c.l.b16 %v652
        %v3943 = vunpack.c.h.b16 %v652
        %v3944 = vunpack.c.l.b16 %v653
        %v3945 = vunpack.c.h.b16 %v653
        %v3946 = vunpack.c.l.b16 %v654
        %v3947 = vunpack.c.h.b16 %v654
        %v3948 = vunpack.c.l.b16 %v655
        %v3949 = vunpack.c.h.b16 %v655
        %v3950 = vunpack.c.l.b16 %v656
        %v3951 = vunpack.c.h.b16 %v656
        %v3952 = vunpack.c.l.b16 %v657
        %v3953 = vunpack.c.h.b16 %v657
        %v3954 = vunpack.c.l.b16 %v658
        %v3955 = vunpack.c.h.b16 %v658
        %v3956 = vunpack.c.l.b16 %v659
        %v3957 = vunpack.c.h.b16 %v659
        %v3958 = vunpack.c.l.b16 %v660
        %v3959 = vunpack.c.h.b16 %v660
        %v3960 = vunpack.c.l.b16 %v661
        %v3961 = vunpack.c.h.b16 %v661
        %v3962 = vunpack.c.l.b16 %v662
        %v3963 = vunpack.c.h.b16 %v662
        %v3964 = vunpack.c.l.b16 %v663
        %v3965 = vunpack.c.h.b16 %v663
        %v3966 = vunpack.c.l.b16 %v664
        %v3967 = vunpack.c.h.b16 %v664
        %v3968 = vunpack.c.l.b16 %v665
        %v3969 = vunpack.c.h.b16 %v665
        %v3970 = vunpack.c.l.b16 %v666
        %v3971 = vunpack.c.h.b16 %v666
        %v3972 = vunpack.c.l.b16 %v667
        %v3973 = vunpack.c.h.b16 %v667
        %v3974 = vunpack.c.l.b16 %v668
        %v3975 = vunpack.c.h.b16 %v668
        %v3976 = vunpack.c.l.b16 %v669
        %v3977 = vunpack.c.h.b16 %v669
        %v3978 = vunpack.c.l.b16 %v670
        %v3979 = vunpack.c.h.b16 %v670
        %v3980 = vunpack.c.l.b16 %v671
        %v3981 = vunpack.c.h.b16 %v671
        %v3982 = vunpack.c.l.b16 %v672
        %v3983 = vunpack.c.h.b16 %v672
        %v3984 = vunpack.c.l.b16 %v673
        %v3985 = vunpack.c.h.b16 %v673
        %v3986 = vunpack.c.l.b16 %v674
        %v3987 = vunpack.c.h.b16 %v674
        %v3988 = vunpack.c.l.b16 %v675
        %v3989 = vunpack.c.h.b16 %v675
        %v3990 = vunpack.c.l.b16 %v676
        %v3991 = vunpack.c.h.b16 %v676
        %v3992 = vunpack.c.l.b16 %v677
        %v3993 = vunpack.c.h.b16 %v677
        %v3994 = vunpack.c.l.b16 %v678
        %v3995 = vunpack.c.h.b16 %v678
        %v3996 = vunpack.c.l.b16 %v679
        %v3997 = vunpack.c.h.b16 %v679
        %v3998 = vunpack.c.l.b16 %v680
        %v3999 = vunpack.c.h.b16 %v680
        %v4000 = vunpack.c.l.b16 %v681
        %v4001 = vunpack.c.h.b16 %v681
        %v4002 = vunpack.c.l.b16 %v682
        %v4003 = vunpack.c.h.b16 %v682
        %v4004 = vunpack.c.l.b16 %v683
        %v4005 = vunpack.c.h.b16 %v683
        %v4006 = vunpack.c.l.b16 %v684
        %v4007 = vunpack.c.h.b16 %v684
        %v4008 = vunpack.c.l.b16 %v685
        %v4009 = vunpack.c.h.b16 %v685
        %v4010 = vunpack.c.l.b16 %v686
        %v4011 = vunpack.c.h.b16 %v686
        %v4012 = vunpack.c.l.b16 %v687
        %v4013 = vunpack.c.h.b16 %v687
        %v4014 = vunpack.c.l.b16 %v688
        %v4015 = vunpack.c.h.b16 %v688
        %v4016 = vunpack.c.l.b16 %v689
        %v4017 = vunpack.c.h.b16 %v689
        %v4018 = vunpack.c.l.b16 %v690
        %v4019 = vunpack.c.h.b16 %v690
        %v4020 = vunpack.c.l.b16 %v691
        %v4021 = vunpack.c.h.b16 %v691
        %v4022 = vunpack.c.l.b16 %v692
        %v4023 = vunpack.c.h.b16 %v692
        %v4024 = vunpack.c.l.b16 %v693
        %v4025 = vunpack.c.h.b16 %v693
        %v4026 = vunpack.c.l.b16 %v694
        %v4027 = vunpack.c.h.b16 %v694
        %v4028 = vunpack.c.l.b16 %v695
        %v4029 = vunpack.c.h.b16 %v695
        %v4030 = vunpack.c.l.b16 %v696
        %v4031 = vunpack.c.h.b16 %v696
        %v4032 = vunpack.c.l.b16 %v697
        %v4033 = vunpack.c.h.b16 %v697
        %v4034 = vunpack.c.l.b16 %v698
        %v4035 = vunpack.c.h.b16 %v698
        %v4036 = vunpack.c.l.b16 %v699
        %v4037 = vunpack.c.h.b16 %v699
        %v4038 = vunpack.c.l.b16 %v700
        %v4039 = vunpack.c.h.b16 %v700
        %v4040 = vunpack.c.l.b16 %v701
        %v4041 = vunpack.c.h.b16 %v701
        %v4042 = vunpack.c.l.b16 %v702
        %v4043 = vunpack.c.h.b16 %v702
        %v4044 = vunpack.c.l.b16 %v703
        %v4045 = vunpack.c.h.b16 %v703
        %v4046 = vunpack.c.l.b16 %v704
        %v4047 = vunpack.c.h.b16 %v704
        %v4048 = vunpack.c.l.b16 %v705
        %v4049 = vunpack.c.h.b16 %v705
        %v4050 = vunpack.c.l.b16 %v706
        %v4051 = vunpack.c.h.b16 %v706
        %v4052 = vunpack.c.l.b16 %v707
        %v4053 = vunpack.c.h.b16 %v707
        %v4054 = vunpack.c.l.b16 %v708
        %v4055 = vunpack.c.h.b16 %v708
        %v4056 = vunpack.c.l.b16 %v709
        %v4057 = vunpack.c.h.b16 %v709
        %v4058 = vunpack.c.l.b16 %v710
        %v4059 = vunpack.c.h.b16 %v710
        %v4060 = vunpack.c.l.b16 %v711
        %v4061 = vunpack.c.h.b16 %v711
        %v4062 = vunpack.c.l.b16 %v712
        %v4063 = vunpack.c.h.b16 %v712
        %v4064 = vunpack.c.l.b16 %v713
        %v4065 = vunpack.c.h.b16 %v713
        %v4066 = vunpack.c.l.b16 %v714
        %v4067 = vunpack.c.h.b16 %v714
        %v4068 = vunpack.c.l.b16 %v715
        %v4069 = vunpack.c.h.b16 %v715
        %v4070 = vunpack.c.l.b16 %v716
        %v4071 = vunpack.c.h.b16 %v716
        %v4072 = vunpack.c.l.b16 %v717
        %v4073 = vunpack.c.h.b16 %v717
        %v4074 = vunpack.c.l.b16 %v718
        %v4075 = vunpack.c.h.b16 %v718
        %v4076 = vunpack.c.l.b16 %v719
        %v4077 = vunpack.c.h.b16 %v719
        %v4078 = vunpack.c.l.b16 %v720
        %v4079 = vunpack.c.h.b16 %v720
        %v4080 = vunpack.c.l.b16 %v721
        %v4081 = vunpack.c.h.b16 %v721
        %v4082 = vunpack.c.l.b16 %v722
        %v4083 = vunpack.c.h.b16 %v722
        %v4084 = vunpack.c.l.b16 %v723
        %v4085 = vunpack.c.h.b16 %v723
        %v4086 = vunpack.c.l.b16 %v724
        %v4087 = vunpack.c.h.b16 %v724
        %v4088 = vunpack.c.l.b16 %v725
        %v4089 = vunpack.c.h.b16 %v725
        %v4090 = vunpack.c.l.b16 %v726
        %v4091 = vunpack.c.h.b16 %v726
        %v4092 = vunpack.c.l.b16 %v727
        %v4093 = vunpack.c.h.b16 %v727
        %v4094 = vunpack.c.l.b16 %v728
        %v4095 = vunpack.c.h.b16 %v728
        %v4096 = vunpack.c.l.b16 %v729
        %v4097 = vunpack.c.h.b16 %v729
        %v4098 = vunpack.c.l.b16 %v730
        %v4099 = vunpack.c.h.b16 %v730
        %v4100 = vunpack.c.l.b16 %v731
        %v4101 = vunpack.c.h.b16 %v731
        %v4102 = vunpack.c.l.b16 %v732
        %v4103 = vunpack.c.h.b16 %v732
        %v4104 = vunpack.c.l.b16 %v733
        %v4105 = vunpack.c.h.b16 %v733
        %v4106 = vunpack.c.l.b16 %v734
        %v4107 = vunpack.c.h.b16 %v734
        %v4108 = vunpack.c.l.b16 %v735
        %v4109 = vunpack.c.h.b16 %v735
        %v4110 = vunpack.c.l.b16 %v736
        %v4111 = vunpack.c.h.b16 %v736
        %v4112 = vunpack.c.l.b16 %v737
        %v4113 = vunpack.c.h.b16 %v737
        %v4114 = vunpack.c.l.b16 %v738
        %v4115 = vunpack.c.h.b16 %v738
        %v4116 = vunpack.c.l.b16 %v739
        %v4117 = vunpack.c.h.b16 %v739
        %v4118 = vunpack.c.l.b16 %v740
        %v4119 = vunpack.c.h.b16 %v740
        %v4120 = vunpack.c.l.b16 %v741
        %v4121 = vunpack.c.h.b16 %v741
        %v4122 = vunpack.c.l.b16 %v742
        %v4123 = vunpack.c.h.b16 %v742
        %v4124 = vunpack.c.l.b16 %v743
        %v4125 = vunpack.c.h.b16 %v743
        %v4126 = vunpack.c.l.b16 %v744
        %v4127 = vunpack.c.h.b16 %v744
        %v4128 = vunpack.c.l.b16 %v745
        %v4129 = vunpack.c.h.b16 %v745
        %v4130 = vunpack.c.l.b16 %v746
        %v4131 = vunpack.c.h.b16 %v746
        %v4132 = vunpack.c.l.b16 %v747
        %v4133 = vunpack.c.h.b16 %v747
        %v4134 = vunpack.c.l.b16 %v748
        %v4135 = vunpack.c.h.b16 %v748
        %v4136 = vunpack.c.l.b16 %v749
        %v4137 = vunpack.c.h.b16 %v749
        %v4138 = vunpack.c.l.b16 %v750
        %v4139 = vunpack.c.h.b16 %v750
        %v4140 = vunpack.c.l.b16 %v751
        %v4141 = vunpack.c.h.b16 %v751
        %v4142 = vunpack.c.l.b16 %v752
        %v4143 = vunpack.c.h.b16 %v752
        %v4144 = vunpack.c.l.b16 %v753
        %v4145 = vunpack.c.h.b16 %v753
        %v4146 = vunpack.c.l.b16 %v754
        %v4147 = vunpack.c.h.b16 %v754
        %v4148 = vunpack.c.l.b16 %v755
        %v4149 = vunpack.c.h.b16 %v755
        %v4150 = vunpack.c.l.b16 %v756
        %v4151 = vunpack.c.h.b16 %v756
        %v4152 = vunpack.c.l.b16 %v757
        %v4153 = vunpack.c.h.b16 %v757
        %v4154 = vunpack.c.l.b16 %v758
        %v4155 = vunpack.c.h.b16 %v758
        %v4156 = vunpack.c.l.b16 %v759
        %v4157 = vunpack.c.h.b16 %v759
        %v4158 = vunpack.c.l.b16 %v760
        %v4159 = vunpack.c.h.b16 %v760
        %v4160 = vunpack.c.l.b16 %v761
        %v4161 = vunpack.c.h.b16 %v761
        %v4162 = vunpack.c.l.b16 %v762
        %v4163 = vunpack.c.h.b16 %v762
        %v4164 = vunpack.c.l.b16 %v763
        %v4165 = vunpack.c.h.b16 %v763
        %v4166 = vunpack.c.l.b16 %v764
        %v4167 = vunpack.c.h.b16 %v764
        %v4168 = vunpack.c.l.b16 %v765
        %v4169 = vunpack.c.h.b16 %v765
        %v4170 = vunpack.c.l.b16 %v766
        %v4171 = vunpack.c.h.b16 %v766
        %v4172 = vunpack.c.l.b16 %v767
        %v4173 = vunpack.c.h.b16 %v767
        %v4174 = vunpack.c.l.b16 %v768
        %v4175 = vunpack.c.h.b16 %v768
        %v4176 = vunpack.c.l.b16 %v769
        %v4177 = vunpack.c.h.b16 %v769
        %v4178 = vunpack.c.l.b16 %v770
        %v4179 = vunpack.c.h.b16 %v770
        %v4180 = vunpack.c.l.b16 %v771
        %v4181 = vunpack.c.h.b16 %v771
        %v4182 = vunpack.c.l.b16 %v772
        %v4183 = vunpack.c.h.b16 %v772
        %v4184 = vunpack.c.l.b16 %v773
        %v4185 = vunpack.c.h.b16 %v773
        %v4186 = vunpack.c.l.b16 %v774
        %v4187 = vunpack.c.h.b16 %v774
        %v4188 = vunpack.c.l.b16 %v775
        %v4189 = vunpack.c.h.b16 %v775
        %v4190 = vunpack.c.l.b16 %v776
        %v4191 = vunpack.c.h.b16 %v776
        %v4192 = vunpack.c.l.b16 %v777
        %v4193 = vunpack.c.h.b16 %v777
        %v4194 = vunpack.c.l.b16 %v778
        %v4195 = vunpack.c.h.b16 %v778
        %v4196 = vunpack.c.l.b16 %v779
        %v4197 = vunpack.c.h.b16 %v779
        %v4198 = vunpack.c.l.b16 %v780
        %v4199 = vunpack.c.h.b16 %v780
        %v4200 = vunpack.c.l.b16 %v781
        %v4201 = vunpack.c.h.b16 %v781
        %v4202 = vunpack.c.l.b16 %v782
        %v4203 = vunpack.c.h.b16 %v782
        %v4204 = vunpack.c.l.b16 %v783
        %v4205 = vunpack.c.h.b16 %v783
        %v4206 = vunpack.c.l.b16 %v784
        %v4207 = vunpack.c.h.b16 %v784
        %v4208 = vunpack.c.l.b16 %v785
        %v4209 = vunpack.c.h.b16 %v785
        %v4210 = vunpack.c.l.b16 %v786
        %v4211 = vunpack.c.h.b16 %v786
        %v4212 = vunpack.c.l.b16 %v787
        %v4213 = vunpack.c.h.b16 %v787
        %v4214 = vunpack.c.l.b16 %v788
        %v4215 = vunpack.c.h.b16 %v788
        %v4216 = vunpack.c.l.b16 %v789
        %v4217 = vunpack.c.h.b16 %v789
        %v4218 = vunpack.c.l.b16 %v790
        %v4219 = vunpack.c.h.b16 %v790
        %v4220 = vunpack.c.l.b16 %v791
        %v4221 = vunpack.c.h.b16 %v791
        %v4222 = vunpack.c.l.b16 %v792
        %v4223 = vunpack.c.h.b16 %v792
        %v4224 = vunpack.c.l.b16 %v793
        %v4225 = vunpack.c.h.b16 %v793
        %v4226 = vunpack.c.l.b16 %v794
        %v4227 = vunpack.c.h.b16 %v794
        %v4228 = vunpack.c.l.b16 %v795
        %v4229 = vunpack.c.h.b16 %v795
        %v4230 = vunpack.c.l.b16 %v796
        %v4231 = vunpack.c.h.b16 %v796
        %v4232 = vunpack.c.l.b16 %v797
        %v4233 = vunpack.c.h.b16 %v797
        %v4234 = vunpack.c.l.b16 %v798
        %v4235 = vunpack.c.h.b16 %v798
        %v4236 = vunpack.c.l.b16 %v799
        %v4237 = vunpack.c.h.b16 %v799
        %v4238 = vunpack.c.l.b16 %v800
        %v4239 = vunpack.c.h.b16 %v800
        %v4240 = vunpack.c.l.b16 %v801
        %v4241 = vunpack.c.h.b16 %v801
        %v4242 = vunpack.c.l.b16 %v802
        %v4243 = vunpack.c.h.b16 %v802
        %v4244 = vunpack.c.l.b16 %v803
        %v4245 = vunpack.c.h.b16 %v803
        %v4246 = vunpack.c.l.b16 %v804
        %v4247 = vunpack.c.h.b16 %v804
        %v4248 = vunpack.c.l.b16 %v805
        %v4249 = vunpack.c.h.b16 %v805
        %v4250 = vunpack.c.l.b16 %v806
        %v4251 = vunpack.c.h.b16 %v806
        %v4252 = vunpack.c.l.b16 %v807
        %v4253 = vunpack.c.h.b16 %v807
        %v4254 = vunpack.c.l.b16 %v808
        %v4255 = vunpack.c.h.b16 %v808
        %v4256 = vunpack.c.l.b16 %v809
        %v4257 = vunpack.c.h.b16 %v809
        %v4258 = vunpack.c.l.b16 %v810
        %v4259 = vunpack.c.h.b16 %v810
        %v4260 = vunpack.c.l.b16 %v811
        %v4261 = vunpack.c.h.b16 %v811
        %v4262 = vunpack.c.l.b16 %v812
        %v4263 = vunpack.c.h.b16 %v812
        %v4264 = vunpack.c.l.b16 %v813
        %v4265 = vunpack.c.h.b16 %v813
        %v4266 = vunpack.c.l.b16 %v814
        %v4267 = vunpack.c.h.b16 %v814
        %v4268 = vunpack.c.l.b16 %v815
        %v4269 = vunpack.c.h.b16 %v815
        %v4270 = vunpack.c.l.b16 %v816
        %v4271 = vunpack.c.h.b16 %v816
        %v4272 = vunpack.c.l.b16 %v817
        %v4273 = vunpack.c.h.b16 %v817
        %v4274 = vunpack.c.l.b16 %v818
        %v4275 = vunpack.c.h.b16 %v818
        %v4276 = vunpack.c.l.b16 %v819
        %v4277 = vunpack.c.h.b16 %v819
        %v4278 = vunpack.c.l.b16 %v820
        %v4279 = vunpack.c.h.b16 %v820
        %v4280 = vunpack.c.l.b16 %v821
        %v4281 = vunpack.c.h.b16 %v821
        %v4282 = vunpack.c.l.b16 %v822
        %v4283 = vunpack.c.h.b16 %v822
        %v4284 = vunpack.c.l.b16 %v823
        %v4285 = vunpack.c.h.b16 %v823
        %v4286 = vunpack.c.l.b16 %v824
        %v4287 = vunpack.c.h.b16 %v824
        %v4288 = vunpack.c.l.b16 %v825
        %v4289 = vunpack.c.h.b16 %v825
        %v4290 = vunpack.c.l.b16 %v826
        %v4291 = vunpack.c.h.b16 %v826
        %v4292 = vunpack.c.l.b16 %v827
        %v4293 = vunpack.c.h.b16 %v827
        %v4294 = vunpack.c.l.b16 %v828
        %v4295 = vunpack.c.h.b16 %v828
        %v4296 = vunpack.c.l.b16 %v829
        %v4297 = vunpack.c.h.b16 %v829
        %v4298 = vunpack.c.l.b16 %v830
        %v4299 = vunpack.c.h.b16 %v830
        %v4300 = vunpack.c.l.b16 %v831
        %v4301 = vunpack.c.h.b16 %v831
        %v4302 = vunpack.c.l.b16 %v832
        %v4303 = vunpack.c.h.b16 %v832
        %v4304 = vunpack.c.l.b16 %v833
        %v4305 = vunpack.c.h.b16 %v833
        %v4306 = vunpack.c.l.b16 %v834
        %v4307 = vunpack.c.h.b16 %v834
        %v4308 = vunpack.c.l.b16 %v835
        %v4309 = vunpack.c.h.b16 %v835
        %v4310 = vunpack.c.l.b16 %v836
        %v4311 = vunpack.c.h.b16 %v836
        %v4312 = vunpack.c.l.b16 %v837
        %v4313 = vunpack.c.h.b16 %v837
        %v4314 = vunpack.c.l.b16 %v838
        %v4315 = vunpack.c.h.b16 %v838
        %v4316 = vunpack.c.l.b16 %v839
        %v4317 = vunpack.c.h.b16 %v839
        %v4318 = vunpack.c.l.b16 %v840
        %v4319 = vunpack.c.h.b16 %v840
        %v4320 = vunpack.c.l.b16 %v841
        %v4321 = vunpack.c.h.b16 %v841
        %v4322 = vunpack.c.l.b16 %v842
        %v4323 = vunpack.c.h.b16 %v842
        %v4324 = vunpack.c.l.b16 %v843
        %v4325 = vunpack.c.h.b16 %v843
        %v4326 = vunpack.c.l.b16 %v844
        %v4327 = vunpack.c.h.b16 %v844
        %v4328 = vunpack.c.l.b16 %v845
        %v4329 = vunpack.c.h.b16 %v845
        %v4330 = vunpack.c.l.b16 %v846
        %v4331 = vunpack.c.h.b16 %v846
        %v4332 = vunpack.c.l.b16 %v847
        %v4333 = vunpack.c.h.b16 %v847
        %v4334 = vunpack.c.l.b16 %v848
        %v4335 = vunpack.c.h.b16 %v848
        %v4336 = vunpack.c.l.b16 %v849
        %v4337 = vunpack.c.h.b16 %v849
        %v4338 = vunpack.c.l.b16 %v850
        %v4339 = vunpack.c.h.b16 %v850
        %v4340 = vunpack.c.l.b16 %v851
        %v4341 = vunpack.c.h.b16 %v851
        %v4342 = vunpack.c.l.b16 %v852
        %v4343 = vunpack.c.h.b16 %v852
        %v4344 = vunpack.c.l.b16 %v853
        %v4345 = vunpack.c.h.b16 %v853
        %v4346 = vunpack.c.l.b16 %v854
        %v4347 = vunpack.c.h.b16 %v854
        %v4348 = vunpack.c.l.b16 %v855
        %v4349 = vunpack.c.h.b16 %v855
        %v4350 = vunpack.c.l.b16 %v856
        %v4351 = vunpack.c.h.b16 %v856
        %v4352 = vunpack.c.l.b16 %v857
        %v4353 = vunpack.c.h.b16 %v857
        %v4354 = vunpack.c.l.b16 %v858
        %v4355 = vunpack.c.h.b16 %v858
        %v4356 = vunpack.c.l.b16 %v859
        %v4357 = vunpack.c.h.b16 %v859
        %v4358 = vunpack.c.l.b16 %v860
        %v4359 = vunpack.c.h.b16 %v860
        %v4360 = vunpack.c.l.b16 %v861
        %v4361 = vunpack.c.h.b16 %v861
        %v4362 = vunpack.c.l.b16 %v862
        %v4363 = vunpack.c.h.b16 %v862
        %v4364 = vunpack.c.l.b16 %v863
        %v4365 = vunpack.c.h.b16 %v863
        %v4366 = vunpack.c.l.b16 %v864
        %v4367 = vunpack.c.h.b16 %v864
        %v4368 = vunpack.c.l.b16 %v865
        %v4369 = vunpack.c.h.b16 %v865
        %v4370 = vunpack.c.l.b16 %v866
        %v4371 = vunpack.c.h.b16 %v866
        %v4372 = vunpack.c.l.b16 %v867
        %v4373 = vunpack.c.h.b16 %v867
        %v4374 = vunpack.c.l.b16 %v868
        %v4375 = vunpack.c.h.b16 %v868
        %v4376 = vunpack.c.l.b16 %v869
        %v4377 = vunpack.c.h.b16 %v869
        %v4378 = vunpack.c.l.b16 %v870
        %v4379 = vunpack.c.h.b16 %v870
        %v4380 = vunpack.c.l.b16 %v871
        %v4381 = vunpack.c.h.b16 %v871
        %v4382 = vunpack.c.l.b16 %v872
        %v4383 = vunpack.c.h.b16 %v872
        %v4384 = vunpack.c.l.b16 %v873
        %v4385 = vunpack.c.h.b16 %v873
        %v4386 = vunpack.c.l.b16 %v874
        %v4387 = vunpack.c.h.b16 %v874
        %v4388 = vunpack.c.l.b16 %v875
        %v4389 = vunpack.c.h.b16 %v875
        %v4390 = vunpack.c.l.b16 %v876
        %v4391 = vunpack.c.h.b16 %v876
        %v4392 = vunpack.c.l.b16 %v877
        %v4393 = vunpack.c.h.b16 %v877
        %v4394 = vunpack.c.l.b16 %v878
        %v4395 = vunpack.c.h.b16 %v878
        %v4396 = vunpack.c.l.b16 %v879
        %v4397 = vunpack.c.h.b16 %v879
        %v4398 = vunpack.c.l.b16 %v880
        %v4399 = vunpack.c.h.b16 %v880
        %v4400 = vunpack.c.l.b16 %v881
        %v4401 = vunpack.c.h.b16 %v881
        %v4402 = vunpack.c.l.b16 %v882
        %v4403 = vunpack.c.h.b16 %v882
        %v4404 = vunpack.c.l.b16 %v883
        %v4405 = vunpack.c.h.b16 %v883
        %v4406 = vunpack.c.l.b16 %v884
        %v4407 = vunpack.c.h.b16 %v884
        %v4408 = vunpack.c.l.b16 %v885
        %v4409 = vunpack.c.h.b16 %v885
        %v4410 = vunpack.c.l.b16 %v886
        %v4411 = vunpack.c.h.b16 %v886
        %v4412 = vunpack.c.l.b16 %v887
        %v4413 = vunpack.c.h.b16 %v887
        %v4414 = vunpack.c.l.b16 %v888
        %v4415 = vunpack.c.h.b16 %v888
        %v4416 = vunpack.c.l.b16 %v889
        %v4417 = vunpack.c.h.b16 %v889
        %v4418 = vunpack.c.l.b16 %v890
        %v4419 = vunpack.c.h.b16 %v890
        %v4420 = vunpack.c.l.b16 %v891
        %v4421 = vunpack.c.h.b16 %v891
        %v4422 = vunpack.c.l.b16 %v892
        %v4423 = vunpack.c.h.b16 %v892
        %v4424 = vunpack.c.l.b16 %v893
        %v4425 = vunpack.c.h.b16 %v893
        %v4426 = vunpack.c.l.b16 %v894
        %v4427 = vunpack.c.h.b16 %v894
        %v4428 = vunpack.c.l.b16 %v895
        %v4429 = vunpack.c.h.b16 %v895
        %v4430 = vunpack.c.l.b16 %v896
        %v4431 = vunpack.c.h.b16 %v896
        %v4432 = vunpack.c.l.b16 %v897
        %v4433 = vunpack.c.h.b16 %v897
        %v4434 = vunpack.c.l.b16 %v898
        %v4435 = vunpack.c.h.b16 %v898
        %v4436 = vunpack.c.l.b16 %v899
        %v4437 = vunpack.c.h.b16 %v899
        %v4438 = vunpack.c.l.b16 %v900
        %v4439 = vunpack.c.h.b16 %v900
        %v4440 = vunpack.c.l.b16 %v901
        %v4441 = vunpack.c.h.b16 %v901
        %v4442 = vunpack.c.l.b16 %v902
        %v4443 = vunpack.c.h.b16 %v902
        %v4444 = vunpack.c.l.b16 %v903
        %v4445 = vunpack.c.h.b16 %v903
        %v4446 = vunpack.c.l.b16 %v904
        %v4447 = vunpack.c.h.b16 %v904
        %v4448 = vunpack.c.l.b16 %v905
        %v4449 = vunpack.c.h.b16 %v905
        %v4450 = vunpack.c.l.b16 %v906
        %v4451 = vunpack.c.h.b16 %v906
        %v4452 = vunpack.c.l.b16 %v907
        %v4453 = vunpack.c.h.b16 %v907
        %v4454 = vunpack.c.l.b16 %v908
        %v4455 = vunpack.c.h.b16 %v908
        %v4456 = vunpack.c.l.b16 %v909
        %v4457 = vunpack.c.h.b16 %v909
        %v4458 = vunpack.c.l.b16 %v910
        %v4459 = vunpack.c.h.b16 %v910
        %v4460 = vunpack.c.l.b16 %v911
        %v4461 = vunpack.c.h.b16 %v911
        %v4462 = vunpack.c.l.b16 %v912
        %v4463 = vunpack.c.h.b16 %v912
        %v4464 = vunpack.c.l.b16 %v913
        %v4465 = vunpack.c.h.b16 %v913
        %v4466 = vunpack.c.l.b16 %v914
        %v4467 = vunpack.c.h.b16 %v914
        %v4468 = vunpack.c.l.b16 %v915
        %v4469 = vunpack.c.h.b16 %v915
        %v4470 = vunpack.c.l.b16 %v916
        %v4471 = vunpack.c.h.b16 %v916
        %v4472 = vunpack.c.l.b16 %v917
        %v4473 = vunpack.c.h.b16 %v917
        %v4474 = vunpack.c.l.b16 %v918
        %v4475 = vunpack.c.h.b16 %v918
        %v4476 = vunpack.c.l.b16 %v919
        %v4477 = vunpack.c.h.b16 %v919
        %v4478 = vunpack.c.l.b16 %v920
        %v4479 = vunpack.c.h.b16 %v920
        %v4480 = vunpack.c.l.b16 %v921
        %v4481 = vunpack.c.h.b16 %v921
        %v4482 = vunpack.c.l.b16 %v922
        %v4483 = vunpack.c.h.b16 %v922
        %v4484 = vunpack.c.l.b16 %v923
        %v4485 = vunpack.c.h.b16 %v923
        %v4486 = vunpack.c.l.b16 %v924
        %v4487 = vunpack.c.h.b16 %v924
        %v4488 = vunpack.c.l.b16 %v925
        %v4489 = vunpack.c.h.b16 %v925
        %v4490 = vunpack.c.l.b16 %v926
        %v4491 = vunpack.c.h.b16 %v926
        %v4492 = vunpack.c.l.b16 %v927
        %v4493 = vunpack.c.h.b16 %v927
        %v4494 = vunpack.c.l.b16 %v928
        %v4495 = vunpack.c.h.b16 %v928
        %v4496 = vunpack.c.l.b16 %v929
        %v4497 = vunpack.c.h.b16 %v929
        %v4498 = vunpack.c.l.b16 %v930
        %v4499 = vunpack.c.h.b16 %v930
        %v4500 = vunpack.c.l.b16 %v931
        %v4501 = vunpack.c.h.b16 %v931
        %v4502 = vunpack.c.l.b16 %v932
        %v4503 = vunpack.c.h.b16 %v932
        %v4504 = vunpack.c.l.b16 %v933
        %v4505 = vunpack.c.h.b16 %v933
        %v4506 = vunpack.c.l.b16 %v934
        %v4507 = vunpack.c.h.b16 %v934
        %v4508 = vunpack.c.l.b16 %v935
        %v4509 = vunpack.c.h.b16 %v935
        %v4510 = vunpack.c.l.b16 %v936
        %v4511 = vunpack.c.h.b16 %v936
        %v4512 = vunpack.c.l.b16 %v937
        %v4513 = vunpack.c.h.b16 %v937
        %v4514 = vunpack.c.l.b16 %v938
        %v4515 = vunpack.c.h.b16 %v938
        %v4516 = vunpack.c.l.b16 %v939
        %v4517 = vunpack.c.h.b16 %v939
        %v4518 = vunpack.c.l.b16 %v940
        %v4519 = vunpack.c.h.b16 %v940
        %v4520 = vunpack.c.l.b16 %v941
        %v4521 = vunpack.c.h.b16 %v941
        %v4522 = vunpack.c.l.b16 %v942
        %v4523 = vunpack.c.h.b16 %v942
        %v4524 = vunpack.c.l.b16 %v943
        %v4525 = vunpack.c.h.b16 %v943
        %v4526 = vunpack.c.l.b16 %v944
        %v4527 = vunpack.c.h.b16 %v944
        %v4528 = vunpack.c.l.b16 %v945
        %v4529 = vunpack.c.h.b16 %v945
        %v4530 = vunpack.c.l.b16 %v946
        %v4531 = vunpack.c.h.b16 %v946
        %v4532 = vunpack.c.l.b16 %v947
        %v4533 = vunpack.c.h.b16 %v947
        %v4534 = vunpack.c.l.b16 %v948
        %v4535 = vunpack.c.h.b16 %v948
        %v4536 = vunpack.c.l.b16 %v949
        %v4537 = vunpack.c.h.b16 %v949
        %v4538 = vunpack.c.l.b16 %v950
        %v4539 = vunpack.c.h.b16 %v950
        %v4540 = vunpack.c.l.b16 %v951
        %v4541 = vunpack.c.h.b16 %v951
        %v4542 = vunpack.c.l.b16 %v952
        %v4543 = vunpack.c.h.b16 %v952
        %v4544 = vunpack.c.l.b16 %v953
        %v4545 = vunpack.c.h.b16 %v953
        %v4546 = vunpack.c.l.b16 %v954
        %v4547 = vunpack.c.h.b16 %v954
        %v4548 = vunpack.c.l.b16 %v955
        %v4549 = vunpack.c.h.b16 %v955
        %v4550 = vunpack.c.l.b16 %v956
        %v4551 = vunpack.c.h.b16 %v956
        %v4552 = vunpack.c.l.b16 %v957
        %v4553 = vunpack.c.h.b16 %v957
        %v4554 = vunpack.c.l.b16 %v958
        %v4555 = vunpack.c.h.b16 %v958
        %v4556 = vunpack.c.l.b16 %v959
        %v4557 = vunpack.c.h.b16 %v959
        %v4558 = vunpack.c.l.b16 %v960
        %v4559 = vunpack.c.h.b16 %v960
        %v4560 = vunpack.c.l.b16 %v961
        %v4561 = vunpack.c.h.b16 %v961
        %v4562 = vunpack.c.l.b16 %v962
        %v4563 = vunpack.c.h.b16 %v962
        %v4564 = vunpack.c.l.b16 %v963
        %v4565 = vunpack.c.h.b16 %v963
        %v4566 = vunpack.c.l.b16 %v964
        %v4567 = vunpack.c.h.b16 %v964
        %v4568 = vunpack.c.l.b16 %v965
        %v4569 = vunpack.c.h.b16 %v965
        %v4570 = vunpack.c.l.b16 %v966
        %v4571 = vunpack.c.h.b16 %v966
        %v4572 = vunpack.c.l.b16 %v967
        %v4573 = vunpack.c.h.b16 %v967
        %v4574 = vunpack.c.l.b16 %v968
        %v4575 = vunpack.c.h.b16 %v968
        %v4576 = vunpack.c.l.b16 %v969
        %v4577 = vunpack.c.h.b16 %v969
        %v4578 = vunpack.c.l.b16 %v970
        %v4579 = vunpack.c.h.b16 %v970
        %v4580 = vunpack.c.l.b16 %v971
        %v4581 = vunpack.c.h.b16 %v971
        %v4582 = vunpack.c.l.b16 %v972
        %v4583 = vunpack.c.h.b16 %v972
        %v4584 = vunpack.c.l.b16 %v973
        %v4585 = vunpack.c.h.b16 %v973
        %v4586 = vunpack.c.l.b16 %v974
        %v4587 = vunpack.c.h.b16 %v974
        %v4588 = vunpack.c.l.b16 %v975
        %v4589 = vunpack.c.h.b16 %v975
        %v4590 = vunpack.c.l.b16 %v976
        %v4591 = vunpack.c.h.b16 %v976
        %v4592 = vunpack.c.l.b16 %v977
        %v4593 = vunpack.c.h.b16 %v977
        %v4594 = vunpack.c.l.b16 %v978
        %v4595 = vunpack.c.h.b16 %v978
        %v4596 = vunpack.c.l.b16 %v979
        %v4597 = vunpack.c.h.b16 %v979
        %v4598 = vunpack.c.l.b16 %v980
        %v4599 = vunpack.c.h.b16 %v980
        %v4600 = vunpack.c.l.b16 %v981
        %v4601 = vunpack.c.h.b16 %v981
        %v4602 = vunpack.c.l.b16 %v982
        %v4603 = vunpack.c.h.b16 %v982
        %v4604 = vunpack.c.l.b16 %v983
        %v4605 = vunpack.c.h.b16 %v983
        %v4606 = vunpack.c.l.b16 %v984
        %v4607 = vunpack.c.h.b16 %v984
        %v4608 = vunpack.c.l.b16 %v985
        %v4609 = vunpack.c.h.b16 %v985
        %v4610 = vunpack.c.l.b16 %v986
        %v4611 = vunpack.c.h.b16 %v986
        %v4612 = vunpack.c.l.b16 %v987
        %v4613 = vunpack.c.h.b16 %v987
        %v4614 = vunpack.c.l.b16 %v988
        %v4615 = vunpack.c.h.b16 %v988
        %v4616 = vunpack.c.l.b16 %v989
        %v4617 = vunpack.c.h.b16 %v989
        %v4618 = vunpack.c.l.b16 %v990
        %v4619 = vunpack.c.h.b16 %v990
        %v4620 = vunpack.c.l.b16 %v991
        %v4621 = vunpack.c.h.b16 %v991
        %v4622 = vunpack.c.l.b16 %v992
        %v4623 = vunpack.c.h.b16 %v992
        %v4624 = vunpack.c.l.b16 %v993
        %v4625 = vunpack.c.h.b16 %v993
        %v4626 = vunpack.c.l.b16 %v994
        %v4627 = vunpack.c.h.b16 %v994
        %v4628 = vunpack.c.l.b16 %v995
        %v4629 = vunpack.c.h.b16 %v995
        %v4630 = vunpack.c.l.b16 %v996
        %v4631 = vunpack.c.h.b16 %v996
        %v4632 = vunpack.c.l.b16 %v997
        %v4633 = vunpack.c.h.b16 %v997
        %v4634 = vunpack.c.l.b16 %v998
        %v4635 = vunpack.c.h.b16 %v998
        %v4636 = vunpack.c.l.b16 %v999
        %v4637 = vunpack.c.h.b16 %v999
        %v4638 = vunpack.c.l.b16 %v1000
        %v4639 = vunpack.c.h.b16 %v1000
        %v4640 = vunpack.c.l.b16 %v1001
        %v4641 = vunpack.c.h.b16 %v1001
        %v4642 = vunpack.c.l.b16 %v1002
        %v4643 = vunpack.c.h.b16 %v1002
        %v4644 = vunpack.c.l.b16 %v1003
        %v4645 = vunpack.c.h.b16 %v1003
        %v4646 = vunpack.c.l.b16 %v1004
        %v4647 = vunpack.c.h.b16 %v1004
        %v4648 = vunpack.c.l.b16 %v1005
        %v4649 = vunpack.c.h.b16 %v1005
        %v4650 = vunpack.c.l.b16 %v1006
        %v4651 = vunpack.c.h.b16 %v1006
        %v4652 = vunpack.c.l.b16 %v1007
        %v4653 = vunpack.c.h.b16 %v1007
        %v4654 = vunpack.c.l.b16 %v1008
        %v4655 = vunpack.c.h.b16 %v1008
        %v4656 = vunpack.c.l.b16 %v1009
        %v4657 = vunpack.c.h.b16 %v1009
        %v4658 = vunpack.c.l.b16 %v1010
        %v4659 = vunpack.c.h.b16 %v1010
        %v4660 = vunpack.c.l.b16 %v1011
        %v4661 = vunpack.c.h.b16 %v1011
        %v4662 = vunpack.c.l.b16 %v1012
        %v4663 = vunpack.c.h.b16 %v1012
        %v4664 = vunpack.c.l.b16 %v1013
        %v4665 = vunpack.c.h.b16 %v1013
        %v4666 = vunpack.c.l.b16 %v1014
        %v4667 = vunpack.c.h.b16 %v1014
        %v4668 = vunpack.c.l.b16 %v1015
        %v4669 = vunpack.c.h.b16 %v1015
        %v4670 = vunpack.c.l.b16 %v1016
        %v4671 = vunpack.c.h.b16 %v1016
        %v4672 = vunpack.c.l.b16 %v1017
        %v4673 = vunpack.c.h.b16 %v1017
        %v4674 = vunpack.c.l.b16 %v1018
        %v4675 = vunpack.c.h.b16 %v1018
        %v4676 = vunpack.c.l.b16 %v1019
        %v4677 = vunpack.c.h.b16 %v1019
        %v4678 = vunpack.c.l.b16 %v1020
        %v4679 = vunpack.c.h.b16 %v1020
        %v4680 = vunpack.c.l.b16 %v1021
        %v4681 = vunpack.c.h.b16 %v1021
        %v4682 = vunpack.c.l.b16 %v1022
        %v4683 = vunpack.c.h.b16 %v1022
        %v4684 = vunpack.c.l.b16 %v1023
        %v4685 = vunpack.c.h.b16 %v1023
        %v4686 = vunpack.c.l.b16 %v1024
        %v4687 = vunpack.c.h.b16 %v1024
        %v4688 = vunpack.c.l.b16 %v1025
        %v4689 = vunpack.c.h.b16 %v1025
        %v4690 = vunpack.c.l.b16 %v1026
        %v4691 = vunpack.c.h.b16 %v1026
        %v4692 = vunpack.c.l.b16 %v1027
        %v4693 = vunpack.c.h.b16 %v1027
        %v4694 = vunpack.c.l.b16 %v1028
        %v4695 = vunpack.c.h.b16 %v1028
        %v4696 = vunpack.c.l.b16 %v1029
        %v4697 = vunpack.c.h.b16 %v1029
        %v4698 = vunpack.c.l.b16 %v1030
        %v4699 = vunpack.c.h.b16 %v1030
        %v4700 = vunpack.c.l.b16 %v1031
        %v4701 = vunpack.c.h.b16 %v1031
        %v4702 = vunpack.c.l.b16 %v1032
        %v4703 = vunpack.c.h.b16 %v1032
        %v4704 = vunpack.c.l.b16 %v1033
        %v4705 = vunpack.c.h.b16 %v1033
        %v4706 = vunpack.c.l.b16 %v1034
        %v4707 = vunpack.c.h.b16 %v1034
        %v4708 = vunpack.c.l.b16 %v1035
        %v4709 = vunpack.c.h.b16 %v1035
        %v4710 = vunpack.c.l.b16 %v1036
        %v4711 = vunpack.c.h.b16 %v1036
        %v4712 = vunpack.c.l.b16 %v1037
        %v4713 = vunpack.c.h.b16 %v1037
        %v4714 = vunpack.c.l.b16 %v1038
        %v4715 = vunpack.c.h.b16 %v1038
        %v4716 = vunpack.c.l.b16 %v1039
        %v4717 = vunpack.c.h.b16 %v1039
        %v4718 = vunpack.c.l.b16 %v1040
        %v4719 = vunpack.c.h.b16 %v1040
        %v4720 = vunpack.c.l.b16 %v1041
        %v4721 = vunpack.c.h.b16 %v1041
        %v4722 = vunpack.c.l.b16 %v1042
        %v4723 = vunpack.c.h.b16 %v1042
        %v4724 = vunpack.c.l.b16 %v1043
        %v4725 = vunpack.c.h.b16 %v1043
        %v4726 = vunpack.c.l.b16 %v1044
        %v4727 = vunpack.c.h.b16 %v1044
        %v4728 = vunpack.c.l.b16 %v1045
        %v4729 = vunpack.c.h.b16 %v1045
        %v4730 = vunpack.c.l.b16 %v1046
        %v4731 = vunpack.c.h.b16 %v1046
        %v4732 = vunpack.c.l.b16 %v1047
        %v4733 = vunpack.c.h.b16 %v1047
        %v4734 = vunpack.c.l.b16 %v1048
        %v4735 = vunpack.c.h.b16 %v1048
        %v4736 = vunpack.c.l.b16 %v1049
        %v4737 = vunpack.c.h.b16 %v1049
        %v4738 = vunpack.c.l.b16 %v1050
        %v4739 = vunpack.c.h.b16 %v1050
        %v4740 = vunpack.c.l.b16 %v1051
        %v4741 = vunpack.c.h.b16 %v1051
        %v4742 = vunpack.c.l.b16 %v1052
        %v4743 = vunpack.c.h.b16 %v1052
        %v4744 = vunpack.c.l.b16 %v1053
        %v4745 = vunpack.c.h.b16 %v1053
        %v4746 = vunpack.c.l.b16 %v1054
        %v4747 = vunpack.c.h.b16 %v1054
        %v4748 = vunpack.c.l.b16 %v1055
        %v4749 = vunpack.c.h.b16 %v1055
        %v4750 = vunpack.c.l.b16 %v1056
        %v4751 = vunpack.c.h.b16 %v1056
        %v4752 = vunpack.c.l.b16 %v1057
        %v4753 = vunpack.c.h.b16 %v1057
        %v4754 = vunpack.c.l.b16 %v1058
        %v4755 = vunpack.c.h.b16 %v1058
        %v4756 = vunpack.c.l.b16 %v1059
        %v4757 = vunpack.c.h.b16 %v1059
        %v4758 = vunpack.c.l.b16 %v1060
        %v4759 = vunpack.c.h.b16 %v1060
        %v4760 = vunpack.c.l.b16 %v1061
        %v4761 = vunpack.c.h.b16 %v1061
        %v4762 = vunpack.c.l.b16 %v1062
        %v4763 = vunpack.c.h.b16 %v1062
        %v4764 = vunpack.c.l.b16 %v1063
        %v4765 = vunpack.c.h.b16 %v1063
        %v4766 = vunpack.c.l.b16 %v1064
        %v4767 = vunpack.c.h.b16 %v1064
        %v4768 = vunpack.c.l.b16 %v1065
        %v4769 = vunpack.c.h.b16 %v1065
        %v4770 = vunpack.c.l.b16 %v1066
        %v4771 = vunpack.c.h.b16 %v1066
        %v4772 = vunpack.c.l.b16 %v1067
        %v4773 = vunpack.c.h.b16 %v1067
        %v4774 = vunpack.c.l.b16 %v1068
        %v4775 = vunpack.c.h.b16 %v1068
        %v4776 = vunpack.c.l.b16 %v1069
        %v4777 = vunpack.c.h.b16 %v1069
        %v4778 = vunpack.c.l.b16 %v1070
        %v4779 = vunpack.c.h.b16 %v1070
        %v4780 = vunpack.c.l.b16 %v1071
        %v4781 = vunpack.c.h.b16 %v1071
        %v4782 = vunpack.c.l.b16 %v1072
        %v4783 = vunpack.c.h.b16 %v1072
        %v4784 = vunpack.c.l.b16 %v1073
        %v4785 = vunpack.c.h.b16 %v1073
        %v4786 = vunpack.c.l.b16 %v1074
        %v4787 = vunpack.c.h.b16 %v1074
        %v4788 = vunpack.c.l.b16 %v1075
        %v4789 = vunpack.c.h.b16 %v1075
        %v4790 = vunpack.c.l.b16 %v1076
        %v4791 = vunpack.c.h.b16 %v1076
        %v4792 = vunpack.c.l.b16 %v1077
        %v4793 = vunpack.c.h.b16 %v1077
        %v4794 = vunpack.c.l.b16 %v1078
        %v4795 = vunpack.c.h.b16 %v1078
        %v4796 = vunpack.c.l.b16 %v1079
        %v4797 = vunpack.c.h.b16 %v1079
        %v4798 = vunpack.c.l.b16 %v1080
        %v4799 = vunpack.c.h.b16 %v1080
        %v4800 = vunpack.c.l.b16 %v1081
        %v4801 = vunpack.c.h.b16 %v1081
        %v4802 = vunpack.c.l.b16 %v1082
        %v4803 = vunpack.c.h.b16 %v1082
        %v4804 = vunpack.c.l.b16 %v1083
        %v4805 = vunpack.c.h.b16 %v1083
        %v4806 = vunpack.c.l.b16 %v1084
        %v4807 = vunpack.c.h.b16 %v1084
        %v4808 = vunpack.c.l.b16 %v1085
        %v4809 = vunpack.c.h.b16 %v1085
        %v4810 = vunpack.c.l.b16 %v1086
        %v4811 = vunpack.c.h.b16 %v1086
        %v4812 = vunpack.c.l.b16 %v1087
        %v4813 = vunpack.c.h.b16 %v1087
        %v4814 = vunpack.c.l.b16 %v1088
        %v4815 = vunpack.c.h.b16 %v1088
        %v4816 = vunpack.c.l.b16 %v1089
        %v4817 = vunpack.c.h.b16 %v1089
        %v4818 = vunpack.c.l.b16 %v1090
        %v4819 = vunpack.c.h.b16 %v1090
        %v4820 = vunpack.c.l.b16 %v1091
        %v4821 = vunpack.c.h.b16 %v1091
        %v4822 = vunpack.c.l.b16 %v1092
        %v4823 = vunpack.c.h.b16 %v1092
        %v4824 = vunpack.c.l.b16 %v1093
        %v4825 = vunpack.c.h.b16 %v1093
        %v4826 = vunpack.c.l.b16 %v1094
        %v4827 = vunpack.c.h.b16 %v1094
        %v4828 = vunpack.c.l.b16 %v1095
        %v4829 = vunpack.c.h.b16 %v1095
        %v4830 = vunpack.c.l.b16 %v1096
        %v4831 = vunpack.c.h.b16 %v1096
        %v4832 = vunpack.c.l.b16 %v1097
        %v4833 = vunpack.c.h.b16 %v1097
        %v4834 = vunpack.c.l.b16 %v1098
        %v4835 = vunpack.c.h.b16 %v1098
        %v4836 = vunpack.c.l.b16 %v1099
        %v4837 = vunpack.c.h.b16 %v1099
        %v4838 = vunpack.c.l.b16 %v1100
        %v4839 = vunpack.c.h.b16 %v1100
        %v4840 = vunpack.c.l.b16 %v1101
        %v4841 = vunpack.c.h.b16 %v1101
        %v4842 = vunpack.c.l.b16 %v1102
        %v4843 = vunpack.c.h.b16 %v1102
        %v4844 = vunpack.c.l.b16 %v1103
        %v4845 = vunpack.c.h.b16 %v1103
        %v4846 = vunpack.c.l.b16 %v1104
        %v4847 = vunpack.c.h.b16 %v1104
        %v4848 = vunpack.c.l.b16 %v1105
        %v4849 = vunpack.c.h.b16 %v1105
        %v4850 = vunpack.c.l.b16 %v1106
        %v4851 = vunpack.c.h.b16 %v1106
        %v4852 = vunpack.c.l.b16 %v1107
        %v4853 = vunpack.c.h.b16 %v1107
        %v4854 = vunpack.c.l.b16 %v1108
        %v4855 = vunpack.c.h.b16 %v1108
        %v4856 = vunpack.c.l.b16 %v1109
        %v4857 = vunpack.c.h.b16 %v1109
        %v4858 = vunpack.c.l.b16 %v1110
        %v4859 = vunpack.c.h.b16 %v1110
        %v4860 = vunpack.c.l.b16 %v1111
        %v4861 = vunpack.c.h.b16 %v1111
        %v4862 = vunpack.c.l.b16 %v1112
        %v4863 = vunpack.c.h.b16 %v1112
        %v4864 = vunpack.c.l.b16 %v1113
        %v4865 = vunpack.c.h.b16 %v1113
        %v4866 = vunpack.c.l.b16 %v1114
        %v4867 = vunpack.c.h.b16 %v1114
        %v4868 = vunpack.c.l.b16 %v1115
        %v4869 = vunpack.c.h.b16 %v1115
        %v4870 = vunpack.c.l.b16 %v1116
        %v4871 = vunpack.c.h.b16 %v1116
        %v4872 = vunpack.c.l.b16 %v1117
        %v4873 = vunpack.c.h.b16 %v1117
        %v4874 = vunpack.c.l.b16 %v1118
        %v4875 = vunpack.c.h.b16 %v1118
        %v4876 = vunpack.c.l.b16 %v1119
        %v4877 = vunpack.c.h.b16 %v1119
        %v4878 = vunpack.c.l.b16 %v1120
        %v4879 = vunpack.c.h.b16 %v1120
        %v4880 = vunpack.c.l.b16 %v1121
        %v4881 = vunpack.c.h.b16 %v1121
        %v4882 = vunpack.c.l.b16 %v1122
        %v4883 = vunpack.c.h.b16 %v1122
        %v4884 = vunpack.c.l.b16 %v1123
        %v4885 = vunpack.c.h.b16 %v1123
        %v4886 = vunpack.c.l.b16 %v1124
        %v4887 = vunpack.c.h.b16 %v1124
        %v4888 = vunpack.c.l.b16 %v1125
        %v4889 = vunpack.c.h.b16 %v1125
        %v4890 = vunpack.c.l.b16 %v1126
        %v4891 = vunpack.c.h.b16 %v1126
        %v4892 = vunpack.c.l.b16 %v1127
        %v4893 = vunpack.c.h.b16 %v1127
        %v4894 = vunpack.c.l.b16 %v1128
        %v4895 = vunpack.c.h.b16 %v1128
        %v4896 = vunpack.c.l.b16 %v1129
        %v4897 = vunpack.c.h.b16 %v1129
        %v4898 = vunpack.c.l.b16 %v1130
        %v4899 = vunpack.c.h.b16 %v1130
        %v4900 = vunpack.c.l.b16 %v1131
        %v4901 = vunpack.c.h.b16 %v1131
        %v4902 = vunpack.c.l.b16 %v1132
        %v4903 = vunpack.c.h.b16 %v1132
        %v4904 = vunpack.c.l.b16 %v1133
        %v4905 = vunpack.c.h.b16 %v1133
        %v4906 = vunpack.c.l.b16 %v1134
        %v4907 = vunpack.c.h.b16 %v1134
        %v4908 = vunpack.c.l.b16 %v1135
        %v4909 = vunpack.c.h.b16 %v1135
        %v4910 = vunpack.c.l.b16 %v1136
        %v4911 = vunpack.c.h.b16 %v1136
        %v4912 = vunpack.c.l.b16 %v1137
        %v4913 = vunpack.c.h.b16 %v1137
        %v4914 = vunpack.c.l.b16 %v1138
        %v4915 = vunpack.c.h.b16 %v1138
        %v4916 = vunpack.c.l.b16 %v1139
        %v4917 = vunpack.c.h.b16 %v1139
        %v4918 = vunpack.c.l.b16 %v1140
        %v4919 = vunpack.c.h.b16 %v1140
        %v4920 = vunpack.c.l.b16 %v1141
        %v4921 = vunpack.c.h.b16 %v1141
        %v4922 = vunpack.c.l.b16 %v1142
        %v4923 = vunpack.c.h.b16 %v1142
        %v4924 = vunpack.c.l.b16 %v1143
        %v4925 = vunpack.c.h.b16 %v1143
        %v4926 = vunpack.c.l.b16 %v1144
        %v4927 = vunpack.c.h.b16 %v1144
        %v4928 = vunpack.c.l.b16 %v1145
        %v4929 = vunpack.c.h.b16 %v1145
        %v4930 = vunpack.c.l.b16 %v1146
        %v4931 = vunpack.c.h.b16 %v1146
        %v4932 = vunpack.c.l.b16 %v1147
        %v4933 = vunpack.c.h.b16 %v1147
        %v4934 = vunpack.c.l.b16 %v1148
        %v4935 = vunpack.c.h.b16 %v1148
        %v4936 = vunpack.c.l.b16 %v1149
        %v4937 = vunpack.c.h.b16 %v1149
        %v4938 = vunpack.c.l.b16 %v1150
        %v4939 = vunpack.c.h.b16 %v1150
        %v4940 = vunpack.c.l.b16 %v1151
        %v4941 = vunpack.c.h.b16 %v1151
        %v4942 = vunpack.c.l.b16 %v1152
        %v4943 = vunpack.c.h.b16 %v1152
        %v4944 = vunpack.c.l.b16 %v1153
        %v4945 = vunpack.c.h.b16 %v1153
        %v4946 = vunpack.c.l.b16 %v1154
        %v4947 = vunpack.c.h.b16 %v1154
        %v4948 = vunpack.c.l.b16 %v1155
        %v4949 = vunpack.c.h.b16 %v1155
        %v4950 = vunpack.c.l.b16 %v1156
        %v4951 = vunpack.c.h.b16 %v1156
        %v4952 = vunpack.c.l.b16 %v1157
        %v4953 = vunpack.c.h.b16 %v1157
        %v4954 = vunpack.c.l.b16 %v1158
        %v4955 = vunpack.c.h.b16 %v1158
        %v4956 = vunpack.c.l.b16 %v1159
        %v4957 = vunpack.c.h.b16 %v1159
        %v4958 = vunpack.c.l.b16 %v1160
        %v4959 = vunpack.c.h.b16 %v1160
        %v4960 = vunpack.c.l.b16 %v1161
        %v4961 = vunpack.c.h.b16 %v1161
        %v4962 = vunpack.c.l.b16 %v1162
        %v4963 = vunpack.c.h.b16 %v1162
        %v4964 = vunpack.c.l.b16 %v1163
        %v4965 = vunpack.c.h.b16 %v1163
        %v4966 = vunpack.c.l.b16 %v1164
        %v4967 = vunpack.c.h.b16 %v1164
        %v4968 = vunpack.c.l.b16 %v1165
        %v4969 = vunpack.c.h.b16 %v1165
        %v4970 = vunpack.c.l.b16 %v1166
        %v4971 = vunpack.c.h.b16 %v1166
        %v4972 = vunpack.c.l.b16 %v1167
        %v4973 = vunpack.c.h.b16 %v1167
        %v4974 = vunpack.c.l.b16 %v1168
        %v4975 = vunpack.c.h.b16 %v1168
        %v4976 = vunpack.c.l.b16 %v1169
        %v4977 = vunpack.c.h.b16 %v1169
        %v4978 = vunpack.c.l.b16 %v1170
        %v4979 = vunpack.c.h.b16 %v1170
        %v4980 = vunpack.c.l.b16 %v1171
        %v4981 = vunpack.c.h.b16 %v1171
        %v4982 = vunpack.c.l.b16 %v1172
        %v4983 = vunpack.c.h.b16 %v1172
        %v4984 = vunpack.c.l.b16 %v1173
        %v4985 = vunpack.c.h.b16 %v1173
        %v4986 = vunpack.c.l.b16 %v1174
        %v4987 = vunpack.c.h.b16 %v1174
        %v4988 = vunpack.c.l.b16 %v1175
        %v4989 = vunpack.c.h.b16 %v1175
        %v4990 = vunpack.c.l.b16 %v1176
        %v4991 = vunpack.c.h.b16 %v1176
        %v4992 = vunpack.c.l.b16 %v1177
        %v4993 = vunpack.c.h.b16 %v1177
        %v4994 = vunpack.c.l.b16 %v1178
        %v4995 = vunpack.c.h.b16 %v1178
        %v4996 = vunpack.c.l.b16 %v1179
        %v4997 = vunpack.c.h.b16 %v1179
        %v4998 = vunpack.c.l.b16 %v1180
        %v4999 = vunpack.c.h.b16 %v1180
        %v5000 = vunpack.c.l.b16 %v1181
        %v5001 = vunpack.c.h.b16 %v1181
        %v5002 = vunpack.c.l.b16 %v1182
        %v5003 = vunpack.c.h.b16 %v1182
        %v5004 = vunpack.c.l.b16 %v1183
        %v5005 = vunpack.c.h.b16 %v1183
        %v5006 = vunpack.c.l.b16 %v1184
        %v5007 = vunpack.c.h.b16 %v1184
        %v5008 = vunpack.c.l.b16 %v1185
        %v5009 = vunpack.c.h.b16 %v1185
        %v5010 = vunpack.c.l.b16 %v1186
        %v5011 = vunpack.c.h.b16 %v1186
        %v5012 = vunpack.c.l.b16 %v1187
        %v5013 = vunpack.c.h.b16 %v1187
        %v5014 = vunpack.c.l.b16 %v1188
        %v5015 = vunpack.c.h.b16 %v1188
        %v5016 = vunpack.c.l.b16 %v1189
        %v5017 = vunpack.c.h.b16 %v1189
        %v5018 = vunpack.c.l.b16 %v1190
        %v5019 = vunpack.c.h.b16 %v1190
        %v5020 = vunpack.c.l.b16 %v1191
        %v5021 = vunpack.c.h.b16 %v1191
        %v5022 = vunpack.c.l.b16 %v1192
        %v5023 = vunpack.c.h.b16 %v1192
        %v5024 = vunpack.c.l.b16 %v1193
        %v5025 = vunpack.c.h.b16 %v1193
        %v5026 = vunpack.c.l.b16 %v1194
        %v5027 = vunpack.c.h.b16 %v1194
        %v5028 = vunpack.c.l.b16 %v1195
        %v5029 = vunpack.c.h.b16 %v1195
        %v5030 = vunpack.c.l.b16 %v1196
        %v5031 = vunpack.c.h.b16 %v1196
        %v5032 = vunpack.c.l.b16 %v1197
        %v5033 = vunpack.c.h.b16 %v1197
        %v5034 = vunpack.c.l.b16 %v1198
        %v5035 = vunpack.c.h.b16 %v1198
        %v5036 = vunpack.c.l.b16 %v1199
        %v5037 = vunpack.c.h.b16 %v1199
        %v5038 = vunpack.c.l.b16 %v1200
        %v5039 = vunpack.c.h.b16 %v1200
        %v5040 = vunpack.c.l.b16 %v1201
        %v5041 = vunpack.c.h.b16 %v1201
        %v5042 = vunpack.c.l.b16 %v1202
        %v5043 = vunpack.c.h.b16 %v1202
        %v5044 = vunpack.c.l.b16 %v1203
        %v5045 = vunpack.c.h.b16 %v1203
        %v5046 = vunpack.c.l.b16 %v1204
        %v5047 = vunpack.c.h.b16 %v1204
        %v5048 = vunpack.c.l.b16 %v1205
        %v5049 = vunpack.c.h.b16 %v1205
        %v5050 = vunpack.c.l.b16 %v1206
        %v5051 = vunpack.c.h.b16 %v1206
        %v5052 = vunpack.c.l.b16 %v1207
        %v5053 = vunpack.c.h.b16 %v1207
        %v5054 = vunpack.c.l.b16 %v1208
        %v5055 = vunpack.c.h.b16 %v1208
        %v5056 = vunpack.c.l.b16 %v1209
        %v5057 = vunpack.c.h.b16 %v1209
        %v5058 = vunpack.c.l.b16 %v1210
        %v5059 = vunpack.c.h.b16 %v1210
        %v5060 = vunpack.c.l.b16 %v1211
        %v5061 = vunpack.c.h.b16 %v1211
        %v5062 = vunpack.c.l.b16 %v1212
        %v5063 = vunpack.c.h.b16 %v1212
        %v5064 = vunpack.c.l.b16 %v1213
        %v5065 = vunpack.c.h.b16 %v1213
        %v5066 = vunpack.c.l.b16 %v1214
        %v5067 = vunpack.c.h.b16 %v1214
        %v5068 = vunpack.c.l.b16 %v1215
        %v5069 = vunpack.c.h.b16 %v1215
        %v5070 = vunpack.c.l.b16 %v1216
        %v5071 = vunpack.c.h.b16 %v1216
        %v5072 = vunpack.c.l.b16 %v1217
        %v5073 = vunpack.c.h.b16 %v1217
        %v5074 = vunpack.c.l.b16 %v1218
        %v5075 = vunpack.c.h.b16 %v1218
        %v5076 = vunpack.c.l.b16 %v1219
        %v5077 = vunpack.c.h.b16 %v1219
        %v5078 = vunpack.c.l.b16 %v1220
        %v5079 = vunpack.c.h.b16 %v1220
        %v5080 = vunpack.c.l.b16 %v1221
        %v5081 = vunpack.c.h.b16 %v1221
        %v5082 = vunpack.c.l.b16 %v1222
        %v5083 = vunpack.c.h.b16 %v1222
        %v5084 = vunpack.c.l.b16 %v1223
        %v5085 = vunpack.c.h.b16 %v1223
        %v5086 = vunpack.c.l.b16 %v1224
        %v5087 = vunpack.c.h.b16 %v1224
        %v5088 = vunpack.c.l.b16 %v1225
        %v5089 = vunpack.c.h.b16 %v1225
        %v5090 = vunpack.c.l.b16 %v1226
        %v5091 = vunpack.c.h.b16 %v1226
        %v5092 = vunpack.c.l.b16 %v1227
        %v5093 = vunpack.c.h.b16 %v1227
        %v5094 = vunpack.c.l.b16 %v1228
        %v5095 = vunpack.c.h.b16 %v1228
        %v5096 = vunpack.c.l.b16 %v1229
        %v5097 = vunpack.c.h.b16 %v1229
        %v5098 = vunpack.c.l.b16 %v1230
        %v5099 = vunpack.c.h.b16 %v1230
        %v5100 = vunpack.c.l.b16 %v1231
        %v5101 = vunpack.c.h.b16 %v1231
        %v5102 = vunpack.c.l.b16 %v1232
        %v5103 = vunpack.c.h.b16 %v1232
        %v5104 = vunpack.c.l.b16 %v1233
        %v5105 = vunpack.c.h.b16 %v1233
        %v5106 = vunpack.c.l.b16 %v1234
        %v5107 = vunpack.c.h.b16 %v1234
        %v5108 = vunpack.c.l.b16 %v1235
        %v5109 = vunpack.c.h.b16 %v1235
        %v5110 = vunpack.c.l.b16 %v1236
        %v5111 = vunpack.c.h.b16 %v1236
        %v5112 = vunpack.c.l.b16 %v1237
        %v5113 = vunpack.c.h.b16 %v1237
        %v5114 = vunpack.c.l.b16 %v1238
        %v5115 = vunpack.c.h.b16 %v1238
        %v5116 = vunpack.c.l.b16 %v1239
        %v5117 = vunpack.c.h.b16 %v1239
        %v5118 = vunpack.c.l.b16 %v1240
        %v5119 = vunpack.c.h.b16 %v1240
        %v5120 = vunpack.c.l.b16 %v1241
        %v5121 = vunpack.c.h.b16 %v1241
        %v5122 = vunpack.c.l.b16 %v1242
        %v5123 = vunpack.c.h.b16 %v1242
        %v5124 = vunpack.c.l.b16 %v1243
        %v5125 = vunpack.c.h.b16 %v1243
        %v5126 = vunpack.c.l.b16 %v1244
        %v5127 = vunpack.c.h.b16 %v1244
        %v5128 = vunpack.c.l.b16 %v1245
        %v5129 = vunpack.c.h.b16 %v1245
        %v5130 = vunpack.c.l.b16 %v1246
        %v5131 = vunpack.c.h.b16 %v1246
        %v5132 = vunpack.c.l.b16 %v1247
        %v5133 = vunpack.c.h.b16 %v1247
        %v5134 = vunpack.c.l.b16 %v1248
        %v5135 = vunpack.c.h.b16 %v1248
        %v5136 = vunpack.c.l.b16 %v1249
        %v5137 = vunpack.c.h.b16 %v1249
        %v5138 = vunpack.c.l.b16 %v1250
        %v5139 = vunpack.c.h.b16 %v1250
        %v5140 = vunpack.c.l.b16 %v1251
        %v5141 = vunpack.c.h.b16 %v1251
        %v5142 = vunpack.c.l.b16 %v1252
        %v5143 = vunpack.c.h.b16 %v1252
        %v5144 = vunpack.c.l.b16 %v1253
        %v5145 = vunpack.c.h.b16 %v1253
        %v5146 = vunpack.c.l.b16 %v1254
        %v5147 = vunpack.c.h.b16 %v1254
        %v5148 = vunpack.c.l.b16 %v1255
        %v5149 = vunpack.c.h.b16 %v1255
        %v5150 = vunpack.c.l.b16 %v1256
        %v5151 = vunpack.c.h.b16 %v1256
        %v5152 = vunpack.c.l.b16 %v1257
        %v5153 = vunpack.c.h.b16 %v1257
        %v5154 = vunpack.c.l.b16 %v1258
        %v5155 = vunpack.c.h.b16 %v1258
        %v5156 = vunpack.c.l.b16 %v1259
        %v5157 = vunpack.c.h.b16 %v1259
        %v5158 = vunpack.c.l.b16 %v1260
        %v5159 = vunpack.c.h.b16 %v1260
        %v5160 = vunpack.c.l.b16 %v1261
        %v5161 = vunpack.c.h.b16 %v1261
        %v5162 = vunpack.c.l.b16 %v1262
        %v5163 = vunpack.c.h.b16 %v1262
        %v5164 = vunpack.c.l.b16 %v1263
        %v5165 = vunpack.c.h.b16 %v1263
        %v5166 = vunpack.c.l.b16 %v1264
        %v5167 = vunpack.c.h.b16 %v1264
        %v5168 = vunpack.c.l.b16 %v1265
        %v5169 = vunpack.c.h.b16 %v1265
        %v5170 = vunpack.c.l.b16 %v1266
        %v5171 = vunpack.c.h.b16 %v1266
        %v5172 = vunpack.c.l.b16 %v1267
        %v5173 = vunpack.c.h.b16 %v1267
        %v5174 = vunpack.c.l.b16 %v1268
        %v5175 = vunpack.c.h.b16 %v1268
        %v5176 = vunpack.c.l.b16 %v1269
        %v5177 = vunpack.c.h.b16 %v1269
        %v5178 = vunpack.c.l.b16 %v1270
        %v5179 = vunpack.c.h.b16 %v1270
        %v5180 = vunpack.c.l.b16 %v1271
        %v5181 = vunpack.c.h.b16 %v1271
        %v5182 = vunpack.c.l.b16 %v1272
        %v5183 = vunpack.c.h.b16 %v1272
        %v5184 = vunpack.c.l.b16 %v1273
        %v5185 = vunpack.c.h.b16 %v1273
        %v5186 = vunpack.c.l.b16 %v1274
        %v5187 = vunpack.c.h.b16 %v1274
        %v5188 = vunpack.c.l.b16 %v1275
        %v5189 = vunpack.c.h.b16 %v1275
        %v5190 = vunpack.c.l.b16 %v1276
        %v5191 = vunpack.c.h.b16 %v1276
        %v5192 = vunpack.c.l.b16 %v1277
        %v5193 = vunpack.c.h.b16 %v1277
        %v5194 = vunpack.c.l.b16 %v1278
        %v5195 = vunpack.c.h.b16 %v1278
        %v5196 = vunpack.c.l.b16 %v1279
        %v5197 = vunpack.c.h.b16 %v1279
        %v5198 = vunpack.c.l.b16 %v1280
        %v5199 = vunpack.c.h.b16 %v1280
        %v5200 = vunpack.c.l.b16 %v1281
        %v5201 = vunpack.c.h.b16 %v1281
        %v5202 = vunpack.c.l.b16 %v1282
        %v5203 = vunpack.c.h.b16 %v1282
        %v5204 = vunpack.c.l.b16 %v1283
        %v5205 = vunpack.c.h.b16 %v1283
        %v5206 = vunpack.c.l.b16 %v1284
        %v5207 = vunpack.c.h.b16 %v1284
        %v5208 = vunpack.c.l.b16 %v1285
        %v5209 = vunpack.c.h.b16 %v1285
        %v5210 = vunpack.c.l.b16 %v1286
        %v5211 = vunpack.c.h.b16 %v1286
        %v5212 = vunpack.c.l.b16 %v1287
        %v5213 = vunpack.c.h.b16 %v1287
        %v5214 = vunpack.c.l.b16 %v1288
        %v5215 = vunpack.c.h.b16 %v1288
        %v5216 = vunpack.c.l.b16 %v1289
        %v5217 = vunpack.c.h.b16 %v1289
        %v5218 = vunpack.c.l.b16 %v1290
        %v5219 = vunpack.c.h.b16 %v1290
        %v5220 = vunpack.c.l.b16 %v1291
        %v5221 = vunpack.c.h.b16 %v1291
        %v5222 = vunpack.c.l.b16 %v1292
        %v5223 = vunpack.c.h.b16 %v1292
        %v5224 = vunpack.c.l.b16 %v1293
        %v5225 = vunpack.c.h.b16 %v1293
        %v5226 = vunpack.c.l.b16 %v1294
        %v5227 = vunpack.c.h.b16 %v1294
        %v5228 = vunpack.c.l.b16 %v1295
        %v5229 = vunpack.c.h.b16 %v1295
        %v5230 = vunpack.c.l.b16 %v1296
        %v5231 = vunpack.c.h.b16 %v1296
        %v5232 = vunpack.c.l.b16 %v1297
        %v5233 = vunpack.c.h.b16 %v1297
        %v5234 = vunpack.c.l.b16 %v1298
        %v5235 = vunpack.c.h.b16 %v1298
        %v5236 = vunpack.c.l.b16 %v1299
        %v5237 = vunpack.c.h.b16 %v1299
        %v5238 = vunpack.c.l.b16 %v1300
        %v5239 = vunpack.c.h.b16 %v1300
        %v5240 = vunpack.c.l.b16 %v1301
        %v5241 = vunpack.c.h.b16 %v1301
        %v5242 = vunpack.c.l.b16 %v1302
        %v5243 = vunpack.c.h.b16 %v1302
        %v5244 = vunpack.c.l.b16 %v1303
        %v5245 = vunpack.c.h.b16 %v1303
        %v5246 = vunpack.c.l.b16 %v1304
        %v5247 = vunpack.c.h.b16 %v1304
        %v5248 = vunpack.c.l.b16 %v1305
        %v5249 = vunpack.c.h.b16 %v1305
        %v5250 = vunpack.c.l.b16 %v1306
        %v5251 = vunpack.c.h.b16 %v1306
        %v5252 = vunpack.c.l.b16 %v1307
        %v5253 = vunpack.c.h.b16 %v1307
        %v5254 = vunpack.c.l.b16 %v1308
        %v5255 = vunpack.c.h.b16 %v1308
        %v5256 = vunpack.c.l.b16 %v1309
        %v5257 = vunpack.c.h.b16 %v1309
        %v5258 = vunpack.c.l.b16 %v1310
        %v5259 = vunpack.c.h.b16 %v1310
        %v5260 = vunpack.c.l.b16 %v1311
        %v5261 = vunpack.c.h.b16 %v1311
        %v5262 = vunpack.c.l.b16 %v1312
        %v5263 = vunpack.c.h.b16 %v1312
        %v5264 = vunpack.c.l.b16 %v1313
        %v5265 = vunpack.c.h.b16 %v1313
        %v5266 = vunpack.c.l.b16 %v1314
        %v5267 = vunpack.c.h.b16 %v1314
        %v5268 = vunpack.c.l.b16 %v1315
        %v5269 = vunpack.c.h.b16 %v1315
        %v5270 = vunpack.c.l.b16 %v1316
        %v5271 = vunpack.c.h.b16 %v1316
        %v5272 = vunpack.c.l.b16 %v1317
        %v5273 = vunpack.c.h.b16 %v1317
        %v5274 = vunpack.c.l.b16 %v1318
        %v5275 = vunpack.c.h.b16 %v1318
        %v5276 = vunpack.c.l.b16 %v1319
        %v5277 = vunpack.c.h.b16 %v1319
        %v5278 = vunpack.c.l.b16 %v1320
        %v5279 = vunpack.c.h.b16 %v1320
        %v5280 = vunpack.c.l.b16 %v1321
        %v5281 = vunpack.c.h.b16 %v1321
        %v5282 = vunpack.c.l.b16 %v1322
        %v5283 = vunpack.c.h.b16 %v1322
        %v5284 = vunpack.c.l.b16 %v1323
        %v5285 = vunpack.c.h.b16 %v1323
        %v5286 = vunpack.c.l.b16 %v1324
        %v5287 = vunpack.c.h.b16 %v1324
        %v5288 = vunpack.c.l.b16 %v1325
        %v5289 = vunpack.c.h.b16 %v1325
        %v5290 = vunpack.c.l.b16 %v1326
        %v5291 = vunpack.c.h.b16 %v1326
        %v5292 = vunpack.c.l.b16 %v1327
        %v5293 = vunpack.c.h.b16 %v1327
        %v5294 = vunpack.c.l.b16 %v1328
        %v5295 = vunpack.c.h.b16 %v1328
        %v5296 = vunpack.c.l.b16 %v1329
        %v5297 = vunpack.c.h.b16 %v1329
        %v5298 = vunpack.c.l.b16 %v1330
        %v5299 = vunpack.c.h.b16 %v1330
        %v5300 = vunpack.c.l.b16 %v1331
        %v5301 = vunpack.c.h.b16 %v1331
        %v5302 = vunpack.c.l.b16 %v1332
        %v5303 = vunpack.c.h.b16 %v1332
        %v5304 = vunpack.c.l.b16 %v1333
        %v5305 = vunpack.c.h.b16 %v1333
        %v5306 = vunpack.c.l.b16 %v1334
        %v5307 = vunpack.c.h.b16 %v1334
        %v5308 = vunpack.c.l.b16 %v1335
        %v5309 = vunpack.c.h.b16 %v1335
        %v5310 = vunpack.c.l.b16 %v1336
        %v5311 = vunpack.c.h.b16 %v1336
        %v5312 = vunpack.c.l.b16 %v1337
        %v5313 = vunpack.c.h.b16 %v1337
        %v5314 = vunpack.c.l.b16 %v1338
        %v5315 = vunpack.c.h.b16 %v1338
        %v5316 = vunpack.c.l.b16 %v1339
        %v5317 = vunpack.c.h.b16 %v1339
        %v5318 = vunpack.c.l.b16 %v1340
        %v5319 = vunpack.c.h.b16 %v1340
        %v5320 = vunpack.c.l.b16 %v1341
        %v5321 = vunpack.c.h.b16 %v1341
        %v5322 = vunpack.c.l.b16 %v1342
        %v5323 = vunpack.c.h.b16 %v1342
        %v5324 = vunpack.c.l.b16 %v1343
        %v5325 = vunpack.c.h.b16 %v1343
        %v5326 = vunpack.c.l.b16 %v1344
        %v5327 = vunpack.c.h.b16 %v1344
        %v5328 = vunpack.c.l.b16 %v1345
        %v5329 = vunpack.c.h.b16 %v1345
        %v5330 = vunpack.c.l.b16 %v1346
        %v5331 = vunpack.c.h.b16 %v1346
        %v5332 = vunpack.c.l.b16 %v1347
        %v5333 = vunpack.c.h.b16 %v1347
        %v5334 = vunpack.c.l.b16 %v1348
        %v5335 = vunpack.c.h.b16 %v1348
        %v5336 = vunpack.c.l.b16 %v1349
        %v5337 = vunpack.c.h.b16 %v1349
        %v5338 = vunpack.c.l.b16 %v1350
        %v5339 = vunpack.c.h.b16 %v1350
        %v5340 = vunpack.c.l.b16 %v1351
        %v5341 = vunpack.c.h.b16 %v1351
        %v5342 = vunpack.c.l.b16 %v1352
        %v5343 = vunpack.c.h.b16 %v1352
        %v5344 = vunpack.c.l.b16 %v1353
        %v5345 = vunpack.c.h.b16 %v1353
        %v5346 = vunpack.c.l.b16 %v1354
        %v5347 = vunpack.c.h.b16 %v1354
        %v5348 = vunpack.c.l.b16 %v1355
        %v5349 = vunpack.c.h.b16 %v1355
        %v5350 = vunpack.c.l.b16 %v1356
        %v5351 = vunpack.c.h.b16 %v1356
        %v5352 = vunpack.c.l.b16 %v1357
        %v5353 = vunpack.c.h.b16 %v1357
        %v5354 = vunpack.c.l.b16 %v1358
        %v5355 = vunpack.c.h.b16 %v1358
        %v5356 = vunpack.c.l.b16 %v1359
        %v5357 = vunpack.c.h.b16 %v1359
        %v5358 = vunpack.c.l.b16 %v1360
        %v5359 = vunpack.c.h.b16 %v1360
        %v5360 = vunpack.c.l.b16 %v1361
        %v5361 = vunpack.c.h.b16 %v1361
        %v5362 = vunpack.c.l.b16 %v1362
        %v5363 = vunpack.c.h.b16 %v1362
        %v5364 = vunpack.c.l.b16 %v1363
        %v5365 = vunpack.c.h.b16 %v1363
        %v5366 = vunpack.c.l.b16 %v1364
        %v5367 = vunpack.c.h.b16 %v1364
        %v5368 = vunpack.c.l.b16 %v1365
        %v5369 = vunpack.c.h.b16 %v1365
        %v5370 = vunpack.c.l.b16 %v1366
        %v5371 = vunpack.c.h.b16 %v1366
        %v5372 = vunpack.c.l.b16 %v1367
        %v5373 = vunpack.c.h.b16 %v1367
        %v5374 = vunpack.c.l.b16 %v1368
        %v5375 = vunpack.c.h.b16 %v1368
        %v5376 = vunpack.c.l.b16 %v1369
        %v5377 = vunpack.c.h.b16 %v1369
        %v5378 = vunpack.c.l.b16 %v1370
        %v5379 = vunpack.c.h.b16 %v1370
        %v5380 = vunpack.c.l.b16 %v1371
        %v5381 = vunpack.c.h.b16 %v1371
        %v5382 = vunpack.c.l.b16 %v1372
        %v5383 = vunpack.c.h.b16 %v1372
        %v5384 = vunpack.c.l.b16 %v1373
        %v5385 = vunpack.c.h.b16 %v1373
        %v5386 = vunpack.c.l.b16 %v1374
        %v5387 = vunpack.c.h.b16 %v1374
        %v5388 = vunpack.c.l.b16 %v1375
        %v5389 = vunpack.c.h.b16 %v1375
        %v5390 = vunpack.c.l.b16 %v1376
        %v5391 = vunpack.c.h.b16 %v1376
        %v5392 = vunpack.c.l.b16 %v1377
        %v5393 = vunpack.c.h.b16 %v1377
        %v5394 = vunpack.c.l.b16 %v1378
        %v5395 = vunpack.c.h.b16 %v1378
        %v5396 = vunpack.c.l.b16 %v1379
        %v5397 = vunpack.c.h.b16 %v1379
        %v5398 = vunpack.c.l.b16 %v1380
        %v5399 = vunpack.c.h.b16 %v1380
        %v5400 = vunpack.c.l.b16 %v1381
        %v5401 = vunpack.c.h.b16 %v1381
        %v5402 = vunpack.c.l.b16 %v1382
        %v5403 = vunpack.c.h.b16 %v1382
        %v5404 = vunpack.c.l.b16 %v1383
        %v5405 = vunpack.c.h.b16 %v1383
        %v5406 = vunpack.c.l.b16 %v1384
        %v5407 = vunpack.c.h.b16 %v1384
        %v5408 = vunpack.c.l.b16 %v1385
        %v5409 = vunpack.c.h.b16 %v1385
        %v5410 = vunpack.c.l.b16 %v1386
        %v5411 = vunpack.c.h.b16 %v1386
        %v5412 = vunpack.c.l.b16 %v1387
        %v5413 = vunpack.c.h.b16 %v1387
        %v5414 = vunpack.c.l.b16 %v1388
        %v5415 = vunpack.c.h.b16 %v1388
        %v5416 = vunpack.c.l.b16 %v1389
        %v5417 = vunpack.c.h.b16 %v1389
        %v5418 = vunpack.c.l.b16 %v1390
        %v5419 = vunpack.c.h.b16 %v1390
        %v5420 = vunpack.c.l.b16 %v1391
        %v5421 = vunpack.c.h.b16 %v1391
        %v5422 = vunpack.c.l.b16 %v1392
        %v5423 = vunpack.c.h.b16 %v1392
        %v5424 = vunpack.c.l.b16 %v1393
        %v5425 = vunpack.c.h.b16 %v1393
        %v5426 = vunpack.c.l.b16 %v1394
        %v5427 = vunpack.c.h.b16 %v1394
        %v5428 = vunpack.c.l.b16 %v1395
        %v5429 = vunpack.c.h.b16 %v1395
        %v5430 = vunpack.c.l.b16 %v1396
        %v5431 = vunpack.c.h.b16 %v1396
        %v5432 = vunpack.c.l.b16 %v1397
        %v5433 = vunpack.c.h.b16 %v1397
        %v5434 = vunpack.c.l.b16 %v1398
        %v5435 = vunpack.c.h.b16 %v1398
        %v5436 = vunpack.c.l.b16 %v1399
        %v5437 = vunpack.c.h.b16 %v1399
        %v5438 = vunpack.c.l.b16 %v1400
        %v5439 = vunpack.c.h.b16 %v1400
        %v5440 = vunpack.c.l.b16 %v1401
        %v5441 = vunpack.c.h.b16 %v1401
        %v5442 = vunpack.c.l.b16 %v1402
        %v5443 = vunpack.c.h.b16 %v1402
        %v5444 = vunpack.c.l.b16 %v1403
        %v5445 = vunpack.c.h.b16 %v1403
        %v5446 = vunpack.c.l.b16 %v1404
        %v5447 = vunpack.c.h.b16 %v1404
        %v5448 = vunpack.c.l.b16 %v1405
        %v5449 = vunpack.c.h.b16 %v1405
        %v5450 = vunpack.c.l.b16 %v1406
        %v5451 = vunpack.c.h.b16 %v1406
        %v5452 = vunpack.c.l.b16 %v1407
        %v5453 = vunpack.c.h.b16 %v1407
        %v5454 = vunpack.c.l.b16 %v1408
        %v5455 = vunpack.c.h.b16 %v1408
        %v5456 = vunpack.c.l.b16 %v1409
        %v5457 = vunpack.c.h.b16 %v1409
        %v5458 = vunpack.c.l.b16 %v1410
        %v5459 = vunpack.c.h.b16 %v1410
        %v5460 = vunpack.c.l.b16 %v1411
        %v5461 = vunpack.c.h.b16 %v1411
        %v5462 = vunpack.c.l.b16 %v1412
        %v5463 = vunpack.c.h.b16 %v1412
        %v5464 = vunpack.c.l.b16 %v1413
        %v5465 = vunpack.c.h.b16 %v1413
        %v5466 = vunpack.c.l.b16 %v1414
        %v5467 = vunpack.c.h.b16 %v1414
        %v5468 = vunpack.c.l.b16 %v1415
        %v5469 = vunpack.c.h.b16 %v1415
        %v5470 = vunpack.c.l.b16 %v1416
        %v5471 = vunpack.c.h.b16 %v1416
        %v5472 = vunpack.c.l.b16 %v1417
        %v5473 = vunpack.c.h.b16 %v1417
        %v5474 = vunpack.c.l.b16 %v1418
        %v5475 = vunpack.c.h.b16 %v1418
        %v5476 = vunpack.c.l.b16 %v1419
        %v5477 = vunpack.c.h.b16 %v1419
        %v5478 = vunpack.c.l.b16 %v1420
        %v5479 = vunpack.c.h.b16 %v1420
        %v5480 = vunpack.c.l.b16 %v1421
        %v5481 = vunpack.c.h.b16 %v1421
        %v5482 = vunpack.c.l.b16 %v1422
        %v5483 = vunpack.c.h.b16 %v1422
        %v5484 = vunpack.c.l.b16 %v1423
        %v5485 = vunpack.c.h.b16 %v1423
        %v5486 = vunpack.c.l.b16 %v1424
        %v5487 = vunpack.c.h.b16 %v1424
        %v5488 = vunpack.c.l.b16 %v1425
        %v5489 = vunpack.c.h.b16 %v1425
        %v5490 = vunpack.c.l.b16 %v1426
        %v5491 = vunpack.c.h.b16 %v1426
        %v5492 = vunpack.c.l.b16 %v1427
        %v5493 = vunpack.c.h.b16 %v1427
        %v5494 = vunpack.c.l.b16 %v1428
        %v5495 = vunpack.c.h.b16 %v1428
        %v5496 = vunpack.c.l.b16 %v1429
        %v5497 = vunpack.c.h.b16 %v1429
        %v5498 = vunpack.c.l.b16 %v1430
        %v5499 = vunpack.c.h.b16 %v1430
        %v5500 = vunpack.c.l.b16 %v1431
        %v5501 = vunpack.c.h.b16 %v1431
        %v5502 = vunpack.c.l.b16 %v1432
        %v5503 = vunpack.c.h.b16 %v1432
        %v5504 = vunpack.c.l.b16 %v1433
        %v5505 = vunpack.c.h.b16 %v1433
        %v5506 = vunpack.c.l.b16 %v1434
        %v5507 = vunpack.c.h.b16 %v1434
        %v5508 = vunpack.c.l.b16 %v1435
        %v5509 = vunpack.c.h.b16 %v1435
        %v5510 = vunpack.c.l.b16 %v1436
        %v5511 = vunpack.c.h.b16 %v1436
        %v5512 = vunpack.c.l.b16 %v1437
        %v5513 = vunpack.c.h.b16 %v1437
        %v5514 = vunpack.c.l.b16 %v1438
        %v5515 = vunpack.c.h.b16 %v1438
        %v5516 = vunpack.c.l.b16 %v1439
        %v5517 = vunpack.c.h.b16 %v1439
        %v5518 = vunpack.c.l.b16 %v1440
        %v5519 = vunpack.c.h.b16 %v1440
        %v5520 = vunpack.c.l.b16 %v1441
        %v5521 = vunpack.c.h.b16 %v1441
        %v5522 = vunpack.c.l.b16 %v1442
        %v5523 = vunpack.c.h.b16 %v1442
        %v5524 = vunpack.c.l.b16 %v1443
        %v5525 = vunpack.c.h.b16 %v1443
        %v5526 = vunpack.c.l.b16 %v1444
        %v5527 = vunpack.c.h.b16 %v1444
        %v5528 = vunpack.c.l.b16 %v1445
        %v5529 = vunpack.c.h.b16 %v1445
        %v5530 = vunpack.c.l.b16 %v1446
        %v5531 = vunpack.c.h.b16 %v1446
        %v5532 = vunpack.c.l.b16 %v1447
        %v5533 = vunpack.c.h.b16 %v1447
        %v5534 = vunpack.c.l.b16 %v1448
        %v5535 = vunpack.c.h.b16 %v1448
        %v5536 = vunpack.c.l.b16 %v1449
        %v5537 = vunpack.c.h.b16 %v1449
        %v5538 = vunpack.c.l.b16 %v1450
        %v5539 = vunpack.c.h.b16 %v1450
        %v5540 = vunpack.c.l.b16 %v1451
        %v5541 = vunpack.c.h.b16 %v1451
        %v5542 = vunpack.c.l.b16 %v1452
        %v5543 = vunpack.c.h.b16 %v1452
        %v5544 = vunpack.c.l.b16 %v1453
        %v5545 = vunpack.c.h.b16 %v1453
        %v5546 = vunpack.c.l.b16 %v1454
        %v5547 = vunpack.c.h.b16 %v1454
        %v5548 = vunpack.c.l.b16 %v1455
        %v5549 = vunpack.c.h.b16 %v1455
        %v5550 = vunpack.c.l.b16 %v1456
        %v5551 = vunpack.c.h.b16 %v1456
        %v5552 = vunpack.c.l.b16 %v1457
        %v5553 = vunpack.c.h.b16 %v1457
        %v5554 = vunpack.c.l.b16 %v1458
        %v5555 = vunpack.c.h.b16 %v1458
        %v5556 = vunpack.c.l.b16 %v1459
        %v5557 = vunpack.c.h.b16 %v1459
        %v5558 = vunpack.c.l.b16 %v1460
        %v5559 = vunpack.c.h.b16 %v1460
        %v5560 = vunpack.c.l.b16 %v1461
        %v5561 = vunpack.c.h.b16 %v1461
        %v5562 = vunpack.c.l.b16 %v1462
        %v5563 = vunpack.c.h.b16 %v1462
        %v5564 = vunpack.c.l.b16 %v1463
        %v5565 = vunpack.c.h.b16 %v1463
        %v5566 = vunpack.c.l.b16 %v1464
        %v5567 = vunpack.c.h.b16 %v1464
        %v5568 = vunpack.c.l.b16 %v1465
        %v5569 = vunpack.c.h.b16 %v1465
        %v5570 = vunpack.c.l.b16 %v1466
        %v5571 = vunpack.c.h.b16 %v1466
        %v5572 = vunpack.c.l.b16 %v1467
        %v5573 = vunpack.c.h.b16 %v1467
        %v5574 = vunpack.c.l.b16 %v1468
        %v5575 = vunpack.c.h.b16 %v1468
        %v5576 = vunpack.c.l.b16 %v1469
        %v5577 = vunpack.c.h.b16 %v1469
        %v5578 = vunpack.c.l.b16 %v1470
        %v5579 = vunpack.c.h.b16 %v1470
        %v5580 = vunpack.c.l.b16 %v1471
        %v5581 = vunpack.c.h.b16 %v1471
        %v5582 = vunpack.c.l.b16 %v1472
        %v5583 = vunpack.c.h.b16 %v1472
        %v5584 = vunpack.c.l.b16 %v1473
        %v5585 = vunpack.c.h.b16 %v1473
        %v5586 = vunpack.c.l.b16 %v1474
        %v5587 = vunpack.c.h.b16 %v1474
        %v5588 = vunpack.c.l.b16 %v1475
        %v5589 = vunpack.c.h.b16 %v1475
        %v5590 = vunpack.c.l.b16 %v1476
        %v5591 = vunpack.c.h.b16 %v1476
        %v5592 = vunpack.c.l.b16 %v1477
        %v5593 = vunpack.c.h.b16 %v1477
        %v5594 = vunpack.c.l.b16 %v1478
        %v5595 = vunpack.c.h.b16 %v1478
        %v5596 = vunpack.c.l.b16 %v1479
        %v5597 = vunpack.c.h.b16 %v1479
        %v5598 = vunpack.c.l.b16 %v1480
        %v5599 = vunpack.c.h.b16 %v1480
        %v5600 = vunpack.c.l.b16 %v1481
        %v5601 = vunpack.c.h.b16 %v1481
        %v5602 = vunpack.c.l.b16 %v1482
        %v5603 = vunpack.c.h.b16 %v1482
        %v5604 = vunpack.c.l.b16 %v1483
        %v5605 = vunpack.c.h.b16 %v1483
        %v5606 = vunpack.c.l.b16 %v1484
        %v5607 = vunpack.c.h.b16 %v1484
        %v5608 = vunpack.c.l.b16 %v1485
        %v5609 = vunpack.c.h.b16 %v1485
        %v5610 = vunpack.c.l.b16 %v1486
        %v5611 = vunpack.c.h.b16 %v1486
        %v5612 = vunpack.c.l.b16 %v1487
        %v5613 = vunpack.c.h.b16 %v1487
        %v5614 = vunpack.c.l.b16 %v1488
        %v5615 = vunpack.c.h.b16 %v1488
        %v5616 = vunpack.c.l.b16 %v1489
        %v5617 = vunpack.c.h.b16 %v1489
        %v5618 = vunpack.c.l.b16 %v1490
        %v5619 = vunpack.c.h.b16 %v1490
        %v5620 = vunpack.c.l.b16 %v1491
        %v5621 = vunpack.c.h.b16 %v1491
        %v5622 = vunpack.c.l.b16 %v1492
        %v5623 = vunpack.c.h.b16 %v1492
        %v5624 = vunpack.c.l.b16 %v1493
        %v5625 = vunpack.c.h.b16 %v1493
        %v5626 = vunpack.c.l.b16 %v1494
        %v5627 = vunpack.c.h.b16 %v1494
        %v5628 = vunpack.c.l.b16 %v1495
        %v5629 = vunpack.c.h.b16 %v1495
        %v5630 = vunpack.c.l.b16 %v1496
        %v5631 = vunpack.c.h.b16 %v1496
        %v5632 = vunpack.c.l.b16 %v1497
        %v5633 = vunpack.c.h.b16 %v1497
        %v5634 = vunpack.c.l.b16 %v1498
        %v5635 = vunpack.c.h.b16 %v1498
        %v5636 = vunpack.c.l.b16 %v1499
        %v5637 = vunpack.c.h.b16 %v1499
        %v5638 = vunpack.c.l.b16 %v1500
        %v5639 = vunpack.c.h.b16 %v1500
        %v5640 = vunpack.c.l.b16 %v1501
        %v5641 = vunpack.c.h.b16 %v1501
        %v5642 = vunpack.c.l.b16 %v1502
        %v5643 = vunpack.c.h.b16 %v1502
        %v5644 = vunpack.c.l.b16 %v1503
        %v5645 = vunpack.c.h.b16 %v1503
        %v5646 = vunpack.c.l.b16 %v1504
        %v5647 = vunpack.c.h.b16 %v1504
        %v5648 = vunpack.c.l.b16 %v1505
        %v5649 = vunpack.c.h.b16 %v1505
        %v5650 = vunpack.c.l.b16 %v1506
        %v5651 = vunpack.c.h.b16 %v1506
        %v5652 = vunpack.c.l.b16 %v1507
        %v5653 = vunpack.c.h.b16 %v1507
        %v5654 = vunpack.c.l.b16 %v1508
        %v5655 = vunpack.c.h.b16 %v1508
        %v5656 = vunpack.c.l.b16 %v1509
        %v5657 = vunpack.c.h.b16 %v1509
        %v5658 = vunpack.c.l.b16 %v1510
        %v5659 = vunpack.c.h.b16 %v1510
        %v5660 = vunpack.c.l.b16 %v1511
        %v5661 = vunpack.c.h.b16 %v1511
        %v5662 = vunpack.c.l.b16 %v1512
        %v5663 = vunpack.c.h.b16 %v1512
        %v5664 = vunpack.c.l.b16 %v1513
        %v5665 = vunpack.c.h.b16 %v1513
        %v5666 = vunpack.c.l.b16 %v1514
        %v5667 = vunpack.c.h.b16 %v1514
        %v5668 = vunpack.c.l.b16 %v1515
        %v5669 = vunpack.c.h.b16 %v1515
        %v5670 = vunpack.c.l.b16 %v1516
        %v5671 = vunpack.c.h.b16 %v1516
        %v5672 = vunpack.c.l.b16 %v1517
        %v5673 = vunpack.c.h.b16 %v1517
        %v5674 = vunpack.c.l.b16 %v1518
        %v5675 = vunpack.c.h.b16 %v1518
        %v5676 = vunpack.c.l.b16 %v1519
        %v5677 = vunpack.c.h.b16 %v1519
        %v5678 = vunpack.c.l.b16 %v1520
        %v5679 = vunpack.c.h.b16 %v1520
        %v5680 = vunpack.c.l.b16 %v1521
        %v5681 = vunpack.c.h.b16 %v1521
        %v5682 = vunpack.c.l.b16 %v1522
        %v5683 = vunpack.c.h.b16 %v1522
        %v5684 = vunpack.c.l.b16 %v1523
        %v5685 = vunpack.c.h.b16 %v1523
        %v5686 = vunpack.c.l.b16 %v1524
        %v5687 = vunpack.c.h.b16 %v1524
        %v5688 = vunpack.c.l.b16 %v1525
        %v5689 = vunpack.c.h.b16 %v1525
        %v5690 = vunpack.c.l.b16 %v1526
        %v5691 = vunpack.c.h.b16 %v1526
        %v5692 = vunpack.c.l.b16 %v1527
        %v5693 = vunpack.c.h.b16 %v1527
        %v5694 = vunpack.c.l.b16 %v1528
        %v5695 = vunpack.c.h.b16 %v1528
        %v5696 = vunpack.c.l.b16 %v1529
        %v5697 = vunpack.c.h.b16 %v1529
        %v5698 = vunpack.c.l.b16 %v1530
        %v5699 = vunpack.c.h.b16 %v1530
        %v5700 = vunpack.c.l.b16 %v1531
        %v5701 = vunpack.c.h.b16 %v1531
        %v5702 = vunpack.c.l.b16 %v1532
        %v5703 = vunpack.c.h.b16 %v1532
        %v5704 = vunpack.c.l.b16 %v1533
        %v5705 = vunpack.c.h.b16 %v1533
        %v5706 = vunpack.c.l.b16 %v1534
        %v5707 = vunpack.c.h.b16 %v1534
        %v5708 = vunpack.c.l.b16 %v1535
        %v5709 = vunpack.c.h.b16 %v1535
        %v5710 = vunpack.c.l.b16 %v1536
        %v5711 = vunpack.c.h.b16 %v1536
        %v5712 = vunpack.c.l.b16 %v1537
        %v5713 = vunpack.c.h.b16 %v1537
        %v5714 = vunpack.c.l.b16 %v1538
        %v5715 = vunpack.c.h.b16 %v1538
        %v5716 = vunpack.c.l.b16 %v1539
        %v5717 = vunpack.c.h.b16 %v1539
        %v5718 = vunpack.c.l.b16 %v1540
        %v5719 = vunpack.c.h.b16 %v1540
        %v5720 = vunpack.c.l.b16 %v1541
        %v5721 = vunpack.c.h.b16 %v1541
        %v5722 = vunpack.c.l.b16 %v1542
        %v5723 = vunpack.c.h.b16 %v1542
        %v5724 = vunpack.c.l.b16 %v1543
        %v5725 = vunpack.c.h.b16 %v1543
        %v5726 = vunpack.c.l.b16 %v1544
        %v5727 = vunpack.c.h.b16 %v1544
        %v5728 = vunpack.c.l.b16 %v1545
        %v5729 = vunpack.c.h.b16 %v1545
        %v5730 = vunpack.c.l.b16 %v1546
        %v5731 = vunpack.c.h.b16 %v1546
        %v5732 = vunpack.c.l.b16 %v1547
        %v5733 = vunpack.c.h.b16 %v1547
        %v5734 = vunpack.c.l.b16 %v1548
        %v5735 = vunpack.c.h.b16 %v1548
        %v5736 = vunpack.c.l.b16 %v1549
        %v5737 = vunpack.c.h.b16 %v1549
        %v5738 = vunpack.c.l.b16 %v1550
        %v5739 = vunpack.c.h.b16 %v1550
        %v5740 = vunpack.c.l.b16 %v1551
        %v5741 = vunpack.c.h.b16 %v1551
        %v5742 = vunpack.c.l.b16 %v1552
        %v5743 = vunpack.c.h.b16 %v1552
        %v5744 = vunpack.c.l.b16 %v1553
        %v5745 = vunpack.c.h.b16 %v1553
        %v5746 = vunpack.c.l.b16 %v1554
        %v5747 = vunpack.c.h.b16 %v1554
        %v5748 = vunpack.c.l.b16 %v1555
        %v5749 = vunpack.c.h.b16 %v1555
        %v5750 = vunpack.c.l.b16 %v1556
        %v5751 = vunpack.c.h.b16 %v1556
        %v5752 = vunpack.c.l.b16 %v1557
        %v5753 = vunpack.c.h.b16 %v1557
        %v5754 = vunpack.c.l.b16 %v1558
        %v5755 = vunpack.c.h.b16 %v1558
        %v5756 = vunpack.c.l.b16 %v1559
        %v5757 = vunpack.c.h.b16 %v1559
        %v5758 = vunpack.c.l.b16 %v1560
        %v5759 = vunpack.c.h.b16 %v1560
        %v5760 = vunpack.c.l.b16 %v1561
        %v5761 = vunpack.c.h.b16 %v1561
        %v5762 = vunpack.c.l.b16 %v1562
        %v5763 = vunpack.c.h.b16 %v1562
        %v5764 = vunpack.c.l.b16 %v1563
        %v5765 = vunpack.c.h.b16 %v1563
        %v5766 = vunpack.c.l.b16 %v1564
        %v5767 = vunpack.c.h.b16 %v1564
        %v5768 = vunpack.c.l.b16 %v1565
        %v5769 = vunpack.c.h.b16 %v1565
        %v5770 = vunpack.c.l.b16 %v1566
        %v5771 = vunpack.c.h.b16 %v1566
        %v5772 = vunpack.c.l.b16 %v1567
        %v5773 = vunpack.c.h.b16 %v1567
        %v5774 = vunpack.c.l.b16 %v1568
        %v5775 = vunpack.c.h.b16 %v1568
        %v5776 = vunpack.c.l.b16 %v1569
        %v5777 = vunpack.c.h.b16 %v1569
        %v5778 = vunpack.c.l.b16 %v1570
        %v5779 = vunpack.c.h.b16 %v1570
        %v5780 = vunpack.c.l.b16 %v1571
        %v5781 = vunpack.c.h.b16 %v1571
        %v5782 = vunpack.c.l.b16 %v1572
        %v5783 = vunpack.c.h.b16 %v1572
        %v5784 = vunpack.c.l.b16 %v1573
        %v5785 = vunpack.c.h.b16 %v1573
        %v5786 = vunpack.c.l.b16 %v1574
        %v5787 = vunpack.c.h.b16 %v1574
        %v5788 = vunpack.c.l.b16 %v1575
        %v5789 = vunpack.c.h.b16 %v1575
        %v5790 = vunpack.c.l.b16 %v1576
        %v5791 = vunpack.c.h.b16 %v1576
        %v5792 = vunpack.c.l.b16 %v1577
        %v5793 = vunpack.c.h.b16 %v1577
        %v5794 = vunpack.c.l.b16 %v1578
        %v5795 = vunpack.c.h.b16 %v1578
        %v5796 = vunpack.c.l.b16 %v1579
        %v5797 = vunpack.c.h.b16 %v1579
        %v5798 = vunpack.c.l.b16 %v1580
        %v5799 = vunpack.c.h.b16 %v1580
        %v5800 = vunpack.c.l.b16 %v1581
        %v5801 = vunpack.c.h.b16 %v1581
        %v5802 = vunpack.c.l.b16 %v1582
        %v5803 = vunpack.c.h.b16 %v1582
        %v5804 = vunpack.c.l.b16 %v1583
        %v5805 = vunpack.c.h.b16 %v1583
        %v5806 = vunpack.c.l.b16 %v1584
        %v5807 = vunpack.c.h.b16 %v1584
        %v5808 = vunpack.c.l.b16 %v1585
        %v5809 = vunpack.c.h.b16 %v1585
        %v5810 = vunpack.c.l.b16 %v1586
        %v5811 = vunpack.c.h.b16 %v1586
        %v5812 = vunpack.c.l.b16 %v1587
        %v5813 = vunpack.c.h.b16 %v1587
        %v5814 = vunpack.c.l.b16 %v1588
        %v5815 = vunpack.c.h.b16 %v1588
        %v5816 = vunpack.c.l.b16 %v1589
        %v5817 = vunpack.c.h.b16 %v1589
        %v5818 = vunpack.c.l.b16 %v1590
        %v5819 = vunpack.c.h.b16 %v1590
        %v5820 = vunpack.c.l.b16 %v1591
        %v5821 = vunpack.c.h.b16 %v1591
        %v5822 = vunpack.c.l.b16 %v1592
        %v5823 = vunpack.c.h.b16 %v1592
        %v5824 = vunpack.c.l.b16 %v1593
        %v5825 = vunpack.c.h.b16 %v1593
        %v5826 = vunpack.c.l.b16 %v1594
        %v5827 = vunpack.c.h.b16 %v1594
        %v5828 = vunpack.c.l.b16 %v1595
        %v5829 = vunpack.c.h.b16 %v1595
        %v5830 = vunpack.c.l.b16 %v1596
        %v5831 = vunpack.c.h.b16 %v1596
        %v5832 = vunpack.c.l.b16 %v1597
        %v5833 = vunpack.c.h.b16 %v1597
        %v5834 = vunpack.c.l.b16 %v1598
        %v5835 = vunpack.c.h.b16 %v1598
        %v5836 = vunpack.c.l.b16 %v1599
        %v5837 = vunpack.c.h.b16 %v1599
        %v5838 = vunpack.c.l.b16 %v1600
        %v5839 = vunpack.c.h.b16 %v1600
        %v5840 = vunpack.c.l.b16 %v1601
        %v5841 = vunpack.c.h.b16 %v1601
        %v5842 = vunpack.c.l.b16 %v1602
        %v5843 = vunpack.c.h.b16 %v1602
        %v5844 = vunpack.c.l.b16 %v1603
        %v5845 = vunpack.c.h.b16 %v1603
        %v5846 = vunpack.c.l.b16 %v1604
        %v5847 = vunpack.c.h.b16 %v1604
        %v5848 = vunpack.c.l.b16 %v1605
        %v5849 = vunpack.c.h.b16 %v1605
        %v5850 = vunpack.c.l.b16 %v1606
        %v5851 = vunpack.c.h.b16 %v1606
        %v5852 = vunpack.c.l.b16 %v1607
        %v5853 = vunpack.c.h.b16 %v1607
        %v5854 = vunpack.c.l.b16 %v1608
        %v5855 = vunpack.c.h.b16 %v1608
        %v5856 = vunpack.c.l.b16 %v1609
        %v5857 = vunpack.c.h.b16 %v1609
        %v5858 = vunpack.c.l.b16 %v1610
        %v5859 = vunpack.c.h.b16 %v1610
        %v5860 = vunpack.c.l.b16 %v1611
        %v5861 = vunpack.c.h.b16 %v1611
        %v5862 = vunpack.c.l.b16 %v1612
        %v5863 = vunpack.c.h.b16 %v1612
        %v5864 = vunpack.c.l.b16 %v1613
        %v5865 = vunpack.c.h.b16 %v1613
        %v5866 = vunpack.c.l.b16 %v1614
        %v5867 = vunpack.c.h.b16 %v1614
        %v5868 = vunpack.c.l.b16 %v1615
        %v5869 = vunpack.c.h.b16 %v1615
        %v5870 = vunpack.c.l.b16 %v1616
        %v5871 = vunpack.c.h.b16 %v1616
        %v5872 = vunpack.c.l.b16 %v1617
        %v5873 = vunpack.c.h.b16 %v1617
        %v5874 = vunpack.c.l.b16 %v1618
        %v5875 = vunpack.c.h.b16 %v1618
        %v5876 = vunpack.c.l.b16 %v1619
        %v5877 = vunpack.c.h.b16 %v1619
        %v5878 = vunpack.c.l.b16 %v1620
        %v5879 = vunpack.c.h.b16 %v1620
        %v5880 = vunpack.c.l.b16 %v1621
        %v5881 = vunpack.c.h.b16 %v1621
        %v5882 = vunpack.c.l.b16 %v1622
        %v5883 = vunpack.c.h.b16 %v1622
        %v5884 = vunpack.c.l.b16 %v1623
        %v5885 = vunpack.c.h.b16 %v1623
        %v5886 = vunpack.c.l.b16 %v1624
        %v5887 = vunpack.c.h.b16 %v1624
        %v5888 = vunpack.c.l.b16 %v1625
        %v5889 = vunpack.c.h.b16 %v1625
        %v5890 = vunpack.c.l.b16 %v1626
        %v5891 = vunpack.c.h.b16 %v1626
        %v5892 = vunpack.c.l.b16 %v1627
        %v5893 = vunpack.c.h.b16 %v1627
        %v5894 = vunpack.c.l.b16 %v1628
        %v5895 = vunpack.c.h.b16 %v1628
        %v5896 = vunpack.c.l.b16 %v1629
        %v5897 = vunpack.c.h.b16 %v1629
        %v5898 = vunpack.c.l.b16 %v1630
        %v5899 = vunpack.c.h.b16 %v1630
        %v5900 = vunpack.c.l.b16 %v1631
        %v5901 = vunpack.c.h.b16 %v1631
        %v5902 = vunpack.c.l.b16 %v1632
        %v5903 = vunpack.c.h.b16 %v1632
        %v5904 = vunpack.c.l.b16 %v1633
        %v5905 = vunpack.c.h.b16 %v1633
        %v5906 = vunpack.c.l.b16 %v1634
        %v5907 = vunpack.c.h.b16 %v1634
        %v5908 = vunpack.c.l.b16 %v1635
        %v5909 = vunpack.c.h.b16 %v1635
        %v5910 = vunpack.c.l.b16 %v1636
        %v5911 = vunpack.c.h.b16 %v1636
        %v5912 = vunpack.c.l.b16 %v1637
        %v5913 = vunpack.c.h.b16 %v1637
        %v5914 = vunpack.c.l.b16 %v1638
        %v5915 = vunpack.c.h.b16 %v1638
        %v5916 = vunpack.c.l.b16 %v1639
        %v5917 = vunpack.c.h.b16 %v1639
        %v5918 = vunpack.c.l.b16 %v1640
        %v5919 = vunpack.c.h.b16 %v1640
        %v5920 = vunpack.c.l.b16 %v1641
        %v5921 = vunpack.c.h.b16 %v1641
        %v5922 = vunpack.c.l.b16 %v1642
        %v5923 = vunpack.c.h.b16 %v1642
        %v5924 = vunpack.c.l.b16 %v1643
        %v5925 = vunpack.c.h.b16 %v1643
        %v5926 = vunpack.c.l.b16 %v1644
        %v5927 = vunpack.c.h.b16 %v1644
        %v5928 = vunpack.c.l.b16 %v1645
        %v5929 = vunpack.c.h.b16 %v1645
        %v5930 = vunpack.c.l.b16 %v1646
        %v5931 = vunpack.c.h.b16 %v1646
        %v5932 = vunpack.c.l.b16 %v1647
        %v5933 = vunpack.c.h.b16 %v1647
        %v5934 = vunpack.c.l.b16 %v1648
        %v5935 = vunpack.c.h.b16 %v1648
        %v5936 = vunpack.c.l.b16 %v1649
        %v5937 = vunpack.c.h.b16 %v1649
        %v5938 = vunpack.c.l.b16 %v1650
        %v5939 = vunpack.c.h.b16 %v1650
        %v5940 = vunpack.c.l.b16 %v1651
        %v5941 = vunpack.c.h.b16 %v1651
        %v5942 = vunpack.c.l.b16 %v1652
        %v5943 = vunpack.c.h.b16 %v1652
        %v5944 = vunpack.c.l.b16 %v1653
        %v5945 = vunpack.c.h.b16 %v1653
        %v5946 = vunpack.c.l.b16 %v1654
        %v5947 = vunpack.c.h.b16 %v1654
        %v5948 = vunpack.c.l.b16 %v1655
        %v5949 = vunpack.c.h.b16 %v1655
        %v5950 = vunpack.c.l.b16 %v1656
        %v5951 = vunpack.c.h.b16 %v1656
        %v5952 = vunpack.c.l.b16 %v1657
        %v5953 = vunpack.c.h.b16 %v1657
        %v5954 = vunpack.c.l.b16 %v1658
        %v5955 = vunpack.c.h.b16 %v1658
        %v5956 = vunpack.c.l.b16 %v1659
        %v5957 = vunpack.c.h.b16 %v1659
        %v5958 = vunpack.c.l.b16 %v1660
        %v5959 = vunpack.c.h.b16 %v1660
        %v5960 = vunpack.c.l.b16 %v1661
        %v5961 = vunpack.c.h.b16 %v1661
        %v5962 = vunpack.c.l.b16 %v1662
        %v5963 = vunpack.c.h.b16 %v1662
        %v5964 = vunpack.c.l.b16 %v1663
        %v5965 = vunpack.c.h.b16 %v1663
        %v5966 = vunpack.c.l.b16 %v1664
        %v5967 = vunpack.c.h.b16 %v1664
        %v5968 = vunpack.c.l.b16 %v1665
        %v5969 = vunpack.c.h.b16 %v1665
        %v5970 = vunpack.c.l.b16 %v1666
        %v5971 = vunpack.c.h.b16 %v1666
        %v5972 = vunpack.c.l.b16 %v1667
        %v5973 = vunpack.c.h.b16 %v1667
        %v5974 = vunpack.c.l.b16 %v1668
        %v5975 = vunpack.c.h.b16 %v1668
        %v5976 = vunpack.c.l.b16 %v1669
        %v5977 = vunpack.c.h.b16 %v1669
        %v5978 = vunpack.c.l.b16 %v1670
        %v5979 = vunpack.c.h.b16 %v1670
        %v5980 = vunpack.c.l.b16 %v1671
        %v5981 = vunpack.c.h.b16 %v1671
        %v5982 = vunpack.c.l.b16 %v1672
        %v5983 = vunpack.c.h.b16 %v1672
        %v5984 = vunpack.c.l.b16 %v1673
        %v5985 = vunpack.c.h.b16 %v1673
        %v5986 = vunpack.c.l.b16 %v1674
        %v5987 = vunpack.c.h.b16 %v1674
        %v5988 = vunpack.c.l.b16 %v1675
        %v5989 = vunpack.c.h.b16 %v1675
        %v5990 = vunpack.c.l.b16 %v1676
        %v5991 = vunpack.c.h.b16 %v1676
        %v5992 = vunpack.c.l.b16 %v1677
        %v5993 = vunpack.c.h.b16 %v1677
        %v5994 = vunpack.c.l.b16 %v1678
        %v5995 = vunpack.c.h.b16 %v1678
        %v5996 = vunpack.c.l.b16 %v1679
        %v5997 = vunpack.c.h.b16 %v1679
        %v5998 = vunpack.c.l.b16 %v1680
        %v5999 = vunpack.c.h.b16 %v1680
        %v6000 = vunpack.c.l.b16 %v1681
        %v6001 = vunpack.c.h.b16 %v1681
        %v6002 = vunpack.c.l.b16 %v1682
        %v6003 = vunpack.c.h.b16 %v1682
        %v6004 = vunpack.c.l.b16 %v1683
        %v6005 = vunpack.c.h.b16 %v1683
        %v6006 = vunpack.c.l.b16 %v1684
        %v6007 = vunpack.c.h.b16 %v1684
        %v6008 = vunpack.c.l.b16 %v1685
        %v6009 = vunpack.c.h.b16 %v1685
        %v6010 = vunpack.c.l.b16 %v1686
        %v6011 = vunpack.c.h.b16 %v1686
        %v6012 = vunpack.c.l.b16 %v1687
        %v6013 = vunpack.c.h.b16 %v1687
        %v6014 = vunpack.c.l.b16 %v1688
        %v6015 = vunpack.c.h.b16 %v1688
        %v6016 = vunpack.c.l.b16 %v1689
        %v6017 = vunpack.c.h.b16 %v1689
        %v6018 = vunpack.c.l.b16 %v1690
        %v6019 = vunpack.c.h.b16 %v1690
        %v6020 = vunpack.c.l.b16 %v1691
        %v6021 = vunpack.c.h.b16 %v1691
        %v6022 = vunpack.c.l.b16 %v1692
        %v6023 = vunpack.c.h.b16 %v1692
        %v6024 = vunpack.c.l.b16 %v1693
        %v6025 = vunpack.c.h.b16 %v1693
        %v6026 = vunpack.c.l.b16 %v1694
        %v6027 = vunpack.c.h.b16 %v1694
        %v6028 = vunpack.c.l.b16 %v1695
        %v6029 = vunpack.c.h.b16 %v1695
        %v6030 = vunpack.c.l.b16 %v1696
        %v6031 = vunpack.c.h.b16 %v1696
        %v6032 = vunpack.c.l.b16 %v1697
        %v6033 = vunpack.c.h.b16 %v1697
        %v6034 = vunpack.c.l.b16 %v1698
        %v6035 = vunpack.c.h.b16 %v1698
        %v6036 = vunpack.c.l.b16 %v1699
        %v6037 = vunpack.c.h.b16 %v1699
        %v6038 = vunpack.c.l.b16 %v1700
        %v6039 = vunpack.c.h.b16 %v1700
        %v6040 = vunpack.c.l.b16 %v1701
        %v6041 = vunpack.c.h.b16 %v1701
        %v6042 = vunpack.c.l.b16 %v1702
        %v6043 = vunpack.c.h.b16 %v1702
        %v6044 = vunpack.c.l.b16 %v1703
        %v6045 = vunpack.c.h.b16 %v1703
        %v6046 = vunpack.c.l.b16 %v1704
        %v6047 = vunpack.c.h.b16 %v1704
        %v6048 = vunpack.c.l.b16 %v1705
        %v6049 = vunpack.c.h.b16 %v1705
        %v6050 = vunpack.c.l.b16 %v1706
        %v6051 = vunpack.c.h.b16 %v1706
        %v6052 = vunpack.c.l.b16 %v1707
        %v6053 = vunpack.c.h.b16 %v1707
        %v6054 = vunpack.c.l.b16 %v1708
        %v6055 = vunpack.c.h.b16 %v1708
        %v6056 = vunpack.c.l.b16 %v1709
        %v6057 = vunpack.c.h.b16 %v1709
        %v6058 = vunpack.c.l.b16 %v1710
        %v6059 = vunpack.c.h.b16 %v1710
        %v6060 = vunpack.c.l.b16 %v1711
        %v6061 = vunpack.c.h.b16 %v1711
        %v6062 = vunpack.c.l.b16 %v1712
        %v6063 = vunpack.c.h.b16 %v1712
        %v6064 = vunpack.c.l.b16 %v1713
        %v6065 = vunpack.c.h.b16 %v1713
        %v6066 = vunpack.c.l.b16 %v1714
        %v6067 = vunpack.c.h.b16 %v1714
        %v6068 = vunpack.c.l.b16 %v1715
        %v6069 = vunpack.c.h.b16 %v1715
        %v6070 = vunpack.c.l.b16 %v1716
        %v6071 = vunpack.c.h.b16 %v1716
        %v6072 = vunpack.c.l.b16 %v1717
        %v6073 = vunpack.c.h.b16 %v1717
        %v6074 = vunpack.c.l.b16 %v1718
        %v6075 = vunpack.c.h.b16 %v1718
        %v6076 = vunpack.c.l.b16 %v1719
        %v6077 = vunpack.c.h.b16 %v1719
        %v6078 = vunpack.c.l.b16 %v1720
        %v6079 = vunpack.c.h.b16 %v1720
        %v6080 = vunpack.c.l.b16 %v1721
        %v6081 = vunpack.c.h.b16 %v1721
        %v6082 = vunpack.c.l.b16 %v1722
        %v6083 = vunpack.c.h.b16 %v1722
        %v6084 = vunpack.c.l.b16 %v1723
        %v6085 = vunpack.c.h.b16 %v1723
        %v6086 = vunpack.c.l.b16 %v1724
        %v6087 = vunpack.c.h.b16 %v1724
        %v6088 = vunpack.c.l.b16 %v1725
        %v6089 = vunpack.c.h.b16 %v1725
        %v6090 = vunpack.c.l.b16 %v1726
        %v6091 = vunpack.c.h.b16 %v1726
        %v6092 = vunpack.c.l.b16 %v1727
        %v6093 = vunpack.c.h.b16 %v1727
        %v6094 = vunpack.c.l.b16 %v1728
        %v6095 = vunpack.c.h.b16 %v1728
        %v6096 = vunpack.c.l.b16 %v1729
        %v6097 = vunpack.c.h.b16 %v1729
        %v6098 = vunpack.c.l.b16 %v1730
        %v6099 = vunpack.c.h.b16 %v1730
        %v6100 = vunpack.c.l.b16 %v1731
        %v6101 = vunpack.c.h.b16 %v1731
        %v6102 = vunpack.c.l.b16 %v1732
        %v6103 = vunpack.c.h.b16 %v1732
        %v6104 = vunpack.c.l.b16 %v1733
        %v6105 = vunpack.c.h.b16 %v1733
        %v6106 = vunpack.c.l.b16 %v1734
        %v6107 = vunpack.c.h.b16 %v1734
        %v6108 = vunpack.c.l.b16 %v1735
        %v6109 = vunpack.c.h.b16 %v1735
        %v6110 = vunpack.c.l.b16 %v1736
        %v6111 = vunpack.c.h.b16 %v1736
        %v6112 = vunpack.c.l.b16 %v1737
        %v6113 = vunpack.c.h.b16 %v1737
        %v6114 = vunpack.c.l.b16 %v1738
        %v6115 = vunpack.c.h.b16 %v1738
        %v6116 = vunpack.c.l.b16 %v1739
        %v6117 = vunpack.c.h.b16 %v1739
        %v6118 = vunpack.c.l.b16 %v1740
        %v6119 = vunpack.c.h.b16 %v1740
        %v6120 = vunpack.c.l.b16 %v1741
        %v6121 = vunpack.c.h.b16 %v1741
        %v6122 = vunpack.c.l.b16 %v1742
        %v6123 = vunpack.c.h.b16 %v1742
        %v6124 = vunpack.c.l.b16 %v1743
        %v6125 = vunpack.c.h.b16 %v1743
        %v6126 = vunpack.c.l.b16 %v1744
        %v6127 = vunpack.c.h.b16 %v1744
        %v6128 = vunpack.c.l.b16 %v1745
        %v6129 = vunpack.c.h.b16 %v1745
        %v6130 = vunpack.c.l.b16 %v1746
        %v6131 = vunpack.c.h.b16 %v1746
        %v6132 = vunpack.c.l.b16 %v1747
        %v6133 = vunpack.c.h.b16 %v1747
        %v6134 = vunpack.c.l.b16 %v1748
        %v6135 = vunpack.c.h.b16 %v1748
        %v6136 = vunpack.c.l.b16 %v1749
        %v6137 = vunpack.c.h.b16 %v1749
        %v6138 = vunpack.c.l.b16 %v1750
        %v6139 = vunpack.c.h.b16 %v1750
        %v6140 = vunpack.c.l.b16 %v1751
        %v6141 = vunpack.c.h.b16 %v1751
        %v6142 = vunpack.c.l.b16 %v1752
        %v6143 = vunpack.c.h.b16 %v1752
        %v6144 = vunpack.c.l.b16 %v1753
        %v6145 = vunpack.c.h.b16 %v1753
        %v6146 = vunpack.c.l.b16 %v1754
        %v6147 = vunpack.c.h.b16 %v1754
        %v6148 = vunpack.c.l.b16 %v1755
        %v6149 = vunpack.c.h.b16 %v1755
        %v6150 = vunpack.c.l.b16 %v1756
        %v6151 = vunpack.c.h.b16 %v1756
        %v6152 = vunpack.c.l.b16 %v1757
        %v6153 = vunpack.c.h.b16 %v1757
        %v6154 = vunpack.c.l.b16 %v1758
        %v6155 = vunpack.c.h.b16 %v1758
        %v6156 = vunpack.c.l.b16 %v1759
        %v6157 = vunpack.c.h.b16 %v1759
        %v6158 = vunpack.c.l.b16 %v1760
        %v6159 = vunpack.c.h.b16 %v1760
        %v6160 = vunpack.c.l.b16 %v1761
        %v6161 = vunpack.c.h.b16 %v1761
        %v6162 = vunpack.c.l.b16 %v1762
        %v6163 = vunpack.c.h.b16 %v1762
        %v6164 = vunpack.c.l.b16 %v1763
        %v6165 = vunpack.c.h.b16 %v1763
        %v6166 = vunpack.c.l.b16 %v1764
        %v6167 = vunpack.c.h.b16 %v1764
        %v6168 = vunpack.c.l.b16 %v1765
        %v6169 = vunpack.c.h.b16 %v1765
        %v6170 = vunpack.c.l.b16 %v1766
        %v6171 = vunpack.c.h.b16 %v1766
        %v6172 = vunpack.c.l.b16 %v1767
        %v6173 = vunpack.c.h.b16 %v1767
        %v6174 = vunpack.c.l.b16 %v1768
        %v6175 = vunpack.c.h.b16 %v1768
        %v6176 = vunpack.c.l.b16 %v1769
        %v6177 = vunpack.c.h.b16 %v1769
        %v6178 = vunpack.c.l.b16 %v1770
        %v6179 = vunpack.c.h.b16 %v1770
        %v6180 = vunpack.c.l.b16 %v1771
        %v6181 = vunpack.c.h.b16 %v1771
        %v6182 = vunpack.c.l.b16 %v1772
        %v6183 = vunpack.c.h.b16 %v1772
        %v6184 = vunpack.c.l.b16 %v1773
        %v6185 = vunpack.c.h.b16 %v1773
        %v6186 = vunpack.c.l.b16 %v1774
        %v6187 = vunpack.c.h.b16 %v1774
        %v6188 = vunpack.c.l.b16 %v1775
        %v6189 = vunpack.c.h.b16 %v1775
        %v6190 = vunpack.c.l.b16 %v1776
        %v6191 = vunpack.c.h.b16 %v1776
        %v6192 = vunpack.c.l.b16 %v1777
        %v6193 = vunpack.c.h.b16 %v1777
        %v6194 = vunpack.c.l.b16 %v1778
        %v6195 = vunpack.c.h.b16 %v1778
        %v6196 = vunpack.c.l.b16 %v1779
        %v6197 = vunpack.c.h.b16 %v1779
        %v6198 = vunpack.c.l.b16 %v1780
        %v6199 = vunpack.c.h.b16 %v1780
        %v6200 = vunpack.c.l.b16 %v1781
        %v6201 = vunpack.c.h.b16 %v1781
        %v6202 = vunpack.c.l.b16 %v1782
        %v6203 = vunpack.c.h.b16 %v1782
        %v6204 = vunpack.c.l.b16 %v1783
        %v6205 = vunpack.c.h.b16 %v1783
        %v6206 = vunpack.c.l.b16 %v1784
        %v6207 = vunpack.c.h.b16 %v1784
        %v6208 = vunpack.c.l.b16 %v1785
        %v6209 = vunpack.c.h.b16 %v1785
        %v6210 = vunpack.c.l.b16 %v1786
        %v6211 = vunpack.c.h.b16 %v1786
        %v6212 = vunpack.c.l.b16 %v1787
        %v6213 = vunpack.c.h.b16 %v1787
        %v6214 = vunpack.c.l.b16 %v1788
        %v6215 = vunpack.c.h.b16 %v1788
        %v6216 = vunpack.c.l.b16 %v1789
        %v6217 = vunpack.c.h.b16 %v1789
        %v6218 = vunpack.c.l.b16 %v1790
        %v6219 = vunpack.c.h.b16 %v1790
        %v6220 = vunpack.c.l.b16 %v1791
        %v6221 = vunpack.c.h.b16 %v1791
        %v6222 = vunpack.c.l.b16 %v1792
        %v6223 = vunpack.c.h.b16 %v1792
        %v6224 = vunpack.c.l.b16 %v1793
        %v6225 = vunpack.c.h.b16 %v1793
        %v6226 = vunpack.c.l.b16 %v1794
        %v6227 = vunpack.c.h.b16 %v1794
        %v6228 = vunpack.c.l.b16 %v1795
        %v6229 = vunpack.c.h.b16 %v1795
        %v6230 = vunpack.c.l.b16 %v1796
        %v6231 = vunpack.c.h.b16 %v1796
        %v6232 = vunpack.c.l.b16 %v1797
        %v6233 = vunpack.c.h.b16 %v1797
        %v6234 = vunpack.c.l.b16 %v1798
        %v6235 = vunpack.c.h.b16 %v1798
        %v6236 = vunpack.c.l.b16 %v1799
        %v6237 = vunpack.c.h.b16 %v1799
        %v6238 = vunpack.c.l.b16 %v1800
        %v6239 = vunpack.c.h.b16 %v1800
        %v6240 = vunpack.c.l.b16 %v1801
        %v6241 = vunpack.c.h.b16 %v1801
        %v6242 = vunpack.c.l.b16 %v1802
        %v6243 = vunpack.c.h.b16 %v1802
        %v6244 = vunpack.c.l.b16 %v1803
        %v6245 = vunpack.c.h.b16 %v1803
        %v6246 = vunpack.c.l.b16 %v1804
        %v6247 = vunpack.c.h.b16 %v1804
        %v6248 = vunpack.c.l.b16 %v1805
        %v6249 = vunpack.c.h.b16 %v1805
        %v6250 = vunpack.c.l.b16 %v1806
        %v6251 = vunpack.c.h.b16 %v1806
        %v6252 = vunpack.c.l.b16 %v1807
        %v6253 = vunpack.c.h.b16 %v1807
        %v6254 = vunpack.c.l.b16 %v1808
        %v6255 = vunpack.c.h.b16 %v1808
        %v6256 = vunpack.c.l.b16 %v1809
        %v6257 = vunpack.c.h.b16 %v1809
        %v6258 = vunpack.c.l.b16 %v1810
        %v6259 = vunpack.c.h.b16 %v1810
        %v6260 = vunpack.c.l.b16 %v1811
        %v6261 = vunpack.c.h.b16 %v1811
        %v6262 = vunpack.c.l.b16 %v1812
        %v6263 = vunpack.c.h.b16 %v1812
        %v6264 = vunpack.c.l.b16 %v1813
        %v6265 = vunpack.c.h.b16 %v1813
        %v6266 = vunpack.c.l.b16 %v1814
        %v6267 = vunpack.c.h.b16 %v1814
        %v6268 = vunpack.c.l.b16 %v1815
        %v6269 = vunpack.c.h.b16 %v1815
        %v6270 = vunpack.c.l.b16 %v1816
        %v6271 = vunpack.c.h.b16 %v1816
        %v6272 = vunpack.c.l.b16 %v1817
        %v6273 = vunpack.c.h.b16 %v1817
        %v6274 = vunpack.c.l.b16 %v1818
        %v6275 = vunpack.c.h.b16 %v1818
        %v6276 = vunpack.c.l.b16 %v1819
        %v6277 = vunpack.c.h.b16 %v1819
        %v6278 = vunpack.c.l.b16 %v1820
        %v6279 = vunpack.c.h.b16 %v1820
        %v6280 = vunpack.c.l.b16 %v1821
        %v6281 = vunpack.c.h.b16 %v1821
        %v6282 = vunpack.c.l.b16 %v1822
        %v6283 = vunpack.c.h.b16 %v1822
        %v6284 = vunpack.c.l.b16 %v1823
        %v6285 = vunpack.c.h.b16 %v1823
        %v6286 = vunpack.c.l.b16 %v1824
        %v6287 = vunpack.c.h.b16 %v1824
        %v6288 = vunpack.c.l.b16 %v1825
        %v6289 = vunpack.c.h.b16 %v1825
        %v6290 = vunpack.c.l.b16 %v1826
        %v6291 = vunpack.c.h.b16 %v1826
        %v6292 = vunpack.c.l.b16 %v1827
        %v6293 = vunpack.c.h.b16 %v1827
        %v6294 = vunpack.c.l.b16 %v1828
        %v6295 = vunpack.c.h.b16 %v1828
        %v6296 = vunpack.c.l.b16 %v1829
        %v6297 = vunpack.c.h.b16 %v1829
        %v6298 = vunpack.c.l.b16 %v1830
        %v6299 = vunpack.c.h.b16 %v1830
        %v6300 = vunpack.c.l.b16 %v1831
        %v6301 = vunpack.c.h.b16 %v1831
        %v6302 = vunpack.c.l.b16 %v1832
        %v6303 = vunpack.c.h.b16 %v1832
        %v6304 = vunpack.c.l.b16 %v1833
        %v6305 = vunpack.c.h.b16 %v1833
        %v6306 = vunpack.c.l.b16 %v1834
        %v6307 = vunpack.c.h.b16 %v1834
        %v6308 = vunpack.c.l.b16 %v1835
        %v6309 = vunpack.c.h.b16 %v1835
        %v6310 = vunpack.c.l.b16 %v1836
        %v6311 = vunpack.c.h.b16 %v1836
        %v6312 = vunpack.c.l.b16 %v1837
        %v6313 = vunpack.c.h.b16 %v1837
        %v6314 = vunpack.c.l.b16 %v1838
        %v6315 = vunpack.c.h.b16 %v1838
        %v6316 = vunpack.c.l.b16 %v1839
        %v6317 = vunpack.c.h.b16 %v1839
        %v6318 = vunpack.c.l.b16 %v1840
        %v6319 = vunpack.c.h.b16 %v1840
        %v6320 = vunpack.c.l.b16 %v1841
        %v6321 = vunpack.c.h.b16 %v1841
        %v6322 = vunpack.c.l.b16 %v1842
        %v6323 = vunpack.c.h.b16 %v1842
        %v6324 = vunpack.c.l.b16 %v1843
        %v6325 = vunpack.c.h.b16 %v1843
        %v6326 = vunpack.c.l.b16 %v1844
        %v6327 = vunpack.c.h.b16 %v1844
        %v6328 = vunpack.c.l.b16 %v1845
        %v6329 = vunpack.c.h.b16 %v1845
        %v6330 = vunpack.c.l.b16 %v1846
        %v6331 = vunpack.c.h.b16 %v1846
        %v6332 = vunpack.c.l.b16 %v1847
        %v6333 = vunpack.c.h.b16 %v1847
        %v6334 = vunpack.c.l.b16 %v1848
        %v6335 = vunpack.c.h.b16 %v1848
        %v6336 = vunpack.c.l.b16 %v1849
        %v6337 = vunpack.c.h.b16 %v1849
        %v6338 = vunpack.c.l.b16 %v1850
        %v6339 = vunpack.c.h.b16 %v1850
        %v6340 = vunpack.c.l.b16 %v1851
        %v6341 = vunpack.c.h.b16 %v1851
        %v6342 = vunpack.c.l.b16 %v1852
        %v6343 = vunpack.c.h.b16 %v1852
        %v6344 = vunpack.c.l.b16 %v1853
        %v6345 = vunpack.c.h.b16 %v1853
        %v6346 = vunpack.c.l.b16 %v1854
        %v6347 = vunpack.c.h.b16 %v1854
        %v6348 = vunpack.c.l.b16 %v1855
        %v6349 = vunpack.c.h.b16 %v1855
        %v6350 = vunpack.c.l.b16 %v1856
        %v6351 = vunpack.c.h.b16 %v1856
        %v6352 = vunpack.c.l.b16 %v1857
        %v6353 = vunpack.c.h.b16 %v1857
        %v6354 = vunpack.c.l.b16 %v1858
        %v6355 = vunpack.c.h.b16 %v1858
        %v6356 = vunpack.c.l.b16 %v1859
        %v6357 = vunpack.c.h.b16 %v1859
        %v6358 = vunpack.c.l.b16 %v1860
        %v6359 = vunpack.c.h.b16 %v1860
        %v6360 = vunpack.c.l.b16 %v1861
        %v6361 = vunpack.c.h.b16 %v1861
        %v6362 = vunpack.c.l.b16 %v1862
        %v6363 = vunpack.c.h.b16 %v1862
        %v6364 = vunpack.c.l.b16 %v1863
        %v6365 = vunpack.c.h.b16 %v1863
        %v6366 = vunpack.c.l.b16 %v1864
        %v6367 = vunpack.c.h.b16 %v1864
        %v6368 = vunpack.c.l.b16 %v1865
        %v6369 = vunpack.c.h.b16 %v1865
        %v6370 = vunpack.c.l.b16 %v1866
        %v6371 = vunpack.c.h.b16 %v1866
        %v6372 = vunpack.c.l.b16 %v1867
        %v6373 = vunpack.c.h.b16 %v1867
        %v6374 = vunpack.c.l.b16 %v1868
        %v6375 = vunpack.c.h.b16 %v1868
        %v6376 = vunpack.c.l.b16 %v1869
        %v6377 = vunpack.c.h.b16 %v1869
        %v6378 = vunpack.c.l.b16 %v1870
        %v6379 = vunpack.c.h.b16 %v1870
        %v6380 = vunpack.c.l.b16 %v1871
        %v6381 = vunpack.c.h.b16 %v1871
        %v6382 = vunpack.c.l.b16 %v1872
        %v6383 = vunpack.c.h.b16 %v1872
        %v6384 = vunpack.c.l.b16 %v1873
        %v6385 = vunpack.c.h.b16 %v1873
        %v6386 = vunpack.c.l.b16 %v1874
        %v6387 = vunpack.c.h.b16 %v1874
        %v6388 = vunpack.c.l.b16 %v1875
        %v6389 = vunpack.c.h.b16 %v1875
        %v6390 = vunpack.c.l.b16 %v1876
        %v6391 = vunpack.c.h.b16 %v1876
        %v6392 = vunpack.c.l.b16 %v1877
        %v6393 = vunpack.c.h.b16 %v1877
        %v6394 = vunpack.c.l.b16 %v1878
        %v6395 = vunpack.c.h.b16 %v1878
        %v6396 = vunpack.c.l.b16 %v1879
        %v6397 = vunpack.c.h.b16 %v1879
        %v6398 = vunpack.c.l.b16 %v1880
        %v6399 = vunpack.c.h.b16 %v1880
        %v6400 = vunpack.c.l.b16 %v1881
        %v6401 = vunpack.c.h.b16 %v1881
        %v6402 = vunpack.c.l.b16 %v1882
        %v6403 = vunpack.c.h.b16 %v1882
        %v6404 = vunpack.c.l.b16 %v1883
        %v6405 = vunpack.c.h.b16 %v1883
        %v6406 = vunpack.c.l.b16 %v1884
        %v6407 = vunpack.c.h.b16 %v1884
        %v6408 = vunpack.c.l.b16 %v1885
        %v6409 = vunpack.c.h.b16 %v1885
        %v6410 = vunpack.c.l.b16 %v1886
        %v6411 = vunpack.c.h.b16 %v1886
        %v6412 = vunpack.c.l.b16 %v1887
        %v6413 = vunpack.c.h.b16 %v1887
        %v6414 = vunpack.c.l.b16 %v1888
        %v6415 = vunpack.c.h.b16 %v1888
        %v6416 = vunpack.c.l.b16 %v1889
        %v6417 = vunpack.c.h.b16 %v1889
        %v6418 = vunpack.c.l.b16 %v1890
        %v6419 = vunpack.c.h.b16 %v1890
        %v6420 = vunpack.c.l.b16 %v1891
        %v6421 = vunpack.c.h.b16 %v1891
        %v6422 = vunpack.c.l.b16 %v1892
        %v6423 = vunpack.c.h.b16 %v1892
        %v6424 = vunpack.c.l.b16 %v1893
        %v6425 = vunpack.c.h.b16 %v1893
        %v6426 = vunpack.c.l.b16 %v1894
        %v6427 = vunpack.c.h.b16 %v1894
        %v6428 = vunpack.c.l.b16 %v1895
        %v6429 = vunpack.c.h.b16 %v1895
        %v6430 = vunpack.c.l.b16 %v1896
        %v6431 = vunpack.c.h.b16 %v1896
        %v6432 = vunpack.c.l.b16 %v1897
        %v6433 = vunpack.c.h.b16 %v1897
        %v6434 = vunpack.c.l.b16 %v1898
        %v6435 = vunpack.c.h.b16 %v1898
        %v6436 = vunpack.c.l.b16 %v1899
        %v6437 = vunpack.c.h.b16 %v1899
        %v6438 = vunpack.c.l.b16 %v1900
        %v6439 = vunpack.c.h.b16 %v1900
        %v6440 = vunpack.c.l.b16 %v1901
        %v6441 = vunpack.c.h.b16 %v1901
        %v6442 = vunpack.c.l.b16 %v1902
        %v6443 = vunpack.c.h.b16 %v1902
        %v6444 = vunpack.c.l.b16 %v1903
        %v6445 = vunpack.c.h.b16 %v1903
        %v6446 = vunpack.c.l.b16 %v1904
        %v6447 = vunpack.c.h.b16 %v1904
        %v6448 = vunpack.c.l.b16 %v1905
        %v6449 = vunpack.c.h.b16 %v1905
        %v6450 = vunpack.c.l.b16 %v1906
        %v6451 = vunpack.c.h.b16 %v1906
        %v6452 = vunpack.c.l.b16 %v1907
        %v6453 = vunpack.c.h.b16 %v1907
        %v6454 = vunpack.c.l.b16 %v1908
        %v6455 = vunpack.c.h.b16 %v1908
        %v6456 = vunpack.c.l.b16 %v1909
        %v6457 = vunpack.c.h.b16 %v1909
        %v6458 = vunpack.c.l.b16 %v1910
        %v6459 = vunpack.c.h.b16 %v1910
        %v6460 = vunpack.c.l.b16 %v1911
        %v6461 = vunpack.c.h.b16 %v1911
        %v6462 = vunpack.c.l.b16 %v1912
        %v6463 = vunpack.c.h.b16 %v1912
        %v6464 = vunpack.c.l.b16 %v1913
        %v6465 = vunpack.c.h.b16 %v1913
        %v6466 = vunpack.c.l.b16 %v1914
        %v6467 = vunpack.c.h.b16 %v1914
        %v6468 = vunpack.c.l.b16 %v1915
        %v6469 = vunpack.c.h.b16 %v1915
        %v6470 = vunpack.c.l.b16 %v1916
        %v6471 = vunpack.c.h.b16 %v1916
        %v6472 = vunpack.c.l.b16 %v1917
        %v6473 = vunpack.c.h.b16 %v1917
        %v6474 = vunpack.c.l.b16 %v1918
        %v6475 = vunpack.c.h.b16 %v1918
        %v6476 = vunpack.c.l.b16 %v1919
        %v6477 = vunpack.c.h.b16 %v1919
        %v6478 = vunpack.c.l.b16 %v1920
        %v6479 = vunpack.c.h.b16 %v1920
        %v6480 = vunpack.c.l.b16 %v1921
        %v6481 = vunpack.c.h.b16 %v1921
        %v6482 = vunpack.c.l.b16 %v1922
        %v6483 = vunpack.c.h.b16 %v1922
        %v6484 = vunpack.c.l.b16 %v1923
        %v6485 = vunpack.c.h.b16 %v1923
        %v6486 = vunpack.c.l.b16 %v1924
        %v6487 = vunpack.c.h.b16 %v1924
        %v6488 = vunpack.c.l.b16 %v1925
        %v6489 = vunpack.c.h.b16 %v1925
        %v6490 = vunpack.c.l.b16 %v1926
        %v6491 = vunpack.c.h.b16 %v1926
        %v6492 = vunpack.c.l.b16 %v1927
        %v6493 = vunpack.c.h.b16 %v1927
        %v6494 = vunpack.c.l.b16 %v1928
        %v6495 = vunpack.c.h.b16 %v1928
        %v6496 = vunpack.c.l.b16 %v1929
        %v6497 = vunpack.c.h.b16 %v1929
        %v6498 = vunpack.c.l.b16 %v1930
        %v6499 = vunpack.c.h.b16 %v1930
        %v6500 = vunpack.c.l.b16 %v1931
        %v6501 = vunpack.c.h.b16 %v1931
        %v6502 = vunpack.c.l.b16 %v1932
        %v6503 = vunpack.c.h.b16 %v1932
        %v6504 = vunpack.c.l.b16 %v1933
        %v6505 = vunpack.c.h.b16 %v1933
        %v6506 = vunpack.c.l.b16 %v1934
        %v6507 = vunpack.c.h.b16 %v1934
        %v6508 = vunpack.c.l.b16 %v1935
        %v6509 = vunpack.c.h.b16 %v1935
        %v6510 = vunpack.c.l.b16 %v1936
        %v6511 = vunpack.c.h.b16 %v1936
        %v6512 = vunpack.c.l.b16 %v1937
        %v6513 = vunpack.c.h.b16 %v1937
        %v6514 = vunpack.c.l.b16 %v1938
        %v6515 = vunpack.c.h.b16 %v1938
        %v6516 = vunpack.c.l.b16 %v1939
        %v6517 = vunpack.c.h.b16 %v1939
        %v6518 = vunpack.c.l.b16 %v1940
        %v6519 = vunpack.c.h.b16 %v1940
        %v6520 = vunpack.c.l.b16 %v1941
        %v6521 = vunpack.c.h.b16 %v1941
        %v6522 = vunpack.c.l.b16 %v1942
        %v6523 = vunpack.c.h.b16 %v1942
        %v6524 = vunpack.c.l.b16 %v1943
        %v6525 = vunpack.c.h.b16 %v1943
        %v6526 = vunpack.c.l.b16 %v1944
        %v6527 = vunpack.c.h.b16 %v1944
        %v6528 = vunpack.c.l.b16 %v1945
        %v6529 = vunpack.c.h.b16 %v1945
        %v6530 = vunpack.c.l.b16 %v1946
        %v6531 = vunpack.c.h.b16 %v1946
        %v6532 = vunpack.c.l.b16 %v1947
        %v6533 = vunpack.c.h.b16 %v1947
        %v6534 = vunpack.c.l.b16 %v1948
        %v6535 = vunpack.c.h.b16 %v1948
        %v6536 = vunpack.c.l.b16 %v1949
        %v6537 = vunpack.c.h.b16 %v1949
        %v6538 = vunpack.c.l.b16 %v1950
        %v6539 = vunpack.c.h.b16 %v1950
        %v6540 = vunpack.c.l.b16 %v1951
        %v6541 = vunpack.c.h.b16 %v1951
        %v6542 = vunpack.c.l.b16 %v1952
        %v6543 = vunpack.c.h.b16 %v1952
        %v6544 = vunpack.c.l.b16 %v1953
        %v6545 = vunpack.c.h.b16 %v1953
        %v6546 = vunpack.c.l.b16 %v1954
        %v6547 = vunpack.c.h.b16 %v1954
        %v6548 = vunpack.c.l.b16 %v1955
        %v6549 = vunpack.c.h.b16 %v1955
        %v6550 = vunpack.c.l.b16 %v1956
        %v6551 = vunpack.c.h.b16 %v1956
        %v6552 = vunpack.c.l.b16 %v1957
        %v6553 = vunpack.c.h.b16 %v1957
        %v6554 = vunpack.c.l.b16 %v1958
        %v6555 = vunpack.c.h.b16 %v1958
        %v6556 = vunpack.c.l.b16 %v1959
        %v6557 = vunpack.c.h.b16 %v1959
        %v6558 = vunpack.c.l.b16 %v1960
        %v6559 = vunpack.c.h.b16 %v1960
        %v6560 = vunpack.c.l.b16 %v1961
        %v6561 = vunpack.c.h.b16 %v1961
        %v6562 = vunpack.c.l.b16 %v1962
        %v6563 = vunpack.c.h.b16 %v1962
        %v6564 = vunpack.c.l.b16 %v1963
        %v6565 = vunpack.c.h.b16 %v1963
        %v6566 = vunpack.c.l.b16 %v1964
        %v6567 = vunpack.c.h.b16 %v1964
        %v6568 = vunpack.c.l.b16 %v1965
        %v6569 = vunpack.c.h.b16 %v1965
        %v6570 = vunpack.c.l.b16 %v1966
        %v6571 = vunpack.c.h.b16 %v1966
        %v6572 = vunpack.c.l.b16 %v1967
        %v6573 = vunpack.c.h.b16 %v1967
        %v6574 = vunpack.c.l.b16 %v1968
        %v6575 = vunpack.c.h.b16 %v1968
        %v6576 = vunpack.c.l.b16 %v1969
        %v6577 = vunpack.c.h.b16 %v1969
        %v6578 = vunpack.c.l.b16 %v1970
        %v6579 = vunpack.c.h.b16 %v1970
        %v6580 = vunpack.c.l.b16 %v1971
        %v6581 = vunpack.c.h.b16 %v1971
        %v6582 = vunpack.c.l.b16 %v1972
        %v6583 = vunpack.c.h.b16 %v1972
        %v6584 = vunpack.c.l.b16 %v1973
        %v6585 = vunpack.c.h.b16 %v1973
        %v6586 = vunpack.c.l.b16 %v1974
        %v6587 = vunpack.c.h.b16 %v1974
        %v6588 = vunpack.c.l.b16 %v1975
        %v6589 = vunpack.c.h.b16 %v1975
        %v6590 = vunpack.c.l.b16 %v1976
        %v6591 = vunpack.c.h.b16 %v1976
        %v6592 = vunpack.c.l.b16 %v1977
        %v6593 = vunpack.c.h.b16 %v1977
        %v6594 = vunpack.c.l.b16 %v1978
        %v6595 = vunpack.c.h.b16 %v1978
        %v6596 = vunpack.c.l.b16 %v1979
        %v6597 = vunpack.c.h.b16 %v1979
        %v6598 = vunpack.c.l.b16 %v1980
        %v6599 = vunpack.c.h.b16 %v1980
        %v6600 = vunpack.c.l.b16 %v1981
        %v6601 = vunpack.c.h.b16 %v1981
        %v6602 = vunpack.c.l.b16 %v1982
        %v6603 = vunpack.c.h.b16 %v1982
        %v6604 = vunpack.c.l.b16 %v1983
        %v6605 = vunpack.c.h.b16 %v1983
        %v6606 = vunpack.c.l.b16 %v1984
        %v6607 = vunpack.c.h.b16 %v1984
        %v6608 = vunpack.c.l.b16 %v1985
        %v6609 = vunpack.c.h.b16 %v1985
        %v6610 = vunpack.c.l.b16 %v1986
        %v6611 = vunpack.c.h.b16 %v1986
        %v6612 = vunpack.c.l.b16 %v1987
        %v6613 = vunpack.c.h.b16 %v1987
        %v6614 = vunpack.c.l.b16 %v1988
        %v6615 = vunpack.c.h.b16 %v1988
        %v6616 = vunpack.c.l.b16 %v1989
        %v6617 = vunpack.c.h.b16 %v1989
        %v6618 = vunpack.c.l.b16 %v1990
        %v6619 = vunpack.c.h.b16 %v1990
        %v6620 = vunpack.c.l.b16 %v1991
        %v6621 = vunpack.c.h.b16 %v1991
        %v6622 = vunpack.c.l.b16 %v1992
        %v6623 = vunpack.c.h.b16 %v1992
        %v6624 = vunpack.c.l.b16 %v1993
        %v6625 = vunpack.c.h.b16 %v1993
        %v6626 = vunpack.c.l.b16 %v1994
        %v6627 = vunpack.c.h.b16 %v1994
        %v6628 = vunpack.c.l.b16 %v1995
        %v6629 = vunpack.c.h.b16 %v1995
        %v6630 = vunpack.c.l.b16 %v1996
        %v6631 = vunpack.c.h.b16 %v1996
        %v6632 = vunpack.c.l.b16 %v1997
        %v6633 = vunpack.c.h.b16 %v1997
        %v6634 = vunpack.c.l.b16 %v1998
        %v6635 = vunpack.c.h.b16 %v1998
        %v6636 = vunpack.c.l.b16 %v1999
        %v6637 = vunpack.c.h.b16 %v1999
        %v6638 = vunpack.c.l.b16 %v2000
        %v6639 = vunpack.c.h.b16 %v2000
        %v6640 = vunpack.c.l.b16 %v2001
        %v6641 = vunpack.c.h.b16 %v2001
        %v6642 = vunpack.c.l.b16 %v2002
        %v6643 = vunpack.c.h.b16 %v2002
        %v6644 = vunpack.c.l.b16 %v2003
        %v6645 = vunpack.c.h.b16 %v2003
        %v6646 = vunpack.c.l.b16 %v2004
        %v6647 = vunpack.c.h.b16 %v2004
        %v6648 = vunpack.c.l.b16 %v2005
        %v6649 = vunpack.c.h.b16 %v2005
        %v6650 = vunpack.c.l.b16 %v2006
        %v6651 = vunpack.c.h.b16 %v2006
        %v6652 = vunpack.c.l.b16 %v2007
        %v6653 = vunpack.c.h.b16 %v2007
        %v6654 = vunpack.c.l.b16 %v2008
        %v6655 = vunpack.c.h.b16 %v2008
        %v6656 = vunpack.c.l.b16 %v2009
        %v6657 = vunpack.c.h.b16 %v2009
        %v6658 = vunpack.c.l.b16 %v2010
        %v6659 = vunpack.c.h.b16 %v2010
        %v6660 = vunpack.c.l.b16 %v2011
        %v6661 = vunpack.c.h.b16 %v2011
        %v6662 = vunpack.c.l.b16 %v2012
        %v6663 = vunpack.c.h.b16 %v2012
        %v6664 = vunpack.c.l.b16 %v2013
        %v6665 = vunpack.c.h.b16 %v2013
        %v6666 = vunpack.c.l.b16 %v2014
        %v6667 = vunpack.c.h.b16 %v2014
        %v6668 = vunpack.c.l.b16 %v2015
        %v6669 = vunpack.c.h.b16 %v2015
        %v6670 = vunpack.c.l.b16 %v2016
        %v6671 = vunpack.c.h.b16 %v2016
        %v6672 = vunpack.c.l.b16 %v2017
        %v6673 = vunpack.c.h.b16 %v2017
        %v6674 = vunpack.c.l.b16 %v2018
        %v6675 = vunpack.c.h.b16 %v2018
        %v6676 = vunpack.c.l.b16 %v2019
        %v6677 = vunpack.c.h.b16 %v2019
        %v6678 = vunpack.c.l.b16 %v2020
        %v6679 = vunpack.c.h.b16 %v2020
        %v6680 = vunpack.c.l.b16 %v2021
        %v6681 = vunpack.c.h.b16 %v2021
        %v6682 = vunpack.c.l.b16 %v2022
        %v6683 = vunpack.c.h.b16 %v2022
        %v6684 = vunpack.c.l.b16 %v2023
        %v6685 = vunpack.c.h.b16 %v2023
        %v6686 = vunpack.c.l.b16 %v2024
        %v6687 = vunpack.c.h.b16 %v2024
        %v6688 = vunpack.c.l.b16 %v2025
        %v6689 = vunpack.c.h.b16 %v2025
        %v6690 = vunpack.c.l.b16 %v2026
        %v6691 = vunpack.c.h.b16 %v2026
        %v6692 = vunpack.c.l.b16 %v2027
        %v6693 = vunpack.c.h.b16 %v2027
        %v6694 = vunpack.c.l.b16 %v2028
        %v6695 = vunpack.c.h.b16 %v2028
        %v6696 = vunpack.c.l.b16 %v2029
        %v6697 = vunpack.c.h.b16 %v2029
        %v6698 = vunpack.c.l.b16 %v2030
        %v6699 = vunpack.c.h.b16 %v2030
        %v6700 = vunpack.c.l.b16 %v2031
        %v6701 = vunpack.c.h.b16 %v2031
        %v6702 = vunpack.c.l.b16 %v2032
        %v6703 = vunpack.c.h.b16 %v2032
        %v6704 = vunpack.c.l.b16 %v2033
        %v6705 = vunpack.c.h.b16 %v2033
        %v6706 = vunpack.c.l.b16 %v2034
        %v6707 = vunpack.c.h.b16 %v2034
        %v6708 = vunpack.c.l.b16 %v2035
        %v6709 = vunpack.c.h.b16 %v2035
        %v6710 = vunpack.c.l.b16 %v2036
        %v6711 = vunpack.c.h.b16 %v2036
        %v6712 = vunpack.c.l.b16 %v2037
        %v6713 = vunpack.c.h.b16 %v2037
        %v6714 = vunpack.c.l.b16 %v2038
        %v6715 = vunpack.c.h.b16 %v2038
        %v6716 = vunpack.c.l.b16 %v2039
        %v6717 = vunpack.c.h.b16 %v2039
        %v6718 = vunpack.c.l.b16 %v2040
        %v6719 = vunpack.c.h.b16 %v2040
        %v6720 = vunpack.c.l.b16 %v2041
        %v6721 = vunpack.c.h.b16 %v2041
        %v6722 = vunpack.c.l.b16 %v2042
        %v6723 = vunpack.c.h.b16 %v2042
        %v6724 = vunpack.c.l.b16 %v2043
        %v6725 = vunpack.c.h.b16 %v2043
        %v6726 = vunpack.c.l.b16 %v2044
        %v6727 = vunpack.c.h.b16 %v2044
        %v6728 = vunpack.c.l.b16 %v2045
        %v6729 = vunpack.c.h.b16 %v2045
        %v6730 = vunpack.c.l.b16 %v2046
        %v6731 = vunpack.c.h.b16 %v2046
        %v6732 = vunpack.c.l.b16 %v2047
        %v6733 = vunpack.c.h.b16 %v2047
        %v6734 = vunpack.c.l.b16 %v2048
        %v6735 = vunpack.c.h.b16 %v2048
        %v6736 = vunpack.c.l.b16 %v2049
        %v6737 = vunpack.c.h.b16 %v2049
        %v6738 = vunpack.c.l.b16 %v2050
        %v6739 = vunpack.c.h.b16 %v2050
        %v6740 = vunpack.c.l.b16 %v2051
        %v6741 = vunpack.c.h.b16 %v2051
        %v6742 = vunpack.c.l.b16 %v2052
        %v6743 = vunpack.c.h.b16 %v2052
        %v6744 = vunpack.c.l.b16 %v2053
        %v6745 = vunpack.c.h.b16 %v2053
        %v6746 = vunpack.c.l.b16 %v2054
        %v6747 = vunpack.c.h.b16 %v2054
        %v6748 = vunpack.c.l.b16 %v2055
        %v6749 = vunpack.c.h.b16 %v2055
        %v6750 = vunpack.c.l.b16 %v2056
        %v6751 = vunpack.c.h.b16 %v2056
        %v6752 = vunpack.c.l.b16 %v2057
        %v6753 = vunpack.c.h.b16 %v2057
        %v6754 = vunpack.c.l.b16 %v2058
        %v6755 = vunpack.c.h.b16 %v2058
        %v6756 = vunpack.c.l.b16 %v2059
        %v6757 = vunpack.c.h.b16 %v2059
        %v6758 = vunpack.c.l.b16 %v2060
        %v6759 = vunpack.c.h.b16 %v2060
        %v6760 = vunpack.c.l.b16 %v2061
        %v6761 = vunpack.c.h.b16 %v2061
        %v6762 = vunpack.c.l.b16 %v2062
        %v6763 = vunpack.c.h.b16 %v2062
        %v6764 = vunpack.c.l.b16 %v2063
        %v6765 = vunpack.c.h.b16 %v2063
        %v6766 = vunpack.c.l.b16 %v2064
        %v6767 = vunpack.c.h.b16 %v2064
        %v6768 = vunpack.c.l.b16 %v2065
        %v6769 = vunpack.c.h.b16 %v2065
        %v6770 = vunpack.c.l.b16 %v2066
        %v6771 = vunpack.c.h.b16 %v2066
        %v6772 = vunpack.c.l.b16 %v2067
        %v6773 = vunpack.c.h.b16 %v2067
        %v6774 = vunpack.c.l.b16 %v2068
        %v6775 = vunpack.c.h.b16 %v2068
        %v6776 = vunpack.c.l.b16 %v2069
        %v6777 = vunpack.c.h.b16 %v2069
        %v6778 = vunpack.c.l.b16 %v2070
        %v6779 = vunpack.c.h.b16 %v2070
        %v6780 = vunpack.c.l.b16 %v2071
        %v6781 = vunpack.c.h.b16 %v2071
        %v6782 = vunpack.c.l.b16 %v2072
        %v6783 = vunpack.c.h.b16 %v2072
        %v6784 = vunpack.c.l.b16 %v2073
        %v6785 = vunpack.c.h.b16 %v2073
        %v6786 = vunpack.c.l.b16 %v2074
        %v6787 = vunpack.c.h.b16 %v2074
        %v6788 = vunpack.c.l.b16 %v2075
        %v6789 = vunpack.c.h.b16 %v2075
        %v6790 = vunpack.c.l.b16 %v2076
        %v6791 = vunpack.c.h.b16 %v2076
        %v6792 = vunpack.c.l.b16 %v2077
        %v6793 = vunpack.c.h.b16 %v2077
        %v6794 = vunpack.c.l.b16 %v2078
        %v6795 = vunpack.c.h.b16 %v2078
        %v6796 = vunpack.c.l.b16 %v2079
        %v6797 = vunpack.c.h.b16 %v2079
        %v6798 = vunpack.c.l.b16 %v2080
        %v6799 = vunpack.c.h.b16 %v2080
        %v6800 = vunpack.c.l.b16 %v2081
        %v6801 = vunpack.c.h.b16 %v2081
        %v6802 = vunpack.c.l.b16 %v2082
        %v6803 = vunpack.c.h.b16 %v2082
        %v6804 = vunpack.c.l.b16 %v2083
        %v6805 = vunpack.c.h.b16 %v2083
        %v6806 = vunpack.c.l.b16 %v2084
        %v6807 = vunpack.c.h.b16 %v2084
        %v6808 = vunpack.c.l.b16 %v2085
        %v6809 = vunpack.c.h.b16 %v2085
        %v6810 = vunpack.c.l.b16 %v2086
        %v6811 = vunpack.c.h.b16 %v2086
        %v6812 = vunpack.c.l.b16 %v2087
        %v6813 = vunpack.c.h.b16 %v2087
        %v6814 = vunpack.c.l.b16 %v2088
        %v6815 = vunpack.c.h.b16 %v2088
        %v6816 = vunpack.c.l.b16 %v2089
        %v6817 = vunpack.c.h.b16 %v2089
        %v6818 = vunpack.c.l.b16 %v2090
        %v6819 = vunpack.c.h.b16 %v2090
        %v6820 = vunpack.c.l.b16 %v2091
        %v6821 = vunpack.c.h.b16 %v2091
        %v6822 = vunpack.c.l.b16 %v2092
        %v6823 = vunpack.c.h.b16 %v2092
        %v6824 = vunpack.c.l.b16 %v2093
        %v6825 = vunpack.c.h.b16 %v2093
        %v6826 = vunpack.c.l.b16 %v2094
        %v6827 = vunpack.c.h.b16 %v2094
        %v6828 = vunpack.c.l.b16 %v2095
        %v6829 = vunpack.c.h.b16 %v2095
        %v6830 = vunpack.c.l.b16 %v2096
        %v6831 = vunpack.c.h.b16 %v2096
        %v6832 = vunpack.c.l.b16 %v2097
        %v6833 = vunpack.c.h.b16 %v2097
        %v6834 = vunpack.c.l.b16 %v2098
        %v6835 = vunpack.c.h.b16 %v2098
        %v6836 = vunpack.c.l.b16 %v2099
        %v6837 = vunpack.c.h.b16 %v2099
        %v6838 = vunpack.c.l.b16 %v2100
        %v6839 = vunpack.c.h.b16 %v2100
        %v6840 = vunpack.c.l.b16 %v2101
        %v6841 = vunpack.c.h.b16 %v2101
        %v6842 = vunpack.c.l.b16 %v2102
        %v6843 = vunpack.c.h.b16 %v2102
        %v6844 = vunpack.c.l.b16 %v2103
        %v6845 = vunpack.c.h.b16 %v2103
        %v6846 = vunpack.c.l.b16 %v2104
        %v6847 = vunpack.c.h.b16 %v2104
        %v6848 = vunpack.c.l.b16 %v2105
        %v6849 = vunpack.c.h.b16 %v2105
        %v6850 = vunpack.c.l.b16 %v2106
        %v6851 = vunpack.c.h.b16 %v2106
        %v6852 = vunpack.c.l.b16 %v2107
        %v6853 = vunpack.c.h.b16 %v2107
        %v6854 = vunpack.c.l.b16 %v2108
        %v6855 = vunpack.c.h.b16 %v2108
        %v6856 = vunpack.c.l.b16 %v2109
        %v6857 = vunpack.c.h.b16 %v2109
        %v6858 = vunpack.c.l.b16 %v2110
        %v6859 = vunpack.c.h.b16 %v2110
        %v6860 = vunpack.c.l.b16 %v2111
        %v6861 = vunpack.c.h.b16 %v2111
        %v6862 = vunpack.c.l.b16 %v2112
        %v6863 = vunpack.c.h.b16 %v2112
        %v6864 = vunpack.c.l.b16 %v2113
        %v6865 = vunpack.c.h.b16 %v2113
        %v6866 = vunpack.c.l.b16 %v2114
        %v6867 = vunpack.c.h.b16 %v2114
        %v6868 = vunpack.c.l.b16 %v2115
        %v6869 = vunpack.c.h.b16 %v2115
        %v6870 = vunpack.c.l.b16 %v2116
        %v6871 = vunpack.c.h.b16 %v2116
        %v6872 = vunpack.c.l.b16 %v2117
        %v6873 = vunpack.c.h.b16 %v2117
        %v6874 = vunpack.c.l.b16 %v2118
        %v6875 = vunpack.c.h.b16 %v2118
        %v6876 = vunpack.c.l.b16 %v2119
        %v6877 = vunpack.c.h.b16 %v2119
        %v6878 = vunpack.c.l.b16 %v2120
        %v6879 = vunpack.c.h.b16 %v2120
        %v6880 = vunpack.c.l.b16 %v2121
        %v6881 = vunpack.c.h.b16 %v2121
        %v6882 = vunpack.c.l.b16 %v2122
        %v6883 = vunpack.c.h.b16 %v2122
        %v6884 = vunpack.c.l.b16 %v2123
        %v6885 = vunpack.c.h.b16 %v2123
        %v6886 = vunpack.c.l.b16 %v2124
        %v6887 = vunpack.c.h.b16 %v2124
        %v6888 = vunpack.c.l.b16 %v2125
        %v6889 = vunpack.c.h.b16 %v2125
        %v6890 = vunpack.c.l.b16 %v2126
        %v6891 = vunpack.c.h.b16 %v2126
        %v6892 = vunpack.c.l.b16 %v2127
        %v6893 = vunpack.c.h.b16 %v2127
        %v6894 = vunpack.c.l.b16 %v2128
        %v6895 = vunpack.c.h.b16 %v2128
        %v6896 = vunpack.c.l.b16 %v2129
        %v6897 = vunpack.c.h.b16 %v2129
        %v6898 = vunpack.c.l.b16 %v2130
        %v6899 = vunpack.c.h.b16 %v2130
        %v6900 = vunpack.c.l.b16 %v2131
        %v6901 = vunpack.c.h.b16 %v2131
        %v6902 = vunpack.c.l.b16 %v2132
        %v6903 = vunpack.c.h.b16 %v2132
        %v6904 = vunpack.c.l.b16 %v2133
        %v6905 = vunpack.c.h.b16 %v2133
        %v6906 = vunpack.c.l.b16 %v2134
        %v6907 = vunpack.c.h.b16 %v2134
        %v6908 = vunpack.c.l.b16 %v2135
        %v6909 = vunpack.c.h.b16 %v2135
        %v6910 = vunpack.c.l.b16 %v2136
        %v6911 = vunpack.c.h.b16 %v2136
        %v6912 = vunpack.c.l.b16 %v2137
        %v6913 = vunpack.c.h.b16 %v2137
        %v6914 = vunpack.c.l.b16 %v2138
        %v6915 = vunpack.c.h.b16 %v2138
        %v6916 = vunpack.c.l.b16 %v2139
        %v6917 = vunpack.c.h.b16 %v2139
        %v6918 = vunpack.c.l.b16 %v2140
        %v6919 = vunpack.c.h.b16 %v2140
        %v6920 = vunpack.c.l.b16 %v2141
        %v6921 = vunpack.c.h.b16 %v2141
        %v6922 = vunpack.c.l.b16 %v2142
        %v6923 = vunpack.c.h.b16 %v2142
        %v6924 = vunpack.c.l.b16 %v2143
        %v6925 = vunpack.c.h.b16 %v2143
        %v6926 = vunpack.c.l.b16 %v2144
        %v6927 = vunpack.c.h.b16 %v2144
        %v6928 = vunpack.c.l.b16 %v2145
        %v6929 = vunpack.c.h.b16 %v2145
        %v6930 = vunpack.c.l.b16 %v2146
        %v6931 = vunpack.c.h.b16 %v2146
        %v6932 = vunpack.c.l.b16 %v2147
        %v6933 = vunpack.c.h.b16 %v2147
        %v6934 = vunpack.c.l.b16 %v2148
        %v6935 = vunpack.c.h.b16 %v2148
        %v6936 = vunpack.c.l.b16 %v2149
        %v6937 = vunpack.c.h.b16 %v2149
        %v6938 = vunpack.c.l.b16 %v2150
        %v6939 = vunpack.c.h.b16 %v2150
        %v6940 = vunpack.c.l.b16 %v2151
        %v6941 = vunpack.c.h.b16 %v2151
        %v6942 = vunpack.c.l.b16 %v2152
        %v6943 = vunpack.c.h.b16 %v2152
        %v6944 = vunpack.c.l.b16 %v2153
        %v6945 = vunpack.c.h.b16 %v2153
        %v6946 = vunpack.c.l.b16 %v2154
        %v6947 = vunpack.c.h.b16 %v2154
        %v6948 = vunpack.c.l.b16 %v2155
        %v6949 = vunpack.c.h.b16 %v2155
        %v6950 = vunpack.c.l.b16 %v2156
        %v6951 = vunpack.c.h.b16 %v2156
        %v6952 = vunpack.c.l.b16 %v2157
        %v6953 = vunpack.c.h.b16 %v2157
        %v6954 = vunpack.c.l.b16 %v2158
        %v6955 = vunpack.c.h.b16 %v2158
        %v6956 = vunpack.c.l.b16 %v2159
        %v6957 = vunpack.c.h.b16 %v2159
        %v6958 = vunpack.c.l.b16 %v2160
        %v6959 = vunpack.c.h.b16 %v2160
        %v6960 = vunpack.c.l.b16 %v2161
        %v6961 = vunpack.c.h.b16 %v2161
        %v6962 = vunpack.c.l.b16 %v2162
        %v6963 = vunpack.c.h.b16 %v2162
        %v6964 = vunpack.c.l.b16 %v2163
        %v6965 = vunpack.c.h.b16 %v2163
        %v6966 = vunpack.c.l.b16 %v2164
        %v6967 = vunpack.c.h.b16 %v2164
        %v6968 = vunpack.c.l.b16 %v2165
        %v6969 = vunpack.c.h.b16 %v2165
        %v6970 = vunpack.c.l.b16 %v2166
        %v6971 = vunpack.c.h.b16 %v2166
        %v6972 = vunpack.c.l.b16 %v2167
        %v6973 = vunpack.c.h.b16 %v2167
        %v6974 = vunpack.c.l.b16 %v2168
        %v6975 = vunpack.c.h.b16 %v2168
        %v6976 = vunpack.c.l.b16 %v2169
        %v6977 = vunpack.c.h.b16 %v2169
        %v6978 = vunpack.c.l.b16 %v2170
        %v6979 = vunpack.c.h.b16 %v2170
        %v6980 = vunpack.c.l.b16 %v2171
        %v6981 = vunpack.c.h.b16 %v2171
        %v6982 = vunpack.c.l.b16 %v2172
        %v6983 = vunpack.c.h.b16 %v2172
        %v6984 = vunpack.c.l.b16 %v2173
        %v6985 = vunpack.c.h.b16 %v2173
        %v6986 = vunpack.c.l.b16 %v2174
        %v6987 = vunpack.c.h.b16 %v2174
        %v6988 = vunpack.c.l.b16 %v2175
        %v6989 = vunpack.c.h.b16 %v2175
        %v6990 = vunpack.c.l.b16 %v2176
        %v6991 = vunpack.c.h.b16 %v2176
        %v6992 = vunpack.c.l.b16 %v2177
        %v6993 = vunpack.c.h.b16 %v2177
        %v6994 = vunpack.c.l.b16 %v2178
        %v6995 = vunpack.c.h.b16 %v2178
        %v6996 = vunpack.c.l.b16 %v2179
        %v6997 = vunpack.c.h.b16 %v2179
        %v6998 = vunpack.c.l.b16 %v2180
        %v6999 = vunpack.c.h.b16 %v2180
        %v7000 = vunpack.c.l.b16 %v2181
        %v7001 = vunpack.c.h.b16 %v2181
        %v7002 = vunpack.c.l.b16 %v2182
        %v7003 = vunpack.c.h.b16 %v2182
        %v7004 = vunpack.c.l.b16 %v2183
        %v7005 = vunpack.c.h.b16 %v2183
        %v7006 = vunpack.c.l.b16 %v2184
        %v7007 = vunpack.c.h.b16 %v2184
        %v7008 = vunpack.c.l.b16 %v2185
        %v7009 = vunpack.c.h.b16 %v2185
        %v7010 = vunpack.c.l.b16 %v2186
        %v7011 = vunpack.c.h.b16 %v2186
        %v7012 = vunpack.c.l.b16 %v2187
        %v7013 = vunpack.c.h.b16 %v2187
        %v7014 = vunpack.c.l.b16 %v2188
        %v7015 = vunpack.c.h.b16 %v2188
        %v7016 = vunpack.c.l.b16 %v2189
        %v7017 = vunpack.c.h.b16 %v2189
        %v7018 = vunpack.c.l.b16 %v2190
        %v7019 = vunpack.c.h.b16 %v2190
        %v7020 = vunpack.c.l.b16 %v2191
        %v7021 = vunpack.c.h.b16 %v2191
        %v7022 = vunpack.c.l.b16 %v2192
        %v7023 = vunpack.c.h.b16 %v2192
        %v7024 = vunpack.c.l.b16 %v2193
        %v7025 = vunpack.c.h.b16 %v2193
        %v7026 = vunpack.c.l.b16 %v2194
        %v7027 = vunpack.c.h.b16 %v2194
        %v7028 = vunpack.c.l.b16 %v2195
        %v7029 = vunpack.c.h.b16 %v2195
        %v7030 = vunpack.c.l.b16 %v2196
        %v7031 = vunpack.c.h.b16 %v2196
        %v7032 = vunpack.c.l.b16 %v2197
        %v7033 = vunpack.c.h.b16 %v2197
        %v7034 = vunpack.c.l.b16 %v2198
        %v7035 = vunpack.c.h.b16 %v2198
        %v7036 = vunpack.c.l.b16 %v2199
        %v7037 = vunpack.c.h.b16 %v2199
        %v7038 = vunpack.c.l.b16 %v2200
        %v7039 = vunpack.c.h.b16 %v2200
        %v7040 = vunpack.c.l.b16 %v2201
        %v7041 = vunpack.c.h.b16 %v2201
        %v7042 = vunpack.c.l.b16 %v2202
        %v7043 = vunpack.c.h.b16 %v2202
        %v7044 = vunpack.c.l.b16 %v2203
        %v7045 = vunpack.c.h.b16 %v2203
        %v7046 = vpack.c.b16 %v3854, %v3846
        %v7047 = vpack.c.b16 %v3855, %v3847
        %v7048 = vpack.c.b16 %v3856, %v3848
        %v7049 = vpack.c.b16 %v3857, %v3849
        %v7050 = vpack.c.b16 %v3858, %v3850
        %v7051 = vpack.c.b16 %v3859, %v3851
        %v7052 = vpack.c.b16 %v3860, %v3852
        %v7053 = vpack.c.b16 %v3861, %v3853
        %v7054 = vpack.c.b16 %v3870, %v3862
        %v7055 = vpack.c.b16 %v3871, %v3863
        %v7056 = vpack.c.b16 %v3872, %v3864
        %v7057 = vpack.c.b16 %v3873, %v3865
        %v7058 = vpack.c.b16 %v3874, %v3866
        %v7059 = vpack.c.b16 %v3875, %v3867
        %v7060 = vpack.c.b16 %v3876, %v3868
        %v7061 = vpack.c.b16 %v3877, %v3869
        %v7062 = vpack.c.b16 %v3886, %v3878
        %v7063 = vpack.c.b16 %v3887, %v3879
        %v7064 = vpack.c.b16 %v3888, %v3880
        %v7065 = vpack.c.b16 %v3889, %v3881
        %v7066 = vpack.c.b16 %v3890, %v3882
        %v7067 = vpack.c.b16 %v3891, %v3883
        %v7068 = vpack.c.b16 %v3892, %v3884
        %v7069 = vpack.c.b16 %v3893, %v3885
        %v7070 = vpack.c.b16 %v3902, %v3894
        %v7071 = vpack.c.b16 %v3903, %v3895
        %v7072 = vpack.c.b16 %v3904, %v3896
        %v7073 = vpack.c.b16 %v3905, %v3897
        %v7074 = vpack.c.b16 %v3906, %v3898
        %v7075 = vpack.c.b16 %v3907, %v3899
        %v7076 = vpack.c.b16 %v3908, %v3900
        %v7077 = vpack.c.b16 %v3909, %v3901
        %v7078 = vpack.c.b16 %v3918, %v3910
        %v7079 = vpack.c.b16 %v3919, %v3911
        %v7080 = vpack.c.b16 %v3920, %v3912
        %v7081 = vpack.c.b16 %v3921, %v3913
        %v7082 = vpack.c.b16 %v3922, %v3914
        %v7083 = vpack.c.b16 %v3923, %v3915
        %v7084 = vpack.c.b16 %v3924, %v3916
        %v7085 = vpack.c.b16 %v3925, %v3917
        %v7086 = vpack.c.b16 %v3934, %v3926
        %v7087 = vpack.c.b16 %v3935, %v3927
        %v7088 = vpack.c.b16 %v3936, %v3928
        %v7089 = vpack.c.b16 %v3937, %v3929
        %v7090 = vpack.c.b16 %v3938, %v3930
        %v7091 = vpack.c.b16 %v3939, %v3931
        %v7092 = vpack.c.b16 %v3940, %v3932
        %v7093 = vpack.c.b16 %v3941, %v3933
        %v7094 = vpack.c.b16 %v3950, %v3942
        %v7095 = vpack.c.b16 %v3951, %v3943
        %v7096 = vpack.c.b16 %v3952, %v3944
        %v7097 = vpack.c.b16 %v3953, %v3945
        %v7098 = vpack.c.b16 %v3954, %v3946
        %v7099 = vpack.c.b16 %v3955, %v3947
        %v7100 = vpack.c.b16 %v3956, %v3948
        %v7101 = vpack.c.b16 %v3957, %v3949
        %v7102 = vpack.c.b16 %v3966, %v3958
        %v7103 = vpack.c.b16 %v3967, %v3959
        %v7104 = vpack.c.b16 %v3968, %v3960
        %v7105 = vpack.c.b16 %v3969, %v3961
        %v7106 = vpack.c.b16 %v3970, %v3962
        %v7107 = vpack.c.b16 %v3971, %v3963
        %v7108 = vpack.c.b16 %v3972, %v3964
        %v7109 = vpack.c.b16 %v3973, %v3965
        %v7110 = vpack.c.b16 %v3982, %v3974
        %v7111 = vpack.c.b16 %v3983, %v3975
        %v7112 = vpack.c.b16 %v3984, %v3976
        %v7113 = vpack.c.b16 %v3985, %v3977
        %v7114 = vpack.c.b16 %v3986, %v3978
        %v7115 = vpack.c.b16 %v3987, %v3979
        %v7116 = vpack.c.b16 %v3988, %v3980
        %v7117 = vpack.c.b16 %v3989, %v3981
        %v7118 = vpack.c.b16 %v3998, %v3990
        %v7119 = vpack.c.b16 %v3999, %v3991
        %v7120 = vpack.c.b16 %v4000, %v3992
        %v7121 = vpack.c.b16 %v4001, %v3993
        %v7122 = vpack.c.b16 %v4002, %v3994
        %v7123 = vpack.c.b16 %v4003, %v3995
        %v7124 = vpack.c.b16 %v4004, %v3996
        %v7125 = vpack.c.b16 %v4005, %v3997
        %v7126 = vpack.c.b16 %v4014, %v4006
        %v7127 = vpack.c.b16 %v4015, %v4007
        %v7128 = vpack.c.b16 %v4016, %v4008
        %v7129 = vpack.c.b16 %v4017, %v4009
        %v7130 = vpack.c.b16 %v4018, %v4010
        %v7131 = vpack.c.b16 %v4019, %v4011
        %v7132 = vpack.c.b16 %v4020, %v4012
        %v7133 = vpack.c.b16 %v4021, %v4013
        %v7134 = vpack.c.b16 %v4030, %v4022
        %v7135 = vpack.c.b16 %v4031, %v4023
        %v7136 = vpack.c.b16 %v4032, %v4024
        %v7137 = vpack.c.b16 %v4033, %v4025
        %v7138 = vpack.c.b16 %v4034, %v4026
        %v7139 = vpack.c.b16 %v4035, %v4027
        %v7140 = vpack.c.b16 %v4036, %v4028
        %v7141 = vpack.c.b16 %v4037, %v4029
        %v7142 = vpack.c.b16 %v4046, %v4038
        %v7143 = vpack.c.b16 %v4047, %v4039
        %v7144 = vpack.c.b16 %v4048, %v4040
        %v7145 = vpack.c.b16 %v4049, %v4041
        %v7146 = vpack.c.b16 %v4050, %v4042
        %v7147 = vpack.c.b16 %v4051, %v4043
        %v7148 = vpack.c.b16 %v4052, %v4044
        %v7149 = vpack.c.b16 %v4053, %v4045
        %v7150 = vpack.c.b16 %v4062, %v4054
        %v7151 = vpack.c.b16 %v4063, %v4055
        %v7152 = vpack.c.b16 %v4064, %v4056
        %v7153 = vpack.c.b16 %v4065, %v4057
        %v7154 = vpack.c.b16 %v4066, %v4058
        %v7155 = vpack.c.b16 %v4067, %v4059
        %v7156 = vpack.c.b16 %v4068, %v4060
        %v7157 = vpack.c.b16 %v4069, %v4061
        %v7158 = vpack.c.b16 %v4078, %v4070
        %v7159 = vpack.c.b16 %v4079, %v4071
        %v7160 = vpack.c.b16 %v4080, %v4072
        %v7161 = vpack.c.b16 %v4081, %v4073
        %v7162 = vpack.c.b16 %v4082, %v4074
        %v7163 = vpack.c.b16 %v4083, %v4075
        %v7164 = vpack.c.b16 %v4084, %v4076
        %v7165 = vpack.c.b16 %v4085, %v4077
        %v7166 = vpack.c.b16 %v4094, %v4086
        %v7167 = vpack.c.b16 %v4095, %v4087
        %v7168 = vpack.c.b16 %v4096, %v4088
        %v7169 = vpack.c.b16 %v4097, %v4089
        %v7170 = vpack.c.b16 %v4098, %v4090
        %v7171 = vpack.c.b16 %v4099, %v4091
        %v7172 = vpack.c.b16 %v4100, %v4092
        %v7173 = vpack.c.b16 %v4101, %v4093
        %v7174 = vpack.c.b16 %v4110, %v4102
        %v7175 = vpack.c.b16 %v4111, %v4103
        %v7176 = vpack.c.b16 %v4112, %v4104
        %v7177 = vpack.c.b16 %v4113, %v4105
        %v7178 = vpack.c.b16 %v4114, %v4106
        %v7179 = vpack.c.b16 %v4115, %v4107
        %v7180 = vpack.c.b16 %v4116, %v4108
        %v7181 = vpack.c.b16 %v4117, %v4109
        %v7182 = vpack.c.b16 %v4126, %v4118
        %v7183 = vpack.c.b16 %v4127, %v4119
        %v7184 = vpack.c.b16 %v4128, %v4120
        %v7185 = vpack.c.b16 %v4129, %v4121
        %v7186 = vpack.c.b16 %v4130, %v4122
        %v7187 = vpack.c.b16 %v4131, %v4123
        %v7188 = vpack.c.b16 %v4132, %v4124
        %v7189 = vpack.c.b16 %v4133, %v4125
        %v7190 = vpack.c.b16 %v4142, %v4134
        %v7191 = vpack.c.b16 %v4143, %v4135
        %v7192 = vpack.c.b16 %v4144, %v4136
        %v7193 = vpack.c.b16 %v4145, %v4137
        %v7194 = vpack.c.b16 %v4146, %v4138
        %v7195 = vpack.c.b16 %v4147, %v4139
        %v7196 = vpack.c.b16 %v4148, %v4140
        %v7197 = vpack.c.b16 %v4149, %v4141
        %v7198 = vpack.c.b16 %v4158, %v4150
        %v7199 = vpack.c.b16 %v4159, %v4151
        %v7200 = vpack.c.b16 %v4160, %v4152
        %v7201 = vpack.c.b16 %v4161, %v4153
        %v7202 = vpack.c.b16 %v4162, %v4154
        %v7203 = vpack.c.b16 %v4163, %v4155
        %v7204 = vpack.c.b16 %v4164, %v4156
        %v7205 = vpack.c.b16 %v4165, %v4157
        %v7206 = vpack.c.b16 %v4174, %v4166
        %v7207 = vpack.c.b16 %v4175, %v4167
        %v7208 = vpack.c.b16 %v4176, %v4168
        %v7209 = vpack.c.b16 %v4177, %v4169
        %v7210 = vpack.c.b16 %v4178, %v4170
        %v7211 = vpack.c.b16 %v4179, %v4171
        %v7212 = vpack.c.b16 %v4180, %v4172
        %v7213 = vpack.c.b16 %v4181, %v4173
        %v7214 = vpack.c.b16 %v4190, %v4182
        %v7215 = vpack.c.b16 %v4191, %v4183
        %v7216 = vpack.c.b16 %v4192, %v4184
        %v7217 = vpack.c.b16 %v4193, %v4185
        %v7218 = vpack.c.b16 %v4194, %v4186
        %v7219 = vpack.c.b16 %v4195, %v4187
        %v7220 = vpack.c.b16 %v4196, %v4188
        %v7221 = vpack.c.b16 %v4197, %v4189
        %v7222 = vpack.c.b16 %v4206, %v4198
        %v7223 = vpack.c.b16 %v4207, %v4199
        %v7224 = vpack.c.b16 %v4208, %v4200
        %v7225 = vpack.c.b16 %v4209, %v4201
        %v7226 = vpack.c.b16 %v4210, %v4202
        %v7227 = vpack.c.b16 %v4211, %v4203
        %v7228 = vpack.c.b16 %v4212, %v4204
        %v7229 = vpack.c.b16 %v4213, %v4205
        %v7230 = vpack.c.b16 %v4222, %v4214
        %v7231 = vpack.c.b16 %v4223, %v4215
        %v7232 = vpack.c.b16 %v4224, %v4216
        %v7233 = vpack.c.b16 %v4225, %v4217
        %v7234 = vpack.c.b16 %v4226, %v4218
        %v7235 = vpack.c.b16 %v4227, %v4219
        %v7236 = vpack.c.b16 %v4228, %v4220
        %v7237 = vpack.c.b16 %v4229, %v4221
        %v7238 = vpack.c.b16 %v4238, %v4230
        %v7239 = vpack.c.b16 %v4239, %v4231
        %v7240 = vpack.c.b16 %v4240, %v4232
        %v7241 = vpack.c.b16 %v4241, %v4233
        %v7242 = vpack.c.b16 %v4242, %v4234
        %v7243 = vpack.c.b16 %v4243, %v4235
        %v7244 = vpack.c.b16 %v4244, %v4236
        %v7245 = vpack.c.b16 %v4245, %v4237
        %v7246 = vpack.c.b16 %v4254, %v4246
        %v7247 = vpack.c.b16 %v4255, %v4247
        %v7248 = vpack.c.b16 %v4256, %v4248
        %v7249 = vpack.c.b16 %v4257, %v4249
        %v7250 = vpack.c.b16 %v4258, %v4250
        %v7251 = vpack.c.b16 %v4259, %v4251
        %v7252 = vpack.c.b16 %v4260, %v4252
        %v7253 = vpack.c.b16 %v4261, %v4253
        %v7254 = vpack.c.b16 %v4270, %v4262
        %v7255 = vpack.c.b16 %v4271, %v4263
        %v7256 = vpack.c.b16 %v4272, %v4264
        %v7257 = vpack.c.b16 %v4273, %v4265
        %v7258 = vpack.c.b16 %v4274, %v4266
        %v7259 = vpack.c.b16 %v4275, %v4267
        %v7260 = vpack.c.b16 %v4276, %v4268
        %v7261 = vpack.c.b16 %v4277, %v4269
        %v7262 = vpack.c.b16 %v4286, %v4278
        %v7263 = vpack.c.b16 %v4287, %v4279
        %v7264 = vpack.c.b16 %v4288, %v4280
        %v7265 = vpack.c.b16 %v4289, %v4281
        %v7266 = vpack.c.b16 %v4290, %v4282
        %v7267 = vpack.c.b16 %v4291, %v4283
        %v7268 = vpack.c.b16 %v4292, %v4284
        %v7269 = vpack.c.b16 %v4293, %v4285
        %v7270 = vpack.c.b16 %v4302, %v4294
        %v7271 = vpack.c.b16 %v4303, %v4295
        %v7272 = vpack.c.b16 %v4304, %v4296
        %v7273 = vpack.c.b16 %v4305, %v4297
        %v7274 = vpack.c.b16 %v4306, %v4298
        %v7275 = vpack.c.b16 %v4307, %v4299
        %v7276 = vpack.c.b16 %v4308, %v4300
        %v7277 = vpack.c.b16 %v4309, %v4301
        %v7278 = vpack.c.b16 %v4318, %v4310
        %v7279 = vpack.c.b16 %v4319, %v4311
        %v7280 = vpack.c.b16 %v4320, %v4312
        %v7281 = vpack.c.b16 %v4321, %v4313
        %v7282 = vpack.c.b16 %v4322, %v4314
        %v7283 = vpack.c.b16 %v4323, %v4315
        %v7284 = vpack.c.b16 %v4324, %v4316
        %v7285 = vpack.c.b16 %v4325, %v4317
        %v7286 = vpack.c.b16 %v4334, %v4326
        %v7287 = vpack.c.b16 %v4335, %v4327
        %v7288 = vpack.c.b16 %v4336, %v4328
        %v7289 = vpack.c.b16 %v4337, %v4329
        %v7290 = vpack.c.b16 %v4338, %v4330
        %v7291 = vpack.c.b16 %v4339, %v4331
        %v7292 = vpack.c.b16 %v4340, %v4332
        %v7293 = vpack.c.b16 %v4341, %v4333
        %v7294 = vpack.c.b16 %v4350, %v4342
        %v7295 = vpack.c.b16 %v4351, %v4343
        %v7296 = vpack.c.b16 %v4352, %v4344
        %v7297 = vpack.c.b16 %v4353, %v4345
        %v7298 = vpack.c.b16 %v4354, %v4346
        %v7299 = vpack.c.b16 %v4355, %v4347
        %v7300 = vpack.c.b16 %v4356, %v4348
        %v7301 = vpack.c.b16 %v4357, %v4349
        %v7302 = vpack.c.b16 %v4366, %v4358
        %v7303 = vpack.c.b16 %v4367, %v4359
        %v7304 = vpack.c.b16 %v4368, %v4360
        %v7305 = vpack.c.b16 %v4369, %v4361
        %v7306 = vpack.c.b16 %v4370, %v4362
        %v7307 = vpack.c.b16 %v4371, %v4363
        %v7308 = vpack.c.b16 %v4372, %v4364
        %v7309 = vpack.c.b16 %v4373, %v4365
        %v7310 = vpack.c.b16 %v4382, %v4374
        %v7311 = vpack.c.b16 %v4383, %v4375
        %v7312 = vpack.c.b16 %v4384, %v4376
        %v7313 = vpack.c.b16 %v4385, %v4377
        %v7314 = vpack.c.b16 %v4386, %v4378
        %v7315 = vpack.c.b16 %v4387, %v4379
        %v7316 = vpack.c.b16 %v4388, %v4380
        %v7317 = vpack.c.b16 %v4389, %v4381
        %v7318 = vpack.c.b16 %v4398, %v4390
        %v7319 = vpack.c.b16 %v4399, %v4391
        %v7320 = vpack.c.b16 %v4400, %v4392
        %v7321 = vpack.c.b16 %v4401, %v4393
        %v7322 = vpack.c.b16 %v4402, %v4394
        %v7323 = vpack.c.b16 %v4403, %v4395
        %v7324 = vpack.c.b16 %v4404, %v4396
        %v7325 = vpack.c.b16 %v4405, %v4397
        %v7326 = vpack.c.b16 %v4414, %v4406
        %v7327 = vpack.c.b16 %v4415, %v4407
        %v7328 = vpack.c.b16 %v4416, %v4408
        %v7329 = vpack.c.b16 %v4417, %v4409
        %v7330 = vpack.c.b16 %v4418, %v4410
        %v7331 = vpack.c.b16 %v4419, %v4411
        %v7332 = vpack.c.b16 %v4420, %v4412
        %v7333 = vpack.c.b16 %v4421, %v4413
        %v7334 = vpack.c.b16 %v4430, %v4422
        %v7335 = vpack.c.b16 %v4431, %v4423
        %v7336 = vpack.c.b16 %v4432, %v4424
        %v7337 = vpack.c.b16 %v4433, %v4425
        %v7338 = vpack.c.b16 %v4434, %v4426
        %v7339 = vpack.c.b16 %v4435, %v4427
        %v7340 = vpack.c.b16 %v4436, %v4428
        %v7341 = vpack.c.b16 %v4437, %v4429
        %v7342 = vpack.c.b16 %v4446, %v4438
        %v7343 = vpack.c.b16 %v4447, %v4439
        %v7344 = vpack.c.b16 %v4448, %v4440
        %v7345 = vpack.c.b16 %v4449, %v4441
        %v7346 = vpack.c.b16 %v4450, %v4442
        %v7347 = vpack.c.b16 %v4451, %v4443
        %v7348 = vpack.c.b16 %v4452, %v4444
        %v7349 = vpack.c.b16 %v4453, %v4445
        %v7350 = vpack.c.b16 %v4462, %v4454
        %v7351 = vpack.c.b16 %v4463, %v4455
        %v7352 = vpack.c.b16 %v4464, %v4456
        %v7353 = vpack.c.b16 %v4465, %v4457
        %v7354 = vpack.c.b16 %v4466, %v4458
        %v7355 = vpack.c.b16 %v4467, %v4459
        %v7356 = vpack.c.b16 %v4468, %v4460
        %v7357 = vpack.c.b16 %v4469, %v4461
        %v7358 = vpack.c.b16 %v4478, %v4470
        %v7359 = vpack.c.b16 %v4479, %v4471
        %v7360 = vpack.c.b16 %v4480, %v4472
        %v7361 = vpack.c.b16 %v4481, %v4473
        %v7362 = vpack.c.b16 %v4482, %v4474
        %v7363 = vpack.c.b16 %v4483, %v4475
        %v7364 = vpack.c.b16 %v4484, %v4476
        %v7365 = vpack.c.b16 %v4485, %v4477
        %v7366 = vpack.c.b16 %v4494, %v4486
        %v7367 = vpack.c.b16 %v4495, %v4487
        %v7368 = vpack.c.b16 %v4496, %v4488
        %v7369 = vpack.c.b16 %v4497, %v4489
        %v7370 = vpack.c.b16 %v4498, %v4490
        %v7371 = vpack.c.b16 %v4499, %v4491
        %v7372 = vpack.c.b16 %v4500, %v4492
        %v7373 = vpack.c.b16 %v4501, %v4493
        %v7374 = vpack.c.b16 %v4510, %v4502
        %v7375 = vpack.c.b16 %v4511, %v4503
        %v7376 = vpack.c.b16 %v4512, %v4504
        %v7377 = vpack.c.b16 %v4513, %v4505
        %v7378 = vpack.c.b16 %v4514, %v4506
        %v7379 = vpack.c.b16 %v4515, %v4507
        %v7380 = vpack.c.b16 %v4516, %v4508
        %v7381 = vpack.c.b16 %v4517, %v4509
        %v7382 = vpack.c.b16 %v4526, %v4518
        %v7383 = vpack.c.b16 %v4527, %v4519
        %v7384 = vpack.c.b16 %v4528, %v4520
        %v7385 = vpack.c.b16 %v4529, %v4521
        %v7386 = vpack.c.b16 %v4530, %v4522
        %v7387 = vpack.c.b16 %v4531, %v4523
        %v7388 = vpack.c.b16 %v4532, %v4524
        %v7389 = vpack.c.b16 %v4533, %v4525
        %v7390 = vpack.c.b16 %v4542, %v4534
        %v7391 = vpack.c.b16 %v4543, %v4535
        %v7392 = vpack.c.b16 %v4544, %v4536
        %v7393 = vpack.c.b16 %v4545, %v4537
        %v7394 = vpack.c.b16 %v4546, %v4538
        %v7395 = vpack.c.b16 %v4547, %v4539
        %v7396 = vpack.c.b16 %v4548, %v4540
        %v7397 = vpack.c.b16 %v4549, %v4541
        %v7398 = vpack.c.b16 %v4558, %v4550
        %v7399 = vpack.c.b16 %v4559, %v4551
        %v7400 = vpack.c.b16 %v4560, %v4552
        %v7401 = vpack.c.b16 %v4561, %v4553
        %v7402 = vpack.c.b16 %v4562, %v4554
        %v7403 = vpack.c.b16 %v4563, %v4555
        %v7404 = vpack.c.b16 %v4564, %v4556
        %v7405 = vpack.c.b16 %v4565, %v4557
        %v7406 = vpack.c.b16 %v4574, %v4566
        %v7407 = vpack.c.b16 %v4575, %v4567
        %v7408 = vpack.c.b16 %v4576, %v4568
        %v7409 = vpack.c.b16 %v4577, %v4569
        %v7410 = vpack.c.b16 %v4578, %v4570
        %v7411 = vpack.c.b16 %v4579, %v4571
        %v7412 = vpack.c.b16 %v4580, %v4572
        %v7413 = vpack.c.b16 %v4581, %v4573
        %v7414 = vpack.c.b16 %v4590, %v4582
        %v7415 = vpack.c.b16 %v4591, %v4583
        %v7416 = vpack.c.b16 %v4592, %v4584
        %v7417 = vpack.c.b16 %v4593, %v4585
        %v7418 = vpack.c.b16 %v4594, %v4586
        %v7419 = vpack.c.b16 %v4595, %v4587
        %v7420 = vpack.c.b16 %v4596, %v4588
        %v7421 = vpack.c.b16 %v4597, %v4589
        %v7422 = vpack.c.b16 %v4606, %v4598
        %v7423 = vpack.c.b16 %v4607, %v4599
        %v7424 = vpack.c.b16 %v4608, %v4600
        %v7425 = vpack.c.b16 %v4609, %v4601
        %v7426 = vpack.c.b16 %v4610, %v4602
        %v7427 = vpack.c.b16 %v4611, %v4603
        %v7428 = vpack.c.b16 %v4612, %v4604
        %v7429 = vpack.c.b16 %v4613, %v4605
        %v7430 = vpack.c.b16 %v4622, %v4614
        %v7431 = vpack.c.b16 %v4623, %v4615
        %v7432 = vpack.c.b16 %v4624, %v4616
        %v7433 = vpack.c.b16 %v4625, %v4617
        %v7434 = vpack.c.b16 %v4626, %v4618
        %v7435 = vpack.c.b16 %v4627, %v4619
        %v7436 = vpack.c.b16 %v4628, %v4620
        %v7437 = vpack.c.b16 %v4629, %v4621
        %v7438 = vpack.c.b16 %v4638, %v4630
        %v7439 = vpack.c.b16 %v4639, %v4631
        %v7440 = vpack.c.b16 %v4640, %v4632
        %v7441 = vpack.c.b16 %v4641, %v4633
        %v7442 = vpack.c.b16 %v4642, %v4634
        %v7443 = vpack.c.b16 %v4643, %v4635
        %v7444 = vpack.c.b16 %v4644, %v4636
        %v7445 = vpack.c.b16 %v4645, %v4637
        %v7446 = vpack.c.b16 %v4654, %v4646
        %v7447 = vpack.c.b16 %v4655, %v4647
        %v7448 = vpack.c.b16 %v4656, %v4648
        %v7449 = vpack.c.b16 %v4657, %v4649
        %v7450 = vpack.c.b16 %v4658, %v4650
        %v7451 = vpack.c.b16 %v4659, %v4651
        %v7452 = vpack.c.b16 %v4660, %v4652
        %v7453 = vpack.c.b16 %v4661, %v4653
        %v7454 = vpack.c.b16 %v4670, %v4662
        %v7455 = vpack.c.b16 %v4671, %v4663
        %v7456 = vpack.c.b16 %v4672, %v4664
        %v7457 = vpack.c.b16 %v4673, %v4665
        %v7458 = vpack.c.b16 %v4674, %v4666
        %v7459 = vpack.c.b16 %v4675, %v4667
        %v7460 = vpack.c.b16 %v4676, %v4668
        %v7461 = vpack.c.b16 %v4677, %v4669
        %v7462 = vpack.c.b16 %v4686, %v4678
        %v7463 = vpack.c.b16 %v4687, %v4679
        %v7464 = vpack.c.b16 %v4688, %v4680
        %v7465 = vpack.c.b16 %v4689, %v4681
        %v7466 = vpack.c.b16 %v4690, %v4682
        %v7467 = vpack.c.b16 %v4691, %v4683
        %v7468 = vpack.c.b16 %v4692, %v4684
        %v7469 = vpack.c.b16 %v4693, %v4685
        %v7470 = vpack.c.b16 %v4702, %v4694
        %v7471 = vpack.c.b16 %v4703, %v4695
        %v7472 = vpack.c.b16 %v4704, %v4696
        %v7473 = vpack.c.b16 %v4705, %v4697
        %v7474 = vpack.c.b16 %v4706, %v4698
        %v7475 = vpack.c.b16 %v4707, %v4699
        %v7476 = vpack.c.b16 %v4708, %v4700
        %v7477 = vpack.c.b16 %v4709, %v4701
        %v7478 = vpack.c.b16 %v4718, %v4710
        %v7479 = vpack.c.b16 %v4719, %v4711
        %v7480 = vpack.c.b16 %v4720, %v4712
        %v7481 = vpack.c.b16 %v4721, %v4713
        %v7482 = vpack.c.b16 %v4722, %v4714
        %v7483 = vpack.c.b16 %v4723, %v4715
        %v7484 = vpack.c.b16 %v4724, %v4716
        %v7485 = vpack.c.b16 %v4725, %v4717
        %v7486 = vpack.c.b16 %v4734, %v4726
        %v7487 = vpack.c.b16 %v4735, %v4727
        %v7488 = vpack.c.b16 %v4736, %v4728
        %v7489 = vpack.c.b16 %v4737, %v4729
        %v7490 = vpack.c.b16 %v4738, %v4730
        %v7491 = vpack.c.b16 %v4739, %v4731
        %v7492 = vpack.c.b16 %v4740, %v4732
        %v7493 = vpack.c.b16 %v4741, %v4733
        %v7494 = vpack.c.b16 %v4750, %v4742
        %v7495 = vpack.c.b16 %v4751, %v4743
        %v7496 = vpack.c.b16 %v4752, %v4744
        %v7497 = vpack.c.b16 %v4753, %v4745
        %v7498 = vpack.c.b16 %v4754, %v4746
        %v7499 = vpack.c.b16 %v4755, %v4747
        %v7500 = vpack.c.b16 %v4756, %v4748
        %v7501 = vpack.c.b16 %v4757, %v4749
        %v7502 = vpack.c.b16 %v4766, %v4758
        %v7503 = vpack.c.b16 %v4767, %v4759
        %v7504 = vpack.c.b16 %v4768, %v4760
        %v7505 = vpack.c.b16 %v4769, %v4761
        %v7506 = vpack.c.b16 %v4770, %v4762
        %v7507 = vpack.c.b16 %v4771, %v4763
        %v7508 = vpack.c.b16 %v4772, %v4764
        %v7509 = vpack.c.b16 %v4773, %v4765
        %v7510 = vpack.c.b16 %v4782, %v4774
        %v7511 = vpack.c.b16 %v4783, %v4775
        %v7512 = vpack.c.b16 %v4784, %v4776
        %v7513 = vpack.c.b16 %v4785, %v4777
        %v7514 = vpack.c.b16 %v4786, %v4778
        %v7515 = vpack.c.b16 %v4787, %v4779
        %v7516 = vpack.c.b16 %v4788, %v4780
        %v7517 = vpack.c.b16 %v4789, %v4781
        %v7518 = vpack.c.b16 %v4798, %v4790
        %v7519 = vpack.c.b16 %v4799, %v4791
        %v7520 = vpack.c.b16 %v4800, %v4792
        %v7521 = vpack.c.b16 %v4801, %v4793
        %v7522 = vpack.c.b16 %v4802, %v4794
        %v7523 = vpack.c.b16 %v4803, %v4795
        %v7524 = vpack.c.b16 %v4804, %v4796
        %v7525 = vpack.c.b16 %v4805, %v4797
        %v7526 = vpack.c.b16 %v4814, %v4806
        %v7527 = vpack.c.b16 %v4815, %v4807
        %v7528 = vpack.c.b16 %v4816, %v4808
        %v7529 = vpack.c.b16 %v4817, %v4809
        %v7530 = vpack.c.b16 %v4818, %v4810
        %v7531 = vpack.c.b16 %v4819, %v4811
        %v7532 = vpack.c.b16 %v4820, %v4812
        %v7533 = vpack.c.b16 %v4821, %v4813
        %v7534 = vpack.c.b16 %v4830, %v4822
        %v7535 = vpack.c.b16 %v4831, %v4823
        %v7536 = vpack.c.b16 %v4832, %v4824
        %v7537 = vpack.c.b16 %v4833, %v4825
        %v7538 = vpack.c.b16 %v4834, %v4826
        %v7539 = vpack.c.b16 %v4835, %v4827
        %v7540 = vpack.c.b16 %v4836, %v4828
        %v7541 = vpack.c.b16 %v4837, %v4829
        %v7542 = vpack.c.b16 %v4846, %v4838
        %v7543 = vpack.c.b16 %v4847, %v4839
        %v7544 = vpack.c.b16 %v4848, %v4840
        %v7545 = vpack.c.b16 %v4849, %v4841
        %v7546 = vpack.c.b16 %v4850, %v4842
        %v7547 = vpack.c.b16 %v4851, %v4843
        %v7548 = vpack.c.b16 %v4852, %v4844
        %v7549 = vpack.c.b16 %v4853, %v4845
        %v7550 = vpack.c.b16 %v4862, %v4854
        %v7551 = vpack.c.b16 %v4863, %v4855
        %v7552 = vpack.c.b16 %v4864, %v4856
        %v7553 = vpack.c.b16 %v4865, %v4857
        %v7554 = vpack.c.b16 %v4866, %v4858
        %v7555 = vpack.c.b16 %v4867, %v4859
        %v7556 = vpack.c.b16 %v4868, %v4860
        %v7557 = vpack.c.b16 %v4869, %v4861
        %v7558 = vpack.c.b16 %v4878, %v4870
        %v7559 = vpack.c.b16 %v4879, %v4871
        %v7560 = vpack.c.b16 %v4880, %v4872
        %v7561 = vpack.c.b16 %v4881, %v4873
        %v7562 = vpack.c.b16 %v4882, %v4874
        %v7563 = vpack.c.b16 %v4883, %v4875
        %v7564 = vpack.c.b16 %v4884, %v4876
        %v7565 = vpack.c.b16 %v4885, %v4877
        %v7566 = vpack.c.b16 %v4894, %v4886
        %v7567 = vpack.c.b16 %v4895, %v4887
        %v7568 = vpack.c.b16 %v4896, %v4888
        %v7569 = vpack.c.b16 %v4897, %v4889
        %v7570 = vpack.c.b16 %v4898, %v4890
        %v7571 = vpack.c.b16 %v4899, %v4891
        %v7572 = vpack.c.b16 %v4900, %v4892
        %v7573 = vpack.c.b16 %v4901, %v4893
        %v7574 = vpack.c.b16 %v4910, %v4902
        %v7575 = vpack.c.b16 %v4911, %v4903
        %v7576 = vpack.c.b16 %v4912, %v4904
        %v7577 = vpack.c.b16 %v4913, %v4905
        %v7578 = vpack.c.b16 %v4914, %v4906
        %v7579 = vpack.c.b16 %v4915, %v4907
        %v7580 = vpack.c.b16 %v4916, %v4908
        %v7581 = vpack.c.b16 %v4917, %v4909
        %v7582 = vpack.c.b16 %v4926, %v4918
        %v7583 = vpack.c.b16 %v4927, %v4919
        %v7584 = vpack.c.b16 %v4928, %v4920
        %v7585 = vpack.c.b16 %v4929, %v4921
        %v7586 = vpack.c.b16 %v4930, %v4922
        %v7587 = vpack.c.b16 %v4931, %v4923
        %v7588 = vpack.c.b16 %v4932, %v4924
        %v7589 = vpack.c.b16 %v4933, %v4925
        %v7590 = vpack.c.b16 %v4942, %v4934
        %v7591 = vpack.c.b16 %v4943, %v4935
        %v7592 = vpack.c.b16 %v4944, %v4936
        %v7593 = vpack.c.b16 %v4945, %v4937
        %v7594 = vpack.c.b16 %v4946, %v4938
        %v7595 = vpack.c.b16 %v4947, %v4939
        %v7596 = vpack.c.b16 %v4948, %v4940
        %v7597 = vpack.c.b16 %v4949, %v4941
        %v7598 = vpack.c.b16 %v4958, %v4950
        %v7599 = vpack.c.b16 %v4959, %v4951
        %v7600 = vpack.c.b16 %v4960, %v4952
        %v7601 = vpack.c.b16 %v4961, %v4953
        %v7602 = vpack.c.b16 %v4962, %v4954
        %v7603 = vpack.c.b16 %v4963, %v4955
        %v7604 = vpack.c.b16 %v4964, %v4956
        %v7605 = vpack.c.b16 %v4965, %v4957
        %v7606 = vpack.c.b16 %v4974, %v4966
        %v7607 = vpack.c.b16 %v4975, %v4967
        %v7608 = vpack.c.b16 %v4976, %v4968
        %v7609 = vpack.c.b16 %v4977, %v4969
        %v7610 = vpack.c.b16 %v4978, %v4970
        %v7611 = vpack.c.b16 %v4979, %v4971
        %v7612 = vpack.c.b16 %v4980, %v4972
        %v7613 = vpack.c.b16 %v4981, %v4973
        %v7614 = vpack.c.b16 %v4990, %v4982
        %v7615 = vpack.c.b16 %v4991, %v4983
        %v7616 = vpack.c.b16 %v4992, %v4984
        %v7617 = vpack.c.b16 %v4993, %v4985
        %v7618 = vpack.c.b16 %v4994, %v4986
        %v7619 = vpack.c.b16 %v4995, %v4987
        %v7620 = vpack.c.b16 %v4996, %v4988
        %v7621 = vpack.c.b16 %v4997, %v4989
        %v7622 = vpack.c.b16 %v5006, %v4998
        %v7623 = vpack.c.b16 %v5007, %v4999
        %v7624 = vpack.c.b16 %v5008, %v5000
        %v7625 = vpack.c.b16 %v5009, %v5001
        %v7626 = vpack.c.b16 %v5010, %v5002
        %v7627 = vpack.c.b16 %v5011, %v5003
        %v7628 = vpack.c.b16 %v5012, %v5004
        %v7629 = vpack.c.b16 %v5013, %v5005
        %v7630 = vpack.c.b16 %v5022, %v5014
        %v7631 = vpack.c.b16 %v5023, %v5015
        %v7632 = vpack.c.b16 %v5024, %v5016
        %v7633 = vpack.c.b16 %v5025, %v5017
        %v7634 = vpack.c.b16 %v5026, %v5018
        %v7635 = vpack.c.b16 %v5027, %v5019
        %v7636 = vpack.c.b16 %v5028, %v5020
        %v7637 = vpack.c.b16 %v5029, %v5021
        %v7638 = vpack.c.b16 %v5038, %v5030
        %v7639 = vpack.c.b16 %v5039, %v5031
        %v7640 = vpack.c.b16 %v5040, %v5032
        %v7641 = vpack.c.b16 %v5041, %v5033
        %v7642 = vpack.c.b16 %v5042, %v5034
        %v7643 = vpack.c.b16 %v5043, %v5035
        %v7644 = vpack.c.b16 %v5044, %v5036
        %v7645 = vpack.c.b16 %v5045, %v5037
        %v7646 = vpack.c.b16 %v5054, %v5046
        %v7647 = vpack.c.b16 %v5055, %v5047
        %v7648 = vpack.c.b16 %v5056, %v5048
        %v7649 = vpack.c.b16 %v5057, %v5049
        %v7650 = vpack.c.b16 %v5058, %v5050
        %v7651 = vpack.c.b16 %v5059, %v5051
        %v7652 = vpack.c.b16 %v5060, %v5052
        %v7653 = vpack.c.b16 %v5061, %v5053
        %v7654 = vpack.c.b16 %v5070, %v5062
        %v7655 = vpack.c.b16 %v5071, %v5063
        %v7656 = vpack.c.b16 %v5072, %v5064
        %v7657 = vpack.c.b16 %v5073, %v5065
        %v7658 = vpack.c.b16 %v5074, %v5066
        %v7659 = vpack.c.b16 %v5075, %v5067
        %v7660 = vpack.c.b16 %v5076, %v5068
        %v7661 = vpack.c.b16 %v5077, %v5069
        %v7662 = vpack.c.b16 %v5086, %v5078
        %v7663 = vpack.c.b16 %v5087, %v5079
        %v7664 = vpack.c.b16 %v5088, %v5080
        %v7665 = vpack.c.b16 %v5089, %v5081
        %v7666 = vpack.c.b16 %v5090, %v5082
        %v7667 = vpack.c.b16 %v5091, %v5083
        %v7668 = vpack.c.b16 %v5092, %v5084
        %v7669 = vpack.c.b16 %v5093, %v5085
        %v7670 = vpack.c.b16 %v5102, %v5094
        %v7671 = vpack.c.b16 %v5103, %v5095
        %v7672 = vpack.c.b16 %v5104, %v5096
        %v7673 = vpack.c.b16 %v5105, %v5097
        %v7674 = vpack.c.b16 %v5106, %v5098
        %v7675 = vpack.c.b16 %v5107, %v5099
        %v7676 = vpack.c.b16 %v5108, %v5100
        %v7677 = vpack.c.b16 %v5109, %v5101
        %v7678 = vpack.c.b16 %v5118, %v5110
        %v7679 = vpack.c.b16 %v5119, %v5111
        %v7680 = vpack.c.b16 %v5120, %v5112
        %v7681 = vpack.c.b16 %v5121, %v5113
        %v7682 = vpack.c.b16 %v5122, %v5114
        %v7683 = vpack.c.b16 %v5123, %v5115
        %v7684 = vpack.c.b16 %v5124, %v5116
        %v7685 = vpack.c.b16 %v5125, %v5117
        %v7686 = vpack.c.b16 %v5134, %v5126
        %v7687 = vpack.c.b16 %v5135, %v5127
        %v7688 = vpack.c.b16 %v5136, %v5128
        %v7689 = vpack.c.b16 %v5137, %v5129
        %v7690 = vpack.c.b16 %v5138, %v5130
        %v7691 = vpack.c.b16 %v5139, %v5131
        %v7692 = vpack.c.b16 %v5140, %v5132
        %v7693 = vpack.c.b16 %v5141, %v5133
        %v7694 = vpack.c.b16 %v5150, %v5142
        %v7695 = vpack.c.b16 %v5151, %v5143
        %v7696 = vpack.c.b16 %v5152, %v5144
        %v7697 = vpack.c.b16 %v5153, %v5145
        %v7698 = vpack.c.b16 %v5154, %v5146
        %v7699 = vpack.c.b16 %v5155, %v5147
        %v7700 = vpack.c.b16 %v5156, %v5148
        %v7701 = vpack.c.b16 %v5157, %v5149
        %v7702 = vpack.c.b16 %v5166, %v5158
        %v7703 = vpack.c.b16 %v5167, %v5159
        %v7704 = vpack.c.b16 %v5168, %v5160
        %v7705 = vpack.c.b16 %v5169, %v5161
        %v7706 = vpack.c.b16 %v5170, %v5162
        %v7707 = vpack.c.b16 %v5171, %v5163
        %v7708 = vpack.c.b16 %v5172, %v5164
        %v7709 = vpack.c.b16 %v5173, %v5165
        %v7710 = vpack.c.b16 %v5182, %v5174
        %v7711 = vpack.c.b16 %v5183, %v5175
        %v7712 = vpack.c.b16 %v5184, %v5176
        %v7713 = vpack.c.b16 %v5185, %v5177
        %v7714 = vpack.c.b16 %v5186, %v5178
        %v7715 = vpack.c.b16 %v5187, %v5179
        %v7716 = vpack.c.b16 %v5188, %v5180
        %v7717 = vpack.c.b16 %v5189, %v5181
        %v7718 = vpack.c.b16 %v5198, %v5190
        %v7719 = vpack.c.b16 %v5199, %v5191
        %v7720 = vpack.c.b16 %v5200, %v5192
        %v7721 = vpack.c.b16 %v5201, %v5193
        %v7722 = vpack.c.b16 %v5202, %v5194
        %v7723 = vpack.c.b16 %v5203, %v5195
        %v7724 = vpack.c.b16 %v5204, %v5196
        %v7725 = vpack.c.b16 %v5205, %v5197
        %v7726 = vpack.c.b16 %v5214, %v5206
        %v7727 = vpack.c.b16 %v5215, %v5207
        %v7728 = vpack.c.b16 %v5216, %v5208
        %v7729 = vpack.c.b16 %v5217, %v5209
        %v7730 = vpack.c.b16 %v5218, %v5210
        %v7731 = vpack.c.b16 %v5219, %v5211
        %v7732 = vpack.c.b16 %v5220, %v5212
        %v7733 = vpack.c.b16 %v5221, %v5213
        %v7734 = vpack.c.b16 %v5230, %v5222
        %v7735 = vpack.c.b16 %v5231, %v5223
        %v7736 = vpack.c.b16 %v5232, %v5224
        %v7737 = vpack.c.b16 %v5233, %v5225
        %v7738 = vpack.c.b16 %v5234, %v5226
        %v7739 = vpack.c.b16 %v5235, %v5227
        %v7740 = vpack.c.b16 %v5236, %v5228
        %v7741 = vpack.c.b16 %v5237, %v5229
        %v7742 = vpack.c.b16 %v5246, %v5238
        %v7743 = vpack.c.b16 %v5247, %v5239
        %v7744 = vpack.c.b16 %v5248, %v5240
        %v7745 = vpack.c.b16 %v5249, %v5241
        %v7746 = vpack.c.b16 %v5250, %v5242
        %v7747 = vpack.c.b16 %v5251, %v5243
        %v7748 = vpack.c.b16 %v5252, %v5244
        %v7749 = vpack.c.b16 %v5253, %v5245
        %v7750 = vpack.c.b16 %v5262, %v5254
        %v7751 = vpack.c.b16 %v5263, %v5255
        %v7752 = vpack.c.b16 %v5264, %v5256
        %v7753 = vpack.c.b16 %v5265, %v5257
        %v7754 = vpack.c.b16 %v5266, %v5258
        %v7755 = vpack.c.b16 %v5267, %v5259
        %v7756 = vpack.c.b16 %v5268, %v5260
        %v7757 = vpack.c.b16 %v5269, %v5261
        %v7758 = vpack.c.b16 %v5278, %v5270
        %v7759 = vpack.c.b16 %v5279, %v5271
        %v7760 = vpack.c.b16 %v5280, %v5272
        %v7761 = vpack.c.b16 %v5281, %v5273
        %v7762 = vpack.c.b16 %v5282, %v5274
        %v7763 = vpack.c.b16 %v5283, %v5275
        %v7764 = vpack.c.b16 %v5284, %v5276
        %v7765 = vpack.c.b16 %v5285, %v5277
        %v7766 = vpack.c.b16 %v5294, %v5286
        %v7767 = vpack.c.b16 %v5295, %v5287
        %v7768 = vpack.c.b16 %v5296, %v5288
        %v7769 = vpack.c.b16 %v5297, %v5289
        %v7770 = vpack.c.b16 %v5298, %v5290
        %v7771 = vpack.c.b16 %v5299, %v5291
        %v7772 = vpack.c.b16 %v5300, %v5292
        %v7773 = vpack.c.b16 %v5301, %v5293
        %v7774 = vpack.c.b16 %v5310, %v5302
        %v7775 = vpack.c.b16 %v5311, %v5303
        %v7776 = vpack.c.b16 %v5312, %v5304
        %v7777 = vpack.c.b16 %v5313, %v5305
        %v7778 = vpack.c.b16 %v5314, %v5306
        %v7779 = vpack.c.b16 %v5315, %v5307
        %v7780 = vpack.c.b16 %v5316, %v5308
        %v7781 = vpack.c.b16 %v5317, %v5309
        %v7782 = vpack.c.b16 %v5326, %v5318
        %v7783 = vpack.c.b16 %v5327, %v5319
        %v7784 = vpack.c.b16 %v5328, %v5320
        %v7785 = vpack.c.b16 %v5329, %v5321
        %v7786 = vpack.c.b16 %v5330, %v5322
        %v7787 = vpack.c.b16 %v5331, %v5323
        %v7788 = vpack.c.b16 %v5332, %v5324
        %v7789 = vpack.c.b16 %v5333, %v5325
        %v7790 = vpack.c.b16 %v5342, %v5334
        %v7791 = vpack.c.b16 %v5343, %v5335
        %v7792 = vpack.c.b16 %v5344, %v5336
        %v7793 = vpack.c.b16 %v5345, %v5337
        %v7794 = vpack.c.b16 %v5346, %v5338
        %v7795 = vpack.c.b16 %v5347, %v5339
        %v7796 = vpack.c.b16 %v5348, %v5340
        %v7797 = vpack.c.b16 %v5349, %v5341
        %v7798 = vpack.c.b16 %v5358, %v5350
        %v7799 = vpack.c.b16 %v5359, %v5351
        %v7800 = vpack.c.b16 %v5360, %v5352
        %v7801 = vpack.c.b16 %v5361, %v5353
        %v7802 = vpack.c.b16 %v5362, %v5354
        %v7803 = vpack.c.b16 %v5363, %v5355
        %v7804 = vpack.c.b16 %v5364, %v5356
        %v7805 = vpack.c.b16 %v5365, %v5357
        %v7806 = vpack.c.b16 %v5374, %v5366
        %v7807 = vpack.c.b16 %v5375, %v5367
        %v7808 = vpack.c.b16 %v5376, %v5368
        %v7809 = vpack.c.b16 %v5377, %v5369
        %v7810 = vpack.c.b16 %v5378, %v5370
        %v7811 = vpack.c.b16 %v5379, %v5371
        %v7812 = vpack.c.b16 %v5380, %v5372
        %v7813 = vpack.c.b16 %v5381, %v5373
        %v7814 = vpack.c.b16 %v5390, %v5382
        %v7815 = vpack.c.b16 %v5391, %v5383
        %v7816 = vpack.c.b16 %v5392, %v5384
        %v7817 = vpack.c.b16 %v5393, %v5385
        %v7818 = vpack.c.b16 %v5394, %v5386
        %v7819 = vpack.c.b16 %v5395, %v5387
        %v7820 = vpack.c.b16 %v5396, %v5388
        %v7821 = vpack.c.b16 %v5397, %v5389
        %v7822 = vpack.c.b16 %v5406, %v5398
        %v7823 = vpack.c.b16 %v5407, %v5399
        %v7824 = vpack.c.b16 %v5408, %v5400
        %v7825 = vpack.c.b16 %v5409, %v5401
        %v7826 = vpack.c.b16 %v5410, %v5402
        %v7827 = vpack.c.b16 %v5411, %v5403
        %v7828 = vpack.c.b16 %v5412, %v5404
        %v7829 = vpack.c.b16 %v5413, %v5405
        %v7830 = vpack.c.b16 %v5422, %v5414
        %v7831 = vpack.c.b16 %v5423, %v5415
        %v7832 = vpack.c.b16 %v5424, %v5416
        %v7833 = vpack.c.b16 %v5425, %v5417
        %v7834 = vpack.c.b16 %v5426, %v5418
        %v7835 = vpack.c.b16 %v5427, %v5419
        %v7836 = vpack.c.b16 %v5428, %v5420
        %v7837 = vpack.c.b16 %v5429, %v5421
        %v7838 = vpack.c.b16 %v5438, %v5430
        %v7839 = vpack.c.b16 %v5439, %v5431
        %v7840 = vpack.c.b16 %v5440, %v5432
        %v7841 = vpack.c.b16 %v5441, %v5433
        %v7842 = vpack.c.b16 %v5442, %v5434
        %v7843 = vpack.c.b16 %v5443, %v5435
        %v7844 = vpack.c.b16 %v5444, %v5436
        %v7845 = vpack.c.b16 %v5445, %v5437
        %v7846 = vpack.c.b16 %v5454, %v5446
        %v7847 = vpack.c.b16 %v5455, %v5447
        %v7848 = vpack.c.b16 %v5456, %v5448
        %v7849 = vpack.c.b16 %v5457, %v5449
        %v7850 = vpack.c.b16 %v5458, %v5450
        %v7851 = vpack.c.b16 %v5459, %v5451
        %v7852 = vpack.c.b16 %v5460, %v5452
        %v7853 = vpack.c.b16 %v5461, %v5453
        %v7854 = vpack.c.b16 %v5470, %v5462
        %v7855 = vpack.c.b16 %v5471, %v5463
        %v7856 = vpack.c.b16 %v5472, %v5464
        %v7857 = vpack.c.b16 %v5473, %v5465
        %v7858 = vpack.c.b16 %v5474, %v5466
        %v7859 = vpack.c.b16 %v5475, %v5467
        %v7860 = vpack.c.b16 %v5476, %v5468
        %v7861 = vpack.c.b16 %v5477, %v5469
        %v7862 = vpack.c.b16 %v5486, %v5478
        %v7863 = vpack.c.b16 %v5487, %v5479
        %v7864 = vpack.c.b16 %v5488, %v5480
        %v7865 = vpack.c.b16 %v5489, %v5481
        %v7866 = vpack.c.b16 %v5490, %v5482
        %v7867 = vpack.c.b16 %v5491, %v5483
        %v7868 = vpack.c.b16 %v5492, %v5484
        %v7869 = vpack.c.b16 %v5493, %v5485
        %v7870 = vpack.c.b16 %v5502, %v5494
        %v7871 = vpack.c.b16 %v5503, %v5495
        %v7872 = vpack.c.b16 %v5504, %v5496
        %v7873 = vpack.c.b16 %v5505, %v5497
        %v7874 = vpack.c.b16 %v5506, %v5498
        %v7875 = vpack.c.b16 %v5507, %v5499
        %v7876 = vpack.c.b16 %v5508, %v5500
        %v7877 = vpack.c.b16 %v5509, %v5501
        %v7878 = vpack.c.b16 %v5518, %v5510
        %v7879 = vpack.c.b16 %v5519, %v5511
        %v7880 = vpack.c.b16 %v5520, %v5512
        %v7881 = vpack.c.b16 %v5521, %v5513
        %v7882 = vpack.c.b16 %v5522, %v5514
        %v7883 = vpack.c.b16 %v5523, %v5515
        %v7884 = vpack.c.b16 %v5524, %v5516
        %v7885 = vpack.c.b16 %v5525, %v5517
        %v7886 = vpack.c.b16 %v5534, %v5526
        %v7887 = vpack.c.b16 %v5535, %v5527
        %v7888 = vpack.c.b16 %v5536, %v5528
        %v7889 = vpack.c.b16 %v5537, %v5529
        %v7890 = vpack.c.b16 %v5538, %v5530
        %v7891 = vpack.c.b16 %v5539, %v5531
        %v7892 = vpack.c.b16 %v5540, %v5532
        %v7893 = vpack.c.b16 %v5541, %v5533
        %v7894 = vpack.c.b16 %v5550, %v5542
        %v7895 = vpack.c.b16 %v5551, %v5543
        %v7896 = vpack.c.b16 %v5552, %v5544
        %v7897 = vpack.c.b16 %v5553, %v5545
        %v7898 = vpack.c.b16 %v5554, %v5546
        %v7899 = vpack.c.b16 %v5555, %v5547
        %v7900 = vpack.c.b16 %v5556, %v5548
        %v7901 = vpack.c.b16 %v5557, %v5549
        %v7902 = vpack.c.b16 %v5566, %v5558
        %v7903 = vpack.c.b16 %v5567, %v5559
        %v7904 = vpack.c.b16 %v5568, %v5560
        %v7905 = vpack.c.b16 %v5569, %v5561
        %v7906 = vpack.c.b16 %v5570, %v5562
        %v7907 = vpack.c.b16 %v5571, %v5563
        %v7908 = vpack.c.b16 %v5572, %v5564
        %v7909 = vpack.c.b16 %v5573, %v5565
        %v7910 = vpack.c.b16 %v5582, %v5574
        %v7911 = vpack.c.b16 %v5583, %v5575
        %v7912 = vpack.c.b16 %v5584, %v5576
        %v7913 = vpack.c.b16 %v5585, %v5577
        %v7914 = vpack.c.b16 %v5586, %v5578
        %v7915 = vpack.c.b16 %v5587, %v5579
        %v7916 = vpack.c.b16 %v5588, %v5580
        %v7917 = vpack.c.b16 %v5589, %v5581
        %v7918 = vpack.c.b16 %v5598, %v5590
        %v7919 = vpack.c.b16 %v5599, %v5591
        %v7920 = vpack.c.b16 %v5600, %v5592
        %v7921 = vpack.c.b16 %v5601, %v5593
        %v7922 = vpack.c.b16 %v5602, %v5594
        %v7923 = vpack.c.b16 %v5603, %v5595
        %v7924 = vpack.c.b16 %v5604, %v5596
        %v7925 = vpack.c.b16 %v5605, %v5597
        %v7926 = vpack.c.b16 %v5614, %v5606
        %v7927 = vpack.c.b16 %v5615, %v5607
        %v7928 = vpack.c.b16 %v5616, %v5608
        %v7929 = vpack.c.b16 %v5617, %v5609
        %v7930 = vpack.c.b16 %v5618, %v5610
        %v7931 = vpack.c.b16 %v5619, %v5611
        %v7932 = vpack.c.b16 %v5620, %v5612
        %v7933 = vpack.c.b16 %v5621, %v5613
        %v7934 = vpack.c.b16 %v5630, %v5622
        %v7935 = vpack.c.b16 %v5631, %v5623
        %v7936 = vpack.c.b16 %v5632, %v5624
        %v7937 = vpack.c.b16 %v5633, %v5625
        %v7938 = vpack.c.b16 %v5634, %v5626
        %v7939 = vpack.c.b16 %v5635, %v5627
        %v7940 = vpack.c.b16 %v5636, %v5628
        %v7941 = vpack.c.b16 %v5637, %v5629
        %v7942 = vpack.c.b16 %v5646, %v5638
        %v7943 = vpack.c.b16 %v5647, %v5639
        %v7944 = vpack.c.b16 %v5648, %v5640
        %v7945 = vpack.c.b16 %v5649, %v5641
        %v7946 = vpack.c.b16 %v5650, %v5642
        %v7947 = vpack.c.b16 %v5651, %v5643
        %v7948 = vpack.c.b16 %v5652, %v5644
        %v7949 = vpack.c.b16 %v5653, %v5645
        %v7950 = vpack.c.b16 %v5662, %v5654
        %v7951 = vpack.c.b16 %v5663, %v5655
        %v7952 = vpack.c.b16 %v5664, %v5656
        %v7953 = vpack.c.b16 %v5665, %v5657
        %v7954 = vpack.c.b16 %v5666, %v5658
        %v7955 = vpack.c.b16 %v5667, %v5659
        %v7956 = vpack.c.b16 %v5668, %v5660
        %v7957 = vpack.c.b16 %v5669, %v5661
        %v7958 = vpack.c.b16 %v5678, %v5670
        %v7959 = vpack.c.b16 %v5679, %v5671
        %v7960 = vpack.c.b16 %v5680, %v5672
        %v7961 = vpack.c.b16 %v5681, %v5673
        %v7962 = vpack.c.b16 %v5682, %v5674
        %v7963 = vpack.c.b16 %v5683, %v5675
        %v7964 = vpack.c.b16 %v5684, %v5676
        %v7965 = vpack.c.b16 %v5685, %v5677
        %v7966 = vpack.c.b16 %v5694, %v5686
        %v7967 = vpack.c.b16 %v5695, %v5687
        %v7968 = vpack.c.b16 %v5696, %v5688
        %v7969 = vpack.c.b16 %v5697, %v5689
        %v7970 = vpack.c.b16 %v5698, %v5690
        %v7971 = vpack.c.b16 %v5699, %v5691
        %v7972 = vpack.c.b16 %v5700, %v5692
        %v7973 = vpack.c.b16 %v5701, %v5693
        %v7974 = vpack.c.b16 %v5710, %v5702
        %v7975 = vpack.c.b16 %v5711, %v5703
        %v7976 = vpack.c.b16 %v5712, %v5704
        %v7977 = vpack.c.b16 %v5713, %v5705
        %v7978 = vpack.c.b16 %v5714, %v5706
        %v7979 = vpack.c.b16 %v5715, %v5707
        %v7980 = vpack.c.b16 %v5716, %v5708
        %v7981 = vpack.c.b16 %v5717, %v5709
        %v7982 = vpack.c.b16 %v5726, %v5718
        %v7983 = vpack.c.b16 %v5727, %v5719
        %v7984 = vpack.c.b16 %v5728, %v5720
        %v7985 = vpack.c.b16 %v5729, %v5721
        %v7986 = vpack.c.b16 %v5730, %v5722
        %v7987 = vpack.c.b16 %v5731, %v5723
        %v7988 = vpack.c.b16 %v5732, %v5724
        %v7989 = vpack.c.b16 %v5733, %v5725
        %v7990 = vpack.c.b16 %v5742, %v5734
        %v7991 = vpack.c.b16 %v5743, %v5735
        %v7992 = vpack.c.b16 %v5744, %v5736
        %v7993 = vpack.c.b16 %v5745, %v5737
        %v7994 = vpack.c.b16 %v5746, %v5738
        %v7995 = vpack.c.b16 %v5747, %v5739
        %v7996 = vpack.c.b16 %v5748, %v5740
        %v7997 = vpack.c.b16 %v5749, %v5741
        %v7998 = vpack.c.b16 %v5758, %v5750
        %v7999 = vpack.c.b16 %v5759, %v5751
        %v8000 = vpack.c.b16 %v5760, %v5752
        %v8001 = vpack.c.b16 %v5761, %v5753
        %v8002 = vpack.c.b16 %v5762, %v5754
        %v8003 = vpack.c.b16 %v5763, %v5755
        %v8004 = vpack.c.b16 %v5764, %v5756
        %v8005 = vpack.c.b16 %v5765, %v5757
        %v8006 = vpack.c.b16 %v5774, %v5766
        %v8007 = vpack.c.b16 %v5775, %v5767
        %v8008 = vpack.c.b16 %v5776, %v5768
        %v8009 = vpack.c.b16 %v5777, %v5769
        %v8010 = vpack.c.b16 %v5778, %v5770
        %v8011 = vpack.c.b16 %v5779, %v5771
        %v8012 = vpack.c.b16 %v5780, %v5772
        %v8013 = vpack.c.b16 %v5781, %v5773
        %v8014 = vpack.c.b16 %v5790, %v5782
        %v8015 = vpack.c.b16 %v5791, %v5783
        %v8016 = vpack.c.b16 %v5792, %v5784
        %v8017 = vpack.c.b16 %v5793, %v5785
        %v8018 = vpack.c.b16 %v5794, %v5786
        %v8019 = vpack.c.b16 %v5795, %v5787
        %v8020 = vpack.c.b16 %v5796, %v5788
        %v8021 = vpack.c.b16 %v5797, %v5789
        %v8022 = vpack.c.b16 %v5806, %v5798
        %v8023 = vpack.c.b16 %v5807, %v5799
        %v8024 = vpack.c.b16 %v5808, %v5800
        %v8025 = vpack.c.b16 %v5809, %v5801
        %v8026 = vpack.c.b16 %v5810, %v5802
        %v8027 = vpack.c.b16 %v5811, %v5803
        %v8028 = vpack.c.b16 %v5812, %v5804
        %v8029 = vpack.c.b16 %v5813, %v5805
        %v8030 = vpack.c.b16 %v5822, %v5814
        %v8031 = vpack.c.b16 %v5823, %v5815
        %v8032 = vpack.c.b16 %v5824, %v5816
        %v8033 = vpack.c.b16 %v5825, %v5817
        %v8034 = vpack.c.b16 %v5826, %v5818
        %v8035 = vpack.c.b16 %v5827, %v5819
        %v8036 = vpack.c.b16 %v5828, %v5820
        %v8037 = vpack.c.b16 %v5829, %v5821
        %v8038 = vpack.c.b16 %v5838, %v5830
        %v8039 = vpack.c.b16 %v5839, %v5831
        %v8040 = vpack.c.b16 %v5840, %v5832
        %v8041 = vpack.c.b16 %v5841, %v5833
        %v8042 = vpack.c.b16 %v5842, %v5834
        %v8043 = vpack.c.b16 %v5843, %v5835
        %v8044 = vpack.c.b16 %v5844, %v5836
        %v8045 = vpack.c.b16 %v5845, %v5837
        %v8046 = vpack.c.b16 %v5854, %v5846
        %v8047 = vpack.c.b16 %v5855, %v5847
        %v8048 = vpack.c.b16 %v5856, %v5848
        %v8049 = vpack.c.b16 %v5857, %v5849
        %v8050 = vpack.c.b16 %v5858, %v5850
        %v8051 = vpack.c.b16 %v5859, %v5851
        %v8052 = vpack.c.b16 %v5860, %v5852
        %v8053 = vpack.c.b16 %v5861, %v5853
        %v8054 = vpack.c.b16 %v5870, %v5862
        %v8055 = vpack.c.b16 %v5871, %v5863
        %v8056 = vpack.c.b16 %v5872, %v5864
        %v8057 = vpack.c.b16 %v5873, %v5865
        %v8058 = vpack.c.b16 %v5874, %v5866
        %v8059 = vpack.c.b16 %v5875, %v5867
        %v8060 = vpack.c.b16 %v5876, %v5868
        %v8061 = vpack.c.b16 %v5877, %v5869
        %v8062 = vpack.c.b16 %v5886, %v5878
        %v8063 = vpack.c.b16 %v5887, %v5879
        %v8064 = vpack.c.b16 %v5888, %v5880
        %v8065 = vpack.c.b16 %v5889, %v5881
        %v8066 = vpack.c.b16 %v5890, %v5882
        %v8067 = vpack.c.b16 %v5891, %v5883
        %v8068 = vpack.c.b16 %v5892, %v5884
        %v8069 = vpack.c.b16 %v5893, %v5885
        %v8070 = vpack.c.b16 %v5902, %v5894
        %v8071 = vpack.c.b16 %v5903, %v5895
        %v8072 = vpack.c.b16 %v5904, %v5896
        %v8073 = vpack.c.b16 %v5905, %v5897
        %v8074 = vpack.c.b16 %v5906, %v5898
        %v8075 = vpack.c.b16 %v5907, %v5899
        %v8076 = vpack.c.b16 %v5908, %v5900
        %v8077 = vpack.c.b16 %v5909, %v5901
        %v8078 = vpack.c.b16 %v5918, %v5910
        %v8079 = vpack.c.b16 %v5919, %v5911
        %v8080 = vpack.c.b16 %v5920, %v5912
        %v8081 = vpack.c.b16 %v5921, %v5913
        %v8082 = vpack.c.b16 %v5922, %v5914
        %v8083 = vpack.c.b16 %v5923, %v5915
        %v8084 = vpack.c.b16 %v5924, %v5916
        %v8085 = vpack.c.b16 %v5925, %v5917
        %v8086 = vpack.c.b16 %v5934, %v5926
        %v8087 = vpack.c.b16 %v5935, %v5927
        %v8088 = vpack.c.b16 %v5936, %v5928
        %v8089 = vpack.c.b16 %v5937, %v5929
        %v8090 = vpack.c.b16 %v5938, %v5930
        %v8091 = vpack.c.b16 %v5939, %v5931
        %v8092 = vpack.c.b16 %v5940, %v5932
        %v8093 = vpack.c.b16 %v5941, %v5933
        %v8094 = vpack.c.b16 %v5950, %v5942
        %v8095 = vpack.c.b16 %v5951, %v5943
        %v8096 = vpack.c.b16 %v5952, %v5944
        %v8097 = vpack.c.b16 %v5953, %v5945
        %v8098 = vpack.c.b16 %v5954, %v5946
        %v8099 = vpack.c.b16 %v5955, %v5947
        %v8100 = vpack.c.b16 %v5956, %v5948
        %v8101 = vpack.c.b16 %v5957, %v5949
        %v8102 = vpack.c.b16 %v5966, %v5958
        %v8103 = vpack.c.b16 %v5967, %v5959
        %v8104 = vpack.c.b16 %v5968, %v5960
        %v8105 = vpack.c.b16 %v5969, %v5961
        %v8106 = vpack.c.b16 %v5970, %v5962
        %v8107 = vpack.c.b16 %v5971, %v5963
        %v8108 = vpack.c.b16 %v5972, %v5964
        %v8109 = vpack.c.b16 %v5973, %v5965
        %v8110 = vpack.c.b16 %v5982, %v5974
        %v8111 = vpack.c.b16 %v5983, %v5975
        %v8112 = vpack.c.b16 %v5984, %v5976
        %v8113 = vpack.c.b16 %v5985, %v5977
        %v8114 = vpack.c.b16 %v5986, %v5978
        %v8115 = vpack.c.b16 %v5987, %v5979
        %v8116 = vpack.c.b16 %v5988, %v5980
        %v8117 = vpack.c.b16 %v5989, %v5981
        %v8118 = vpack.c.b16 %v5998, %v5990
        %v8119 = vpack.c.b16 %v5999, %v5991
        %v8120 = vpack.c.b16 %v6000, %v5992
        %v8121 = vpack.c.b16 %v6001, %v5993
        %v8122 = vpack.c.b16 %v6002, %v5994
        %v8123 = vpack.c.b16 %v6003, %v5995
        %v8124 = vpack.c.b16 %v6004, %v5996
        %v8125 = vpack.c.b16 %v6005, %v5997
        %v8126 = vpack.c.b16 %v6014, %v6006
        %v8127 = vpack.c.b16 %v6015, %v6007
        %v8128 = vpack.c.b16 %v6016, %v6008
        %v8129 = vpack.c.b16 %v6017, %v6009
        %v8130 = vpack.c.b16 %v6018, %v6010
        %v8131 = vpack.c.b16 %v6019, %v6011
        %v8132 = vpack.c.b16 %v6020, %v6012
        %v8133 = vpack.c.b16 %v6021, %v6013
        %v8134 = vpack.c.b16 %v6030, %v6022
        %v8135 = vpack.c.b16 %v6031, %v6023
        %v8136 = vpack.c.b16 %v6032, %v6024
        %v8137 = vpack.c.b16 %v6033, %v6025
        %v8138 = vpack.c.b16 %v6034, %v6026
        %v8139 = vpack.c.b16 %v6035, %v6027
        %v8140 = vpack.c.b16 %v6036, %v6028
        %v8141 = vpack.c.b16 %v6037, %v6029
        %v8142 = vpack.c.b16 %v6046, %v6038
        %v8143 = vpack.c.b16 %v6047, %v6039
        %v8144 = vpack.c.b16 %v6048, %v6040
        %v8145 = vpack.c.b16 %v6049, %v6041
        %v8146 = vpack.c.b16 %v6050, %v6042
        %v8147 = vpack.c.b16 %v6051, %v6043
        %v8148 = vpack.c.b16 %v6052, %v6044
        %v8149 = vpack.c.b16 %v6053, %v6045
        %v8150 = vpack.c.b16 %v6062, %v6054
        %v8151 = vpack.c.b16 %v6063, %v6055
        %v8152 = vpack.c.b16 %v6064, %v6056
        %v8153 = vpack.c.b16 %v6065, %v6057
        %v8154 = vpack.c.b16 %v6066, %v6058
        %v8155 = vpack.c.b16 %v6067, %v6059
        %v8156 = vpack.c.b16 %v6068, %v6060
        %v8157 = vpack.c.b16 %v6069, %v6061
        %v8158 = vpack.c.b16 %v6078, %v6070
        %v8159 = vpack.c.b16 %v6079, %v6071
        %v8160 = vpack.c.b16 %v6080, %v6072
        %v8161 = vpack.c.b16 %v6081, %v6073
        %v8162 = vpack.c.b16 %v6082, %v6074
        %v8163 = vpack.c.b16 %v6083, %v6075
        %v8164 = vpack.c.b16 %v6084, %v6076
        %v8165 = vpack.c.b16 %v6085, %v6077
        %v8166 = vpack.c.b16 %v6094, %v6086
        %v8167 = vpack.c.b16 %v6095, %v6087
        %v8168 = vpack.c.b16 %v6096, %v6088
        %v8169 = vpack.c.b16 %v6097, %v6089
        %v8170 = vpack.c.b16 %v6098, %v6090
        %v8171 = vpack.c.b16 %v6099, %v6091
        %v8172 = vpack.c.b16 %v6100, %v6092
        %v8173 = vpack.c.b16 %v6101, %v6093
        %v8174 = vpack.c.b16 %v6110, %v6102
        %v8175 = vpack.c.b16 %v6111, %v6103
        %v8176 = vpack.c.b16 %v6112, %v6104
        %v8177 = vpack.c.b16 %v6113, %v6105
        %v8178 = vpack.c.b16 %v6114, %v6106
        %v8179 = vpack.c.b16 %v6115, %v6107
        %v8180 = vpack.c.b16 %v6116, %v6108
        %v8181 = vpack.c.b16 %v6117, %v6109
        %v8182 = vpack.c.b16 %v6126, %v6118
        %v8183 = vpack.c.b16 %v6127, %v6119
        %v8184 = vpack.c.b16 %v6128, %v6120
        %v8185 = vpack.c.b16 %v6129, %v6121
        %v8186 = vpack.c.b16 %v6130, %v6122
        %v8187 = vpack.c.b16 %v6131, %v6123
        %v8188 = vpack.c.b16 %v6132, %v6124
        %v8189 = vpack.c.b16 %v6133, %v6125
        %v8190 = vpack.c.b16 %v6142, %v6134
        %v8191 = vpack.c.b16 %v6143, %v6135
        %v8192 = vpack.c.b16 %v6144, %v6136
        %v8193 = vpack.c.b16 %v6145, %v6137
        %v8194 = vpack.c.b16 %v6146, %v6138
        %v8195 = vpack.c.b16 %v6147, %v6139
        %v8196 = vpack.c.b16 %v6148, %v6140
        %v8197 = vpack.c.b16 %v6149, %v6141
        %v8198 = vpack.c.b16 %v6158, %v6150
        %v8199 = vpack.c.b16 %v6159, %v6151
        %v8200 = vpack.c.b16 %v6160, %v6152
        %v8201 = vpack.c.b16 %v6161, %v6153
        %v8202 = vpack.c.b16 %v6162, %v6154
        %v8203 = vpack.c.b16 %v6163, %v6155
        %v8204 = vpack.c.b16 %v6164, %v6156
        %v8205 = vpack.c.b16 %v6165, %v6157
        %v8206 = vpack.c.b16 %v6174, %v6166
        %v8207 = vpack.c.b16 %v6175, %v6167
        %v8208 = vpack.c.b16 %v6176, %v6168
        %v8209 = vpack.c.b16 %v6177, %v6169
        %v8210 = vpack.c.b16 %v6178, %v6170
        %v8211 = vpack.c.b16 %v6179, %v6171
        %v8212 = vpack.c.b16 %v6180, %v6172
        %v8213 = vpack.c.b16 %v6181, %v6173
        %v8214 = vpack.c.b16 %v6190, %v6182
        %v8215 = vpack.c.b16 %v6191, %v6183
        %v8216 = vpack.c.b16 %v6192, %v6184
        %v8217 = vpack.c.b16 %v6193, %v6185
        %v8218 = vpack.c.b16 %v6194, %v6186
        %v8219 = vpack.c.b16 %v6195, %v6187
        %v8220 = vpack.c.b16 %v6196, %v6188
        %v8221 = vpack.c.b16 %v6197, %v6189
        %v8222 = vpack.c.b16 %v6206, %v6198
        %v8223 = vpack.c.b16 %v6207, %v6199
        %v8224 = vpack.c.b16 %v6208, %v6200
        %v8225 = vpack.c.b16 %v6209, %v6201
        %v8226 = vpack.c.b16 %v6210, %v6202
        %v8227 = vpack.c.b16 %v6211, %v6203
        %v8228 = vpack.c.b16 %v6212, %v6204
        %v8229 = vpack.c.b16 %v6213, %v6205
        %v8230 = vpack.c.b16 %v6222, %v6214
        %v8231 = vpack.c.b16 %v6223, %v6215
        %v8232 = vpack.c.b16 %v6224, %v6216
        %v8233 = vpack.c.b16 %v6225, %v6217
        %v8234 = vpack.c.b16 %v6226, %v6218
        %v8235 = vpack.c.b16 %v6227, %v6219
        %v8236 = vpack.c.b16 %v6228, %v6220
        %v8237 = vpack.c.b16 %v6229, %v6221
        %v8238 = vpack.c.b16 %v6238, %v6230
        %v8239 = vpack.c.b16 %v6239, %v6231
        %v8240 = vpack.c.b16 %v6240, %v6232
        %v8241 = vpack.c.b16 %v6241, %v6233
        %v8242 = vpack.c.b16 %v6242, %v6234
        %v8243 = vpack.c.b16 %v6243, %v6235
        %v8244 = vpack.c.b16 %v6244, %v6236
        %v8245 = vpack.c.b16 %v6245, %v6237
        %v8246 = vpack.c.b16 %v6254, %v6246
        %v8247 = vpack.c.b16 %v6255, %v6247
        %v8248 = vpack.c.b16 %v6256, %v6248
        %v8249 = vpack.c.b16 %v6257, %v6249
        %v8250 = vpack.c.b16 %v6258, %v6250
        %v8251 = vpack.c.b16 %v6259, %v6251
        %v8252 = vpack.c.b16 %v6260, %v6252
        %v8253 = vpack.c.b16 %v6261, %v6253
        %v8254 = vpack.c.b16 %v6270, %v6262
        %v8255 = vpack.c.b16 %v6271, %v6263
        %v8256 = vpack.c.b16 %v6272, %v6264
        %v8257 = vpack.c.b16 %v6273, %v6265
        %v8258 = vpack.c.b16 %v6274, %v6266
        %v8259 = vpack.c.b16 %v6275, %v6267
        %v8260 = vpack.c.b16 %v6276, %v6268
        %v8261 = vpack.c.b16 %v6277, %v6269
        %v8262 = vpack.c.b16 %v6286, %v6278
        %v8263 = vpack.c.b16 %v6287, %v6279
        %v8264 = vpack.c.b16 %v6288, %v6280
        %v8265 = vpack.c.b16 %v6289, %v6281
        %v8266 = vpack.c.b16 %v6290, %v6282
        %v8267 = vpack.c.b16 %v6291, %v6283
        %v8268 = vpack.c.b16 %v6292, %v6284
        %v8269 = vpack.c.b16 %v6293, %v6285
        %v8270 = vpack.c.b16 %v6302, %v6294
        %v8271 = vpack.c.b16 %v6303, %v6295
        %v8272 = vpack.c.b16 %v6304, %v6296
        %v8273 = vpack.c.b16 %v6305, %v6297
        %v8274 = vpack.c.b16 %v6306, %v6298
        %v8275 = vpack.c.b16 %v6307, %v6299
        %v8276 = vpack.c.b16 %v6308, %v6300
        %v8277 = vpack.c.b16 %v6309, %v6301
        %v8278 = vpack.c.b16 %v6318, %v6310
        %v8279 = vpack.c.b16 %v6319, %v6311
        %v8280 = vpack.c.b16 %v6320, %v6312
        %v8281 = vpack.c.b16 %v6321, %v6313
        %v8282 = vpack.c.b16 %v6322, %v6314
        %v8283 = vpack.c.b16 %v6323, %v6315
        %v8284 = vpack.c.b16 %v6324, %v6316
        %v8285 = vpack.c.b16 %v6325, %v6317
        %v8286 = vpack.c.b16 %v6334, %v6326
        %v8287 = vpack.c.b16 %v6335, %v6327
        %v8288 = vpack.c.b16 %v6336, %v6328
        %v8289 = vpack.c.b16 %v6337, %v6329
        %v8290 = vpack.c.b16 %v6338, %v6330
        %v8291 = vpack.c.b16 %v6339, %v6331
        %v8292 = vpack.c.b16 %v6340, %v6332
        %v8293 = vpack.c.b16 %v6341, %v6333
        %v8294 = vpack.c.b16 %v6350, %v6342
        %v8295 = vpack.c.b16 %v6351, %v6343
        %v8296 = vpack.c.b16 %v6352, %v6344
        %v8297 = vpack.c.b16 %v6353, %v6345
        %v8298 = vpack.c.b16 %v6354, %v6346
        %v8299 = vpack.c.b16 %v6355, %v6347
        %v8300 = vpack.c.b16 %v6356, %v6348
        %v8301 = vpack.c.b16 %v6357, %v6349
        %v8302 = vpack.c.b16 %v6366, %v6358
        %v8303 = vpack.c.b16 %v6367, %v6359
        %v8304 = vpack.c.b16 %v6368, %v6360
        %v8305 = vpack.c.b16 %v6369, %v6361
        %v8306 = vpack.c.b16 %v6370, %v6362
        %v8307 = vpack.c.b16 %v6371, %v6363
        %v8308 = vpack.c.b16 %v6372, %v6364
        %v8309 = vpack.c.b16 %v6373, %v6365
        %v8310 = vpack.c.b16 %v6382, %v6374
        %v8311 = vpack.c.b16 %v6383, %v6375
        %v8312 = vpack.c.b16 %v6384, %v6376
        %v8313 = vpack.c.b16 %v6385, %v6377
        %v8314 = vpack.c.b16 %v6386, %v6378
        %v8315 = vpack.c.b16 %v6387, %v6379
        %v8316 = vpack.c.b16 %v6388, %v6380
        %v8317 = vpack.c.b16 %v6389, %v6381
        %v8318 = vpack.c.b16 %v6398, %v6390
        %v8319 = vpack.c.b16 %v6399, %v6391
        %v8320 = vpack.c.b16 %v6400, %v6392
        %v8321 = vpack.c.b16 %v6401, %v6393
        %v8322 = vpack.c.b16 %v6402, %v6394
        %v8323 = vpack.c.b16 %v6403, %v6395
        %v8324 = vpack.c.b16 %v6404, %v6396
        %v8325 = vpack.c.b16 %v6405, %v6397
        %v8326 = vpack.c.b16 %v6414, %v6406
        %v8327 = vpack.c.b16 %v6415, %v6407
        %v8328 = vpack.c.b16 %v6416, %v6408
        %v8329 = vpack.c.b16 %v6417, %v6409
        %v8330 = vpack.c.b16 %v6418, %v6410
        %v8331 = vpack.c.b16 %v6419, %v6411
        %v8332 = vpack.c.b16 %v6420, %v6412
        %v8333 = vpack.c.b16 %v6421, %v6413
        %v8334 = vpack.c.b16 %v6430, %v6422
        %v8335 = vpack.c.b16 %v6431, %v6423
        %v8336 = vpack.c.b16 %v6432, %v6424
        %v8337 = vpack.c.b16 %v6433, %v6425
        %v8338 = vpack.c.b16 %v6434, %v6426
        %v8339 = vpack.c.b16 %v6435, %v6427
        %v8340 = vpack.c.b16 %v6436, %v6428
        %v8341 = vpack.c.b16 %v6437, %v6429
        %v8342 = vpack.c.b16 %v6446, %v6438
        %v8343 = vpack.c.b16 %v6447, %v6439
        %v8344 = vpack.c.b16 %v6448, %v6440
        %v8345 = vpack.c.b16 %v6449, %v6441
        %v8346 = vpack.c.b16 %v6450, %v6442
        %v8347 = vpack.c.b16 %v6451, %v6443
        %v8348 = vpack.c.b16 %v6452, %v6444
        %v8349 = vpack.c.b16 %v6453, %v6445
        %v8350 = vpack.c.b16 %v6462, %v6454
        %v8351 = vpack.c.b16 %v6463, %v6455
        %v8352 = vpack.c.b16 %v6464, %v6456
        %v8353 = vpack.c.b16 %v6465, %v6457
        %v8354 = vpack.c.b16 %v6466, %v6458
        %v8355 = vpack.c.b16 %v6467, %v6459
        %v8356 = vpack.c.b16 %v6468, %v6460
        %v8357 = vpack.c.b16 %v6469, %v6461
        %v8358 = vpack.c.b16 %v6478, %v6470
        %v8359 = vpack.c.b16 %v6479, %v6471
        %v8360 = vpack.c.b16 %v6480, %v6472
        %v8361 = vpack.c.b16 %v6481, %v6473
        %v8362 = vpack.c.b16 %v6482, %v6474
        %v8363 = vpack.c.b16 %v6483, %v6475
        %v8364 = vpack.c.b16 %v6484, %v6476
        %v8365 = vpack.c.b16 %v6485, %v6477
        %v8366 = vpack.c.b16 %v6494, %v6486
        %v8367 = vpack.c.b16 %v6495, %v6487
        %v8368 = vpack.c.b16 %v6496, %v6488
        %v8369 = vpack.c.b16 %v6497, %v6489
        %v8370 = vpack.c.b16 %v6498, %v6490
        %v8371 = vpack.c.b16 %v6499, %v6491
        %v8372 = vpack.c.b16 %v6500, %v6492
        %v8373 = vpack.c.b16 %v6501, %v6493
        %v8374 = vpack.c.b16 %v6510, %v6502
        %v8375 = vpack.c.b16 %v6511, %v6503
        %v8376 = vpack.c.b16 %v6512, %v6504
        %v8377 = vpack.c.b16 %v6513, %v6505
        %v8378 = vpack.c.b16 %v6514, %v6506
        %v8379 = vpack.c.b16 %v6515, %v6507
        %v8380 = vpack.c.b16 %v6516, %v6508
        %v8381 = vpack.c.b16 %v6517, %v6509
        %v8382 = vpack.c.b16 %v6526, %v6518
        %v8383 = vpack.c.b16 %v6527, %v6519
        %v8384 = vpack.c.b16 %v6528, %v6520
        %v8385 = vpack.c.b16 %v6529, %v6521
        %v8386 = vpack.c.b16 %v6530, %v6522
        %v8387 = vpack.c.b16 %v6531, %v6523
        %v8388 = vpack.c.b16 %v6532, %v6524
        %v8389 = vpack.c.b16 %v6533, %v6525
        %v8390 = vpack.c.b16 %v6542, %v6534
        %v8391 = vpack.c.b16 %v6543, %v6535
        %v8392 = vpack.c.b16 %v6544, %v6536
        %v8393 = vpack.c.b16 %v6545, %v6537
        %v8394 = vpack.c.b16 %v6546, %v6538
        %v8395 = vpack.c.b16 %v6547, %v6539
        %v8396 = vpack.c.b16 %v6548, %v6540
        %v8397 = vpack.c.b16 %v6549, %v6541
        %v8398 = vpack.c.b16 %v6558, %v6550
        %v8399 = vpack.c.b16 %v6559, %v6551
        %v8400 = vpack.c.b16 %v6560, %v6552
        %v8401 = vpack.c.b16 %v6561, %v6553
        %v8402 = vpack.c.b16 %v6562, %v6554
        %v8403 = vpack.c.b16 %v6563, %v6555
        %v8404 = vpack.c.b16 %v6564, %v6556
        %v8405 = vpack.c.b16 %v6565, %v6557
        %v8406 = vpack.c.b16 %v6574, %v6566
        %v8407 = vpack.c.b16 %v6575, %v6567
        %v8408 = vpack.c.b16 %v6576, %v6568
        %v8409 = vpack.c.b16 %v6577, %v6569
        %v8410 = vpack.c.b16 %v6578, %v6570
        %v8411 = vpack.c.b16 %v6579, %v6571
        %v8412 = vpack.c.b16 %v6580, %v6572
        %v8413 = vpack.c.b16 %v6581, %v6573
        %v8414 = vpack.c.b16 %v6590, %v6582
        %v8415 = vpack.c.b16 %v6591, %v6583
        %v8416 = vpack.c.b16 %v6592, %v6584
        %v8417 = vpack.c.b16 %v6593, %v6585
        %v8418 = vpack.c.b16 %v6594, %v6586
        %v8419 = vpack.c.b16 %v6595, %v6587
        %v8420 = vpack.c.b16 %v6596, %v6588
        %v8421 = vpack.c.b16 %v6597, %v6589
        %v8422 = vpack.c.b16 %v6606, %v6598
        %v8423 = vpack.c.b16 %v6607, %v6599
        %v8424 = vpack.c.b16 %v6608, %v6600
        %v8425 = vpack.c.b16 %v6609, %v6601
        %v8426 = vpack.c.b16 %v6610, %v6602
        %v8427 = vpack.c.b16 %v6611, %v6603
        %v8428 = vpack.c.b16 %v6612, %v6604
        %v8429 = vpack.c.b16 %v6613, %v6605
        %v8430 = vpack.c.b16 %v6622, %v6614
        %v8431 = vpack.c.b16 %v6623, %v6615
        %v8432 = vpack.c.b16 %v6624, %v6616
        %v8433 = vpack.c.b16 %v6625, %v6617
        %v8434 = vpack.c.b16 %v6626, %v6618
        %v8435 = vpack.c.b16 %v6627, %v6619
        %v8436 = vpack.c.b16 %v6628, %v6620
        %v8437 = vpack.c.b16 %v6629, %v6621
        %v8438 = vpack.c.b16 %v6638, %v6630
        %v8439 = vpack.c.b16 %v6639, %v6631
        %v8440 = vpack.c.b16 %v6640, %v6632
        %v8441 = vpack.c.b16 %v6641, %v6633
        %v8442 = vpack.c.b16 %v6642, %v6634
        %v8443 = vpack.c.b16 %v6643, %v6635
        %v8444 = vpack.c.b16 %v6644, %v6636
        %v8445 = vpack.c.b16 %v6645, %v6637
        %v8446 = vpack.c.b16 %v6654, %v6646
        %v8447 = vpack.c.b16 %v6655, %v6647
        %v8448 = vpack.c.b16 %v6656, %v6648
        %v8449 = vpack.c.b16 %v6657, %v6649
        %v8450 = vpack.c.b16 %v6658, %v6650
        %v8451 = vpack.c.b16 %v6659, %v6651
        %v8452 = vpack.c.b16 %v6660, %v6652
        %v8453 = vpack.c.b16 %v6661, %v6653
        %v8454 = vpack.c.b16 %v6670, %v6662
        %v8455 = vpack.c.b16 %v6671, %v6663
        %v8456 = vpack.c.b16 %v6672, %v6664
        %v8457 = vpack.c.b16 %v6673, %v6665
        %v8458 = vpack.c.b16 %v6674, %v6666
        %v8459 = vpack.c.b16 %v6675, %v6667
        %v8460 = vpack.c.b16 %v6676, %v6668
        %v8461 = vpack.c.b16 %v6677, %v6669
        %v8462 = vpack.c.b16 %v6686, %v6678
        %v8463 = vpack.c.b16 %v6687, %v6679
        %v8464 = vpack.c.b16 %v6688, %v6680
        %v8465 = vpack.c.b16 %v6689, %v6681
        %v8466 = vpack.c.b16 %v6690, %v6682
        %v8467 = vpack.c.b16 %v6691, %v6683
        %v8468 = vpack.c.b16 %v6692, %v6684
        %v8469 = vpack.c.b16 %v6693, %v6685
        %v8470 = vpack.c.b16 %v6702, %v6694
        %v8471 = vpack.c.b16 %v6703, %v6695
        %v8472 = vpack.c.b16 %v6704, %v6696
        %v8473 = vpack.c.b16 %v6705, %v6697
        %v8474 = vpack.c.b16 %v6706, %v6698
        %v8475 = vpack.c.b16 %v6707, %v6699
        %v8476 = vpack.c.b16 %v6708, %v6700
        %v8477 = vpack.c.b16 %v6709, %v6701
        %v8478 = vpack.c.b16 %v6718, %v6710
        %v8479 = vpack.c.b16 %v6719, %v6711
        %v8480 = vpack.c.b16 %v6720, %v6712
        %v8481 = vpack.c.b16 %v6721, %v6713
        %v8482 = vpack.c.b16 %v6722, %v6714
        %v8483 = vpack.c.b16 %v6723, %v6715
        %v8484 = vpack.c.b16 %v6724, %v6716
        %v8485 = vpack.c.b16 %v6725, %v6717
        %v8486 = vpack.c.b16 %v6734, %v6726
        %v8487 = vpack.c.b16 %v6735, %v6727
        %v8488 = vpack.c.b16 %v6736, %v6728
        %v8489 = vpack.c.b16 %v6737, %v6729
        %v8490 = vpack.c.b16 %v6738, %v6730
        %v8491 = vpack.c.b16 %v6739, %v6731
        %v8492 = vpack.c.b16 %v6740, %v6732
        %v8493 = vpack.c.b16 %v6741, %v6733
        %v8494 = vpack.c.b16 %v6750, %v6742
        %v8495 = vpack.c.b16 %v6751, %v6743
        %v8496 = vpack.c.b16 %v6752, %v6744
        %v8497 = vpack.c.b16 %v6753, %v6745
        %v8498 = vpack.c.b16 %v6754, %v6746
        %v8499 = vpack.c.b16 %v6755, %v6747
        %v8500 = vpack.c.b16 %v6756, %v6748
        %v8501 = vpack.c.b16 %v6757, %v6749
        %v8502 = vpack.c.b16 %v6766, %v6758
        %v8503 = vpack.c.b16 %v6767, %v6759
        %v8504 = vpack.c.b16 %v6768, %v6760
        %v8505 = vpack.c.b16 %v6769, %v6761
        %v8506 = vpack.c.b16 %v6770, %v6762
        %v8507 = vpack.c.b16 %v6771, %v6763
        %v8508 = vpack.c.b16 %v6772, %v6764
        %v8509 = vpack.c.b16 %v6773, %v6765
        %v8510 = vpack.c.b16 %v6782, %v6774
        %v8511 = vpack.c.b16 %v6783, %v6775
        %v8512 = vpack.c.b16 %v6784, %v6776
        %v8513 = vpack.c.b16 %v6785, %v6777
        %v8514 = vpack.c.b16 %v6786, %v6778
        %v8515 = vpack.c.b16 %v6787, %v6779
        %v8516 = vpack.c.b16 %v6788, %v6780
        %v8517 = vpack.c.b16 %v6789, %v6781
        %v8518 = vpack.c.b16 %v6798, %v6790
        %v8519 = vpack.c.b16 %v6799, %v6791
        %v8520 = vpack.c.b16 %v6800, %v6792
        %v8521 = vpack.c.b16 %v6801, %v6793
        %v8522 = vpack.c.b16 %v6802, %v6794
        %v8523 = vpack.c.b16 %v6803, %v6795
        %v8524 = vpack.c.b16 %v6804, %v6796
        %v8525 = vpack.c.b16 %v6805, %v6797
        %v8526 = vpack.c.b16 %v6814, %v6806
        %v8527 = vpack.c.b16 %v6815, %v6807
        %v8528 = vpack.c.b16 %v6816, %v6808
        %v8529 = vpack.c.b16 %v6817, %v6809
        %v8530 = vpack.c.b16 %v6818, %v6810
        %v8531 = vpack.c.b16 %v6819, %v6811
        %v8532 = vpack.c.b16 %v6820, %v6812
        %v8533 = vpack.c.b16 %v6821, %v6813
        %v8534 = vpack.c.b16 %v6830, %v6822
        %v8535 = vpack.c.b16 %v6831, %v6823
        %v8536 = vpack.c.b16 %v6832, %v6824
        %v8537 = vpack.c.b16 %v6833, %v6825
        %v8538 = vpack.c.b16 %v6834, %v6826
        %v8539 = vpack.c.b16 %v6835, %v6827
        %v8540 = vpack.c.b16 %v6836, %v6828
        %v8541 = vpack.c.b16 %v6837, %v6829
        %v8542 = vpack.c.b16 %v6846, %v6838
        %v8543 = vpack.c.b16 %v6847, %v6839
        %v8544 = vpack.c.b16 %v6848, %v6840
        %v8545 = vpack.c.b16 %v6849, %v6841
        %v8546 = vpack.c.b16 %v6850, %v6842
        %v8547 = vpack.c.b16 %v6851, %v6843
        %v8548 = vpack.c.b16 %v6852, %v6844
        %v8549 = vpack.c.b16 %v6853, %v6845
        %v8550 = vpack.c.b16 %v6862, %v6854
        %v8551 = vpack.c.b16 %v6863, %v6855
        %v8552 = vpack.c.b16 %v6864, %v6856
        %v8553 = vpack.c.b16 %v6865, %v6857
        %v8554 = vpack.c.b16 %v6866, %v6858
        %v8555 = vpack.c.b16 %v6867, %v6859
        %v8556 = vpack.c.b16 %v6868, %v6860
        %v8557 = vpack.c.b16 %v6869, %v6861
        %v8558 = vpack.c.b16 %v6878, %v6870
        %v8559 = vpack.c.b16 %v6879, %v6871
        %v8560 = vpack.c.b16 %v6880, %v6872
        %v8561 = vpack.c.b16 %v6881, %v6873
        %v8562 = vpack.c.b16 %v6882, %v6874
        %v8563 = vpack.c.b16 %v6883, %v6875
        %v8564 = vpack.c.b16 %v6884, %v6876
        %v8565 = vpack.c.b16 %v6885, %v6877
        %v8566 = vpack.c.b16 %v6894, %v6886
        %v8567 = vpack.c.b16 %v6895, %v6887
        %v8568 = vpack.c.b16 %v6896, %v6888
        %v8569 = vpack.c.b16 %v6897, %v6889
        %v8570 = vpack.c.b16 %v6898, %v6890
        %v8571 = vpack.c.b16 %v6899, %v6891
        %v8572 = vpack.c.b16 %v6900, %v6892
        %v8573 = vpack.c.b16 %v6901, %v6893
        %v8574 = vpack.c.b16 %v6910, %v6902
        %v8575 = vpack.c.b16 %v6911, %v6903
        %v8576 = vpack.c.b16 %v6912, %v6904
        %v8577 = vpack.c.b16 %v6913, %v6905
        %v8578 = vpack.c.b16 %v6914, %v6906
        %v8579 = vpack.c.b16 %v6915, %v6907
        %v8580 = vpack.c.b16 %v6916, %v6908
        %v8581 = vpack.c.b16 %v6917, %v6909
        %v8582 = vpack.c.b16 %v6926, %v6918
        %v8583 = vpack.c.b16 %v6927, %v6919
        %v8584 = vpack.c.b16 %v6928, %v6920
        %v8585 = vpack.c.b16 %v6929, %v6921
        %v8586 = vpack.c.b16 %v6930, %v6922
        %v8587 = vpack.c.b16 %v6931, %v6923
        %v8588 = vpack.c.b16 %v6932, %v6924
        %v8589 = vpack.c.b16 %v6933, %v6925
        %v8590 = vpack.c.b16 %v6942, %v6934
        %v8591 = vpack.c.b16 %v6943, %v6935
        %v8592 = vpack.c.b16 %v6944, %v6936
        %v8593 = vpack.c.b16 %v6945, %v6937
        %v8594 = vpack.c.b16 %v6946, %v6938
        %v8595 = vpack.c.b16 %v6947, %v6939
        %v8596 = vpack.c.b16 %v6948, %v6940
        %v8597 = vpack.c.b16 %v6949, %v6941
        %v8598 = vpack.c.b16 %v6958, %v6950
        %v8599 = vpack.c.b16 %v6959, %v6951
        %v8600 = vpack.c.b16 %v6960, %v6952
        %v8601 = vpack.c.b16 %v6961, %v6953
        %v8602 = vpack.c.b16 %v6962, %v6954
        %v8603 = vpack.c.b16 %v6963, %v6955
        %v8604 = vpack.c.b16 %v6964, %v6956
        %v8605 = vpack.c.b16 %v6965, %v6957
        %v8606 = vpack.c.b16 %v6974, %v6966
        %v8607 = vpack.c.b16 %v6975, %v6967
        %v8608 = vpack.c.b16 %v6976, %v6968
        %v8609 = vpack.c.b16 %v6977, %v6969
        %v8610 = vpack.c.b16 %v6978, %v6970
        %v8611 = vpack.c.b16 %v6979, %v6971
        %v8612 = vpack.c.b16 %v6980, %v6972
        %v8613 = vpack.c.b16 %v6981, %v6973
        %v8614 = vpack.c.b16 %v6990, %v6982
        %v8615 = vpack.c.b16 %v6991, %v6983
        %v8616 = vpack.c.b16 %v6992, %v6984
        %v8617 = vpack.c.b16 %v6993, %v6985
        %v8618 = vpack.c.b16 %v6994, %v6986
        %v8619 = vpack.c.b16 %v6995, %v6987
        %v8620 = vpack.c.b16 %v6996, %v6988
        %v8621 = vpack.c.b16 %v6997, %v6989
        %v8622 = vpack.c.b16 %v7006, %v6998
        %v8623 = vpack.c.b16 %v7007, %v6999
        %v8624 = vpack.c.b16 %v7008, %v7000
        %v8625 = vpack.c.b16 %v7009, %v7001
        %v8626 = vpack.c.b16 %v7010, %v7002
        %v8627 = vpack.c.b16 %v7011, %v7003
        %v8628 = vpack.c.b16 %v7012, %v7004
        %v8629 = vpack.c.b16 %v7013, %v7005
        %v8630 = vpack.c.b16 %v7022, %v7014
        %v8631 = vpack.c.b16 %v7023, %v7015
        %v8632 = vpack.c.b16 %v7024, %v7016
        %v8633 = vpack.c.b16 %v7025, %v7017
        %v8634 = vpack.c.b16 %v7026, %v7018
        %v8635 = vpack.c.b16 %v7027, %v7019
        %v8636 = vpack.c.b16 %v7028, %v7020
        %v8637 = vpack.c.b16 %v7029, %v7021
        %v8638 = vpack.c.b16 %v7038, %v7030
        %v8639 = vpack.c.b16 %v7039, %v7031
        %v8640 = vpack.c.b16 %v7040, %v7032
        %v8641 = vpack.c.b16 %v7041, %v7033
        %v8642 = vpack.c.b16 %v7042, %v7034
        %v8643 = vpack.c.b16 %v7043, %v7035
        %v8644 = vpack.c.b16 %v7044, %v7036
        %v8645 = vpack.c.b16 %v7045, %v7037
        %10246 = vmatprep.subr.bf16.mxu0 %v7103
        %10247 = vmatpush1.bf16.msra.mxu0 %v7102
        %10248 = vmatprep.subr.bf16.mxu0 %v7095
        %10249 = vmatpush1.bf16.msra.mxu0 %v7094
        %10250 = vmatprep.subr.bf16.mxu0 %v7087
        %10251 = vmatpush1.bf16.msra.mxu0 %v7086
        %10252 = vmatprep.subr.bf16.mxu0 %v7079
        %10253 = vmatpush1.bf16.msra.mxu0 %v7078
        %10254 = vmatprep.subr.bf16.mxu0 %v7071
        %10255 = vmatpush1.bf16.msra.mxu0 %v7070
        %10256 = vmatprep.subr.bf16.mxu0 %v7063
        %10257 = vmatpush1.bf16.msra.mxu0 %v7062
        %10258 = vmatprep.subr.bf16.mxu0 %v7055
        %10259 = vmatpush1.bf16.msra.mxu0 %v7054
        %10260 = vmatprep.subr.bf16.mxu0 %v7047
        %10261 = vmatpush1.bf16.msra.mxu0 %v7046
        %10262 = vmatprep.subr.bf16.mxu0 %v7167
        %10263 = vmatpush2.bf16.msra.mxu0 %v7166
        %10264 = vmatprep.subr.bf16.mxu0 %v7159
        %10265 = vmatpush2.bf16.msra.mxu0 %v7158
        %10266 = vmatprep.subr.bf16.mxu0 %v7151
        %10267 = vmatpush2.bf16.msra.mxu0 %v7150
        %10268 = vmatprep.subr.bf16.mxu0 %v7143
        %10269 = vmatpush2.bf16.msra.mxu0 %v7142
        %10270 = vmatprep.subr.bf16.mxu0 %v7135
        %10271 = vmatpush2.bf16.msra.mxu0 %v7134
        %10272 = vmatprep.subr.bf16.mxu0 %v7127
        %10273 = vmatpush2.bf16.msra.mxu0 %v7126
        %10274 = vmatprep.subr.bf16.mxu0 %v7119
        %10275 = vmatpush2.bf16.msra.mxu0 %v7118
        %10276 = vmatprep.subr.bf16.mxu0 %v7111
        %10277 = vmatpush2.bf16.msra.mxu0 %v7110
        %10278 = vmatprep.mubr.bf16.mxu0 %v580
        %10279 = vmatmul.mubr.bf16.gmra.mxu0 %v579
        %v10280 = vpop.f32.mrf.mxu0
        %v10281 = vadd.f32 %v2209, %v10280
        %v10282 = vpop.f32.mrf.mxu0
        %v10283 = vadd.f32 %v2213, %v10282
        %v10284 = vpop.f32.mrf.mxu0
        %v10285 = vpop.f32.mrf.mxu0
        %10286 = vdwg.mxu0
        %10287 = vmatprep.subr.bf16.mxu0 %v7231
        %10288 = vmatpush1.bf16.msra.mxu0 %v7230
        %10289 = vmatprep.subr.bf16.mxu0 %v7223
        %10290 = vmatpush1.bf16.msra.mxu0 %v7222
        %10291 = vmatprep.subr.bf16.mxu0 %v7215
        %10292 = vmatpush1.bf16.msra.mxu0 %v7214
        %10293 = vmatprep.subr.bf16.mxu0 %v7207
        %10294 = vmatpush1.bf16.msra.mxu0 %v7206
        %10295 = vmatprep.subr.bf16.mxu0 %v7199
        %10296 = vmatpush1.bf16.msra.mxu0 %v7198
        %10297 = vmatprep.subr.bf16.mxu0 %v7191
        %10298 = vmatpush1.bf16.msra.mxu0 %v7190
        %10299 = vmatprep.subr.bf16.mxu0 %v7183
        %10300 = vmatpush1.bf16.msra.mxu0 %v7182
        %10301 = vmatprep.subr.bf16.mxu0 %v7175
        %10302 = vmatpush1.bf16.msra.mxu0 %v7174
        %10303 = vmatprep.subr.bf16.mxu0 %v7295
        %10304 = vmatpush2.bf16.msra.mxu0 %v7294
        %10305 = vmatprep.subr.bf16.mxu0 %v7287
        %10306 = vmatpush2.bf16.msra.mxu0 %v7286
        %10307 = vmatprep.subr.bf16.mxu0 %v7279
        %10308 = vmatpush2.bf16.msra.mxu0 %v7278
        %10309 = vmatprep.subr.bf16.mxu0 %v7271
        %10310 = vmatpush2.bf16.msra.mxu0 %v7270
        %10311 = vmatprep.subr.bf16.mxu0 %v7263
        %10312 = vmatpush2.bf16.msra.mxu0 %v7262
        %10313 = vmatprep.subr.bf16.mxu0 %v7255
        %10314 = vmatpush2.bf16.msra.mxu0 %v7254
        %10315 = vmatprep.subr.bf16.mxu0 %v7247
        %10316 = vmatpush2.bf16.msra.mxu0 %v7246
        %10317 = vmatprep.subr.bf16.mxu0 %v7239
        %10318 = vmatpush2.bf16.msra.mxu0 %v7238
        %10319 = vmatprep.mubr.bf16.mxu0 %v582
        %10320 = vmatmul.mubr.bf16.gmra.mxu0 %v581
        %v10321 = vpop.f32.mrf.mxu0
        %v10322 = vadd.f32 %v10281, %v10321
        %v10323 = vpop.f32.mrf.mxu0
        %v10324 = vadd.f32 %v10283, %v10323
        %v10325 = vpop.f32.mrf.mxu0
        %v10326 = vpop.f32.mrf.mxu0
        %10327 = vdwg.mxu0
        %10328 = vmatprep.subr.bf16.mxu0 %v7359
        %10329 = vmatpush1.bf16.msra.mxu0 %v7358
        %10330 = vmatprep.subr.bf16.mxu0 %v7351
        %10331 = vmatpush1.bf16.msra.mxu0 %v7350
        %10332 = vmatprep.subr.bf16.mxu0 %v7343
        %10333 = vmatpush1.bf16.msra.mxu0 %v7342
        %10334 = vmatprep.subr.bf16.mxu0 %v7335
        %10335 = vmatpush1.bf16.msra.mxu0 %v7334
        %10336 = vmatprep.subr.bf16.mxu0 %v7327
        %10337 = vmatpush1.bf16.msra.mxu0 %v7326
        %10338 = vmatprep.subr.bf16.mxu0 %v7319
        %10339 = vmatpush1.bf16.msra.mxu0 %v7318
        %10340 = vmatprep.subr.bf16.mxu0 %v7311
        %10341 = vmatpush1.bf16.msra.mxu0 %v7310
        %10342 = vmatprep.subr.bf16.mxu0 %v7303
        %10343 = vmatpush1.bf16.msra.mxu0 %v7302
        %10344 = vmatprep.subr.bf16.mxu0 %v7423
        %10345 = vmatpush2.bf16.msra.mxu0 %v7422
        %10346 = vmatprep.subr.bf16.mxu0 %v7415
        %10347 = vmatpush2.bf16.msra.mxu0 %v7414
        %10348 = vmatprep.subr.bf16.mxu0 %v7407
        %10349 = vmatpush2.bf16.msra.mxu0 %v7406
        %10350 = vmatprep.subr.bf16.mxu0 %v7399
        %10351 = vmatpush2.bf16.msra.mxu0 %v7398
        %10352 = vmatprep.subr.bf16.mxu0 %v7391
        %10353 = vmatpush2.bf16.msra.mxu0 %v7390
        %10354 = vmatprep.subr.bf16.mxu0 %v7383
        %10355 = vmatpush2.bf16.msra.mxu0 %v7382
        %10356 = vmatprep.subr.bf16.mxu0 %v7375
        %10357 = vmatpush2.bf16.msra.mxu0 %v7374
        %10358 = vmatprep.subr.bf16.mxu0 %v7367
        %10359 = vmatpush2.bf16.msra.mxu0 %v7366
        %10360 = vmatprep.mubr.bf16.mxu0 %v584
        %10361 = vmatmul.mubr.bf16.gmra.mxu0 %v583
        %v10362 = vpop.f32.mrf.mxu0
        %v10363 = vadd.f32 %v10322, %v10362
        %v10364 = vpop.f32.mrf.mxu0
        %v10365 = vadd.f32 %v10324, %v10364
        %v10366 = vpop.f32.mrf.mxu0
        %v10367 = vpop.f32.mrf.mxu0
        %10368 = vdwg.mxu0
        %10369 = vmatprep.subr.bf16.mxu0 %v7487
        %10370 = vmatpush1.bf16.msra.mxu0 %v7486
        %10371 = vmatprep.subr.bf16.mxu0 %v7479
        %10372 = vmatpush1.bf16.msra.mxu0 %v7478
        %10373 = vmatprep.subr.bf16.mxu0 %v7471
        %10374 = vmatpush1.bf16.msra.mxu0 %v7470
        %10375 = vmatprep.subr.bf16.mxu0 %v7463
        %10376 = vmatpush1.bf16.msra.mxu0 %v7462
        %10377 = vmatprep.subr.bf16.mxu0 %v7455
        %10378 = vmatpush1.bf16.msra.mxu0 %v7454
        %10379 = vmatprep.subr.bf16.mxu0 %v7447
        %10380 = vmatpush1.bf16.msra.mxu0 %v7446
        %10381 = vmatprep.subr.bf16.mxu0 %v7439
        %10382 = vmatpush1.bf16.msra.mxu0 %v7438
        %10383 = vmatprep.subr.bf16.mxu0 %v7431
        %10384 = vmatpush1.bf16.msra.mxu0 %v7430
        %10385 = vmatprep.subr.bf16.mxu0 %v7551
        %10386 = vmatpush2.bf16.msra.mxu0 %v7550
        %10387 = vmatprep.subr.bf16.mxu0 %v7543
        %10388 = vmatpush2.bf16.msra.mxu0 %v7542
        %10389 = vmatprep.subr.bf16.mxu0 %v7535
        %10390 = vmatpush2.bf16.msra.mxu0 %v7534
        %10391 = vmatprep.subr.bf16.mxu0 %v7527
        %10392 = vmatpush2.bf16.msra.mxu0 %v7526
        %10393 = vmatprep.subr.bf16.mxu0 %v7519
        %10394 = vmatpush2.bf16.msra.mxu0 %v7518
        %10395 = vmatprep.subr.bf16.mxu0 %v7511
        %10396 = vmatpush2.bf16.msra.mxu0 %v7510
        %10397 = vmatprep.subr.bf16.mxu0 %v7503
        %10398 = vmatpush2.bf16.msra.mxu0 %v7502
        %10399 = vmatprep.subr.bf16.mxu0 %v7495
        %10400 = vmatpush2.bf16.msra.mxu0 %v7494
        %10401 = vmatprep.mubr.bf16.mxu0 %v586
        %10402 = vmatmul.mubr.bf16.gmra.mxu0 %v585
        %v10403 = vpop.f32.mrf.mxu0
        %v10404 = vadd.f32 %v10363, %v10403
        %v10405 = vpop.f32.mrf.mxu0
        %v10406 = vadd.f32 %v10365, %v10405
        %v10407 = vpop.f32.mrf.mxu0
        %v10408 = vpop.f32.mrf.mxu0
        %10409 = vdwg.mxu0
        %10410 = vmatprep.subr.bf16.mxu0 %v7615
        %10411 = vmatpush1.bf16.msra.mxu0 %v7614
        %10412 = vmatprep.subr.bf16.mxu0 %v7607
        %10413 = vmatpush1.bf16.msra.mxu0 %v7606
        %10414 = vmatprep.subr.bf16.mxu0 %v7599
        %10415 = vmatpush1.bf16.msra.mxu0 %v7598
        %10416 = vmatprep.subr.bf16.mxu0 %v7591
        %10417 = vmatpush1.bf16.msra.mxu0 %v7590
        %10418 = vmatprep.subr.bf16.mxu0 %v7583
        %10419 = vmatpush1.bf16.msra.mxu0 %v7582
        %10420 = vmatprep.subr.bf16.mxu0 %v7575
        %10421 = vmatpush1.bf16.msra.mxu0 %v7574
        %10422 = vmatprep.subr.bf16.mxu0 %v7567
        %10423 = vmatpush1.bf16.msra.mxu0 %v7566
        %10424 = vmatprep.subr.bf16.mxu0 %v7559
        %10425 = vmatpush1.bf16.msra.mxu0 %v7558
        %10426 = vmatprep.subr.bf16.mxu0 %v7679
        %10427 = vmatpush2.bf16.msra.mxu0 %v7678
        %10428 = vmatprep.subr.bf16.mxu0 %v7671
        %10429 = vmatpush2.bf16.msra.mxu0 %v7670
        %10430 = vmatprep.subr.bf16.mxu0 %v7663
        %10431 = vmatpush2.bf16.msra.mxu0 %v7662
        %10432 = vmatprep.subr.bf16.mxu0 %v7655
        %10433 = vmatpush2.bf16.msra.mxu0 %v7654
        %10434 = vmatprep.subr.bf16.mxu0 %v7647
        %10435 = vmatpush2.bf16.msra.mxu0 %v7646
        %10436 = vmatprep.subr.bf16.mxu0 %v7639
        %10437 = vmatpush2.bf16.msra.mxu0 %v7638
        %10438 = vmatprep.subr.bf16.mxu0 %v7631
        %10439 = vmatpush2.bf16.msra.mxu0 %v7630
        %10440 = vmatprep.subr.bf16.mxu0 %v7623
        %10441 = vmatpush2.bf16.msra.mxu0 %v7622
        %10442 = vmatprep.mubr.bf16.mxu0 %v588
        %10443 = vmatmul.mubr.bf16.gmra.mxu0 %v587
        %v10444 = vpop.f32.mrf.mxu0
        %v10445 = vadd.f32 %v10404, %v10444
        %v10446 = vpop.f32.mrf.mxu0
        %v10447 = vadd.f32 %v10406, %v10446
        %v10448 = vpop.f32.mrf.mxu0
        %v10449 = vpop.f32.mrf.mxu0
        %10450 = vdwg.mxu0
        %10451 = vmatprep.subr.bf16.mxu0 %v7743
        %10452 = vmatpush1.bf16.msra.mxu0 %v7742
        %10453 = vmatprep.subr.bf16.mxu0 %v7735
        %10454 = vmatpush1.bf16.msra.mxu0 %v7734
        %10455 = vmatprep.subr.bf16.mxu0 %v7727
        %10456 = vmatpush1.bf16.msra.mxu0 %v7726
        %10457 = vmatprep.subr.bf16.mxu0 %v7719
        %10458 = vmatpush1.bf16.msra.mxu0 %v7718
        %10459 = vmatprep.subr.bf16.mxu0 %v7711
        %10460 = vmatpush1.bf16.msra.mxu0 %v7710
        %10461 = vmatprep.subr.bf16.mxu0 %v7703
        %10462 = vmatpush1.bf16.msra.mxu0 %v7702
        %10463 = vmatprep.subr.bf16.mxu0 %v7695
        %10464 = vmatpush1.bf16.msra.mxu0 %v7694
        %10465 = vmatprep.subr.bf16.mxu0 %v7687
        %10466 = vmatpush1.bf16.msra.mxu0 %v7686
        %10467 = vmatprep.subr.bf16.mxu0 %v7807
        %10468 = vmatpush2.bf16.msra.mxu0 %v7806
        %10469 = vmatprep.subr.bf16.mxu0 %v7799
        %10470 = vmatpush2.bf16.msra.mxu0 %v7798
        %10471 = vmatprep.subr.bf16.mxu0 %v7791
        %10472 = vmatpush2.bf16.msra.mxu0 %v7790
        %10473 = vmatprep.subr.bf16.mxu0 %v7783
        %10474 = vmatpush2.bf16.msra.mxu0 %v7782
        %10475 = vmatprep.subr.bf16.mxu0 %v7775
        %10476 = vmatpush2.bf16.msra.mxu0 %v7774
        %10477 = vmatprep.subr.bf16.mxu0 %v7767
        %10478 = vmatpush2.bf16.msra.mxu0 %v7766
        %10479 = vmatprep.subr.bf16.mxu0 %v7759
        %10480 = vmatpush2.bf16.msra.mxu0 %v7758
        %10481 = vmatprep.subr.bf16.mxu0 %v7751
        %10482 = vmatpush2.bf16.msra.mxu0 %v7750
        %10483 = vmatprep.mubr.bf16.mxu0 %v590
        %10484 = vmatmul.mubr.bf16.gmra.mxu0 %v589
        %v10485 = vpop.f32.mrf.mxu0
        %v10486 = vadd.f32 %v10445, %v10485
        %v10487 = vpop.f32.mrf.mxu0
        %v10488 = vadd.f32 %v10447, %v10487
        %v10489 = vpop.f32.mrf.mxu0
        %v10490 = vpop.f32.mrf.mxu0
        %10491 = vdwg.mxu0
        %10492 = vmatprep.subr.bf16.mxu0 %v7871
        %10493 = vmatpush1.bf16.msra.mxu0 %v7870
        %10494 = vmatprep.subr.bf16.mxu0 %v7863
        %10495 = vmatpush1.bf16.msra.mxu0 %v7862
        %10496 = vmatprep.subr.bf16.mxu0 %v7855
        %10497 = vmatpush1.bf16.msra.mxu0 %v7854
        %10498 = vmatprep.subr.bf16.mxu0 %v7847
        %10499 = vmatpush1.bf16.msra.mxu0 %v7846
        %10500 = vmatprep.subr.bf16.mxu0 %v7839
        %10501 = vmatpush1.bf16.msra.mxu0 %v7838
        %10502 = vmatprep.subr.bf16.mxu0 %v7831
        %10503 = vmatpush1.bf16.msra.mxu0 %v7830
        %10504 = vmatprep.subr.bf16.mxu0 %v7823
        %10505 = vmatpush1.bf16.msra.mxu0 %v7822
        %10506 = vmatprep.subr.bf16.mxu0 %v7815
        %10507 = vmatpush1.bf16.msra.mxu0 %v7814
        %10508 = vmatprep.subr.bf16.mxu0 %v7935
        %10509 = vmatpush2.bf16.msra.mxu0 %v7934
        %10510 = vmatprep.subr.bf16.mxu0 %v7927
        %10511 = vmatpush2.bf16.msra.mxu0 %v7926
        %10512 = vmatprep.subr.bf16.mxu0 %v7919
        %10513 = vmatpush2.bf16.msra.mxu0 %v7918
        %10514 = vmatprep.subr.bf16.mxu0 %v7911
        %10515 = vmatpush2.bf16.msra.mxu0 %v7910
        %10516 = vmatprep.subr.bf16.mxu0 %v7903
        %10517 = vmatpush2.bf16.msra.mxu0 %v7902
        %10518 = vmatprep.subr.bf16.mxu0 %v7895
        %10519 = vmatpush2.bf16.msra.mxu0 %v7894
        %10520 = vmatprep.subr.bf16.mxu0 %v7887
        %10521 = vmatpush2.bf16.msra.mxu0 %v7886
        %10522 = vmatprep.subr.bf16.mxu0 %v7879
        %10523 = vmatpush2.bf16.msra.mxu0 %v7878
        %10524 = vmatprep.mubr.bf16.mxu0 %v592
        %10525 = vmatmul.mubr.bf16.gmra.mxu0 %v591
        %v10526 = vpop.f32.mrf.mxu0
        %v10527 = vadd.f32 %v10486, %v10526
        %v10528 = vpop.f32.mrf.mxu0
        %v10529 = vadd.f32 %v10488, %v10528
        %v10530 = vpop.f32.mrf.mxu0
        %v10531 = vpop.f32.mrf.mxu0
        %10532 = vdwg.mxu0
        %10533 = vmatprep.subr.bf16.mxu0 %v7999
        %10534 = vmatpush1.bf16.msra.mxu0 %v7998
        %10535 = vmatprep.subr.bf16.mxu0 %v7991
        %10536 = vmatpush1.bf16.msra.mxu0 %v7990
        %10537 = vmatprep.subr.bf16.mxu0 %v7983
        %10538 = vmatpush1.bf16.msra.mxu0 %v7982
        %10539 = vmatprep.subr.bf16.mxu0 %v7975
        %10540 = vmatpush1.bf16.msra.mxu0 %v7974
        %10541 = vmatprep.subr.bf16.mxu0 %v7967
        %10542 = vmatpush1.bf16.msra.mxu0 %v7966
        %10543 = vmatprep.subr.bf16.mxu0 %v7959
        %10544 = vmatpush1.bf16.msra.mxu0 %v7958
        %10545 = vmatprep.subr.bf16.mxu0 %v7951
        %10546 = vmatpush1.bf16.msra.mxu0 %v7950
        %10547 = vmatprep.subr.bf16.mxu0 %v7943
        %10548 = vmatpush1.bf16.msra.mxu0 %v7942
        %10549 = vmatprep.subr.bf16.mxu0 %v8063
        %10550 = vmatpush2.bf16.msra.mxu0 %v8062
        %10551 = vmatprep.subr.bf16.mxu0 %v8055
        %10552 = vmatpush2.bf16.msra.mxu0 %v8054
        %10553 = vmatprep.subr.bf16.mxu0 %v8047
        %10554 = vmatpush2.bf16.msra.mxu0 %v8046
        %10555 = vmatprep.subr.bf16.mxu0 %v8039
        %10556 = vmatpush2.bf16.msra.mxu0 %v8038
        %10557 = vmatprep.subr.bf16.mxu0 %v8031
        %10558 = vmatpush2.bf16.msra.mxu0 %v8030
        %10559 = vmatprep.subr.bf16.mxu0 %v8023
        %10560 = vmatpush2.bf16.msra.mxu0 %v8022
        %10561 = vmatprep.subr.bf16.mxu0 %v8015
        %10562 = vmatpush2.bf16.msra.mxu0 %v8014
        %10563 = vmatprep.subr.bf16.mxu0 %v8007
        %10564 = vmatpush2.bf16.msra.mxu0 %v8006
        %10565 = vmatprep.mubr.bf16.mxu0 %v594
        %10566 = vmatmul.mubr.bf16.gmra.mxu0 %v593
        %v10567 = vpop.f32.mrf.mxu0
        %v10568 = vadd.f32 %v10527, %v10567
        %v10569 = vpop.f32.mrf.mxu0
        %v10570 = vadd.f32 %v10529, %v10569
        %v10571 = vpop.f32.mrf.mxu0
        %v10572 = vpop.f32.mrf.mxu0
        %10573 = vdwg.mxu0
        %10574 = vmatprep.subr.bf16.mxu0 %v8127
        %10575 = vmatpush1.bf16.msra.mxu0 %v8126
        %10576 = vmatprep.subr.bf16.mxu0 %v8119
        %10577 = vmatpush1.bf16.msra.mxu0 %v8118
        %10578 = vmatprep.subr.bf16.mxu0 %v8111
        %10579 = vmatpush1.bf16.msra.mxu0 %v8110
        %10580 = vmatprep.subr.bf16.mxu0 %v8103
        %10581 = vmatpush1.bf16.msra.mxu0 %v8102
        %10582 = vmatprep.subr.bf16.mxu0 %v8095
        %10583 = vmatpush1.bf16.msra.mxu0 %v8094
        %10584 = vmatprep.subr.bf16.mxu0 %v8087
        %10585 = vmatpush1.bf16.msra.mxu0 %v8086
        %10586 = vmatprep.subr.bf16.mxu0 %v8079
        %10587 = vmatpush1.bf16.msra.mxu0 %v8078
        %10588 = vmatprep.subr.bf16.mxu0 %v8071
        %10589 = vmatpush1.bf16.msra.mxu0 %v8070
        %10590 = vmatprep.subr.bf16.mxu0 %v8191
        %10591 = vmatpush2.bf16.msra.mxu0 %v8190
        %10592 = vmatprep.subr.bf16.mxu0 %v8183
        %10593 = vmatpush2.bf16.msra.mxu0 %v8182
        %10594 = vmatprep.subr.bf16.mxu0 %v8175
        %10595 = vmatpush2.bf16.msra.mxu0 %v8174
        %10596 = vmatprep.subr.bf16.mxu0 %v8167
        %10597 = vmatpush2.bf16.msra.mxu0 %v8166
        %10598 = vmatprep.subr.bf16.mxu0 %v8159
        %10599 = vmatpush2.bf16.msra.mxu0 %v8158
        %10600 = vmatprep.subr.bf16.mxu0 %v8151
        %10601 = vmatpush2.bf16.msra.mxu0 %v8150
        %10602 = vmatprep.subr.bf16.mxu0 %v8143
        %10603 = vmatpush2.bf16.msra.mxu0 %v8142
        %10604 = vmatprep.subr.bf16.mxu0 %v8135
        %10605 = vmatpush2.bf16.msra.mxu0 %v8134
        %10606 = vmatprep.mubr.bf16.mxu0 %v596
        %10607 = vmatmul.mubr.bf16.gmra.mxu0 %v595
        %v10608 = vpop.f32.mrf.mxu0
        %v10609 = vadd.f32 %v10568, %v10608
        %v10610 = vpop.f32.mrf.mxu0
        %v10611 = vadd.f32 %v10570, %v10610
        %v10612 = vpop.f32.mrf.mxu0
        %v10613 = vpop.f32.mrf.mxu0
        %10614 = vdwg.mxu0
        %10615 = vmatprep.subr.bf16.mxu0 %v8255
        %10616 = vmatpush1.bf16.msra.mxu0 %v8254
        %10617 = vmatprep.subr.bf16.mxu0 %v8247
        %10618 = vmatpush1.bf16.msra.mxu0 %v8246
        %10619 = vmatprep.subr.bf16.mxu0 %v8239
        %10620 = vmatpush1.bf16.msra.mxu0 %v8238
        %10621 = vmatprep.subr.bf16.mxu0 %v8231
        %10622 = vmatpush1.bf16.msra.mxu0 %v8230
        %10623 = vmatprep.subr.bf16.mxu0 %v8223
        %10624 = vmatpush1.bf16.msra.mxu0 %v8222
        %10625 = vmatprep.subr.bf16.mxu0 %v8215
        %10626 = vmatpush1.bf16.msra.mxu0 %v8214
        %10627 = vmatprep.subr.bf16.mxu0 %v8207
        %10628 = vmatpush1.bf16.msra.mxu0 %v8206
        %10629 = vmatprep.subr.bf16.mxu0 %v8199
        %10630 = vmatpush1.bf16.msra.mxu0 %v8198
        %10631 = vmatprep.subr.bf16.mxu0 %v8319
        %10632 = vmatpush2.bf16.msra.mxu0 %v8318
        %10633 = vmatprep.subr.bf16.mxu0 %v8311
        %10634 = vmatpush2.bf16.msra.mxu0 %v8310
        %10635 = vmatprep.subr.bf16.mxu0 %v8303
        %10636 = vmatpush2.bf16.msra.mxu0 %v8302
        %10637 = vmatprep.subr.bf16.mxu0 %v8295
        %10638 = vmatpush2.bf16.msra.mxu0 %v8294
        %10639 = vmatprep.subr.bf16.mxu0 %v8287
        %10640 = vmatpush2.bf16.msra.mxu0 %v8286
        %10641 = vmatprep.subr.bf16.mxu0 %v8279
        %10642 = vmatpush2.bf16.msra.mxu0 %v8278
        %10643 = vmatprep.subr.bf16.mxu0 %v8271
        %10644 = vmatpush2.bf16.msra.mxu0 %v8270
        %10645 = vmatprep.subr.bf16.mxu0 %v8263
        %10646 = vmatpush2.bf16.msra.mxu0 %v8262
        %10647 = vmatprep.mubr.bf16.mxu0 %v598
        %10648 = vmatmul.mubr.bf16.gmra.mxu0 %v597
        %v10649 = vpop.f32.mrf.mxu0
        %v10650 = vadd.f32 %v10609, %v10649
        %v10651 = vpop.f32.mrf.mxu0
        %v10652 = vadd.f32 %v10611, %v10651
        %v10653 = vpop.f32.mrf.mxu0
        %v10654 = vpop.f32.mrf.mxu0
        %10655 = vdwg.mxu0
        %10656 = vmatprep.subr.bf16.mxu0 %v8383
        %10657 = vmatpush1.bf16.msra.mxu0 %v8382
        %10658 = vmatprep.subr.bf16.mxu0 %v8375
        %10659 = vmatpush1.bf16.msra.mxu0 %v8374
        %10660 = vmatprep.subr.bf16.mxu0 %v8367
        %10661 = vmatpush1.bf16.msra.mxu0 %v8366
        %10662 = vmatprep.subr.bf16.mxu0 %v8359
        %10663 = vmatpush1.bf16.msra.mxu0 %v8358
        %10664 = vmatprep.subr.bf16.mxu0 %v8351
        %10665 = vmatpush1.bf16.msra.mxu0 %v8350
        %10666 = vmatprep.subr.bf16.mxu0 %v8343
        %10667 = vmatpush1.bf16.msra.mxu0 %v8342
        %10668 = vmatprep.subr.bf16.mxu0 %v8335
        %10669 = vmatpush1.bf16.msra.mxu0 %v8334
        %10670 = vmatprep.subr.bf16.mxu0 %v8327
        %10671 = vmatpush1.bf16.msra.mxu0 %v8326
        %10672 = vmatprep.subr.bf16.mxu0 %v8447
        %10673 = vmatpush2.bf16.msra.mxu0 %v8446
        %10674 = vmatprep.subr.bf16.mxu0 %v8439
        %10675 = vmatpush2.bf16.msra.mxu0 %v8438
        %10676 = vmatprep.subr.bf16.mxu0 %v8431
        %10677 = vmatpush2.bf16.msra.mxu0 %v8430
        %10678 = vmatprep.subr.bf16.mxu0 %v8423
        %10679 = vmatpush2.bf16.msra.mxu0 %v8422
        %10680 = vmatprep.subr.bf16.mxu0 %v8415
        %10681 = vmatpush2.bf16.msra.mxu0 %v8414
        %10682 = vmatprep.subr.bf16.mxu0 %v8407
        %10683 = vmatpush2.bf16.msra.mxu0 %v8406
        %10684 = vmatprep.subr.bf16.mxu0 %v8399
        %10685 = vmatpush2.bf16.msra.mxu0 %v8398
        %10686 = vmatprep.subr.bf16.mxu0 %v8391
        %10687 = vmatpush2.bf16.msra.mxu0 %v8390
        %10688 = vmatprep.mubr.bf16.mxu0 %v600
        %10689 = vmatmul.mubr.bf16.gmra.mxu0 %v599
        %v10690 = vpop.f32.mrf.mxu0
        %v10691 = vadd.f32 %v10650, %v10690
        %v10692 = vpop.f32.mrf.mxu0
        %v10693 = vadd.f32 %v10652, %v10692
        %v10694 = vpop.f32.mrf.mxu0
        %v10695 = vpop.f32.mrf.mxu0
        %10696 = vdwg.mxu0
        %10697 = vmatprep.subr.bf16.mxu0 %v8511
        %10698 = vmatpush1.bf16.msra.mxu0 %v8510
        %10699 = vmatprep.subr.bf16.mxu0 %v8503
        %10700 = vmatpush1.bf16.msra.mxu0 %v8502
        %10701 = vmatprep.subr.bf16.mxu0 %v8495
        %10702 = vmatpush1.bf16.msra.mxu0 %v8494
        %10703 = vmatprep.subr.bf16.mxu0 %v8487
        %10704 = vmatpush1.bf16.msra.mxu0 %v8486
        %10705 = vmatprep.subr.bf16.mxu0 %v8479
        %10706 = vmatpush1.bf16.msra.mxu0 %v8478
        %10707 = vmatprep.subr.bf16.mxu0 %v8471
        %10708 = vmatpush1.bf16.msra.mxu0 %v8470
        %10709 = vmatprep.subr.bf16.mxu0 %v8463
        %10710 = vmatpush1.bf16.msra.mxu0 %v8462
        %10711 = vmatprep.subr.bf16.mxu0 %v8455
        %10712 = vmatpush1.bf16.msra.mxu0 %v8454
        %10713 = vmatprep.subr.bf16.mxu0 %v8575
        %10714 = vmatpush2.bf16.msra.mxu0 %v8574
        %10715 = vmatprep.subr.bf16.mxu0 %v8567
        %10716 = vmatpush2.bf16.msra.mxu0 %v8566
        %10717 = vmatprep.subr.bf16.mxu0 %v8559
        %10718 = vmatpush2.bf16.msra.mxu0 %v8558
        %10719 = vmatprep.subr.bf16.mxu0 %v8551
        %10720 = vmatpush2.bf16.msra.mxu0 %v8550
        %10721 = vmatprep.subr.bf16.mxu0 %v8543
        %10722 = vmatpush2.bf16.msra.mxu0 %v8542
        %10723 = vmatprep.subr.bf16.mxu0 %v8535
        %10724 = vmatpush2.bf16.msra.mxu0 %v8534
        %10725 = vmatprep.subr.bf16.mxu0 %v8527
        %10726 = vmatpush2.bf16.msra.mxu0 %v8526
        %10727 = vmatprep.subr.bf16.mxu0 %v8519
        %10728 = vmatpush2.bf16.msra.mxu0 %v8518
        %10729 = vmatprep.mubr.bf16.mxu0 %v602
        %10730 = vmatmul.mubr.bf16.gmra.mxu0 %v601
        %v10731 = vpop.f32.mrf.mxu0
        %v10732 = vadd.f32 %v10691, %v10731
        %v10733 = vpop.f32.mrf.mxu0
        %v10734 = vadd.f32 %v10693, %v10733
        %v10735 = vpop.f32.mrf.mxu0
        %v10736 = vpop.f32.mrf.mxu0
        %10737 = vdwg.mxu0
        %10738 = vmatprep.subr.bf16.mxu0 %v8639
        %10739 = vmatpush1.bf16.msra.mxu0 %v8638
        %10740 = vmatprep.subr.bf16.mxu0 %v8631
        %10741 = vmatpush1.bf16.msra.mxu0 %v8630
        %10742 = vmatprep.subr.bf16.mxu0 %v8623
        %10743 = vmatpush1.bf16.msra.mxu0 %v8622
        %10744 = vmatprep.subr.bf16.mxu0 %v8615
        %10745 = vmatpush1.bf16.msra.mxu0 %v8614
        %10746 = vmatprep.subr.bf16.mxu0 %v8607
        %10747 = vmatpush1.bf16.msra.mxu0 %v8606
        %10748 = vmatprep.subr.bf16.mxu0 %v8599
        %10749 = vmatpush1.bf16.msra.mxu0 %v8598
        %10750 = vmatprep.subr.bf16.mxu0 %v8591
        %10751 = vmatpush1.bf16.msra.mxu0 %v8590
        %10752 = vmatprep.subr.bf16.mxu0 %v8583
        %10753 = vmatpush1.bf16.msra.mxu0 %v8582
        %10754 = vmatprep.subr.bf16.mxu0 0
        %10755 = vmatpush2.bf16.msra.mxu0 0
        %10756 = vmatprep.subr.bf16.mxu0 0
        %10757 = vmatpush2.bf16.msra.mxu0 0
        %10758 = vmatprep.subr.bf16.mxu0 0
        %10759 = vmatpush2.bf16.msra.mxu0 0
        %10760 = vmatprep.subr.bf16.mxu0 0
        %10761 = vmatpush2.bf16.msra.mxu0 0
        %10762 = vmatprep.subr.bf16.mxu0 0
        %10763 = vmatpush2.bf16.msra.mxu0 0
        %10764 = vmatprep.subr.bf16.mxu0 0
        %10765 = vmatpush2.bf16.msra.mxu0 0
        %10766 = vmatprep.subr.bf16.mxu0 0
        %10767 = vmatpush2.bf16.msra.mxu0 0
        %10768 = vmatprep.subr.bf16.mxu0 0
        %10769 = vmatpush2.bf16.msra.mxu0 0
        %10770 = vmatprep.mubr.bf16.mxu0 0
        %10771 = vmatmul.mubr.bf16.gmra.mxu0 %v603
        %v10772 = vpop.f32.mrf.mxu0
        %v10773 = vadd.f32 %v10732, %v10772
        %v10774 = vpop.f32.mrf.mxu0
        %v10775 = vadd.f32 %v10734, %v10774
        %v10776 = vpop.f32.mrf.mxu0
        %v10777 = vpop.f32.mrf.mxu0
        %10778 = vdwg.mxu0
        %10779 = vmatprep.subr.bf16.mxu0 %v7105
        %10780 = vmatpush1.bf16.msra.mxu0 %v7104
        %10781 = vmatprep.subr.bf16.mxu0 %v7097
        %10782 = vmatpush1.bf16.msra.mxu0 %v7096
        %10783 = vmatprep.subr.bf16.mxu0 %v7089
        %10784 = vmatpush1.bf16.msra.mxu0 %v7088
        %10785 = vmatprep.subr.bf16.mxu0 %v7081
        %10786 = vmatpush1.bf16.msra.mxu0 %v7080
        %10787 = vmatprep.subr.bf16.mxu0 %v7073
        %10788 = vmatpush1.bf16.msra.mxu0 %v7072
        %10789 = vmatprep.subr.bf16.mxu0 %v7065
        %10790 = vmatpush1.bf16.msra.mxu0 %v7064
        %10791 = vmatprep.subr.bf16.mxu0 %v7057
        %10792 = vmatpush1.bf16.msra.mxu0 %v7056
        %10793 = vmatprep.subr.bf16.mxu0 %v7049
        %10794 = vmatpush1.bf16.msra.mxu0 %v7048
        %10795 = vmatprep.subr.bf16.mxu0 %v7169
        %10796 = vmatpush2.bf16.msra.mxu0 %v7168
        %10797 = vmatprep.subr.bf16.mxu0 %v7161
        %10798 = vmatpush2.bf16.msra.mxu0 %v7160
        %10799 = vmatprep.subr.bf16.mxu0 %v7153
        %10800 = vmatpush2.bf16.msra.mxu0 %v7152
        %10801 = vmatprep.subr.bf16.mxu0 %v7145
        %10802 = vmatpush2.bf16.msra.mxu0 %v7144
        %10803 = vmatprep.subr.bf16.mxu0 %v7137
        %10804 = vmatpush2.bf16.msra.mxu0 %v7136
        %10805 = vmatprep.subr.bf16.mxu0 %v7129
        %10806 = vmatpush2.bf16.msra.mxu0 %v7128
        %10807 = vmatprep.subr.bf16.mxu0 %v7121
        %10808 = vmatpush2.bf16.msra.mxu0 %v7120
        %10809 = vmatprep.subr.bf16.mxu0 %v7113
        %10810 = vmatpush2.bf16.msra.mxu0 %v7112
        %10811 = vmatprep.mubr.bf16.mxu0 %v580
        %10812 = vmatmul.mubr.bf16.gmra.mxu0 %v579
        %v10813 = vpop.f32.mrf.mxu0
        %v10814 = vadd.f32 %v2217, %v10813
        %v10815 = vpop.f32.mrf.mxu0
        %v10816 = vadd.f32 %v2221, %v10815
        %v10817 = vpop.f32.mrf.mxu0
        %v10818 = vpop.f32.mrf.mxu0
        %10819 = vdwg.mxu0
        %10820 = vmatprep.subr.bf16.mxu0 %v7233
        %10821 = vmatpush1.bf16.msra.mxu0 %v7232
        %10822 = vmatprep.subr.bf16.mxu0 %v7225
        %10823 = vmatpush1.bf16.msra.mxu0 %v7224
        %10824 = vmatprep.subr.bf16.mxu0 %v7217
        %10825 = vmatpush1.bf16.msra.mxu0 %v7216
        %10826 = vmatprep.subr.bf16.mxu0 %v7209
        %10827 = vmatpush1.bf16.msra.mxu0 %v7208
        %10828 = vmatprep.subr.bf16.mxu0 %v7201
        %10829 = vmatpush1.bf16.msra.mxu0 %v7200
        %10830 = vmatprep.subr.bf16.mxu0 %v7193
        %10831 = vmatpush1.bf16.msra.mxu0 %v7192
        %10832 = vmatprep.subr.bf16.mxu0 %v7185
        %10833 = vmatpush1.bf16.msra.mxu0 %v7184
        %10834 = vmatprep.subr.bf16.mxu0 %v7177
        %10835 = vmatpush1.bf16.msra.mxu0 %v7176
        %10836 = vmatprep.subr.bf16.mxu0 %v7297
        %10837 = vmatpush2.bf16.msra.mxu0 %v7296
        %10838 = vmatprep.subr.bf16.mxu0 %v7289
        %10839 = vmatpush2.bf16.msra.mxu0 %v7288
        %10840 = vmatprep.subr.bf16.mxu0 %v7281
        %10841 = vmatpush2.bf16.msra.mxu0 %v7280
        %10842 = vmatprep.subr.bf16.mxu0 %v7273
        %10843 = vmatpush2.bf16.msra.mxu0 %v7272
        %10844 = vmatprep.subr.bf16.mxu0 %v7265
        %10845 = vmatpush2.bf16.msra.mxu0 %v7264
        %10846 = vmatprep.subr.bf16.mxu0 %v7257
        %10847 = vmatpush2.bf16.msra.mxu0 %v7256
        %10848 = vmatprep.subr.bf16.mxu0 %v7249
        %10849 = vmatpush2.bf16.msra.mxu0 %v7248
        %10850 = vmatprep.subr.bf16.mxu0 %v7241
        %10851 = vmatpush2.bf16.msra.mxu0 %v7240
        %10852 = vmatprep.mubr.bf16.mxu0 %v582
        %10853 = vmatmul.mubr.bf16.gmra.mxu0 %v581
        %v10854 = vpop.f32.mrf.mxu0
        %v10855 = vadd.f32 %v10814, %v10854
        %v10856 = vpop.f32.mrf.mxu0
        %v10857 = vadd.f32 %v10816, %v10856
        %v10858 = vpop.f32.mrf.mxu0
        %v10859 = vpop.f32.mrf.mxu0
        %10860 = vdwg.mxu0
        %10861 = vmatprep.subr.bf16.mxu0 %v7361
        %10862 = vmatpush1.bf16.msra.mxu0 %v7360
        %10863 = vmatprep.subr.bf16.mxu0 %v7353
        %10864 = vmatpush1.bf16.msra.mxu0 %v7352
        %10865 = vmatprep.subr.bf16.mxu0 %v7345
        %10866 = vmatpush1.bf16.msra.mxu0 %v7344
        %10867 = vmatprep.subr.bf16.mxu0 %v7337
        %10868 = vmatpush1.bf16.msra.mxu0 %v7336
        %10869 = vmatprep.subr.bf16.mxu0 %v7329
        %10870 = vmatpush1.bf16.msra.mxu0 %v7328
        %10871 = vmatprep.subr.bf16.mxu0 %v7321
        %10872 = vmatpush1.bf16.msra.mxu0 %v7320
        %10873 = vmatprep.subr.bf16.mxu0 %v7313
        %10874 = vmatpush1.bf16.msra.mxu0 %v7312
        %10875 = vmatprep.subr.bf16.mxu0 %v7305
        %10876 = vmatpush1.bf16.msra.mxu0 %v7304
        %10877 = vmatprep.subr.bf16.mxu0 %v7425
        %10878 = vmatpush2.bf16.msra.mxu0 %v7424
        %10879 = vmatprep.subr.bf16.mxu0 %v7417
        %10880 = vmatpush2.bf16.msra.mxu0 %v7416
        %10881 = vmatprep.subr.bf16.mxu0 %v7409
        %10882 = vmatpush2.bf16.msra.mxu0 %v7408
        %10883 = vmatprep.subr.bf16.mxu0 %v7401
        %10884 = vmatpush2.bf16.msra.mxu0 %v7400
        %10885 = vmatprep.subr.bf16.mxu0 %v7393
        %10886 = vmatpush2.bf16.msra.mxu0 %v7392
        %10887 = vmatprep.subr.bf16.mxu0 %v7385
        %10888 = vmatpush2.bf16.msra.mxu0 %v7384
        %10889 = vmatprep.subr.bf16.mxu0 %v7377
        %10890 = vmatpush2.bf16.msra.mxu0 %v7376
        %10891 = vmatprep.subr.bf16.mxu0 %v7369
        %10892 = vmatpush2.bf16.msra.mxu0 %v7368
        %10893 = vmatprep.mubr.bf16.mxu0 %v584
        %10894 = vmatmul.mubr.bf16.gmra.mxu0 %v583
        %v10895 = vpop.f32.mrf.mxu0
        %v10896 = vadd.f32 %v10855, %v10895
        %v10897 = vpop.f32.mrf.mxu0
        %v10898 = vadd.f32 %v10857, %v10897
        %v10899 = vpop.f32.mrf.mxu0
        %v10900 = vpop.f32.mrf.mxu0
        %10901 = vdwg.mxu0
        %10902 = vmatprep.subr.bf16.mxu0 %v7489
        %10903 = vmatpush1.bf16.msra.mxu0 %v7488
        %10904 = vmatprep.subr.bf16.mxu0 %v7481
        %10905 = vmatpush1.bf16.msra.mxu0 %v7480
        %10906 = vmatprep.subr.bf16.mxu0 %v7473
        %10907 = vmatpush1.bf16.msra.mxu0 %v7472
        %10908 = vmatprep.subr.bf16.mxu0 %v7465
        %10909 = vmatpush1.bf16.msra.mxu0 %v7464
        %10910 = vmatprep.subr.bf16.mxu0 %v7457
        %10911 = vmatpush1.bf16.msra.mxu0 %v7456
        %10912 = vmatprep.subr.bf16.mxu0 %v7449
        %10913 = vmatpush1.bf16.msra.mxu0 %v7448
        %10914 = vmatprep.subr.bf16.mxu0 %v7441
        %10915 = vmatpush1.bf16.msra.mxu0 %v7440
        %10916 = vmatprep.subr.bf16.mxu0 %v7433
        %10917 = vmatpush1.bf16.msra.mxu0 %v7432
        %10918 = vmatprep.subr.bf16.mxu0 %v7553
        %10919 = vmatpush2.bf16.msra.mxu0 %v7552
        %10920 = vmatprep.subr.bf16.mxu0 %v7545
        %10921 = vmatpush2.bf16.msra.mxu0 %v7544
        %10922 = vmatprep.subr.bf16.mxu0 %v7537
        %10923 = vmatpush2.bf16.msra.mxu0 %v7536
        %10924 = vmatprep.subr.bf16.mxu0 %v7529
        %10925 = vmatpush2.bf16.msra.mxu0 %v7528
        %10926 = vmatprep.subr.bf16.mxu0 %v7521
        %10927 = vmatpush2.bf16.msra.mxu0 %v7520
        %10928 = vmatprep.subr.bf16.mxu0 %v7513
        %10929 = vmatpush2.bf16.msra.mxu0 %v7512
        %10930 = vmatprep.subr.bf16.mxu0 %v7505
        %10931 = vmatpush2.bf16.msra.mxu0 %v7504
        %10932 = vmatprep.subr.bf16.mxu0 %v7497
        %10933 = vmatpush2.bf16.msra.mxu0 %v7496
        %10934 = vmatprep.mubr.bf16.mxu0 %v586
        %10935 = vmatmul.mubr.bf16.gmra.mxu0 %v585
        %v10936 = vpop.f32.mrf.mxu0
        %v10937 = vadd.f32 %v10896, %v10936
        %v10938 = vpop.f32.mrf.mxu0
        %v10939 = vadd.f32 %v10898, %v10938
        %v10940 = vpop.f32.mrf.mxu0
        %v10941 = vpop.f32.mrf.mxu0
        %10942 = vdwg.mxu0
        %10943 = vmatprep.subr.bf16.mxu0 %v7617
        %10944 = vmatpush1.bf16.msra.mxu0 %v7616
        %10945 = vmatprep.subr.bf16.mxu0 %v7609
        %10946 = vmatpush1.bf16.msra.mxu0 %v7608
        %10947 = vmatprep.subr.bf16.mxu0 %v7601
        %10948 = vmatpush1.bf16.msra.mxu0 %v7600
        %10949 = vmatprep.subr.bf16.mxu0 %v7593
        %10950 = vmatpush1.bf16.msra.mxu0 %v7592
        %10951 = vmatprep.subr.bf16.mxu0 %v7585
        %10952 = vmatpush1.bf16.msra.mxu0 %v7584
        %10953 = vmatprep.subr.bf16.mxu0 %v7577
        %10954 = vmatpush1.bf16.msra.mxu0 %v7576
        %10955 = vmatprep.subr.bf16.mxu0 %v7569
        %10956 = vmatpush1.bf16.msra.mxu0 %v7568
        %10957 = vmatprep.subr.bf16.mxu0 %v7561
        %10958 = vmatpush1.bf16.msra.mxu0 %v7560
        %10959 = vmatprep.subr.bf16.mxu0 %v7681
        %10960 = vmatpush2.bf16.msra.mxu0 %v7680
        %10961 = vmatprep.subr.bf16.mxu0 %v7673
        %10962 = vmatpush2.bf16.msra.mxu0 %v7672
        %10963 = vmatprep.subr.bf16.mxu0 %v7665
        %10964 = vmatpush2.bf16.msra.mxu0 %v7664
        %10965 = vmatprep.subr.bf16.mxu0 %v7657
        %10966 = vmatpush2.bf16.msra.mxu0 %v7656
        %10967 = vmatprep.subr.bf16.mxu0 %v7649
        %10968 = vmatpush2.bf16.msra.mxu0 %v7648
        %10969 = vmatprep.subr.bf16.mxu0 %v7641
        %10970 = vmatpush2.bf16.msra.mxu0 %v7640
        %10971 = vmatprep.subr.bf16.mxu0 %v7633
        %10972 = vmatpush2.bf16.msra.mxu0 %v7632
        %10973 = vmatprep.subr.bf16.mxu0 %v7625
        %10974 = vmatpush2.bf16.msra.mxu0 %v7624
        %10975 = vmatprep.mubr.bf16.mxu0 %v588
        %10976 = vmatmul.mubr.bf16.gmra.mxu0 %v587
        %v10977 = vpop.f32.mrf.mxu0
        %v10978 = vadd.f32 %v10937, %v10977
        %v10979 = vpop.f32.mrf.mxu0
        %v10980 = vadd.f32 %v10939, %v10979
        %v10981 = vpop.f32.mrf.mxu0
        %v10982 = vpop.f32.mrf.mxu0
        %10983 = vdwg.mxu0
        %10984 = vmatprep.subr.bf16.mxu0 %v7745
        %10985 = vmatpush1.bf16.msra.mxu0 %v7744
        %10986 = vmatprep.subr.bf16.mxu0 %v7737
        %10987 = vmatpush1.bf16.msra.mxu0 %v7736
        %10988 = vmatprep.subr.bf16.mxu0 %v7729
        %10989 = vmatpush1.bf16.msra.mxu0 %v7728
        %10990 = vmatprep.subr.bf16.mxu0 %v7721
        %10991 = vmatpush1.bf16.msra.mxu0 %v7720
        %10992 = vmatprep.subr.bf16.mxu0 %v7713
        %10993 = vmatpush1.bf16.msra.mxu0 %v7712
        %10994 = vmatprep.subr.bf16.mxu0 %v7705
        %10995 = vmatpush1.bf16.msra.mxu0 %v7704
        %10996 = vmatprep.subr.bf16.mxu0 %v7697
        %10997 = vmatpush1.bf16.msra.mxu0 %v7696
        %10998 = vmatprep.subr.bf16.mxu0 %v7689
        %10999 = vmatpush1.bf16.msra.mxu0 %v7688
        %11000 = vmatprep.subr.bf16.mxu0 %v7809
        %11001 = vmatpush2.bf16.msra.mxu0 %v7808
        %11002 = vmatprep.subr.bf16.mxu0 %v7801
        %11003 = vmatpush2.bf16.msra.mxu0 %v7800
        %11004 = vmatprep.subr.bf16.mxu0 %v7793
        %11005 = vmatpush2.bf16.msra.mxu0 %v7792
        %11006 = vmatprep.subr.bf16.mxu0 %v7785
        %11007 = vmatpush2.bf16.msra.mxu0 %v7784
        %11008 = vmatprep.subr.bf16.mxu0 %v7777
        %11009 = vmatpush2.bf16.msra.mxu0 %v7776
        %11010 = vmatprep.subr.bf16.mxu0 %v7769
        %11011 = vmatpush2.bf16.msra.mxu0 %v7768
        %11012 = vmatprep.subr.bf16.mxu0 %v7761
        %11013 = vmatpush2.bf16.msra.mxu0 %v7760
        %11014 = vmatprep.subr.bf16.mxu0 %v7753
        %11015 = vmatpush2.bf16.msra.mxu0 %v7752
        %11016 = vmatprep.mubr.bf16.mxu0 %v590
        %11017 = vmatmul.mubr.bf16.gmra.mxu0 %v589
        %v11018 = vpop.f32.mrf.mxu0
        %v11019 = vadd.f32 %v10978, %v11018
        %v11020 = vpop.f32.mrf.mxu0
        %v11021 = vadd.f32 %v10980, %v11020
        %v11022 = vpop.f32.mrf.mxu0
        %v11023 = vpop.f32.mrf.mxu0
        %11024 = vdwg.mxu0
        %11025 = vmatprep.subr.bf16.mxu0 %v7873
        %11026 = vmatpush1.bf16.msra.mxu0 %v7872
        %11027 = vmatprep.subr.bf16.mxu0 %v7865
        %11028 = vmatpush1.bf16.msra.mxu0 %v7864
        %11029 = vmatprep.subr.bf16.mxu0 %v7857
        %11030 = vmatpush1.bf16.msra.mxu0 %v7856
        %11031 = vmatprep.subr.bf16.mxu0 %v7849
        %11032 = vmatpush1.bf16.msra.mxu0 %v7848
        %11033 = vmatprep.subr.bf16.mxu0 %v7841
        %11034 = vmatpush1.bf16.msra.mxu0 %v7840
        %11035 = vmatprep.subr.bf16.mxu0 %v7833
        %11036 = vmatpush1.bf16.msra.mxu0 %v7832
        %11037 = vmatprep.subr.bf16.mxu0 %v7825
        %11038 = vmatpush1.bf16.msra.mxu0 %v7824
        %11039 = vmatprep.subr.bf16.mxu0 %v7817
        %11040 = vmatpush1.bf16.msra.mxu0 %v7816
        %11041 = vmatprep.subr.bf16.mxu0 %v7937
        %11042 = vmatpush2.bf16.msra.mxu0 %v7936
        %11043 = vmatprep.subr.bf16.mxu0 %v7929
        %11044 = vmatpush2.bf16.msra.mxu0 %v7928
        %11045 = vmatprep.subr.bf16.mxu0 %v7921
        %11046 = vmatpush2.bf16.msra.mxu0 %v7920
        %11047 = vmatprep.subr.bf16.mxu0 %v7913
        %11048 = vmatpush2.bf16.msra.mxu0 %v7912
        %11049 = vmatprep.subr.bf16.mxu0 %v7905
        %11050 = vmatpush2.bf16.msra.mxu0 %v7904
        %11051 = vmatprep.subr.bf16.mxu0 %v7897
        %11052 = vmatpush2.bf16.msra.mxu0 %v7896
        %11053 = vmatprep.subr.bf16.mxu0 %v7889
        %11054 = vmatpush2.bf16.msra.mxu0 %v7888
        %11055 = vmatprep.subr.bf16.mxu0 %v7881
        %11056 = vmatpush2.bf16.msra.mxu0 %v7880
        %11057 = vmatprep.mubr.bf16.mxu0 %v592
        %11058 = vmatmul.mubr.bf16.gmra.mxu0 %v591
        %v11059 = vpop.f32.mrf.mxu0
        %v11060 = vadd.f32 %v11019, %v11059
        %v11061 = vpop.f32.mrf.mxu0
        %v11062 = vadd.f32 %v11021, %v11061
        %v11063 = vpop.f32.mrf.mxu0
        %v11064 = vpop.f32.mrf.mxu0
        %11065 = vdwg.mxu0
        %11066 = vmatprep.subr.bf16.mxu0 %v8001
        %11067 = vmatpush1.bf16.msra.mxu0 %v8000
        %11068 = vmatprep.subr.bf16.mxu0 %v7993
        %11069 = vmatpush1.bf16.msra.mxu0 %v7992
        %11070 = vmatprep.subr.bf16.mxu0 %v7985
        %11071 = vmatpush1.bf16.msra.mxu0 %v7984
        %11072 = vmatprep.subr.bf16.mxu0 %v7977
        %11073 = vmatpush1.bf16.msra.mxu0 %v7976
        %11074 = vmatprep.subr.bf16.mxu0 %v7969
        %11075 = vmatpush1.bf16.msra.mxu0 %v7968
        %11076 = vmatprep.subr.bf16.mxu0 %v7961
        %11077 = vmatpush1.bf16.msra.mxu0 %v7960
        %11078 = vmatprep.subr.bf16.mxu0 %v7953
        %11079 = vmatpush1.bf16.msra.mxu0 %v7952
        %11080 = vmatprep.subr.bf16.mxu0 %v7945
        %11081 = vmatpush1.bf16.msra.mxu0 %v7944
        %11082 = vmatprep.subr.bf16.mxu0 %v8065
        %11083 = vmatpush2.bf16.msra.mxu0 %v8064
        %11084 = vmatprep.subr.bf16.mxu0 %v8057
        %11085 = vmatpush2.bf16.msra.mxu0 %v8056
        %11086 = vmatprep.subr.bf16.mxu0 %v8049
        %11087 = vmatpush2.bf16.msra.mxu0 %v8048
        %11088 = vmatprep.subr.bf16.mxu0 %v8041
        %11089 = vmatpush2.bf16.msra.mxu0 %v8040
        %11090 = vmatprep.subr.bf16.mxu0 %v8033
        %11091 = vmatpush2.bf16.msra.mxu0 %v8032
        %11092 = vmatprep.subr.bf16.mxu0 %v8025
        %11093 = vmatpush2.bf16.msra.mxu0 %v8024
        %11094 = vmatprep.subr.bf16.mxu0 %v8017
        %11095 = vmatpush2.bf16.msra.mxu0 %v8016
        %11096 = vmatprep.subr.bf16.mxu0 %v8009
        %11097 = vmatpush2.bf16.msra.mxu0 %v8008
        %11098 = vmatprep.mubr.bf16.mxu0 %v594
        %11099 = vmatmul.mubr.bf16.gmra.mxu0 %v593
        %v11100 = vpop.f32.mrf.mxu0
        %v11101 = vadd.f32 %v11060, %v11100
        %v11102 = vpop.f32.mrf.mxu0
        %v11103 = vadd.f32 %v11062, %v11102
        %v11104 = vpop.f32.mrf.mxu0
        %v11105 = vpop.f32.mrf.mxu0
        %11106 = vdwg.mxu0
        %11107 = vmatprep.subr.bf16.mxu0 %v8129
        %11108 = vmatpush1.bf16.msra.mxu0 %v8128
        %11109 = vmatprep.subr.bf16.mxu0 %v8121
        %11110 = vmatpush1.bf16.msra.mxu0 %v8120
        %11111 = vmatprep.subr.bf16.mxu0 %v8113
        %11112 = vmatpush1.bf16.msra.mxu0 %v8112
        %11113 = vmatprep.subr.bf16.mxu0 %v8105
        %11114 = vmatpush1.bf16.msra.mxu0 %v8104
        %11115 = vmatprep.subr.bf16.mxu0 %v8097
        %11116 = vmatpush1.bf16.msra.mxu0 %v8096
        %11117 = vmatprep.subr.bf16.mxu0 %v8089
        %11118 = vmatpush1.bf16.msra.mxu0 %v8088
        %11119 = vmatprep.subr.bf16.mxu0 %v8081
        %11120 = vmatpush1.bf16.msra.mxu0 %v8080
        %11121 = vmatprep.subr.bf16.mxu0 %v8073
        %11122 = vmatpush1.bf16.msra.mxu0 %v8072
        %11123 = vmatprep.subr.bf16.mxu0 %v8193
        %11124 = vmatpush2.bf16.msra.mxu0 %v8192
        %11125 = vmatprep.subr.bf16.mxu0 %v8185
        %11126 = vmatpush2.bf16.msra.mxu0 %v8184
        %11127 = vmatprep.subr.bf16.mxu0 %v8177
        %11128 = vmatpush2.bf16.msra.mxu0 %v8176
        %11129 = vmatprep.subr.bf16.mxu0 %v8169
        %11130 = vmatpush2.bf16.msra.mxu0 %v8168
        %11131 = vmatprep.subr.bf16.mxu0 %v8161
        %11132 = vmatpush2.bf16.msra.mxu0 %v8160
        %11133 = vmatprep.subr.bf16.mxu0 %v8153
        %11134 = vmatpush2.bf16.msra.mxu0 %v8152
        %11135 = vmatprep.subr.bf16.mxu0 %v8145
        %11136 = vmatpush2.bf16.msra.mxu0 %v8144
        %11137 = vmatprep.subr.bf16.mxu0 %v8137
        %11138 = vmatpush2.bf16.msra.mxu0 %v8136
        %11139 = vmatprep.mubr.bf16.mxu0 %v596
        %11140 = vmatmul.mubr.bf16.gmra.mxu0 %v595
        %v11141 = vpop.f32.mrf.mxu0
        %v11142 = vadd.f32 %v11101, %v11141
        %v11143 = vpop.f32.mrf.mxu0
        %v11144 = vadd.f32 %v11103, %v11143
        %v11145 = vpop.f32.mrf.mxu0
        %v11146 = vpop.f32.mrf.mxu0
        %11147 = vdwg.mxu0
        %11148 = vmatprep.subr.bf16.mxu0 %v8257
        %11149 = vmatpush1.bf16.msra.mxu0 %v8256
        %11150 = vmatprep.subr.bf16.mxu0 %v8249
        %11151 = vmatpush1.bf16.msra.mxu0 %v8248
        %11152 = vmatprep.subr.bf16.mxu0 %v8241
        %11153 = vmatpush1.bf16.msra.mxu0 %v8240
        %11154 = vmatprep.subr.bf16.mxu0 %v8233
        %11155 = vmatpush1.bf16.msra.mxu0 %v8232
        %11156 = vmatprep.subr.bf16.mxu0 %v8225
        %11157 = vmatpush1.bf16.msra.mxu0 %v8224
        %11158 = vmatprep.subr.bf16.mxu0 %v8217
        %11159 = vmatpush1.bf16.msra.mxu0 %v8216
        %11160 = vmatprep.subr.bf16.mxu0 %v8209
        %11161 = vmatpush1.bf16.msra.mxu0 %v8208
        %11162 = vmatprep.subr.bf16.mxu0 %v8201
        %11163 = vmatpush1.bf16.msra.mxu0 %v8200
        %11164 = vmatprep.subr.bf16.mxu0 %v8321
        %11165 = vmatpush2.bf16.msra.mxu0 %v8320
        %11166 = vmatprep.subr.bf16.mxu0 %v8313
        %11167 = vmatpush2.bf16.msra.mxu0 %v8312
        %11168 = vmatprep.subr.bf16.mxu0 %v8305
        %11169 = vmatpush2.bf16.msra.mxu0 %v8304
        %11170 = vmatprep.subr.bf16.mxu0 %v8297
        %11171 = vmatpush2.bf16.msra.mxu0 %v8296
        %11172 = vmatprep.subr.bf16.mxu0 %v8289
        %11173 = vmatpush2.bf16.msra.mxu0 %v8288
        %11174 = vmatprep.subr.bf16.mxu0 %v8281
        %11175 = vmatpush2.bf16.msra.mxu0 %v8280
        %11176 = vmatprep.subr.bf16.mxu0 %v8273
        %11177 = vmatpush2.bf16.msra.mxu0 %v8272
        %11178 = vmatprep.subr.bf16.mxu0 %v8265
        %11179 = vmatpush2.bf16.msra.mxu0 %v8264
        %11180 = vmatprep.mubr.bf16.mxu0 %v598
        %11181 = vmatmul.mubr.bf16.gmra.mxu0 %v597
        %v11182 = vpop.f32.mrf.mxu0
        %v11183 = vadd.f32 %v11142, %v11182
        %v11184 = vpop.f32.mrf.mxu0
        %v11185 = vadd.f32 %v11144, %v11184
        %v11186 = vpop.f32.mrf.mxu0
        %v11187 = vpop.f32.mrf.mxu0
        %11188 = vdwg.mxu0
        %11189 = vmatprep.subr.bf16.mxu0 %v8385
        %11190 = vmatpush1.bf16.msra.mxu0 %v8384
        %11191 = vmatprep.subr.bf16.mxu0 %v8377
        %11192 = vmatpush1.bf16.msra.mxu0 %v8376
        %11193 = vmatprep.subr.bf16.mxu0 %v8369
        %11194 = vmatpush1.bf16.msra.mxu0 %v8368
        %11195 = vmatprep.subr.bf16.mxu0 %v8361
        %11196 = vmatpush1.bf16.msra.mxu0 %v8360
        %11197 = vmatprep.subr.bf16.mxu0 %v8353
        %11198 = vmatpush1.bf16.msra.mxu0 %v8352
        %11199 = vmatprep.subr.bf16.mxu0 %v8345
        %11200 = vmatpush1.bf16.msra.mxu0 %v8344
        %11201 = vmatprep.subr.bf16.mxu0 %v8337
        %11202 = vmatpush1.bf16.msra.mxu0 %v8336
        %11203 = vmatprep.subr.bf16.mxu0 %v8329
        %11204 = vmatpush1.bf16.msra.mxu0 %v8328
        %11205 = vmatprep.subr.bf16.mxu0 %v8449
        %11206 = vmatpush2.bf16.msra.mxu0 %v8448
        %11207 = vmatprep.subr.bf16.mxu0 %v8441
        %11208 = vmatpush2.bf16.msra.mxu0 %v8440
        %11209 = vmatprep.subr.bf16.mxu0 %v8433
        %11210 = vmatpush2.bf16.msra.mxu0 %v8432
        %11211 = vmatprep.subr.bf16.mxu0 %v8425
        %11212 = vmatpush2.bf16.msra.mxu0 %v8424
        %11213 = vmatprep.subr.bf16.mxu0 %v8417
        %11214 = vmatpush2.bf16.msra.mxu0 %v8416
        %11215 = vmatprep.subr.bf16.mxu0 %v8409
        %11216 = vmatpush2.bf16.msra.mxu0 %v8408
        %11217 = vmatprep.subr.bf16.mxu0 %v8401
        %11218 = vmatpush2.bf16.msra.mxu0 %v8400
        %11219 = vmatprep.subr.bf16.mxu0 %v8393
        %11220 = vmatpush2.bf16.msra.mxu0 %v8392
        %11221 = vmatprep.mubr.bf16.mxu0 %v600
        %11222 = vmatmul.mubr.bf16.gmra.mxu0 %v599
        %v11223 = vpop.f32.mrf.mxu0
        %v11224 = vadd.f32 %v11183, %v11223
        %v11225 = vpop.f32.mrf.mxu0
        %v11226 = vadd.f32 %v11185, %v11225
        %v11227 = vpop.f32.mrf.mxu0
        %v11228 = vpop.f32.mrf.mxu0
        %11229 = vdwg.mxu0
        %11230 = vmatprep.subr.bf16.mxu0 %v8513
        %11231 = vmatpush1.bf16.msra.mxu0 %v8512
        %11232 = vmatprep.subr.bf16.mxu0 %v8505
        %11233 = vmatpush1.bf16.msra.mxu0 %v8504
        %11234 = vmatprep.subr.bf16.mxu0 %v8497
        %11235 = vmatpush1.bf16.msra.mxu0 %v8496
        %11236 = vmatprep.subr.bf16.mxu0 %v8489
        %11237 = vmatpush1.bf16.msra.mxu0 %v8488
        %11238 = vmatprep.subr.bf16.mxu0 %v8481
        %11239 = vmatpush1.bf16.msra.mxu0 %v8480
        %11240 = vmatprep.subr.bf16.mxu0 %v8473
        %11241 = vmatpush1.bf16.msra.mxu0 %v8472
        %11242 = vmatprep.subr.bf16.mxu0 %v8465
        %11243 = vmatpush1.bf16.msra.mxu0 %v8464
        %11244 = vmatprep.subr.bf16.mxu0 %v8457
        %11245 = vmatpush1.bf16.msra.mxu0 %v8456
        %11246 = vmatprep.subr.bf16.mxu0 %v8577
        %11247 = vmatpush2.bf16.msra.mxu0 %v8576
        %11248 = vmatprep.subr.bf16.mxu0 %v8569
        %11249 = vmatpush2.bf16.msra.mxu0 %v8568
        %11250 = vmatprep.subr.bf16.mxu0 %v8561
        %11251 = vmatpush2.bf16.msra.mxu0 %v8560
        %11252 = vmatprep.subr.bf16.mxu0 %v8553
        %11253 = vmatpush2.bf16.msra.mxu0 %v8552
        %11254 = vmatprep.subr.bf16.mxu0 %v8545
        %11255 = vmatpush2.bf16.msra.mxu0 %v8544
        %11256 = vmatprep.subr.bf16.mxu0 %v8537
        %11257 = vmatpush2.bf16.msra.mxu0 %v8536
        %11258 = vmatprep.subr.bf16.mxu0 %v8529
        %11259 = vmatpush2.bf16.msra.mxu0 %v8528
        %11260 = vmatprep.subr.bf16.mxu0 %v8521
        %11261 = vmatpush2.bf16.msra.mxu0 %v8520
        %11262 = vmatprep.mubr.bf16.mxu0 %v602
        %11263 = vmatmul.mubr.bf16.gmra.mxu0 %v601
        %v11264 = vpop.f32.mrf.mxu0
        %v11265 = vadd.f32 %v11224, %v11264
        %v11266 = vpop.f32.mrf.mxu0
        %v11267 = vadd.f32 %v11226, %v11266
        %v11268 = vpop.f32.mrf.mxu0
        %v11269 = vpop.f32.mrf.mxu0
        %11270 = vdwg.mxu0
        %11271 = vmatprep.subr.bf16.mxu0 %v8641
        %11272 = vmatpush1.bf16.msra.mxu0 %v8640
        %11273 = vmatprep.subr.bf16.mxu0 %v8633
        %11274 = vmatpush1.bf16.msra.mxu0 %v8632
        %11275 = vmatprep.subr.bf16.mxu0 %v8625
        %11276 = vmatpush1.bf16.msra.mxu0 %v8624
        %11277 = vmatprep.subr.bf16.mxu0 %v8617
        %11278 = vmatpush1.bf16.msra.mxu0 %v8616
        %11279 = vmatprep.subr.bf16.mxu0 %v8609
        %11280 = vmatpush1.bf16.msra.mxu0 %v8608
        %11281 = vmatprep.subr.bf16.mxu0 %v8601
        %11282 = vmatpush1.bf16.msra.mxu0 %v8600
        %11283 = vmatprep.subr.bf16.mxu0 %v8593
        %11284 = vmatpush1.bf16.msra.mxu0 %v8592
        %11285 = vmatprep.subr.bf16.mxu0 %v8585
        %11286 = vmatpush1.bf16.msra.mxu0 %v8584
        %11287 = vmatprep.subr.bf16.mxu0 0
        %11288 = vmatpush2.bf16.msra.mxu0 0
        %11289 = vmatprep.subr.bf16.mxu0 0
        %11290 = vmatpush2.bf16.msra.mxu0 0
        %11291 = vmatprep.subr.bf16.mxu0 0
        %11292 = vmatpush2.bf16.msra.mxu0 0
        %11293 = vmatprep.subr.bf16.mxu0 0
        %11294 = vmatpush2.bf16.msra.mxu0 0
        %11295 = vmatprep.subr.bf16.mxu0 0
        %11296 = vmatpush2.bf16.msra.mxu0 0
        %11297 = vmatprep.subr.bf16.mxu0 0
        %11298 = vmatpush2.bf16.msra.mxu0 0
        %11299 = vmatprep.subr.bf16.mxu0 0
        %11300 = vmatpush2.bf16.msra.mxu0 0
        %11301 = vmatprep.subr.bf16.mxu0 0
        %11302 = vmatpush2.bf16.msra.mxu0 0
        %11303 = vmatprep.mubr.bf16.mxu0 0
        %11304 = vmatmul.mubr.bf16.gmra.mxu0 %v603
        %v11305 = vpop.f32.mrf.mxu0
        %v11306 = vadd.f32 %v11265, %v11305
        %v11307 = vpop.f32.mrf.mxu0
        %v11308 = vadd.f32 %v11267, %v11307
        %v11309 = vpop.f32.mrf.mxu0
        %v11310 = vpop.f32.mrf.mxu0
        %11311 = vdwg.mxu0
        %11312 = vmatprep.subr.bf16.mxu0 %v7107
        %11313 = vmatpush1.bf16.msra.mxu0 %v7106
        %11314 = vmatprep.subr.bf16.mxu0 %v7099
        %11315 = vmatpush1.bf16.msra.mxu0 %v7098
        %11316 = vmatprep.subr.bf16.mxu0 %v7091
        %11317 = vmatpush1.bf16.msra.mxu0 %v7090
        %11318 = vmatprep.subr.bf16.mxu0 %v7083
        %11319 = vmatpush1.bf16.msra.mxu0 %v7082
        %11320 = vmatprep.subr.bf16.mxu0 %v7075
        %11321 = vmatpush1.bf16.msra.mxu0 %v7074
        %11322 = vmatprep.subr.bf16.mxu0 %v7067
        %11323 = vmatpush1.bf16.msra.mxu0 %v7066
        %11324 = vmatprep.subr.bf16.mxu0 %v7059
        %11325 = vmatpush1.bf16.msra.mxu0 %v7058
        %11326 = vmatprep.subr.bf16.mxu0 %v7051
        %11327 = vmatpush1.bf16.msra.mxu0 %v7050
        %11328 = vmatprep.subr.bf16.mxu0 %v7171
        %11329 = vmatpush2.bf16.msra.mxu0 %v7170
        %11330 = vmatprep.subr.bf16.mxu0 %v7163
        %11331 = vmatpush2.bf16.msra.mxu0 %v7162
        %11332 = vmatprep.subr.bf16.mxu0 %v7155
        %11333 = vmatpush2.bf16.msra.mxu0 %v7154
        %11334 = vmatprep.subr.bf16.mxu0 %v7147
        %11335 = vmatpush2.bf16.msra.mxu0 %v7146
        %11336 = vmatprep.subr.bf16.mxu0 %v7139
        %11337 = vmatpush2.bf16.msra.mxu0 %v7138
        %11338 = vmatprep.subr.bf16.mxu0 %v7131
        %11339 = vmatpush2.bf16.msra.mxu0 %v7130
        %11340 = vmatprep.subr.bf16.mxu0 %v7123
        %11341 = vmatpush2.bf16.msra.mxu0 %v7122
        %11342 = vmatprep.subr.bf16.mxu0 %v7115
        %11343 = vmatpush2.bf16.msra.mxu0 %v7114
        %11344 = vmatprep.mubr.bf16.mxu0 %v580
        %11345 = vmatmul.mubr.bf16.gmra.mxu0 %v579
        %v11346 = vpop.f32.mrf.mxu0
        %v11347 = vadd.f32 %v2225, %v11346
        %v11348 = vpop.f32.mrf.mxu0
        %v11349 = vadd.f32 %v2229, %v11348
        %v11350 = vpop.f32.mrf.mxu0
        %v11351 = vpop.f32.mrf.mxu0
        %11352 = vdwg.mxu0
        %11353 = vmatprep.subr.bf16.mxu0 %v7235
        %11354 = vmatpush1.bf16.msra.mxu0 %v7234
        %11355 = vmatprep.subr.bf16.mxu0 %v7227
        %11356 = vmatpush1.bf16.msra.mxu0 %v7226
        %11357 = vmatprep.subr.bf16.mxu0 %v7219
        %11358 = vmatpush1.bf16.msra.mxu0 %v7218
        %11359 = vmatprep.subr.bf16.mxu0 %v7211
        %11360 = vmatpush1.bf16.msra.mxu0 %v7210
        %11361 = vmatprep.subr.bf16.mxu0 %v7203
        %11362 = vmatpush1.bf16.msra.mxu0 %v7202
        %11363 = vmatprep.subr.bf16.mxu0 %v7195
        %11364 = vmatpush1.bf16.msra.mxu0 %v7194
        %11365 = vmatprep.subr.bf16.mxu0 %v7187
        %11366 = vmatpush1.bf16.msra.mxu0 %v7186
        %11367 = vmatprep.subr.bf16.mxu0 %v7179
        %11368 = vmatpush1.bf16.msra.mxu0 %v7178
        %11369 = vmatprep.subr.bf16.mxu0 %v7299
        %11370 = vmatpush2.bf16.msra.mxu0 %v7298
        %11371 = vmatprep.subr.bf16.mxu0 %v7291
        %11372 = vmatpush2.bf16.msra.mxu0 %v7290
        %11373 = vmatprep.subr.bf16.mxu0 %v7283
        %11374 = vmatpush2.bf16.msra.mxu0 %v7282
        %11375 = vmatprep.subr.bf16.mxu0 %v7275
        %11376 = vmatpush2.bf16.msra.mxu0 %v7274
        %11377 = vmatprep.subr.bf16.mxu0 %v7267
        %11378 = vmatpush2.bf16.msra.mxu0 %v7266
        %11379 = vmatprep.subr.bf16.mxu0 %v7259
        %11380 = vmatpush2.bf16.msra.mxu0 %v7258
        %11381 = vmatprep.subr.bf16.mxu0 %v7251
        %11382 = vmatpush2.bf16.msra.mxu0 %v7250
        %11383 = vmatprep.subr.bf16.mxu0 %v7243
        %11384 = vmatpush2.bf16.msra.mxu0 %v7242
        %11385 = vmatprep.mubr.bf16.mxu0 %v582
        %11386 = vmatmul.mubr.bf16.gmra.mxu0 %v581
        %v11387 = vpop.f32.mrf.mxu0
        %v11388 = vadd.f32 %v11347, %v11387
        %v11389 = vpop.f32.mrf.mxu0
        %v11390 = vadd.f32 %v11349, %v11389
        %v11391 = vpop.f32.mrf.mxu0
        %v11392 = vpop.f32.mrf.mxu0
        %11393 = vdwg.mxu0
        %11394 = vmatprep.subr.bf16.mxu0 %v7363
        %11395 = vmatpush1.bf16.msra.mxu0 %v7362
        %11396 = vmatprep.subr.bf16.mxu0 %v7355
        %11397 = vmatpush1.bf16.msra.mxu0 %v7354
        %11398 = vmatprep.subr.bf16.mxu0 %v7347
        %11399 = vmatpush1.bf16.msra.mxu0 %v7346
        %11400 = vmatprep.subr.bf16.mxu0 %v7339
        %11401 = vmatpush1.bf16.msra.mxu0 %v7338
        %11402 = vmatprep.subr.bf16.mxu0 %v7331
        %11403 = vmatpush1.bf16.msra.mxu0 %v7330
        %11404 = vmatprep.subr.bf16.mxu0 %v7323
        %11405 = vmatpush1.bf16.msra.mxu0 %v7322
        %11406 = vmatprep.subr.bf16.mxu0 %v7315
        %11407 = vmatpush1.bf16.msra.mxu0 %v7314
        %11408 = vmatprep.subr.bf16.mxu0 %v7307
        %11409 = vmatpush1.bf16.msra.mxu0 %v7306
        %11410 = vmatprep.subr.bf16.mxu0 %v7427
        %11411 = vmatpush2.bf16.msra.mxu0 %v7426
        %11412 = vmatprep.subr.bf16.mxu0 %v7419
        %11413 = vmatpush2.bf16.msra.mxu0 %v7418
        %11414 = vmatprep.subr.bf16.mxu0 %v7411
        %11415 = vmatpush2.bf16.msra.mxu0 %v7410
        %11416 = vmatprep.subr.bf16.mxu0 %v7403
        %11417 = vmatpush2.bf16.msra.mxu0 %v7402
        %11418 = vmatprep.subr.bf16.mxu0 %v7395
        %11419 = vmatpush2.bf16.msra.mxu0 %v7394
        %11420 = vmatprep.subr.bf16.mxu0 %v7387
        %11421 = vmatpush2.bf16.msra.mxu0 %v7386
        %11422 = vmatprep.subr.bf16.mxu0 %v7379
        %11423 = vmatpush2.bf16.msra.mxu0 %v7378
        %11424 = vmatprep.subr.bf16.mxu0 %v7371
        %11425 = vmatpush2.bf16.msra.mxu0 %v7370
        %11426 = vmatprep.mubr.bf16.mxu0 %v584
        %11427 = vmatmul.mubr.bf16.gmra.mxu0 %v583
        %v11428 = vpop.f32.mrf.mxu0
        %v11429 = vadd.f32 %v11388, %v11428
        %v11430 = vpop.f32.mrf.mxu0
        %v11431 = vadd.f32 %v11390, %v11430
        %v11432 = vpop.f32.mrf.mxu0
        %v11433 = vpop.f32.mrf.mxu0
        %11434 = vdwg.mxu0
        %11435 = vmatprep.subr.bf16.mxu0 %v7491
        %11436 = vmatpush1.bf16.msra.mxu0 %v7490
        %11437 = vmatprep.subr.bf16.mxu0 %v7483
        %11438 = vmatpush1.bf16.msra.mxu0 %v7482
        %11439 = vmatprep.subr.bf16.mxu0 %v7475
        %11440 = vmatpush1.bf16.msra.mxu0 %v7474
        %11441 = vmatprep.subr.bf16.mxu0 %v7467
        %11442 = vmatpush1.bf16.msra.mxu0 %v7466
        %11443 = vmatprep.subr.bf16.mxu0 %v7459
        %11444 = vmatpush1.bf16.msra.mxu0 %v7458
        %11445 = vmatprep.subr.bf16.mxu0 %v7451
        %11446 = vmatpush1.bf16.msra.mxu0 %v7450
        %11447 = vmatprep.subr.bf16.mxu0 %v7443
        %11448 = vmatpush1.bf16.msra.mxu0 %v7442
        %11449 = vmatprep.subr.bf16.mxu0 %v7435
        %11450 = vmatpush1.bf16.msra.mxu0 %v7434
        %11451 = vmatprep.subr.bf16.mxu0 %v7555
        %11452 = vmatpush2.bf16.msra.mxu0 %v7554
        %11453 = vmatprep.subr.bf16.mxu0 %v7547
        %11454 = vmatpush2.bf16.msra.mxu0 %v7546
        %11455 = vmatprep.subr.bf16.mxu0 %v7539
        %11456 = vmatpush2.bf16.msra.mxu0 %v7538
        %11457 = vmatprep.subr.bf16.mxu0 %v7531
        %11458 = vmatpush2.bf16.msra.mxu0 %v7530
        %11459 = vmatprep.subr.bf16.mxu0 %v7523
        %11460 = vmatpush2.bf16.msra.mxu0 %v7522
        %11461 = vmatprep.subr.bf16.mxu0 %v7515
        %11462 = vmatpush2.bf16.msra.mxu0 %v7514
        %11463 = vmatprep.subr.bf16.mxu0 %v7507
        %11464 = vmatpush2.bf16.msra.mxu0 %v7506
        %11465 = vmatprep.subr.bf16.mxu0 %v7499
        %11466 = vmatpush2.bf16.msra.mxu0 %v7498
        %11467 = vmatprep.mubr.bf16.mxu0 %v586
        %11468 = vmatmul.mubr.bf16.gmra.mxu0 %v585
        %v11469 = vpop.f32.mrf.mxu0
        %v11470 = vadd.f32 %v11429, %v11469
        %v11471 = vpop.f32.mrf.mxu0
        %v11472 = vadd.f32 %v11431, %v11471
        %v11473 = vpop.f32.mrf.mxu0
        %v11474 = vpop.f32.mrf.mxu0
        %11475 = vdwg.mxu0
        %11476 = vmatprep.subr.bf16.mxu0 %v7619
        %11477 = vmatpush1.bf16.msra.mxu0 %v7618
        %11478 = vmatprep.subr.bf16.mxu0 %v7611
        %11479 = vmatpush1.bf16.msra.mxu0 %v7610
        %11480 = vmatprep.subr.bf16.mxu0 %v7603
        %11481 = vmatpush1.bf16.msra.mxu0 %v7602
        %11482 = vmatprep.subr.bf16.mxu0 %v7595
        %11483 = vmatpush1.bf16.msra.mxu0 %v7594
        %11484 = vmatprep.subr.bf16.mxu0 %v7587
        %11485 = vmatpush1.bf16.msra.mxu0 %v7586
        %11486 = vmatprep.subr.bf16.mxu0 %v7579
        %11487 = vmatpush1.bf16.msra.mxu0 %v7578
        %11488 = vmatprep.subr.bf16.mxu0 %v7571
        %11489 = vmatpush1.bf16.msra.mxu0 %v7570
        %11490 = vmatprep.subr.bf16.mxu0 %v7563
        %11491 = vmatpush1.bf16.msra.mxu0 %v7562
        %11492 = vmatprep.subr.bf16.mxu0 %v7683
        %11493 = vmatpush2.bf16.msra.mxu0 %v7682
        %11494 = vmatprep.subr.bf16.mxu0 %v7675
        %11495 = vmatpush2.bf16.msra.mxu0 %v7674
        %11496 = vmatprep.subr.bf16.mxu0 %v7667
        %11497 = vmatpush2.bf16.msra.mxu0 %v7666
        %11498 = vmatprep.subr.bf16.mxu0 %v7659
        %11499 = vmatpush2.bf16.msra.mxu0 %v7658
        %11500 = vmatprep.subr.bf16.mxu0 %v7651
        %11501 = vmatpush2.bf16.msra.mxu0 %v7650
        %11502 = vmatprep.subr.bf16.mxu0 %v7643
        %11503 = vmatpush2.bf16.msra.mxu0 %v7642
        %11504 = vmatprep.subr.bf16.mxu0 %v7635
        %11505 = vmatpush2.bf16.msra.mxu0 %v7634
        %11506 = vmatprep.subr.bf16.mxu0 %v7627
        %11507 = vmatpush2.bf16.msra.mxu0 %v7626
        %11508 = vmatprep.mubr.bf16.mxu0 %v588
        %11509 = vmatmul.mubr.bf16.gmra.mxu0 %v587
        %v11510 = vpop.f32.mrf.mxu0
        %v11511 = vadd.f32 %v11470, %v11510
        %v11512 = vpop.f32.mrf.mxu0
        %v11513 = vadd.f32 %v11472, %v11512
        %v11514 = vpop.f32.mrf.mxu0
        %v11515 = vpop.f32.mrf.mxu0
        %11516 = vdwg.mxu0
        %11517 = vmatprep.subr.bf16.mxu0 %v7747
        %11518 = vmatpush1.bf16.msra.mxu0 %v7746
        %11519 = vmatprep.subr.bf16.mxu0 %v7739
        %11520 = vmatpush1.bf16.msra.mxu0 %v7738
        %11521 = vmatprep.subr.bf16.mxu0 %v7731
        %11522 = vmatpush1.bf16.msra.mxu0 %v7730
        %11523 = vmatprep.subr.bf16.mxu0 %v7723
        %11524 = vmatpush1.bf16.msra.mxu0 %v7722
        %11525 = vmatprep.subr.bf16.mxu0 %v7715
        %11526 = vmatpush1.bf16.msra.mxu0 %v7714
        %11527 = vmatprep.subr.bf16.mxu0 %v7707
        %11528 = vmatpush1.bf16.msra.mxu0 %v7706
        %11529 = vmatprep.subr.bf16.mxu0 %v7699
        %11530 = vmatpush1.bf16.msra.mxu0 %v7698
        %11531 = vmatprep.subr.bf16.mxu0 %v7691
        %11532 = vmatpush1.bf16.msra.mxu0 %v7690
        %11533 = vmatprep.subr.bf16.mxu0 %v7811
        %11534 = vmatpush2.bf16.msra.mxu0 %v7810
        %11535 = vmatprep.subr.bf16.mxu0 %v7803
        %11536 = vmatpush2.bf16.msra.mxu0 %v7802
        %11537 = vmatprep.subr.bf16.mxu0 %v7795
        %11538 = vmatpush2.bf16.msra.mxu0 %v7794
        %11539 = vmatprep.subr.bf16.mxu0 %v7787
        %11540 = vmatpush2.bf16.msra.mxu0 %v7786
        %11541 = vmatprep.subr.bf16.mxu0 %v7779
        %11542 = vmatpush2.bf16.msra.mxu0 %v7778
        %11543 = vmatprep.subr.bf16.mxu0 %v7771
        %11544 = vmatpush2.bf16.msra.mxu0 %v7770
        %11545 = vmatprep.subr.bf16.mxu0 %v7763
        %11546 = vmatpush2.bf16.msra.mxu0 %v7762
        %11547 = vmatprep.subr.bf16.mxu0 %v7755
        %11548 = vmatpush2.bf16.msra.mxu0 %v7754
        %11549 = vmatprep.mubr.bf16.mxu0 %v590
        %11550 = vmatmul.mubr.bf16.gmra.mxu0 %v589
        %v11551 = vpop.f32.mrf.mxu0
        %v11552 = vadd.f32 %v11511, %v11551
        %v11553 = vpop.f32.mrf.mxu0
        %v11554 = vadd.f32 %v11513, %v11553
        %v11555 = vpop.f32.mrf.mxu0
        %v11556 = vpop.f32.mrf.mxu0
        %11557 = vdwg.mxu0
        %11558 = vmatprep.subr.bf16.mxu0 %v7875
        %11559 = vmatpush1.bf16.msra.mxu0 %v7874
        %11560 = vmatprep.subr.bf16.mxu0 %v7867
        %11561 = vmatpush1.bf16.msra.mxu0 %v7866
        %11562 = vmatprep.subr.bf16.mxu0 %v7859
        %11563 = vmatpush1.bf16.msra.mxu0 %v7858
        %11564 = vmatprep.subr.bf16.mxu0 %v7851
        %11565 = vmatpush1.bf16.msra.mxu0 %v7850
        %11566 = vmatprep.subr.bf16.mxu0 %v7843
        %11567 = vmatpush1.bf16.msra.mxu0 %v7842
        %11568 = vmatprep.subr.bf16.mxu0 %v7835
        %11569 = vmatpush1.bf16.msra.mxu0 %v7834
        %11570 = vmatprep.subr.bf16.mxu0 %v7827
        %11571 = vmatpush1.bf16.msra.mxu0 %v7826
        %11572 = vmatprep.subr.bf16.mxu0 %v7819
        %11573 = vmatpush1.bf16.msra.mxu0 %v7818
        %11574 = vmatprep.subr.bf16.mxu0 %v7939
        %11575 = vmatpush2.bf16.msra.mxu0 %v7938
        %11576 = vmatprep.subr.bf16.mxu0 %v7931
        %11577 = vmatpush2.bf16.msra.mxu0 %v7930
        %11578 = vmatprep.subr.bf16.mxu0 %v7923
        %11579 = vmatpush2.bf16.msra.mxu0 %v7922
        %11580 = vmatprep.subr.bf16.mxu0 %v7915
        %11581 = vmatpush2.bf16.msra.mxu0 %v7914
        %11582 = vmatprep.subr.bf16.mxu0 %v7907
        %11583 = vmatpush2.bf16.msra.mxu0 %v7906
        %11584 = vmatprep.subr.bf16.mxu0 %v7899
        %11585 = vmatpush2.bf16.msra.mxu0 %v7898
        %11586 = vmatprep.subr.bf16.mxu0 %v7891
        %11587 = vmatpush2.bf16.msra.mxu0 %v7890
        %11588 = vmatprep.subr.bf16.mxu0 %v7883
        %11589 = vmatpush2.bf16.msra.mxu0 %v7882
        %11590 = vmatprep.mubr.bf16.mxu0 %v592
        %11591 = vmatmul.mubr.bf16.gmra.mxu0 %v591
        %v11592 = vpop.f32.mrf.mxu0
        %v11593 = vadd.f32 %v11552, %v11592
        %v11594 = vpop.f32.mrf.mxu0
        %v11595 = vadd.f32 %v11554, %v11594
        %v11596 = vpop.f32.mrf.mxu0
        %v11597 = vpop.f32.mrf.mxu0
        %11598 = vdwg.mxu0
        %11599 = vmatprep.subr.bf16.mxu0 %v8003
        %11600 = vmatpush1.bf16.msra.mxu0 %v8002
        %11601 = vmatprep.subr.bf16.mxu0 %v7995
        %11602 = vmatpush1.bf16.msra.mxu0 %v7994
        %11603 = vmatprep.subr.bf16.mxu0 %v7987
        %11604 = vmatpush1.bf16.msra.mxu0 %v7986
        %11605 = vmatprep.subr.bf16.mxu0 %v7979
        %11606 = vmatpush1.bf16.msra.mxu0 %v7978
        %11607 = vmatprep.subr.bf16.mxu0 %v7971
        %11608 = vmatpush1.bf16.msra.mxu0 %v7970
        %11609 = vmatprep.subr.bf16.mxu0 %v7963
        %11610 = vmatpush1.bf16.msra.mxu0 %v7962
        %11611 = vmatprep.subr.bf16.mxu0 %v7955
        %11612 = vmatpush1.bf16.msra.mxu0 %v7954
        %11613 = vmatprep.subr.bf16.mxu0 %v7947
        %11614 = vmatpush1.bf16.msra.mxu0 %v7946
        %11615 = vmatprep.subr.bf16.mxu0 %v8067
        %11616 = vmatpush2.bf16.msra.mxu0 %v8066
        %11617 = vmatprep.subr.bf16.mxu0 %v8059
        %11618 = vmatpush2.bf16.msra.mxu0 %v8058
        %11619 = vmatprep.subr.bf16.mxu0 %v8051
        %11620 = vmatpush2.bf16.msra.mxu0 %v8050
        %11621 = vmatprep.subr.bf16.mxu0 %v8043
        %11622 = vmatpush2.bf16.msra.mxu0 %v8042
        %11623 = vmatprep.subr.bf16.mxu0 %v8035
        %11624 = vmatpush2.bf16.msra.mxu0 %v8034
        %11625 = vmatprep.subr.bf16.mxu0 %v8027
        %11626 = vmatpush2.bf16.msra.mxu0 %v8026
        %11627 = vmatprep.subr.bf16.mxu0 %v8019
        %11628 = vmatpush2.bf16.msra.mxu0 %v8018
        %11629 = vmatprep.subr.bf16.mxu0 %v8011
        %11630 = vmatpush2.bf16.msra.mxu0 %v8010
        %11631 = vmatprep.mubr.bf16.mxu0 %v594
        %11632 = vmatmul.mubr.bf16.gmra.mxu0 %v593
        %v11633 = vpop.f32.mrf.mxu0
        %v11634 = vadd.f32 %v11593, %v11633
        %v11635 = vpop.f32.mrf.mxu0
        %v11636 = vadd.f32 %v11595, %v11635
        %v11637 = vpop.f32.mrf.mxu0
        %v11638 = vpop.f32.mrf.mxu0
        %11639 = vdwg.mxu0
        %11640 = vmatprep.subr.bf16.mxu0 %v8131
        %11641 = vmatpush1.bf16.msra.mxu0 %v8130
        %11642 = vmatprep.subr.bf16.mxu0 %v8123
        %11643 = vmatpush1.bf16.msra.mxu0 %v8122
        %11644 = vmatprep.subr.bf16.mxu0 %v8115
        %11645 = vmatpush1.bf16.msra.mxu0 %v8114
        %11646 = vmatprep.subr.bf16.mxu0 %v8107
        %11647 = vmatpush1.bf16.msra.mxu0 %v8106
        %11648 = vmatprep.subr.bf16.mxu0 %v8099
        %11649 = vmatpush1.bf16.msra.mxu0 %v8098
        %11650 = vmatprep.subr.bf16.mxu0 %v8091
        %11651 = vmatpush1.bf16.msra.mxu0 %v8090
        %11652 = vmatprep.subr.bf16.mxu0 %v8083
        %11653 = vmatpush1.bf16.msra.mxu0 %v8082
        %11654 = vmatprep.subr.bf16.mxu0 %v8075
        %11655 = vmatpush1.bf16.msra.mxu0 %v8074
        %11656 = vmatprep.subr.bf16.mxu0 %v8195
        %11657 = vmatpush2.bf16.msra.mxu0 %v8194
        %11658 = vmatprep.subr.bf16.mxu0 %v8187
        %11659 = vmatpush2.bf16.msra.mxu0 %v8186
        %11660 = vmatprep.subr.bf16.mxu0 %v8179
        %11661 = vmatpush2.bf16.msra.mxu0 %v8178
        %11662 = vmatprep.subr.bf16.mxu0 %v8171
        %11663 = vmatpush2.bf16.msra.mxu0 %v8170
        %11664 = vmatprep.subr.bf16.mxu0 %v8163
        %11665 = vmatpush2.bf16.msra.mxu0 %v8162
        %11666 = vmatprep.subr.bf16.mxu0 %v8155
        %11667 = vmatpush2.bf16.msra.mxu0 %v8154
        %11668 = vmatprep.subr.bf16.mxu0 %v8147
        %11669 = vmatpush2.bf16.msra.mxu0 %v8146
        %11670 = vmatprep.subr.bf16.mxu0 %v8139
        %11671 = vmatpush2.bf16.msra.mxu0 %v8138
        %11672 = vmatprep.mubr.bf16.mxu0 %v596
        %11673 = vmatmul.mubr.bf16.gmra.mxu0 %v595
        %v11674 = vpop.f32.mrf.mxu0
        %v11675 = vadd.f32 %v11634, %v11674
        %v11676 = vpop.f32.mrf.mxu0
        %v11677 = vadd.f32 %v11636, %v11676
        %v11678 = vpop.f32.mrf.mxu0
        %v11679 = vpop.f32.mrf.mxu0
        %11680 = vdwg.mxu0
        %11681 = vmatprep.subr.bf16.mxu0 %v8259
        %11682 = vmatpush1.bf16.msra.mxu0 %v8258
        %11683 = vmatprep.subr.bf16.mxu0 %v8251
        %11684 = vmatpush1.bf16.msra.mxu0 %v8250
        %11685 = vmatprep.subr.bf16.mxu0 %v8243
        %11686 = vmatpush1.bf16.msra.mxu0 %v8242
        %11687 = vmatprep.subr.bf16.mxu0 %v8235
        %11688 = vmatpush1.bf16.msra.mxu0 %v8234
        %11689 = vmatprep.subr.bf16.mxu0 %v8227
        %11690 = vmatpush1.bf16.msra.mxu0 %v8226
        %11691 = vmatprep.subr.bf16.mxu0 %v8219
        %11692 = vmatpush1.bf16.msra.mxu0 %v8218
        %11693 = vmatprep.subr.bf16.mxu0 %v8211
        %11694 = vmatpush1.bf16.msra.mxu0 %v8210
        %11695 = vmatprep.subr.bf16.mxu0 %v8203
        %11696 = vmatpush1.bf16.msra.mxu0 %v8202
        %11697 = vmatprep.subr.bf16.mxu0 %v8323
        %11698 = vmatpush2.bf16.msra.mxu0 %v8322
        %11699 = vmatprep.subr.bf16.mxu0 %v8315
        %11700 = vmatpush2.bf16.msra.mxu0 %v8314
        %11701 = vmatprep.subr.bf16.mxu0 %v8307
        %11702 = vmatpush2.bf16.msra.mxu0 %v8306
        %11703 = vmatprep.subr.bf16.mxu0 %v8299
        %11704 = vmatpush2.bf16.msra.mxu0 %v8298
        %11705 = vmatprep.subr.bf16.mxu0 %v8291
        %11706 = vmatpush2.bf16.msra.mxu0 %v8290
        %11707 = vmatprep.subr.bf16.mxu0 %v8283
        %11708 = vmatpush2.bf16.msra.mxu0 %v8282
        %11709 = vmatprep.subr.bf16.mxu0 %v8275
        %11710 = vmatpush2.bf16.msra.mxu0 %v8274
        %11711 = vmatprep.subr.bf16.mxu0 %v8267
        %11712 = vmatpush2.bf16.msra.mxu0 %v8266
        %11713 = vmatprep.mubr.bf16.mxu0 %v598
        %11714 = vmatmul.mubr.bf16.gmra.mxu0 %v597
        %v11715 = vpop.f32.mrf.mxu0
        %v11716 = vadd.f32 %v11675, %v11715
        %v11717 = vpop.f32.mrf.mxu0
        %v11718 = vadd.f32 %v11677, %v11717
        %v11719 = vpop.f32.mrf.mxu0
        %v11720 = vpop.f32.mrf.mxu0
        %11721 = vdwg.mxu0
        %11722 = vmatprep.subr.bf16.mxu0 %v8387
        %11723 = vmatpush1.bf16.msra.mxu0 %v8386
        %11724 = vmatprep.subr.bf16.mxu0 %v8379
        %11725 = vmatpush1.bf16.msra.mxu0 %v8378
        %11726 = vmatprep.subr.bf16.mxu0 %v8371
        %11727 = vmatpush1.bf16.msra.mxu0 %v8370
        %11728 = vmatprep.subr.bf16.mxu0 %v8363
        %11729 = vmatpush1.bf16.msra.mxu0 %v8362
        %11730 = vmatprep.subr.bf16.mxu0 %v8355
        %11731 = vmatpush1.bf16.msra.mxu0 %v8354
        %11732 = vmatprep.subr.bf16.mxu0 %v8347
        %11733 = vmatpush1.bf16.msra.mxu0 %v8346
        %11734 = vmatprep.subr.bf16.mxu0 %v8339
        %11735 = vmatpush1.bf16.msra.mxu0 %v8338
        %11736 = vmatprep.subr.bf16.mxu0 %v8331
        %11737 = vmatpush1.bf16.msra.mxu0 %v8330
        %11738 = vmatprep.subr.bf16.mxu0 %v8451
        %11739 = vmatpush2.bf16.msra.mxu0 %v8450
        %11740 = vmatprep.subr.bf16.mxu0 %v8443
        %11741 = vmatpush2.bf16.msra.mxu0 %v8442
        %11742 = vmatprep.subr.bf16.mxu0 %v8435
        %11743 = vmatpush2.bf16.msra.mxu0 %v8434
        %11744 = vmatprep.subr.bf16.mxu0 %v8427
        %11745 = vmatpush2.bf16.msra.mxu0 %v8426
        %11746 = vmatprep.subr.bf16.mxu0 %v8419
        %11747 = vmatpush2.bf16.msra.mxu0 %v8418
        %11748 = vmatprep.subr.bf16.mxu0 %v8411
        %11749 = vmatpush2.bf16.msra.mxu0 %v8410
        %11750 = vmatprep.subr.bf16.mxu0 %v8403
        %11751 = vmatpush2.bf16.msra.mxu0 %v8402
        %11752 = vmatprep.subr.bf16.mxu0 %v8395
        %11753 = vmatpush2.bf16.msra.mxu0 %v8394
        %11754 = vmatprep.mubr.bf16.mxu0 %v600
        %11755 = vmatmul.mubr.bf16.gmra.mxu0 %v599
        %v11756 = vpop.f32.mrf.mxu0
        %v11757 = vadd.f32 %v11716, %v11756
        %v11758 = vpop.f32.mrf.mxu0
        %v11759 = vadd.f32 %v11718, %v11758
        %v11760 = vpop.f32.mrf.mxu0
        %v11761 = vpop.f32.mrf.mxu0
        %11762 = vdwg.mxu0
        %11763 = vmatprep.subr.bf16.mxu0 %v8515
        %11764 = vmatpush1.bf16.msra.mxu0 %v8514
        %11765 = vmatprep.subr.bf16.mxu0 %v8507
        %11766 = vmatpush1.bf16.msra.mxu0 %v8506
        %11767 = vmatprep.subr.bf16.mxu0 %v8499
        %11768 = vmatpush1.bf16.msra.mxu0 %v8498
        %11769 = vmatprep.subr.bf16.mxu0 %v8491
        %11770 = vmatpush1.bf16.msra.mxu0 %v8490
        %11771 = vmatprep.subr.bf16.mxu0 %v8483
        %11772 = vmatpush1.bf16.msra.mxu0 %v8482
        %11773 = vmatprep.subr.bf16.mxu0 %v8475
        %11774 = vmatpush1.bf16.msra.mxu0 %v8474
        %11775 = vmatprep.subr.bf16.mxu0 %v8467
        %11776 = vmatpush1.bf16.msra.mxu0 %v8466
        %11777 = vmatprep.subr.bf16.mxu0 %v8459
        %11778 = vmatpush1.bf16.msra.mxu0 %v8458
        %11779 = vmatprep.subr.bf16.mxu0 %v8579
        %11780 = vmatpush2.bf16.msra.mxu0 %v8578
        %11781 = vmatprep.subr.bf16.mxu0 %v8571
        %11782 = vmatpush2.bf16.msra.mxu0 %v8570
        %11783 = vmatprep.subr.bf16.mxu0 %v8563
        %11784 = vmatpush2.bf16.msra.mxu0 %v8562
        %11785 = vmatprep.subr.bf16.mxu0 %v8555
        %11786 = vmatpush2.bf16.msra.mxu0 %v8554
        %11787 = vmatprep.subr.bf16.mxu0 %v8547
        %11788 = vmatpush2.bf16.msra.mxu0 %v8546
        %11789 = vmatprep.subr.bf16.mxu0 %v8539
        %11790 = vmatpush2.bf16.msra.mxu0 %v8538
        %11791 = vmatprep.subr.bf16.mxu0 %v8531
        %11792 = vmatpush2.bf16.msra.mxu0 %v8530
        %11793 = vmatprep.subr.bf16.mxu0 %v8523
        %11794 = vmatpush2.bf16.msra.mxu0 %v8522
        %11795 = vmatprep.mubr.bf16.mxu0 %v602
        %11796 = vmatmul.mubr.bf16.gmra.mxu0 %v601
        %v11797 = vpop.f32.mrf.mxu0
        %v11798 = vadd.f32 %v11757, %v11797
        %v11799 = vpop.f32.mrf.mxu0
        %v11800 = vadd.f32 %v11759, %v11799
        %v11801 = vpop.f32.mrf.mxu0
        %v11802 = vpop.f32.mrf.mxu0
        %11803 = vdwg.mxu0
        %11804 = vmatprep.subr.bf16.mxu0 %v8643
        %11805 = vmatpush1.bf16.msra.mxu0 %v8642
        %11806 = vmatprep.subr.bf16.mxu0 %v8635
        %11807 = vmatpush1.bf16.msra.mxu0 %v8634
        %11808 = vmatprep.subr.bf16.mxu0 %v8627
        %11809 = vmatpush1.bf16.msra.mxu0 %v8626
        %11810 = vmatprep.subr.bf16.mxu0 %v8619
        %11811 = vmatpush1.bf16.msra.mxu0 %v8618
        %11812 = vmatprep.subr.bf16.mxu0 %v8611
        %11813 = vmatpush1.bf16.msra.mxu0 %v8610
        %11814 = vmatprep.subr.bf16.mxu0 %v8603
        %11815 = vmatpush1.bf16.msra.mxu0 %v8602
        %11816 = vmatprep.subr.bf16.mxu0 %v8595
        %11817 = vmatpush1.bf16.msra.mxu0 %v8594
        %11818 = vmatprep.subr.bf16.mxu0 %v8587
        %11819 = vmatpush1.bf16.msra.mxu0 %v8586
        %11820 = vmatprep.subr.bf16.mxu0 0
        %11821 = vmatpush2.bf16.msra.mxu0 0
        %11822 = vmatprep.subr.bf16.mxu0 0
        %11823 = vmatpush2.bf16.msra.mxu0 0
        %11824 = vmatprep.subr.bf16.mxu0 0
        %11825 = vmatpush2.bf16.msra.mxu0 0
        %11826 = vmatprep.subr.bf16.mxu0 0
        %11827 = vmatpush2.bf16.msra.mxu0 0
        %11828 = vmatprep.subr.bf16.mxu0 0
        %11829 = vmatpush2.bf16.msra.mxu0 0
        %11830 = vmatprep.subr.bf16.mxu0 0
        %11831 = vmatpush2.bf16.msra.mxu0 0
        %11832 = vmatprep.subr.bf16.mxu0 0
        %11833 = vmatpush2.bf16.msra.mxu0 0
        %11834 = vmatprep.subr.bf16.mxu0 0
        %11835 = vmatpush2.bf16.msra.mxu0 0
        %11836 = vmatprep.mubr.bf16.mxu0 0
        %11837 = vmatmul.mubr.bf16.gmra.mxu0 %v603
        %v11838 = vpop.f32.mrf.mxu0
        %v11839 = vadd.f32 %v11798, %v11838
        %v11840 = vpop.f32.mrf.mxu0
        %v11841 = vadd.f32 %v11800, %v11840
        %v11842 = vpop.f32.mrf.mxu0
        %v11843 = vpop.f32.mrf.mxu0
        %11844 = vdwg.mxu0
        %11845 = vmatprep.subr.bf16.mxu0 %v7109
        %11846 = vmatpush1.bf16.msra.mxu0 %v7108
        %11847 = vmatprep.subr.bf16.mxu0 %v7101
        %11848 = vmatpush1.bf16.msra.mxu0 %v7100
        %11849 = vmatprep.subr.bf16.mxu0 %v7093
        %11850 = vmatpush1.bf16.msra.mxu0 %v7092
        %11851 = vmatprep.subr.bf16.mxu0 %v7085
        %11852 = vmatpush1.bf16.msra.mxu0 %v7084
        %11853 = vmatprep.subr.bf16.mxu0 %v7077
        %11854 = vmatpush1.bf16.msra.mxu0 %v7076
        %11855 = vmatprep.subr.bf16.mxu0 %v7069
        %11856 = vmatpush1.bf16.msra.mxu0 %v7068
        %11857 = vmatprep.subr.bf16.mxu0 %v7061
        %11858 = vmatpush1.bf16.msra.mxu0 %v7060
        %11859 = vmatprep.subr.bf16.mxu0 %v7053
        %11860 = vmatpush1.bf16.msra.mxu0 %v7052
        %11861 = vmatprep.subr.bf16.mxu0 %v7173
        %11862 = vmatpush2.bf16.msra.mxu0 %v7172
        %11863 = vmatprep.subr.bf16.mxu0 %v7165
        %11864 = vmatpush2.bf16.msra.mxu0 %v7164
        %11865 = vmatprep.subr.bf16.mxu0 %v7157
        %11866 = vmatpush2.bf16.msra.mxu0 %v7156
        %11867 = vmatprep.subr.bf16.mxu0 %v7149
        %11868 = vmatpush2.bf16.msra.mxu0 %v7148
        %11869 = vmatprep.subr.bf16.mxu0 %v7141
        %11870 = vmatpush2.bf16.msra.mxu0 %v7140
        %11871 = vmatprep.subr.bf16.mxu0 %v7133
        %11872 = vmatpush2.bf16.msra.mxu0 %v7132
        %11873 = vmatprep.subr.bf16.mxu0 %v7125
        %11874 = vmatpush2.bf16.msra.mxu0 %v7124
        %11875 = vmatprep.subr.bf16.mxu0 %v7117
        %11876 = vmatpush2.bf16.msra.mxu0 %v7116
        %11877 = vmatprep.mubr.bf16.mxu0 %v580
        %11878 = vmatmul.mubr.bf16.gmra.mxu0 %v579
        %v11879 = vpop.f32.mrf.mxu0
        %v11880 = vadd.f32 %v2233, %v11879
        %v11881 = vpop.f32.mrf.mxu0
        %v11882 = vadd.f32 %v2237, %v11881
        %v11883 = vpop.f32.mrf.mxu0
        %v11884 = vpop.f32.mrf.mxu0
        %11885 = vdwg.mxu0
        %11886 = vmatprep.subr.bf16.mxu0 %v7237
        %11887 = vmatpush1.bf16.msra.mxu0 %v7236
        %11888 = vmatprep.subr.bf16.mxu0 %v7229
        %11889 = vmatpush1.bf16.msra.mxu0 %v7228
        %11890 = vmatprep.subr.bf16.mxu0 %v7221
        %11891 = vmatpush1.bf16.msra.mxu0 %v7220
        %11892 = vmatprep.subr.bf16.mxu0 %v7213
        %11893 = vmatpush1.bf16.msra.mxu0 %v7212
        %11894 = vmatprep.subr.bf16.mxu0 %v7205
        %11895 = vmatpush1.bf16.msra.mxu0 %v7204
        %11896 = vmatprep.subr.bf16.mxu0 %v7197
        %11897 = vmatpush1.bf16.msra.mxu0 %v7196
        %11898 = vmatprep.subr.bf16.mxu0 %v7189
        %11899 = vmatpush1.bf16.msra.mxu0 %v7188
        %11900 = vmatprep.subr.bf16.mxu0 %v7181
        %11901 = vmatpush1.bf16.msra.mxu0 %v7180
        %11902 = vmatprep.subr.bf16.mxu0 %v7301
        %11903 = vmatpush2.bf16.msra.mxu0 %v7300
        %11904 = vmatprep.subr.bf16.mxu0 %v7293
        %11905 = vmatpush2.bf16.msra.mxu0 %v7292
        %11906 = vmatprep.subr.bf16.mxu0 %v7285
        %11907 = vmatpush2.bf16.msra.mxu0 %v7284
        %11908 = vmatprep.subr.bf16.mxu0 %v7277
        %11909 = vmatpush2.bf16.msra.mxu0 %v7276
        %11910 = vmatprep.subr.bf16.mxu0 %v7269
        %11911 = vmatpush2.bf16.msra.mxu0 %v7268
        %11912 = vmatprep.subr.bf16.mxu0 %v7261
        %11913 = vmatpush2.bf16.msra.mxu0 %v7260
        %11914 = vmatprep.subr.bf16.mxu0 %v7253
        %11915 = vmatpush2.bf16.msra.mxu0 %v7252
        %11916 = vmatprep.subr.bf16.mxu0 %v7245
        %11917 = vmatpush2.bf16.msra.mxu0 %v7244
        %11918 = vmatprep.mubr.bf16.mxu0 %v582
        %11919 = vmatmul.mubr.bf16.gmra.mxu0 %v581
        %v11920 = vpop.f32.mrf.mxu0
        %v11921 = vadd.f32 %v11880, %v11920
        %v11922 = vpop.f32.mrf.mxu0
        %v11923 = vadd.f32 %v11882, %v11922
        %v11924 = vpop.f32.mrf.mxu0
        %v11925 = vpop.f32.mrf.mxu0
        %11926 = vdwg.mxu0
        %11927 = vmatprep.subr.bf16.mxu0 %v7365
        %11928 = vmatpush1.bf16.msra.mxu0 %v7364
        %11929 = vmatprep.subr.bf16.mxu0 %v7357
        %11930 = vmatpush1.bf16.msra.mxu0 %v7356
        %11931 = vmatprep.subr.bf16.mxu0 %v7349
        %11932 = vmatpush1.bf16.msra.mxu0 %v7348
        %11933 = vmatprep.subr.bf16.mxu0 %v7341
        %11934 = vmatpush1.bf16.msra.mxu0 %v7340
        %11935 = vmatprep.subr.bf16.mxu0 %v7333
        %11936 = vmatpush1.bf16.msra.mxu0 %v7332
        %11937 = vmatprep.subr.bf16.mxu0 %v7325
        %11938 = vmatpush1.bf16.msra.mxu0 %v7324
        %11939 = vmatprep.subr.bf16.mxu0 %v7317
        %11940 = vmatpush1.bf16.msra.mxu0 %v7316
        %11941 = vmatprep.subr.bf16.mxu0 %v7309
        %11942 = vmatpush1.bf16.msra.mxu0 %v7308
        %11943 = vmatprep.subr.bf16.mxu0 %v7429
        %11944 = vmatpush2.bf16.msra.mxu0 %v7428
        %11945 = vmatprep.subr.bf16.mxu0 %v7421
        %11946 = vmatpush2.bf16.msra.mxu0 %v7420
        %11947 = vmatprep.subr.bf16.mxu0 %v7413
        %11948 = vmatpush2.bf16.msra.mxu0 %v7412
        %11949 = vmatprep.subr.bf16.mxu0 %v7405
        %11950 = vmatpush2.bf16.msra.mxu0 %v7404
        %11951 = vmatprep.subr.bf16.mxu0 %v7397
        %11952 = vmatpush2.bf16.msra.mxu0 %v7396
        %11953 = vmatprep.subr.bf16.mxu0 %v7389
        %11954 = vmatpush2.bf16.msra.mxu0 %v7388
        %11955 = vmatprep.subr.bf16.mxu0 %v7381
        %11956 = vmatpush2.bf16.msra.mxu0 %v7380
        %11957 = vmatprep.subr.bf16.mxu0 %v7373
        %11958 = vmatpush2.bf16.msra.mxu0 %v7372
        %11959 = vmatprep.mubr.bf16.mxu0 %v584
        %11960 = vmatmul.mubr.bf16.gmra.mxu0 %v583
        %v11961 = vpop.f32.mrf.mxu0
        %v11962 = vadd.f32 %v11921, %v11961
        %v11963 = vpop.f32.mrf.mxu0
        %v11964 = vadd.f32 %v11923, %v11963
        %v11965 = vpop.f32.mrf.mxu0
        %v11966 = vpop.f32.mrf.mxu0
        %11967 = vdwg.mxu0
        %11968 = vmatprep.subr.bf16.mxu0 %v7493
        %11969 = vmatpush1.bf16.msra.mxu0 %v7492
        %11970 = vmatprep.subr.bf16.mxu0 %v7485
        %11971 = vmatpush1.bf16.msra.mxu0 %v7484
        %11972 = vmatprep.subr.bf16.mxu0 %v7477
        %11973 = vmatpush1.bf16.msra.mxu0 %v7476
        %11974 = vmatprep.subr.bf16.mxu0 %v7469
        %11975 = vmatpush1.bf16.msra.mxu0 %v7468
        %11976 = vmatprep.subr.bf16.mxu0 %v7461
        %11977 = vmatpush1.bf16.msra.mxu0 %v7460
        %11978 = vmatprep.subr.bf16.mxu0 %v7453
        %11979 = vmatpush1.bf16.msra.mxu0 %v7452
        %11980 = vmatprep.subr.bf16.mxu0 %v7445
        %11981 = vmatpush1.bf16.msra.mxu0 %v7444
        %11982 = vmatprep.subr.bf16.mxu0 %v7437
        %11983 = vmatpush1.bf16.msra.mxu0 %v7436
        %11984 = vmatprep.subr.bf16.mxu0 %v7557
        %11985 = vmatpush2.bf16.msra.mxu0 %v7556
        %11986 = vmatprep.subr.bf16.mxu0 %v7549
        %11987 = vmatpush2.bf16.msra.mxu0 %v7548
        %11988 = vmatprep.subr.bf16.mxu0 %v7541
        %11989 = vmatpush2.bf16.msra.mxu0 %v7540
        %11990 = vmatprep.subr.bf16.mxu0 %v7533
        %11991 = vmatpush2.bf16.msra.mxu0 %v7532
        %11992 = vmatprep.subr.bf16.mxu0 %v7525
        %11993 = vmatpush2.bf16.msra.mxu0 %v7524
        %11994 = vmatprep.subr.bf16.mxu0 %v7517
        %11995 = vmatpush2.bf16.msra.mxu0 %v7516
        %11996 = vmatprep.subr.bf16.mxu0 %v7509
        %11997 = vmatpush2.bf16.msra.mxu0 %v7508
        %11998 = vmatprep.subr.bf16.mxu0 %v7501
        %11999 = vmatpush2.bf16.msra.mxu0 %v7500
        %12000 = vmatprep.mubr.bf16.mxu0 %v586
        %12001 = vmatmul.mubr.bf16.gmra.mxu0 %v585
        %v12002 = vpop.f32.mrf.mxu0
        %v12003 = vadd.f32 %v11962, %v12002
        %v12004 = vpop.f32.mrf.mxu0
        %v12005 = vadd.f32 %v11964, %v12004
        %v12006 = vpop.f32.mrf.mxu0
        %v12007 = vpop.f32.mrf.mxu0
        %12008 = vdwg.mxu0
        %12009 = vmatprep.subr.bf16.mxu0 %v7621
        %12010 = vmatpush1.bf16.msra.mxu0 %v7620
        %12011 = vmatprep.subr.bf16.mxu0 %v7613
        %12012 = vmatpush1.bf16.msra.mxu0 %v7612
        %12013 = vmatprep.subr.bf16.mxu0 %v7605
        %12014 = vmatpush1.bf16.msra.mxu0 %v7604
        %12015 = vmatprep.subr.bf16.mxu0 %v7597
        %12016 = vmatpush1.bf16.msra.mxu0 %v7596
        %12017 = vmatprep.subr.bf16.mxu0 %v7589
        %12018 = vmatpush1.bf16.msra.mxu0 %v7588
        %12019 = vmatprep.subr.bf16.mxu0 %v7581
        %12020 = vmatpush1.bf16.msra.mxu0 %v7580
        %12021 = vmatprep.subr.bf16.mxu0 %v7573
        %12022 = vmatpush1.bf16.msra.mxu0 %v7572
        %12023 = vmatprep.subr.bf16.mxu0 %v7565
        %12024 = vmatpush1.bf16.msra.mxu0 %v7564
        %12025 = vmatprep.subr.bf16.mxu0 %v7685
        %12026 = vmatpush2.bf16.msra.mxu0 %v7684
        %12027 = vmatprep.subr.bf16.mxu0 %v7677
        %12028 = vmatpush2.bf16.msra.mxu0 %v7676
        %12029 = vmatprep.subr.bf16.mxu0 %v7669
        %12030 = vmatpush2.bf16.msra.mxu0 %v7668
        %12031 = vmatprep.subr.bf16.mxu0 %v7661
        %12032 = vmatpush2.bf16.msra.mxu0 %v7660
        %12033 = vmatprep.subr.bf16.mxu0 %v7653
        %12034 = vmatpush2.bf16.msra.mxu0 %v7652
        %12035 = vmatprep.subr.bf16.mxu0 %v7645
        %12036 = vmatpush2.bf16.msra.mxu0 %v7644
        %12037 = vmatprep.subr.bf16.mxu0 %v7637
        %12038 = vmatpush2.bf16.msra.mxu0 %v7636
        %12039 = vmatprep.subr.bf16.mxu0 %v7629
        %12040 = vmatpush2.bf16.msra.mxu0 %v7628
        %12041 = vmatprep.mubr.bf16.mxu0 %v588
        %12042 = vmatmul.mubr.bf16.gmra.mxu0 %v587
        %v12043 = vpop.f32.mrf.mxu0
        %v12044 = vadd.f32 %v12003, %v12043
        %v12045 = vpop.f32.mrf.mxu0
        %v12046 = vadd.f32 %v12005, %v12045
        %v12047 = vpop.f32.mrf.mxu0
        %v12048 = vpop.f32.mrf.mxu0
        %12049 = vdwg.mxu0
        %12050 = vmatprep.subr.bf16.mxu0 %v7749
        %12051 = vmatpush1.bf16.msra.mxu0 %v7748
        %12052 = vmatprep.subr.bf16.mxu0 %v7741
        %12053 = vmatpush1.bf16.msra.mxu0 %v7740
        %12054 = vmatprep.subr.bf16.mxu0 %v7733
        %12055 = vmatpush1.bf16.msra.mxu0 %v7732
        %12056 = vmatprep.subr.bf16.mxu0 %v7725
        %12057 = vmatpush1.bf16.msra.mxu0 %v7724
        %12058 = vmatprep.subr.bf16.mxu0 %v7717
        %12059 = vmatpush1.bf16.msra.mxu0 %v7716
        %12060 = vmatprep.subr.bf16.mxu0 %v7709
        %12061 = vmatpush1.bf16.msra.mxu0 %v7708
        %12062 = vmatprep.subr.bf16.mxu0 %v7701
        %12063 = vmatpush1.bf16.msra.mxu0 %v7700
        %12064 = vmatprep.subr.bf16.mxu0 %v7693
        %12065 = vmatpush1.bf16.msra.mxu0 %v7692
        %12066 = vmatprep.subr.bf16.mxu0 %v7813
        %12067 = vmatpush2.bf16.msra.mxu0 %v7812
        %12068 = vmatprep.subr.bf16.mxu0 %v7805
        %12069 = vmatpush2.bf16.msra.mxu0 %v7804
        %12070 = vmatprep.subr.bf16.mxu0 %v7797
        %12071 = vmatpush2.bf16.msra.mxu0 %v7796
        %12072 = vmatprep.subr.bf16.mxu0 %v7789
        %12073 = vmatpush2.bf16.msra.mxu0 %v7788
        %12074 = vmatprep.subr.bf16.mxu0 %v7781
        %12075 = vmatpush2.bf16.msra.mxu0 %v7780
        %12076 = vmatprep.subr.bf16.mxu0 %v7773
        %12077 = vmatpush2.bf16.msra.mxu0 %v7772
        %12078 = vmatprep.subr.bf16.mxu0 %v7765
        %12079 = vmatpush2.bf16.msra.mxu0 %v7764
        %12080 = vmatprep.subr.bf16.mxu0 %v7757
        %12081 = vmatpush2.bf16.msra.mxu0 %v7756
        %12082 = vmatprep.mubr.bf16.mxu0 %v590
        %12083 = vmatmul.mubr.bf16.gmra.mxu0 %v589
        %v12084 = vpop.f32.mrf.mxu0
        %v12085 = vadd.f32 %v12044, %v12084
        %v12086 = vpop.f32.mrf.mxu0
        %v12087 = vadd.f32 %v12046, %v12086
        %v12088 = vpop.f32.mrf.mxu0
        %v12089 = vpop.f32.mrf.mxu0
        %12090 = vdwg.mxu0
        %12091 = vmatprep.subr.bf16.mxu0 %v7877
        %12092 = vmatpush1.bf16.msra.mxu0 %v7876
        %12093 = vmatprep.subr.bf16.mxu0 %v7869
        %12094 = vmatpush1.bf16.msra.mxu0 %v7868
        %12095 = vmatprep.subr.bf16.mxu0 %v7861
        %12096 = vmatpush1.bf16.msra.mxu0 %v7860
        %12097 = vmatprep.subr.bf16.mxu0 %v7853
        %12098 = vmatpush1.bf16.msra.mxu0 %v7852
        %12099 = vmatprep.subr.bf16.mxu0 %v7845
        %12100 = vmatpush1.bf16.msra.mxu0 %v7844
        %12101 = vmatprep.subr.bf16.mxu0 %v7837
        %12102 = vmatpush1.bf16.msra.mxu0 %v7836
        %12103 = vmatprep.subr.bf16.mxu0 %v7829
        %12104 = vmatpush1.bf16.msra.mxu0 %v7828
        %12105 = vmatprep.subr.bf16.mxu0 %v7821
        %12106 = vmatpush1.bf16.msra.mxu0 %v7820
        %12107 = vmatprep.subr.bf16.mxu0 %v7941
        %12108 = vmatpush2.bf16.msra.mxu0 %v7940
        %12109 = vmatprep.subr.bf16.mxu0 %v7933
        %12110 = vmatpush2.bf16.msra.mxu0 %v7932
        %12111 = vmatprep.subr.bf16.mxu0 %v7925
        %12112 = vmatpush2.bf16.msra.mxu0 %v7924
        %12113 = vmatprep.subr.bf16.mxu0 %v7917
        %12114 = vmatpush2.bf16.msra.mxu0 %v7916
        %12115 = vmatprep.subr.bf16.mxu0 %v7909
        %12116 = vmatpush2.bf16.msra.mxu0 %v7908
        %12117 = vmatprep.subr.bf16.mxu0 %v7901
        %12118 = vmatpush2.bf16.msra.mxu0 %v7900
        %12119 = vmatprep.subr.bf16.mxu0 %v7893
        %12120 = vmatpush2.bf16.msra.mxu0 %v7892
        %12121 = vmatprep.subr.bf16.mxu0 %v7885
        %12122 = vmatpush2.bf16.msra.mxu0 %v7884
        %12123 = vmatprep.mubr.bf16.mxu0 %v592
        %12124 = vmatmul.mubr.bf16.gmra.mxu0 %v591
        %v12125 = vpop.f32.mrf.mxu0
        %v12126 = vadd.f32 %v12085, %v12125
        %v12127 = vpop.f32.mrf.mxu0
        %v12128 = vadd.f32 %v12087, %v12127
        %v12129 = vpop.f32.mrf.mxu0
        %v12130 = vpop.f32.mrf.mxu0
        %12131 = vdwg.mxu0
        %12132 = vmatprep.subr.bf16.mxu0 %v8005
        %12133 = vmatpush1.bf16.msra.mxu0 %v8004
        %12134 = vmatprep.subr.bf16.mxu0 %v7997
        %12135 = vmatpush1.bf16.msra.mxu0 %v7996
        %12136 = vmatprep.subr.bf16.mxu0 %v7989
        %12137 = vmatpush1.bf16.msra.mxu0 %v7988
        %12138 = vmatprep.subr.bf16.mxu0 %v7981
        %12139 = vmatpush1.bf16.msra.mxu0 %v7980
        %12140 = vmatprep.subr.bf16.mxu0 %v7973
        %12141 = vmatpush1.bf16.msra.mxu0 %v7972
        %12142 = vmatprep.subr.bf16.mxu0 %v7965
        %12143 = vmatpush1.bf16.msra.mxu0 %v7964
        %12144 = vmatprep.subr.bf16.mxu0 %v7957
        %12145 = vmatpush1.bf16.msra.mxu0 %v7956
        %12146 = vmatprep.subr.bf16.mxu0 %v7949
        %12147 = vmatpush1.bf16.msra.mxu0 %v7948
        %12148 = vmatprep.subr.bf16.mxu0 %v8069
        %12149 = vmatpush2.bf16.msra.mxu0 %v8068
        %12150 = vmatprep.subr.bf16.mxu0 %v8061
        %12151 = vmatpush2.bf16.msra.mxu0 %v8060
        %12152 = vmatprep.subr.bf16.mxu0 %v8053
        %12153 = vmatpush2.bf16.msra.mxu0 %v8052
        %12154 = vmatprep.subr.bf16.mxu0 %v8045
        %12155 = vmatpush2.bf16.msra.mxu0 %v8044
        %12156 = vmatprep.subr.bf16.mxu0 %v8037
        %12157 = vmatpush2.bf16.msra.mxu0 %v8036
        %12158 = vmatprep.subr.bf16.mxu0 %v8029
        %12159 = vmatpush2.bf16.msra.mxu0 %v8028
        %12160 = vmatprep.subr.bf16.mxu0 %v8021
        %12161 = vmatpush2.bf16.msra.mxu0 %v8020
        %12162 = vmatprep.subr.bf16.mxu0 %v8013
        %12163 = vmatpush2.bf16.msra.mxu0 %v8012
        %12164 = vmatprep.mubr.bf16.mxu0 %v594
        %12165 = vmatmul.mubr.bf16.gmra.mxu0 %v593
        %v12166 = vpop.f32.mrf.mxu0
        %v12167 = vadd.f32 %v12126, %v12166
        %v12168 = vpop.f32.mrf.mxu0
        %v12169 = vadd.f32 %v12128, %v12168
        %v12170 = vpop.f32.mrf.mxu0
        %v12171 = vpop.f32.mrf.mxu0
        %12172 = vdwg.mxu0
        %12173 = vmatprep.subr.bf16.mxu0 %v8133
        %12174 = vmatpush1.bf16.msra.mxu0 %v8132
        %12175 = vmatprep.subr.bf16.mxu0 %v8125
        %12176 = vmatpush1.bf16.msra.mxu0 %v8124
        %12177 = vmatprep.subr.bf16.mxu0 %v8117
        %12178 = vmatpush1.bf16.msra.mxu0 %v8116
        %12179 = vmatprep.subr.bf16.mxu0 %v8109
        %12180 = vmatpush1.bf16.msra.mxu0 %v8108
        %12181 = vmatprep.subr.bf16.mxu0 %v8101
        %12182 = vmatpush1.bf16.msra.mxu0 %v8100
        %12183 = vmatprep.subr.bf16.mxu0 %v8093
        %12184 = vmatpush1.bf16.msra.mxu0 %v8092
        %12185 = vmatprep.subr.bf16.mxu0 %v8085
        %12186 = vmatpush1.bf16.msra.mxu0 %v8084
        %12187 = vmatprep.subr.bf16.mxu0 %v8077
        %12188 = vmatpush1.bf16.msra.mxu0 %v8076
        %12189 = vmatprep.subr.bf16.mxu0 %v8197
        %12190 = vmatpush2.bf16.msra.mxu0 %v8196
        %12191 = vmatprep.subr.bf16.mxu0 %v8189
        %12192 = vmatpush2.bf16.msra.mxu0 %v8188
        %12193 = vmatprep.subr.bf16.mxu0 %v8181
        %12194 = vmatpush2.bf16.msra.mxu0 %v8180
        %12195 = vmatprep.subr.bf16.mxu0 %v8173
        %12196 = vmatpush2.bf16.msra.mxu0 %v8172
        %12197 = vmatprep.subr.bf16.mxu0 %v8165
        %12198 = vmatpush2.bf16.msra.mxu0 %v8164
        %12199 = vmatprep.subr.bf16.mxu0 %v8157
        %12200 = vmatpush2.bf16.msra.mxu0 %v8156
        %12201 = vmatprep.subr.bf16.mxu0 %v8149
        %12202 = vmatpush2.bf16.msra.mxu0 %v8148
        %12203 = vmatprep.subr.bf16.mxu0 %v8141
        %12204 = vmatpush2.bf16.msra.mxu0 %v8140
        %12205 = vmatprep.mubr.bf16.mxu0 %v596
        %12206 = vmatmul.mubr.bf16.gmra.mxu0 %v595
        %v12207 = vpop.f32.mrf.mxu0
        %v12208 = vadd.f32 %v12167, %v12207
        %v12209 = vpop.f32.mrf.mxu0
        %v12210 = vadd.f32 %v12169, %v12209
        %v12211 = vpop.f32.mrf.mxu0
        %v12212 = vpop.f32.mrf.mxu0
        %12213 = vdwg.mxu0
        %12214 = vmatprep.subr.bf16.mxu0 %v8261
        %12215 = vmatpush1.bf16.msra.mxu0 %v8260
        %12216 = vmatprep.subr.bf16.mxu0 %v8253
        %12217 = vmatpush1.bf16.msra.mxu0 %v8252
        %12218 = vmatprep.subr.bf16.mxu0 %v8245
        %12219 = vmatpush1.bf16.msra.mxu0 %v8244
        %12220 = vmatprep.subr.bf16.mxu0 %v8237
        %12221 = vmatpush1.bf16.msra.mxu0 %v8236
        %12222 = vmatprep.subr.bf16.mxu0 %v8229
        %12223 = vmatpush1.bf16.msra.mxu0 %v8228
        %12224 = vmatprep.subr.bf16.mxu0 %v8221
        %12225 = vmatpush1.bf16.msra.mxu0 %v8220
        %12226 = vmatprep.subr.bf16.mxu0 %v8213
        %12227 = vmatpush1.bf16.msra.mxu0 %v8212
        %12228 = vmatprep.subr.bf16.mxu0 %v8205
        %12229 = vmatpush1.bf16.msra.mxu0 %v8204
        %12230 = vmatprep.subr.bf16.mxu0 %v8325
        %12231 = vmatpush2.bf16.msra.mxu0 %v8324
        %12232 = vmatprep.subr.bf16.mxu0 %v8317
        %12233 = vmatpush2.bf16.msra.mxu0 %v8316
        %12234 = vmatprep.subr.bf16.mxu0 %v8309
        %12235 = vmatpush2.bf16.msra.mxu0 %v8308
        %12236 = vmatprep.subr.bf16.mxu0 %v8301
        %12237 = vmatpush2.bf16.msra.mxu0 %v8300
        %12238 = vmatprep.subr.bf16.mxu0 %v8293
        %12239 = vmatpush2.bf16.msra.mxu0 %v8292
        %12240 = vmatprep.subr.bf16.mxu0 %v8285
        %12241 = vmatpush2.bf16.msra.mxu0 %v8284
        %12242 = vmatprep.subr.bf16.mxu0 %v8277
        %12243 = vmatpush2.bf16.msra.mxu0 %v8276
        %12244 = vmatprep.subr.bf16.mxu0 %v8269
        %12245 = vmatpush2.bf16.msra.mxu0 %v8268
        %12246 = vmatprep.mubr.bf16.mxu0 %v598
        %12247 = vmatmul.mubr.bf16.gmra.mxu0 %v597
        %v12248 = vpop.f32.mrf.mxu0
        %v12249 = vadd.f32 %v12208, %v12248
        %v12250 = vpop.f32.mrf.mxu0
        %v12251 = vadd.f32 %v12210, %v12250
        %v12252 = vpop.f32.mrf.mxu0
        %v12253 = vpop.f32.mrf.mxu0
        %12254 = vdwg.mxu0
        %12255 = vmatprep.subr.bf16.mxu0 %v8389
        %12256 = vmatpush1.bf16.msra.mxu0 %v8388
        %12257 = vmatprep.subr.bf16.mxu0 %v8381
        %12258 = vmatpush1.bf16.msra.mxu0 %v8380
        %12259 = vmatprep.subr.bf16.mxu0 %v8373
        %12260 = vmatpush1.bf16.msra.mxu0 %v8372
        %12261 = vmatprep.subr.bf16.mxu0 %v8365
        %12262 = vmatpush1.bf16.msra.mxu0 %v8364
        %12263 = vmatprep.subr.bf16.mxu0 %v8357
        %12264 = vmatpush1.bf16.msra.mxu0 %v8356
        %12265 = vmatprep.subr.bf16.mxu0 %v8349
        %12266 = vmatpush1.bf16.msra.mxu0 %v8348
        %12267 = vmatprep.subr.bf16.mxu0 %v8341
        %12268 = vmatpush1.bf16.msra.mxu0 %v8340
        %12269 = vmatprep.subr.bf16.mxu0 %v8333
        %12270 = vmatpush1.bf16.msra.mxu0 %v8332
        %12271 = vmatprep.subr.bf16.mxu0 %v8453
        %12272 = vmatpush2.bf16.msra.mxu0 %v8452
        %12273 = vmatprep.subr.bf16.mxu0 %v8445
        %12274 = vmatpush2.bf16.msra.mxu0 %v8444
        %12275 = vmatprep.subr.bf16.mxu0 %v8437
        %12276 = vmatpush2.bf16.msra.mxu0 %v8436
        %12277 = vmatprep.subr.bf16.mxu0 %v8429
        %12278 = vmatpush2.bf16.msra.mxu0 %v8428
        %12279 = vmatprep.subr.bf16.mxu0 %v8421
        %12280 = vmatpush2.bf16.msra.mxu0 %v8420
        %12281 = vmatprep.subr.bf16.mxu0 %v8413
        %12282 = vmatpush2.bf16.msra.mxu0 %v8412
        %12283 = vmatprep.subr.bf16.mxu0 %v8405
        %12284 = vmatpush2.bf16.msra.mxu0 %v8404
        %12285 = vmatprep.subr.bf16.mxu0 %v8397
        %12286 = vmatpush2.bf16.msra.mxu0 %v8396
        %12287 = vmatprep.mubr.bf16.mxu0 %v600
        %12288 = vmatmul.mubr.bf16.gmra.mxu0 %v599
        %v12289 = vpop.f32.mrf.mxu0
        %v12290 = vadd.f32 %v12249, %v12289
        %v12291 = vpop.f32.mrf.mxu0
        %v12292 = vadd.f32 %v12251, %v12291
        %v12293 = vpop.f32.mrf.mxu0
        %v12294 = vpop.f32.mrf.mxu0
        %12295 = vdwg.mxu0
        %12296 = vmatprep.subr.bf16.mxu0 %v8517
        %12297 = vmatpush1.bf16.msra.mxu0 %v8516
        %12298 = vmatprep.subr.bf16.mxu0 %v8509
        %12299 = vmatpush1.bf16.msra.mxu0 %v8508
        %12300 = vmatprep.subr.bf16.mxu0 %v8501
        %12301 = vmatpush1.bf16.msra.mxu0 %v8500
        %12302 = vmatprep.subr.bf16.mxu0 %v8493
        %12303 = vmatpush1.bf16.msra.mxu0 %v8492
        %12304 = vmatprep.subr.bf16.mxu0 %v8485
        %12305 = vmatpush1.bf16.msra.mxu0 %v8484
        %12306 = vmatprep.subr.bf16.mxu0 %v8477
        %12307 = vmatpush1.bf16.msra.mxu0 %v8476
        %12308 = vmatprep.subr.bf16.mxu0 %v8469
        %12309 = vmatpush1.bf16.msra.mxu0 %v8468
        %12310 = vmatprep.subr.bf16.mxu0 %v8461
        %12311 = vmatpush1.bf16.msra.mxu0 %v8460
        %12312 = vmatprep.subr.bf16.mxu0 %v8581
        %12313 = vmatpush2.bf16.msra.mxu0 %v8580
        %12314 = vmatprep.subr.bf16.mxu0 %v8573
        %12315 = vmatpush2.bf16.msra.mxu0 %v8572
        %12316 = vmatprep.subr.bf16.mxu0 %v8565
        %12317 = vmatpush2.bf16.msra.mxu0 %v8564
        %12318 = vmatprep.subr.bf16.mxu0 %v8557
        %12319 = vmatpush2.bf16.msra.mxu0 %v8556
        %12320 = vmatprep.subr.bf16.mxu0 %v8549
        %12321 = vmatpush2.bf16.msra.mxu0 %v8548
        %12322 = vmatprep.subr.bf16.mxu0 %v8541
        %12323 = vmatpush2.bf16.msra.mxu0 %v8540
        %12324 = vmatprep.subr.bf16.mxu0 %v8533
        %12325 = vmatpush2.bf16.msra.mxu0 %v8532
        %12326 = vmatprep.subr.bf16.mxu0 %v8525
        %12327 = vmatpush2.bf16.msra.mxu0 %v8524
        %12328 = vmatprep.mubr.bf16.mxu0 %v602
        %12329 = vmatmul.mubr.bf16.gmra.mxu0 %v601
        %v12330 = vpop.f32.mrf.mxu0
        %v12331 = vadd.f32 %v12290, %v12330
        %v12332 = vpop.f32.mrf.mxu0
        %v12333 = vadd.f32 %v12292, %v12332
        %v12334 = vpop.f32.mrf.mxu0
        %v12335 = vpop.f32.mrf.mxu0
        %12336 = vdwg.mxu0
        %12337 = vmatprep.subr.bf16.mxu0 %v8645
        %12338 = vmatpush1.bf16.msra.mxu0 %v8644
        %12339 = vmatprep.subr.bf16.mxu0 %v8637
        %12340 = vmatpush1.bf16.msra.mxu0 %v8636
        %12341 = vmatprep.subr.bf16.mxu0 %v8629
        %12342 = vmatpush1.bf16.msra.mxu0 %v8628
        %12343 = vmatprep.subr.bf16.mxu0 %v8621
        %12344 = vmatpush1.bf16.msra.mxu0 %v8620
        %12345 = vmatprep.subr.bf16.mxu0 %v8613
        %12346 = vmatpush1.bf16.msra.mxu0 %v8612
        %12347 = vmatprep.subr.bf16.mxu0 %v8605
        %12348 = vmatpush1.bf16.msra.mxu0 %v8604
        %12349 = vmatprep.subr.bf16.mxu0 %v8597
        %12350 = vmatpush1.bf16.msra.mxu0 %v8596
        %12351 = vmatprep.subr.bf16.mxu0 %v8589
        %12352 = vmatpush1.bf16.msra.mxu0 %v8588
        %12353 = vmatprep.subr.bf16.mxu0 0
        %12354 = vmatpush2.bf16.msra.mxu0 0
        %12355 = vmatprep.subr.bf16.mxu0 0
        %12356 = vmatpush2.bf16.msra.mxu0 0
        %12357 = vmatprep.subr.bf16.mxu0 0
        %12358 = vmatpush2.bf16.msra.mxu0 0
        %12359 = vmatprep.subr.bf16.mxu0 0
        %12360 = vmatpush2.bf16.msra.mxu0 0
        %12361 = vmatprep.subr.bf16.mxu0 0
        %12362 = vmatpush2.bf16.msra.mxu0 0
        %12363 = vmatprep.subr.bf16.mxu0 0
        %12364 = vmatpush2.bf16.msra.mxu0 0
        %12365 = vmatprep.subr.bf16.mxu0 0
        %12366 = vmatpush2.bf16.msra.mxu0 0
        %12367 = vmatprep.subr.bf16.mxu0 0
        %12368 = vmatpush2.bf16.msra.mxu0 0
        %12369 = vmatprep.mubr.bf16.mxu0 0
        %12370 = vmatmul.mubr.bf16.gmra.mxu0 %v603
        %v12371 = vpop.f32.mrf.mxu0
        %v12372 = vadd.f32 %v12331, %v12371
        %v12373 = vpop.f32.mrf.mxu0
        %v12374 = vadd.f32 %v12333, %v12373
        %v12375 = vpop.f32.mrf.mxu0
        %v12376 = vpop.f32.mrf.mxu0
        %12377 = vdwg.mxu0
        %v12378 = vmax.f32 %v10773, 0.0
        %v12379 = vmax.f32 %v10775, 0.0
        %v12380 = vmax.f32 %v11306, 0.0
        %v12381 = vmax.f32 %v11308, 0.0
        %v12382 = vmax.f32 %v11839, 0.0
        %v12383 = vmax.f32 %v11841, 0.0
        %v12384 = vmax.f32 %v12372, 0.0
        %v12385 = vmax.f32 %v12374, 0.0
        %s12386 = sld [smem:[#allocation4]]
        %v12387 = vlaneseq
        %v12388 = vshrl.u32 %v12387, 7
        %v12389 = vstv %s12386
        %vm12390 = vcmp.lt.s32.totalorder %v12388, %v12389
        %v12391 = vsel %vm12390, 1, 0
        %v12392 = vcvt.s32.f32 %v12391
        %s12393 = scvt.s32.f32 %s12386
        %v12394 = vmul.f32 %v12378, %v12392
        %v12395 = vmul.f32 %v12379, %v12392
        %v12396 = vmul.f32 %v12380, %v12392
        %v12397 = vmul.f32 %v12381, %v12392
        %v12398 = vmul.f32 %v12382, %v12392
        %v12399 = vmul.f32 %v12383, %v12392
        %v12400 = vmul.f32 %v12384, %v12392
        %v12401 = vmul.f32 %v12385, %v12392
        %v12402 = vrot.slane %v12394, 4
        %v12403 = vadd.f32 %v12394, %v12402
        %v12404 = vrot.slane %v12403, 2
        %v12405 = vadd.f32 %v12403, %v12404
        %v12406 = vrot.slane %v12405, 1
        %v12407 = vadd.f32 %v12405, %v12406
        %v12408 = vrot.slane %v12395, 4
        %v12409 = vadd.f32 %v12395, %v12408
        %v12410 = vrot.slane %v12409, 2
        %v12411 = vadd.f32 %v12409, %v12410
        %v12412 = vrot.slane %v12411, 1
        %v12413 = vadd.f32 %v12411, %v12412
        %v12414 = vrot.slane %v12396, 4
        %v12415 = vadd.f32 %v12396, %v12414
        %v12416 = vrot.slane %v12415, 2
        %v12417 = vadd.f32 %v12415, %v12416
        %v12418 = vrot.slane %v12417, 1
        %v12419 = vadd.f32 %v12417, %v12418
        %v12420 = vrot.slane %v12397, 4
        %v12421 = vadd.f32 %v12397, %v12420
        %v12422 = vrot.slane %v12421, 2
        %v12423 = vadd.f32 %v12421, %v12422
        %v12424 = vrot.slane %v12423, 1
        %v12425 = vadd.f32 %v12423, %v12424
        %v12426 = vrot.slane %v12398, 4
        %v12427 = vadd.f32 %v12398, %v12426
        %v12428 = vrot.slane %v12427, 2
        %v12429 = vadd.f32 %v12427, %v12428
        %v12430 = vrot.slane %v12429, 1
        %v12431 = vadd.f32 %v12429, %v12430
        %v12432 = vrot.slane %v12399, 4
        %v12433 = vadd.f32 %v12399, %v12432
        %v12434 = vrot.slane %v12433, 2
        %v12435 = vadd.f32 %v12433, %v12434
        %v12436 = vrot.slane %v12435, 1
        %v12437 = vadd.f32 %v12435, %v12436
        %v12438 = vrot.slane %v12400, 4
        %v12439 = vadd.f32 %v12400, %v12438
        %v12440 = vrot.slane %v12439, 2
        %v12441 = vadd.f32 %v12439, %v12440
        %v12442 = vrot.slane %v12441, 1
        %v12443 = vadd.f32 %v12441, %v12442
        %v12444 = vrot.slane %v12401, 4
        %v12445 = vadd.f32 %v12401, %v12444
        %v12446 = vrot.slane %v12445, 2
        %v12447 = vadd.f32 %v12445, %v12446
        %v12448 = vrot.slane %v12447, 1
        %v12449 = vadd.f32 %v12447, %v12448
        %v12450 = vstv %s12393
        %v12451 = vrcp.pop %v12450
        %v12452 = vmul.f32 %v12407, %v12451
        %v12453 = vmul.f32 %v12413, %v12451
        %v12454 = vmul.f32 %v12419, %v12451
        %v12455 = vmul.f32 %v12425, %v12451
        %v12456 = vmul.f32 %v12431, %v12451
        %v12457 = vmul.f32 %v12437, %v12451
        %v12458 = vmul.f32 %v12443, %v12451
        %v12459 = vmul.f32 %v12449, %v12451
        %v12460 = vsub.f32 %v12378, %v12452
        %v12461 = vsub.f32 %v12379, %v12453
        %v12462 = vsub.f32 %v12380, %v12454
        %v12463 = vsub.f32 %v12381, %v12455
        %v12464 = vsub.f32 %v12382, %v12456
        %v12465 = vsub.f32 %v12383, %v12457
        %v12466 = vsub.f32 %v12384, %v12458
        %v12467 = vsub.f32 %v12385, %v12459
        %v12468 = vmul.f32 %v12460, %v12392
        %v12469 = vmul.f32 %v12461, %v12392
        %v12470 = vmul.f32 %v12462, %v12392
        %v12471 = vmul.f32 %v12463, %v12392
        %v12472 = vmul.f32 %v12464, %v12392
        %v12473 = vmul.f32 %v12465, %v12392
        %v12474 = vmul.f32 %v12466, %v12392
        %v12475 = vmul.f32 %v12467, %v12392
        %v12476 = vmul.f32 %v12468, %v12468
        %v12477 = vmul.f32 %v12469, %v12469
        %v12478 = vmul.f32 %v12470, %v12470
        %v12479 = vmul.f32 %v12471, %v12471
        %v12480 = vmul.f32 %v12472, %v12472
        %v12481 = vmul.f32 %v12473, %v12473
        %v12482 = vmul.f32 %v12474, %v12474
        %v12483 = vmul.f32 %v12475, %v12475
        %v12484 = vrot.slane %v12476, 4
        %v12485 = vadd.f32 %v12476, %v12484
        %v12486 = vrot.slane %v12485, 2
        %v12487 = vadd.f32 %v12485, %v12486
        %v12488 = vrot.slane %v12487, 1
        %v12489 = vadd.f32 %v12487, %v12488
        %v12490 = vrot.slane %v12477, 4
        %v12491 = vadd.f32 %v12477, %v12490
        %v12492 = vrot.slane %v12491, 2
        %v12493 = vadd.f32 %v12491, %v12492
        %v12494 = vrot.slane %v12493, 1
        %v12495 = vadd.f32 %v12493, %v12494
        %v12496 = vrot.slane %v12478, 4
        %v12497 = vadd.f32 %v12478, %v12496
        %v12498 = vrot.slane %v12497, 2
        %v12499 = vadd.f32 %v12497, %v12498
        %v12500 = vrot.slane %v12499, 1
        %v12501 = vadd.f32 %v12499, %v12500
        %v12502 = vrot.slane %v12479, 4
        %v12503 = vadd.f32 %v12479, %v12502
        %v12504 = vrot.slane %v12503, 2
        %v12505 = vadd.f32 %v12503, %v12504
        %v12506 = vrot.slane %v12505, 1
        %v12507 = vadd.f32 %v12505, %v12506
        %v12508 = vrot.slane %v12480, 4
        %v12509 = vadd.f32 %v12480, %v12508
        %v12510 = vrot.slane %v12509, 2
        %v12511 = vadd.f32 %v12509, %v12510
        %v12512 = vrot.slane %v12511, 1
        %v12513 = vadd.f32 %v12511, %v12512
        %v12514 = vrot.slane %v12481, 4
        %v12515 = vadd.f32 %v12481, %v12514
        %v12516 = vrot.slane %v12515, 2
        %v12517 = vadd.f32 %v12515, %v12516
        %v12518 = vrot.slane %v12517, 1
        %v12519 = vadd.f32 %v12517, %v12518
        %v12520 = vrot.slane %v12482, 4
        %v12521 = vadd.f32 %v12482, %v12520
        %v12522 = vrot.slane %v12521, 2
        %v12523 = vadd.f32 %v12521, %v12522
        %v12524 = vrot.slane %v12523, 1
        %v12525 = vadd.f32 %v12523, %v12524
        %v12526 = vrot.slane %v12483, 4
        %v12527 = vadd.f32 %v12483, %v12526
        %v12528 = vrot.slane %v12527, 2
        %v12529 = vadd.f32 %v12527, %v12528
        %v12530 = vrot.slane %v12529, 1
        %v12531 = vadd.f32 %v12529, %v12530
        %v12532 = vmul.f32 %v12489, %v12451
        %v12533 = vmul.f32 %v12495, %v12451
        %v12534 = vmul.f32 %v12501, %v12451
        %v12535 = vmul.f32 %v12507, %v12451
        %v12536 = vmul.f32 %v12513, %v12451
        %v12537 = vmul.f32 %v12519, %v12451
        %v12538 = vmul.f32 %v12525, %v12451
        %v12539 = vmul.f32 %v12531, %v12451
        %v12540 = vadd.f32 %v12532, 1e-05
        %v12541 = vadd.f32 %v12533, 1e-05
        %v12542 = vadd.f32 %v12534, 1e-05
        %v12543 = vadd.f32 %v12535, 1e-05
        %v12544 = vadd.f32 %v12536, 1e-05
        %v12545 = vadd.f32 %v12537, 1e-05
        %v12546 = vadd.f32 %v12538, 1e-05
        %v12547 = vadd.f32 %v12539, 1e-05
        %v12548 = vrsqrt.pop %v12540
        %v12549 = vrsqrt.pop %v12541
        %v12550 = vrsqrt.pop %v12542
        %v12551 = vrsqrt.pop %v12543
        %v12552 = vrsqrt.pop %v12544
        %v12553 = vrsqrt.pop %v12545
        %v12554 = vrsqrt.pop %v12546
        %v12555 = vrsqrt.pop %v12547
        %v12556 = vmul.f32 %v12460, %v12548
        %v12557 = vmul.f32 %v12461, %v12549
        %v12558 = vmul.f32 %v12462, %v12550
        %v12559 = vmul.f32 %v12463, %v12551
        %v12560 = vmul.f32 %v12464, %v12552
        %v12561 = vmul.f32 %v12465, %v12553
        %v12562 = vmul.f32 %v12466, %v12554
        %v12563 = vmul.f32 %v12467, %v12555
        %v12564 = vld [vmem:[%s462] sm:$0xff]
        %v12566 = vlaneseq
        %v12567 = vshrl.u32 %v12566, 7
        %v12568 = vsub.s32 0, %v12567
        %v12569 = vrot.slane %v12564, %v12568
        %v12570 = vlaneseq
        %v12571 = vshrl.u32 %v12570, 7
        %v12572 = vsub.s32 1, %v12571
        %v12573 = vrot.slane %v12564, %v12572
        %v12574 = vlaneseq
        %v12575 = vshrl.u32 %v12574, 7
        %v12576 = vsub.s32 2, %v12575
        %v12577 = vrot.slane %v12564, %v12576
        %v12578 = vlaneseq
        %v12579 = vshrl.u32 %v12578, 7
        %v12580 = vsub.s32 3, %v12579
        %v12581 = vrot.slane %v12564, %v12580
        %v12582 = vlaneseq
        %v12583 = vshrl.u32 %v12582, 7
        %v12584 = vsub.s32 4, %v12583
        %v12585 = vrot.slane %v12564, %v12584
        %v12586 = vlaneseq
        %v12587 = vshrl.u32 %v12586, 7
        %v12588 = vsub.s32 5, %v12587
        %v12589 = vrot.slane %v12564, %v12588
        %v12590 = vlaneseq
        %v12591 = vshrl.u32 %v12590, 7
        %v12592 = vsub.s32 6, %v12591
        %v12593 = vrot.slane %v12564, %v12592
        %v12594 = vlaneseq
        %v12595 = vshrl.u32 %v12594, 7
        %v12596 = vsub.s32 7, %v12595
        %v12597 = vrot.slane %v12564, %v12596
        %v12606 = vmul.f32 %v12556, %v12569
        %v12607 = vmul.f32 %v12557, %v12573
        %v12608 = vmul.f32 %v12558, %v12577
        %v12609 = vmul.f32 %v12559, %v12581
        %v12610 = vmul.f32 %v12560, %v12585
        %v12611 = vmul.f32 %v12561, %v12589
        %v12612 = vmul.f32 %v12562, %v12593
        %v12613 = vmul.f32 %v12563, %v12597
        %v12614 = vld [vmem:[%s471] sm:$0xff]
        %v12616 = vlaneseq
        %v12617 = vshrl.u32 %v12616, 7
        %v12618 = vsub.s32 0, %v12617
        %v12619 = vrot.slane %v12614, %v12618
        %v12620 = vlaneseq
        %v12621 = vshrl.u32 %v12620, 7
        %v12622 = vsub.s32 1, %v12621
        %v12623 = vrot.slane %v12614, %v12622
        %v12624 = vlaneseq
        %v12625 = vshrl.u32 %v12624, 7
        %v12626 = vsub.s32 2, %v12625
        %v12627 = vrot.slane %v12614, %v12626
        %v12628 = vlaneseq
        %v12629 = vshrl.u32 %v12628, 7
        %v12630 = vsub.s32 3, %v12629
        %v12631 = vrot.slane %v12614, %v12630
        %v12632 = vlaneseq
        %v12633 = vshrl.u32 %v12632, 7
        %v12634 = vsub.s32 4, %v12633
        %v12635 = vrot.slane %v12614, %v12634
        %v12636 = vlaneseq
        %v12637 = vshrl.u32 %v12636, 7
        %v12638 = vsub.s32 5, %v12637
        %v12639 = vrot.slane %v12614, %v12638
        %v12640 = vlaneseq
        %v12641 = vshrl.u32 %v12640, 7
        %v12642 = vsub.s32 6, %v12641
        %v12643 = vrot.slane %v12614, %v12642
        %v12644 = vlaneseq
        %v12645 = vshrl.u32 %v12644, 7
        %v12646 = vsub.s32 7, %v12645
        %v12647 = vrot.slane %v12614, %v12646
        %v12656 = vadd.f32 %v12606, %v12619
        %v12657 = vadd.f32 %v12607, %v12623
        %v12658 = vadd.f32 %v12608, %v12627
        %v12659 = vadd.f32 %v12609, %v12631
        %v12660 = vadd.f32 %v12610, %v12635
        %v12661 = vadd.f32 %v12611, %v12639
        %v12662 = vadd.f32 %v12612, %v12643
        %v12663 = vadd.f32 %v12613, %v12647
        %v12664 = vmax.f32 %v12656, 0.0
        %v12665 = vmax.f32 %v12657, 0.0
        %v12666 = vmax.f32 %v12658, 0.0
        %v12667 = vmax.f32 %v12659, 0.0
        %v12668 = vmax.f32 %v12660, 0.0
        %v12669 = vmax.f32 %v12661, 0.0
        %v12670 = vmax.f32 %v12662, 0.0
        %v12671 = vmax.f32 %v12663, 0.0
        %v12672 = vld [vmem:[#allocation2] sm:$0xff]
        %v12673 = vld [vmem:[#allocation2 + $0x8] sm:$0xff]
        %v12674 = vpack.c.bf16 %v12664, %v12664
        %v12675 = vpack.c.bf16 %v12665, %v12665
        %v12676 = vpack.c.bf16 %v12666, %v12666
        %v12677 = vpack.c.bf16 %v12667, %v12667
        %v12678 = vpack.c.bf16 %v12668, %v12668
        %v12679 = vpack.c.bf16 %v12669, %v12669
        %v12680 = vpack.c.bf16 %v12670, %v12670
        %v12681 = vpack.c.bf16 %v12671, %v12671
        %v12682 = vld [vmem:[%s480] sm:$0xff]
        %v12683 = vld [vmem:[%s480 + $0x8] sm:$0xff]
        %v12684 = vld [vmem:[%s480 + $0x10] sm:$0xff]
        %v12685 = vld [vmem:[%s480 + $0x18] sm:$0xff]
        %v12686 = vld [vmem:[%s480 + $0x20] sm:$0xff]
        %v12687 = vld [vmem:[%s480 + $0x28] sm:$0xff]
        %v12688 = vld [vmem:[%s480 + $0x30] sm:$0xff]
        %v12689 = vld [vmem:[%s480 + $0x38] sm:$0xff]
        %v12690 = vld [vmem:[%s480 + $0x40] sm:$0xff]
        %v12691 = vld [vmem:[%s480 + $0x48] sm:$0xff]
        %v12692 = vld [vmem:[%s480 + $0x50] sm:$0xff]
        %v12693 = vld [vmem:[%s480 + $0x58] sm:$0xff]
        %v12694 = vld [vmem:[%s480 + $0x60] sm:$0xff]
        %v12695 = vld [vmem:[%s480 + $0x68] sm:$0xff]
        %v12696 = vld [vmem:[%s480 + $0x70] sm:$0xff]
        %v12697 = vld [vmem:[%s480 + $0x78] sm:$0xff]
        %v12698 = vld [vmem:[%s480 + $0x80] sm:$0xff]
        %v12699 = vld [vmem:[%s480 + $0x88] sm:$0xff]
        %v12700 = vld [vmem:[%s480 + $0x90] sm:$0xff]
        %v12701 = vld [vmem:[%s480 + $0x98] sm:$0xff]
        %v12702 = vld [vmem:[%s480 + $0xa0] sm:$0xff]
        %v12703 = vld [vmem:[%s480 + $0xa8] sm:$0xff]
        %v12704 = vld [vmem:[%s480 + $0xb0] sm:$0xff]
        %v12705 = vld [vmem:[%s480 + $0xb8] sm:$0xff]
        %v12706 = vld [vmem:[%s480 + $0xc0] sm:$0xff]
        %v12707 = vld [vmem:[%s480 + $0xc8] sm:$0xff]
        %v12708 = vld [vmem:[%s480 + $0xd0] sm:$0xff]
        %v12709 = vld [vmem:[%s480 + $0xd8] sm:$0xff]
        %v12710 = vld [vmem:[%s480 + $0xe0] sm:$0xff]
        %v12711 = vld [vmem:[%s480 + $0xe8] sm:$0xff]
        %v12712 = vld [vmem:[%s480 + $0xf0] sm:$0xff]
        %v12713 = vld [vmem:[%s480 + $0xf8] sm:$0xff]
        %v12714 = vld [vmem:[%s480 + $0x100] sm:$0xff]
        %v12715 = vld [vmem:[%s480 + $0x108] sm:$0xff]
        %v12716 = vld [vmem:[%s480 + $0x110] sm:$0xff]
        %v12717 = vld [vmem:[%s480 + $0x118] sm:$0xff]
        %v12718 = vld [vmem:[%s480 + $0x120] sm:$0xff]
        %v12719 = vld [vmem:[%s480 + $0x128] sm:$0xff]
        %v12720 = vld [vmem:[%s480 + $0x130] sm:$0xff]
        %v12721 = vld [vmem:[%s480 + $0x138] sm:$0xff]
        %v12722 = vld [vmem:[%s480 + $0x140] sm:$0xff]
        %v12723 = vld [vmem:[%s480 + $0x148] sm:$0xff]
        %v12724 = vld [vmem:[%s480 + $0x150] sm:$0xff]
        %v12725 = vld [vmem:[%s480 + $0x158] sm:$0xff]
        %v12726 = vld [vmem:[%s480 + $0x160] sm:$0xff]
        %v12727 = vld [vmem:[%s480 + $0x168] sm:$0xff]
        %v12728 = vld [vmem:[%s480 + $0x170] sm:$0xff]
        %v12729 = vld [vmem:[%s480 + $0x178] sm:$0xff]
        %v12730 = vld [vmem:[%s480 + $0x180] sm:$0xff]
        %v12731 = vld [vmem:[%s480 + $0x188] sm:$0xff]
        %v12732 = vld [vmem:[%s480 + $0x190] sm:$0xff]
        %v12733 = vld [vmem:[%s480 + $0x198] sm:$0xff]
        %v12734 = vld [vmem:[%s480 + $0x1a0] sm:$0xff]
        %v12735 = vld [vmem:[%s480 + $0x1a8] sm:$0xff]
        %v12736 = vld [vmem:[%s480 + $0x1b0] sm:$0xff]
        %v12737 = vld [vmem:[%s480 + $0x1b8] sm:$0xff]
        %v12738 = vld [vmem:[%s480 + $0x1c0] sm:$0xff]
        %v12739 = vld [vmem:[%s480 + $0x1c8] sm:$0xff]
        %v12740 = vld [vmem:[%s480 + $0x1d0] sm:$0xff]
        %v12741 = vld [vmem:[%s480 + $0x1d8] sm:$0xff]
        %v12742 = vld [vmem:[%s480 + $0x1e0] sm:$0xff]
        %v12743 = vld [vmem:[%s480 + $0x1e8] sm:$0xff]
        %v12744 = vld [vmem:[%s480 + $0x1f0] sm:$0xff]
        %v12745 = vld [vmem:[%s480 + $0x1f8] sm:$0xff]
        %v12746 = vld [vmem:[%s480 + $0x200] sm:$0xff]
        %v12747 = vld [vmem:[%s480 + $0x208] sm:$0xff]
        %v12748 = vld [vmem:[%s480 + $0x210] sm:$0xff]
        %v12749 = vld [vmem:[%s480 + $0x218] sm:$0xff]
        %v12750 = vld [vmem:[%s480 + $0x220] sm:$0xff]
        %v12751 = vld [vmem:[%s480 + $0x228] sm:$0xff]
        %v12752 = vld [vmem:[%s480 + $0x230] sm:$0xff]
        %v12753 = vld [vmem:[%s480 + $0x238] sm:$0xff]
        %v12754 = vld [vmem:[%s480 + $0x240] sm:$0xff]
        %v12755 = vld [vmem:[%s480 + $0x248] sm:$0xff]
        %v12756 = vld [vmem:[%s480 + $0x250] sm:$0xff]
        %v12757 = vld [vmem:[%s480 + $0x258] sm:$0xff]
        %v12758 = vld [vmem:[%s480 + $0x260] sm:$0xff]
        %v12759 = vld [vmem:[%s480 + $0x268] sm:$0xff]
        %v12760 = vld [vmem:[%s480 + $0x270] sm:$0xff]
        %v12761 = vld [vmem:[%s480 + $0x278] sm:$0xff]
        %v12762 = vld [vmem:[%s480 + $0x280] sm:$0xff]
        %v12763 = vld [vmem:[%s480 + $0x288] sm:$0xff]
        %v12764 = vld [vmem:[%s480 + $0x290] sm:$0xff]
        %v12765 = vld [vmem:[%s480 + $0x298] sm:$0xff]
        %v12766 = vld [vmem:[%s480 + $0x2a0] sm:$0xff]
        %v12767 = vld [vmem:[%s480 + $0x2a8] sm:$0xff]
        %v12768 = vld [vmem:[%s480 + $0x2b0] sm:$0xff]
        %v12769 = vld [vmem:[%s480 + $0x2b8] sm:$0xff]
        %v12770 = vld [vmem:[%s480 + $0x2c0] sm:$0xff]
        %v12771 = vld [vmem:[%s480 + $0x2c8] sm:$0xff]
        %v12772 = vld [vmem:[%s480 + $0x2d0] sm:$0xff]
        %v12773 = vld [vmem:[%s480 + $0x2d8] sm:$0xff]
        %v12774 = vld [vmem:[%s480 + $0x2e0] sm:$0xff]
        %v12775 = vld [vmem:[%s480 + $0x2e8] sm:$0xff]
        %v12776 = vld [vmem:[%s480 + $0x2f0] sm:$0xff]
        %v12777 = vld [vmem:[%s480 + $0x2f8] sm:$0xff]
        %v12778 = vld [vmem:[%s480 + $0x300] sm:$0xff]
        %v12779 = vld [vmem:[%s480 + $0x308] sm:$0xff]
        %v12780 = vld [vmem:[%s480 + $0x310] sm:$0xff]
        %v12781 = vld [vmem:[%s480 + $0x318] sm:$0xff]
        %v12782 = vld [vmem:[%s480 + $0x320] sm:$0xff]
        %v12783 = vld [vmem:[%s480 + $0x328] sm:$0xff]
        %v12784 = vld [vmem:[%s480 + $0x330] sm:$0xff]
        %v12785 = vld [vmem:[%s480 + $0x338] sm:$0xff]
        %v12786 = vld [vmem:[%s480 + $0x340] sm:$0xff]
        %v12787 = vld [vmem:[%s480 + $0x348] sm:$0xff]
        %v12788 = vld [vmem:[%s480 + $0x350] sm:$0xff]
        %v12789 = vld [vmem:[%s480 + $0x358] sm:$0xff]
        %v12790 = vld [vmem:[%s480 + $0x360] sm:$0xff]
        %v12791 = vld [vmem:[%s480 + $0x368] sm:$0xff]
        %v12792 = vld [vmem:[%s480 + $0x370] sm:$0xff]
        %v12793 = vld [vmem:[%s480 + $0x378] sm:$0xff]
        %v12794 = vld [vmem:[%s480 + $0x380] sm:$0xff]
        %v12795 = vld [vmem:[%s480 + $0x388] sm:$0xff]
        %v12796 = vld [vmem:[%s480 + $0x390] sm:$0xff]
        %v12797 = vld [vmem:[%s480 + $0x398] sm:$0xff]
        %v12798 = vld [vmem:[%s480 + $0x3a0] sm:$0xff]
        %v12799 = vld [vmem:[%s480 + $0x3a8] sm:$0xff]
        %v12800 = vld [vmem:[%s480 + $0x3b0] sm:$0xff]
        %v12801 = vld [vmem:[%s480 + $0x3b8] sm:$0xff]
        %v12802 = vld [vmem:[%s480 + $0x3c0] sm:$0xff]
        %v12803 = vld [vmem:[%s480 + $0x3c8] sm:$0xff]
        %v12804 = vld [vmem:[%s480 + $0x3d0] sm:$0xff]
        %v12805 = vld [vmem:[%s480 + $0x3d8] sm:$0xff]
        %v12806 = vld [vmem:[%s480 + $0x3e0] sm:$0xff]
        %v12807 = vld [vmem:[%s480 + $0x3e8] sm:$0xff]
        %v12808 = vld [vmem:[%s480 + $0x3f0] sm:$0xff]
        %v12809 = vld [vmem:[%s480 + $0x3f8] sm:$0xff]
        %v12938 = vunpack.c.l.b16 %v12682
        %v12939 = vunpack.c.h.b16 %v12682
        %v12940 = vunpack.c.l.b16 %v12683
        %v12941 = vunpack.c.h.b16 %v12683
        %v12942 = vunpack.c.l.b16 %v12684
        %v12943 = vunpack.c.h.b16 %v12684
        %v12944 = vunpack.c.l.b16 %v12685
        %v12945 = vunpack.c.h.b16 %v12685
        %v12946 = vunpack.c.l.b16 %v12686
        %v12947 = vunpack.c.h.b16 %v12686
        %v12948 = vunpack.c.l.b16 %v12687
        %v12949 = vunpack.c.h.b16 %v12687
        %v12950 = vunpack.c.l.b16 %v12688
        %v12951 = vunpack.c.h.b16 %v12688
        %v12952 = vunpack.c.l.b16 %v12689
        %v12953 = vunpack.c.h.b16 %v12689
        %v12954 = vunpack.c.l.b16 %v12690
        %v12955 = vunpack.c.h.b16 %v12690
        %v12956 = vunpack.c.l.b16 %v12691
        %v12957 = vunpack.c.h.b16 %v12691
        %v12958 = vunpack.c.l.b16 %v12692
        %v12959 = vunpack.c.h.b16 %v12692
        %v12960 = vunpack.c.l.b16 %v12693
        %v12961 = vunpack.c.h.b16 %v12693
        %v12962 = vunpack.c.l.b16 %v12694
        %v12963 = vunpack.c.h.b16 %v12694
        %v12964 = vunpack.c.l.b16 %v12695
        %v12965 = vunpack.c.h.b16 %v12695
        %v12966 = vunpack.c.l.b16 %v12696
        %v12967 = vunpack.c.h.b16 %v12696
        %v12968 = vunpack.c.l.b16 %v12697
        %v12969 = vunpack.c.h.b16 %v12697
        %v12970 = vunpack.c.l.b16 %v12698
        %v12971 = vunpack.c.h.b16 %v12698
        %v12972 = vunpack.c.l.b16 %v12699
        %v12973 = vunpack.c.h.b16 %v12699
        %v12974 = vunpack.c.l.b16 %v12700
        %v12975 = vunpack.c.h.b16 %v12700
        %v12976 = vunpack.c.l.b16 %v12701
        %v12977 = vunpack.c.h.b16 %v12701
        %v12978 = vunpack.c.l.b16 %v12702
        %v12979 = vunpack.c.h.b16 %v12702
        %v12980 = vunpack.c.l.b16 %v12703
        %v12981 = vunpack.c.h.b16 %v12703
        %v12982 = vunpack.c.l.b16 %v12704
        %v12983 = vunpack.c.h.b16 %v12704
        %v12984 = vunpack.c.l.b16 %v12705
        %v12985 = vunpack.c.h.b16 %v12705
        %v12986 = vunpack.c.l.b16 %v12706
        %v12987 = vunpack.c.h.b16 %v12706
        %v12988 = vunpack.c.l.b16 %v12707
        %v12989 = vunpack.c.h.b16 %v12707
        %v12990 = vunpack.c.l.b16 %v12708
        %v12991 = vunpack.c.h.b16 %v12708
        %v12992 = vunpack.c.l.b16 %v12709
        %v12993 = vunpack.c.h.b16 %v12709
        %v12994 = vunpack.c.l.b16 %v12710
        %v12995 = vunpack.c.h.b16 %v12710
        %v12996 = vunpack.c.l.b16 %v12711
        %v12997 = vunpack.c.h.b16 %v12711
        %v12998 = vunpack.c.l.b16 %v12712
        %v12999 = vunpack.c.h.b16 %v12712
        %v13000 = vunpack.c.l.b16 %v12713
        %v13001 = vunpack.c.h.b16 %v12713
        %v13002 = vunpack.c.l.b16 %v12714
        %v13003 = vunpack.c.h.b16 %v12714
        %v13004 = vunpack.c.l.b16 %v12715
        %v13005 = vunpack.c.h.b16 %v12715
        %v13006 = vunpack.c.l.b16 %v12716
        %v13007 = vunpack.c.h.b16 %v12716
        %v13008 = vunpack.c.l.b16 %v12717
        %v13009 = vunpack.c.h.b16 %v12717
        %v13010 = vunpack.c.l.b16 %v12718
        %v13011 = vunpack.c.h.b16 %v12718
        %v13012 = vunpack.c.l.b16 %v12719
        %v13013 = vunpack.c.h.b16 %v12719
        %v13014 = vunpack.c.l.b16 %v12720
        %v13015 = vunpack.c.h.b16 %v12720
        %v13016 = vunpack.c.l.b16 %v12721
        %v13017 = vunpack.c.h.b16 %v12721
        %v13018 = vunpack.c.l.b16 %v12722
        %v13019 = vunpack.c.h.b16 %v12722
        %v13020 = vunpack.c.l.b16 %v12723
        %v13021 = vunpack.c.h.b16 %v12723
        %v13022 = vunpack.c.l.b16 %v12724
        %v13023 = vunpack.c.h.b16 %v12724
        %v13024 = vunpack.c.l.b16 %v12725
        %v13025 = vunpack.c.h.b16 %v12725
        %v13026 = vunpack.c.l.b16 %v12726
        %v13027 = vunpack.c.h.b16 %v12726
        %v13028 = vunpack.c.l.b16 %v12727
        %v13029 = vunpack.c.h.b16 %v12727
        %v13030 = vunpack.c.l.b16 %v12728
        %v13031 = vunpack.c.h.b16 %v12728
        %v13032 = vunpack.c.l.b16 %v12729
        %v13033 = vunpack.c.h.b16 %v12729
        %v13034 = vunpack.c.l.b16 %v12730
        %v13035 = vunpack.c.h.b16 %v12730
        %v13036 = vunpack.c.l.b16 %v12731
        %v13037 = vunpack.c.h.b16 %v12731
        %v13038 = vunpack.c.l.b16 %v12732
        %v13039 = vunpack.c.h.b16 %v12732
        %v13040 = vunpack.c.l.b16 %v12733
        %v13041 = vunpack.c.h.b16 %v12733
        %v13042 = vunpack.c.l.b16 %v12734
        %v13043 = vunpack.c.h.b16 %v12734
        %v13044 = vunpack.c.l.b16 %v12735
        %v13045 = vunpack.c.h.b16 %v12735
        %v13046 = vunpack.c.l.b16 %v12736
        %v13047 = vunpack.c.h.b16 %v12736
        %v13048 = vunpack.c.l.b16 %v12737
        %v13049 = vunpack.c.h.b16 %v12737
        %v13050 = vunpack.c.l.b16 %v12738
        %v13051 = vunpack.c.h.b16 %v12738
        %v13052 = vunpack.c.l.b16 %v12739
        %v13053 = vunpack.c.h.b16 %v12739
        %v13054 = vunpack.c.l.b16 %v12740
        %v13055 = vunpack.c.h.b16 %v12740
        %v13056 = vunpack.c.l.b16 %v12741
        %v13057 = vunpack.c.h.b16 %v12741
        %v13058 = vunpack.c.l.b16 %v12742
        %v13059 = vunpack.c.h.b16 %v12742
        %v13060 = vunpack.c.l.b16 %v12743
        %v13061 = vunpack.c.h.b16 %v12743
        %v13062 = vunpack.c.l.b16 %v12744
        %v13063 = vunpack.c.h.b16 %v12744
        %v13064 = vunpack.c.l.b16 %v12745
        %v13065 = vunpack.c.h.b16 %v12745
        %v13066 = vunpack.c.l.b16 %v12746
        %v13067 = vunpack.c.h.b16 %v12746
        %v13068 = vunpack.c.l.b16 %v12747
        %v13069 = vunpack.c.h.b16 %v12747
        %v13070 = vunpack.c.l.b16 %v12748
        %v13071 = vunpack.c.h.b16 %v12748
        %v13072 = vunpack.c.l.b16 %v12749
        %v13073 = vunpack.c.h.b16 %v12749
        %v13074 = vunpack.c.l.b16 %v12750
        %v13075 = vunpack.c.h.b16 %v12750
        %v13076 = vunpack.c.l.b16 %v12751
        %v13077 = vunpack.c.h.b16 %v12751
        %v13078 = vunpack.c.l.b16 %v12752
        %v13079 = vunpack.c.h.b16 %v12752
        %v13080 = vunpack.c.l.b16 %v12753
        %v13081 = vunpack.c.h.b16 %v12753
        %v13082 = vunpack.c.l.b16 %v12754
        %v13083 = vunpack.c.h.b16 %v12754
        %v13084 = vunpack.c.l.b16 %v12755
        %v13085 = vunpack.c.h.b16 %v12755
        %v13086 = vunpack.c.l.b16 %v12756
        %v13087 = vunpack.c.h.b16 %v12756
        %v13088 = vunpack.c.l.b16 %v12757
        %v13089 = vunpack.c.h.b16 %v12757
        %v13090 = vunpack.c.l.b16 %v12758
        %v13091 = vunpack.c.h.b16 %v12758
        %v13092 = vunpack.c.l.b16 %v12759
        %v13093 = vunpack.c.h.b16 %v12759
        %v13094 = vunpack.c.l.b16 %v12760
        %v13095 = vunpack.c.h.b16 %v12760
        %v13096 = vunpack.c.l.b16 %v12761
        %v13097 = vunpack.c.h.b16 %v12761
        %v13098 = vunpack.c.l.b16 %v12762
        %v13099 = vunpack.c.h.b16 %v12762
        %v13100 = vunpack.c.l.b16 %v12763
        %v13101 = vunpack.c.h.b16 %v12763
        %v13102 = vunpack.c.l.b16 %v12764
        %v13103 = vunpack.c.h.b16 %v12764
        %v13104 = vunpack.c.l.b16 %v12765
        %v13105 = vunpack.c.h.b16 %v12765
        %v13106 = vunpack.c.l.b16 %v12766
        %v13107 = vunpack.c.h.b16 %v12766
        %v13108 = vunpack.c.l.b16 %v12767
        %v13109 = vunpack.c.h.b16 %v12767
        %v13110 = vunpack.c.l.b16 %v12768
        %v13111 = vunpack.c.h.b16 %v12768
        %v13112 = vunpack.c.l.b16 %v12769
        %v13113 = vunpack.c.h.b16 %v12769
        %v13114 = vunpack.c.l.b16 %v12770
        %v13115 = vunpack.c.h.b16 %v12770
        %v13116 = vunpack.c.l.b16 %v12771
        %v13117 = vunpack.c.h.b16 %v12771
        %v13118 = vunpack.c.l.b16 %v12772
        %v13119 = vunpack.c.h.b16 %v12772
        %v13120 = vunpack.c.l.b16 %v12773
        %v13121 = vunpack.c.h.b16 %v12773
        %v13122 = vunpack.c.l.b16 %v12774
        %v13123 = vunpack.c.h.b16 %v12774
        %v13124 = vunpack.c.l.b16 %v12775
        %v13125 = vunpack.c.h.b16 %v12775
        %v13126 = vunpack.c.l.b16 %v12776
        %v13127 = vunpack.c.h.b16 %v12776
        %v13128 = vunpack.c.l.b16 %v12777
        %v13129 = vunpack.c.h.b16 %v12777
        %v13130 = vunpack.c.l.b16 %v12778
        %v13131 = vunpack.c.h.b16 %v12778
        %v13132 = vunpack.c.l.b16 %v12779
        %v13133 = vunpack.c.h.b16 %v12779
        %v13134 = vunpack.c.l.b16 %v12780
        %v13135 = vunpack.c.h.b16 %v12780
        %v13136 = vunpack.c.l.b16 %v12781
        %v13137 = vunpack.c.h.b16 %v12781
        %v13138 = vunpack.c.l.b16 %v12782
        %v13139 = vunpack.c.h.b16 %v12782
        %v13140 = vunpack.c.l.b16 %v12783
        %v13141 = vunpack.c.h.b16 %v12783
        %v13142 = vunpack.c.l.b16 %v12784
        %v13143 = vunpack.c.h.b16 %v12784
        %v13144 = vunpack.c.l.b16 %v12785
        %v13145 = vunpack.c.h.b16 %v12785
        %v13146 = vunpack.c.l.b16 %v12786
        %v13147 = vunpack.c.h.b16 %v12786
        %v13148 = vunpack.c.l.b16 %v12787
        %v13149 = vunpack.c.h.b16 %v12787
        %v13150 = vunpack.c.l.b16 %v12788
        %v13151 = vunpack.c.h.b16 %v12788
        %v13152 = vunpack.c.l.b16 %v12789
        %v13153 = vunpack.c.h.b16 %v12789
        %v13154 = vunpack.c.l.b16 %v12790
        %v13155 = vunpack.c.h.b16 %v12790
        %v13156 = vunpack.c.l.b16 %v12791
        %v13157 = vunpack.c.h.b16 %v12791
        %v13158 = vunpack.c.l.b16 %v12792
        %v13159 = vunpack.c.h.b16 %v12792
        %v13160 = vunpack.c.l.b16 %v12793
        %v13161 = vunpack.c.h.b16 %v12793
        %v13162 = vunpack.c.l.b16 %v12794
        %v13163 = vunpack.c.h.b16 %v12794
        %v13164 = vunpack.c.l.b16 %v12795
        %v13165 = vunpack.c.h.b16 %v12795
        %v13166 = vunpack.c.l.b16 %v12796
        %v13167 = vunpack.c.h.b16 %v12796
        %v13168 = vunpack.c.l.b16 %v12797
        %v13169 = vunpack.c.h.b16 %v12797
        %v13170 = vunpack.c.l.b16 %v12798
        %v13171 = vunpack.c.h.b16 %v12798
        %v13172 = vunpack.c.l.b16 %v12799
        %v13173 = vunpack.c.h.b16 %v12799
        %v13174 = vunpack.c.l.b16 %v12800
        %v13175 = vunpack.c.h.b16 %v12800
        %v13176 = vunpack.c.l.b16 %v12801
        %v13177 = vunpack.c.h.b16 %v12801
        %v13178 = vunpack.c.l.b16 %v12802
        %v13179 = vunpack.c.h.b16 %v12802
        %v13180 = vunpack.c.l.b16 %v12803
        %v13181 = vunpack.c.h.b16 %v12803
        %v13182 = vunpack.c.l.b16 %v12804
        %v13183 = vunpack.c.h.b16 %v12804
        %v13184 = vunpack.c.l.b16 %v12805
        %v13185 = vunpack.c.h.b16 %v12805
        %v13186 = vunpack.c.l.b16 %v12806
        %v13187 = vunpack.c.h.b16 %v12806
        %v13188 = vunpack.c.l.b16 %v12807
        %v13189 = vunpack.c.h.b16 %v12807
        %v13190 = vunpack.c.l.b16 %v12808
        %v13191 = vunpack.c.h.b16 %v12808
        %v13192 = vunpack.c.l.b16 %v12809
        %v13193 = vunpack.c.h.b16 %v12809
        %v13194 = vpack.c.b16 %v12940, %v12938
        %v13195 = vpack.c.b16 %v12941, %v12939
        %v13196 = vpack.c.b16 %v12944, %v12942
        %v13197 = vpack.c.b16 %v12945, %v12943
        %v13198 = vpack.c.b16 %v12948, %v12946
        %v13199 = vpack.c.b16 %v12949, %v12947
        %v13200 = vpack.c.b16 %v12952, %v12950
        %v13201 = vpack.c.b16 %v12953, %v12951
        %v13202 = vpack.c.b16 %v12956, %v12954
        %v13203 = vpack.c.b16 %v12957, %v12955
        %v13204 = vpack.c.b16 %v12960, %v12958
        %v13205 = vpack.c.b16 %v12961, %v12959
        %v13206 = vpack.c.b16 %v12964, %v12962
        %v13207 = vpack.c.b16 %v12965, %v12963
        %v13208 = vpack.c.b16 %v12968, %v12966
        %v13209 = vpack.c.b16 %v12969, %v12967
        %v13210 = vpack.c.b16 %v12972, %v12970
        %v13211 = vpack.c.b16 %v12973, %v12971
        %v13212 = vpack.c.b16 %v12976, %v12974
        %v13213 = vpack.c.b16 %v12977, %v12975
        %v13214 = vpack.c.b16 %v12980, %v12978
        %v13215 = vpack.c.b16 %v12981, %v12979
        %v13216 = vpack.c.b16 %v12984, %v12982
        %v13217 = vpack.c.b16 %v12985, %v12983
        %v13218 = vpack.c.b16 %v12988, %v12986
        %v13219 = vpack.c.b16 %v12989, %v12987
        %v13220 = vpack.c.b16 %v12992, %v12990
        %v13221 = vpack.c.b16 %v12993, %v12991
        %v13222 = vpack.c.b16 %v12996, %v12994
        %v13223 = vpack.c.b16 %v12997, %v12995
        %v13224 = vpack.c.b16 %v13000, %v12998
        %v13225 = vpack.c.b16 %v13001, %v12999
        %v13226 = vpack.c.b16 %v13004, %v13002
        %v13227 = vpack.c.b16 %v13005, %v13003
        %v13228 = vpack.c.b16 %v13008, %v13006
        %v13229 = vpack.c.b16 %v13009, %v13007
        %v13230 = vpack.c.b16 %v13012, %v13010
        %v13231 = vpack.c.b16 %v13013, %v13011
        %v13232 = vpack.c.b16 %v13016, %v13014
        %v13233 = vpack.c.b16 %v13017, %v13015
        %v13234 = vpack.c.b16 %v13020, %v13018
        %v13235 = vpack.c.b16 %v13021, %v13019
        %v13236 = vpack.c.b16 %v13024, %v13022
        %v13237 = vpack.c.b16 %v13025, %v13023
        %v13238 = vpack.c.b16 %v13028, %v13026
        %v13239 = vpack.c.b16 %v13029, %v13027
        %v13240 = vpack.c.b16 %v13032, %v13030
        %v13241 = vpack.c.b16 %v13033, %v13031
        %v13242 = vpack.c.b16 %v13036, %v13034
        %v13243 = vpack.c.b16 %v13037, %v13035
        %v13244 = vpack.c.b16 %v13040, %v13038
        %v13245 = vpack.c.b16 %v13041, %v13039
        %v13246 = vpack.c.b16 %v13044, %v13042
        %v13247 = vpack.c.b16 %v13045, %v13043
        %v13248 = vpack.c.b16 %v13048, %v13046
        %v13249 = vpack.c.b16 %v13049, %v13047
        %v13250 = vpack.c.b16 %v13052, %v13050
        %v13251 = vpack.c.b16 %v13053, %v13051
        %v13252 = vpack.c.b16 %v13056, %v13054
        %v13253 = vpack.c.b16 %v13057, %v13055
        %v13254 = vpack.c.b16 %v13060, %v13058
        %v13255 = vpack.c.b16 %v13061, %v13059
        %v13256 = vpack.c.b16 %v13064, %v13062
        %v13257 = vpack.c.b16 %v13065, %v13063
        %v13258 = vpack.c.b16 %v13068, %v13066
        %v13259 = vpack.c.b16 %v13069, %v13067
        %v13260 = vpack.c.b16 %v13072, %v13070
        %v13261 = vpack.c.b16 %v13073, %v13071
        %v13262 = vpack.c.b16 %v13076, %v13074
        %v13263 = vpack.c.b16 %v13077, %v13075
        %v13264 = vpack.c.b16 %v13080, %v13078
        %v13265 = vpack.c.b16 %v13081, %v13079
        %v13266 = vpack.c.b16 %v13084, %v13082
        %v13267 = vpack.c.b16 %v13085, %v13083
        %v13268 = vpack.c.b16 %v13088, %v13086
        %v13269 = vpack.c.b16 %v13089, %v13087
        %v13270 = vpack.c.b16 %v13092, %v13090
        %v13271 = vpack.c.b16 %v13093, %v13091
        %v13272 = vpack.c.b16 %v13096, %v13094
        %v13273 = vpack.c.b16 %v13097, %v13095
        %v13274 = vpack.c.b16 %v13100, %v13098
        %v13275 = vpack.c.b16 %v13101, %v13099
        %v13276 = vpack.c.b16 %v13104, %v13102
        %v13277 = vpack.c.b16 %v13105, %v13103
        %v13278 = vpack.c.b16 %v13108, %v13106
        %v13279 = vpack.c.b16 %v13109, %v13107
        %v13280 = vpack.c.b16 %v13112, %v13110
        %v13281 = vpack.c.b16 %v13113, %v13111
        %v13282 = vpack.c.b16 %v13116, %v13114
        %v13283 = vpack.c.b16 %v13117, %v13115
        %v13284 = vpack.c.b16 %v13120, %v13118
        %v13285 = vpack.c.b16 %v13121, %v13119
        %v13286 = vpack.c.b16 %v13124, %v13122
        %v13287 = vpack.c.b16 %v13125, %v13123
        %v13288 = vpack.c.b16 %v13128, %v13126
        %v13289 = vpack.c.b16 %v13129, %v13127
        %v13290 = vpack.c.b16 %v13132, %v13130
        %v13291 = vpack.c.b16 %v13133, %v13131
        %v13292 = vpack.c.b16 %v13136, %v13134
        %v13293 = vpack.c.b16 %v13137, %v13135
        %v13294 = vpack.c.b16 %v13140, %v13138
        %v13295 = vpack.c.b16 %v13141, %v13139
        %v13296 = vpack.c.b16 %v13144, %v13142
        %v13297 = vpack.c.b16 %v13145, %v13143
        %v13298 = vpack.c.b16 %v13148, %v13146
        %v13299 = vpack.c.b16 %v13149, %v13147
        %v13300 = vpack.c.b16 %v13152, %v13150
        %v13301 = vpack.c.b16 %v13153, %v13151
        %v13302 = vpack.c.b16 %v13156, %v13154
        %v13303 = vpack.c.b16 %v13157, %v13155
        %v13304 = vpack.c.b16 %v13160, %v13158
        %v13305 = vpack.c.b16 %v13161, %v13159
        %v13306 = vpack.c.b16 %v13164, %v13162
        %v13307 = vpack.c.b16 %v13165, %v13163
        %v13308 = vpack.c.b16 %v13168, %v13166
        %v13309 = vpack.c.b16 %v13169, %v13167
        %v13310 = vpack.c.b16 %v13172, %v13170
        %v13311 = vpack.c.b16 %v13173, %v13171
        %v13312 = vpack.c.b16 %v13176, %v13174
        %v13313 = vpack.c.b16 %v13177, %v13175
        %v13314 = vpack.c.b16 %v13180, %v13178
        %v13315 = vpack.c.b16 %v13181, %v13179
        %v13316 = vpack.c.b16 %v13184, %v13182
        %v13317 = vpack.c.b16 %v13185, %v13183
        %v13318 = vpack.c.b16 %v13188, %v13186
        %v13319 = vpack.c.b16 %v13189, %v13187
        %v13320 = vpack.c.b16 %v13192, %v13190
        %v13321 = vpack.c.b16 %v13193, %v13191
        %13450 = vmatprep.subr.bf16.mxu0 %v13209
        %13451 = vmatpush1.bf16.msra.mxu0 %v13208
        %13452 = vmatprep.subr.bf16.mxu0 %v13207
        %13453 = vmatpush1.bf16.msra.mxu0 %v13206
        %13454 = vmatprep.subr.bf16.mxu0 %v13205
        %13455 = vmatpush1.bf16.msra.mxu0 %v13204
        %13456 = vmatprep.subr.bf16.mxu0 %v13203
        %13457 = vmatpush1.bf16.msra.mxu0 %v13202
        %13458 = vmatprep.subr.bf16.mxu0 %v13201
        %13459 = vmatpush1.bf16.msra.mxu0 %v13200
        %13460 = vmatprep.subr.bf16.mxu0 %v13199
        %13461 = vmatpush1.bf16.msra.mxu0 %v13198
        %13462 = vmatprep.subr.bf16.mxu0 %v13197
        %13463 = vmatpush1.bf16.msra.mxu0 %v13196
        %13464 = vmatprep.subr.bf16.mxu0 %v13195
        %13465 = vmatpush1.bf16.msra.mxu0 %v13194
        %13466 = vmatprep.subr.bf16.mxu0 %v13225
        %13467 = vmatpush2.bf16.msra.mxu0 %v13224
        %13468 = vmatprep.subr.bf16.mxu0 %v13223
        %13469 = vmatpush2.bf16.msra.mxu0 %v13222
        %13470 = vmatprep.subr.bf16.mxu0 %v13221
        %13471 = vmatpush2.bf16.msra.mxu0 %v13220
        %13472 = vmatprep.subr.bf16.mxu0 %v13219
        %13473 = vmatpush2.bf16.msra.mxu0 %v13218
        %13474 = vmatprep.subr.bf16.mxu0 %v13217
        %13475 = vmatpush2.bf16.msra.mxu0 %v13216
        %13476 = vmatprep.subr.bf16.mxu0 %v13215
        %13477 = vmatpush2.bf16.msra.mxu0 %v13214
        %13478 = vmatprep.subr.bf16.mxu0 %v13213
        %13479 = vmatpush2.bf16.msra.mxu0 %v13212
        %13480 = vmatprep.subr.bf16.mxu0 %v13211
        %13481 = vmatpush2.bf16.msra.mxu0 %v13210
        %13482 = vmatprep.mubr.bf16.mxu0 %v12675
        %13483 = vmatmul.mubr.bf16.gmra.mxu0 %v12674
        %v13484 = vpop.f32.mrf.mxu0
        %v13485 = vadd.f32 0.0, %v13484
        %v13486 = vpop.f32.mrf.mxu0
        %v13487 = vadd.f32 0.0, %v13486
        %v13488 = vpop.f32.mrf.mxu0
        %v13489 = vpop.f32.mrf.mxu0
        %13490 = vdwg.mxu0
        %13491 = vmatprep.subr.bf16.mxu0 %v13241
        %13492 = vmatpush1.bf16.msra.mxu0 %v13240
        %13493 = vmatprep.subr.bf16.mxu0 %v13239
        %13494 = vmatpush1.bf16.msra.mxu0 %v13238
        %13495 = vmatprep.subr.bf16.mxu0 %v13237
        %13496 = vmatpush1.bf16.msra.mxu0 %v13236
        %13497 = vmatprep.subr.bf16.mxu0 %v13235
        %13498 = vmatpush1.bf16.msra.mxu0 %v13234
        %13499 = vmatprep.subr.bf16.mxu0 %v13233
        %13500 = vmatpush1.bf16.msra.mxu0 %v13232
        %13501 = vmatprep.subr.bf16.mxu0 %v13231
        %13502 = vmatpush1.bf16.msra.mxu0 %v13230
        %13503 = vmatprep.subr.bf16.mxu0 %v13229
        %13504 = vmatpush1.bf16.msra.mxu0 %v13228
        %13505 = vmatprep.subr.bf16.mxu0 %v13227
        %13506 = vmatpush1.bf16.msra.mxu0 %v13226
        %13507 = vmatprep.subr.bf16.mxu0 %v13257
        %13508 = vmatpush2.bf16.msra.mxu0 %v13256
        %13509 = vmatprep.subr.bf16.mxu0 %v13255
        %13510 = vmatpush2.bf16.msra.mxu0 %v13254
        %13511 = vmatprep.subr.bf16.mxu0 %v13253
        %13512 = vmatpush2.bf16.msra.mxu0 %v13252
        %13513 = vmatprep.subr.bf16.mxu0 %v13251
        %13514 = vmatpush2.bf16.msra.mxu0 %v13250
        %13515 = vmatprep.subr.bf16.mxu0 %v13249
        %13516 = vmatpush2.bf16.msra.mxu0 %v13248
        %13517 = vmatprep.subr.bf16.mxu0 %v13247
        %13518 = vmatpush2.bf16.msra.mxu0 %v13246
        %13519 = vmatprep.subr.bf16.mxu0 %v13245
        %13520 = vmatpush2.bf16.msra.mxu0 %v13244
        %13521 = vmatprep.subr.bf16.mxu0 %v13243
        %13522 = vmatpush2.bf16.msra.mxu0 %v13242
        %13523 = vmatprep.mubr.bf16.mxu0 %v12677
        %13524 = vmatmul.mubr.bf16.gmra.mxu0 %v12676
        %v13525 = vpop.f32.mrf.mxu0
        %v13526 = vadd.f32 %v13485, %v13525
        %v13527 = vpop.f32.mrf.mxu0
        %v13528 = vadd.f32 %v13487, %v13527
        %v13529 = vpop.f32.mrf.mxu0
        %v13530 = vpop.f32.mrf.mxu0
        %13531 = vdwg.mxu0
        %13532 = vmatprep.subr.bf16.mxu0 %v13273
        %13533 = vmatpush1.bf16.msra.mxu0 %v13272
        %13534 = vmatprep.subr.bf16.mxu0 %v13271
        %13535 = vmatpush1.bf16.msra.mxu0 %v13270
        %13536 = vmatprep.subr.bf16.mxu0 %v13269
        %13537 = vmatpush1.bf16.msra.mxu0 %v13268
        %13538 = vmatprep.subr.bf16.mxu0 %v13267
        %13539 = vmatpush1.bf16.msra.mxu0 %v13266
        %13540 = vmatprep.subr.bf16.mxu0 %v13265
        %13541 = vmatpush1.bf16.msra.mxu0 %v13264
        %13542 = vmatprep.subr.bf16.mxu0 %v13263
        %13543 = vmatpush1.bf16.msra.mxu0 %v13262
        %13544 = vmatprep.subr.bf16.mxu0 %v13261
        %13545 = vmatpush1.bf16.msra.mxu0 %v13260
        %13546 = vmatprep.subr.bf16.mxu0 %v13259
        %13547 = vmatpush1.bf16.msra.mxu0 %v13258
        %13548 = vmatprep.subr.bf16.mxu0 %v13289
        %13549 = vmatpush2.bf16.msra.mxu0 %v13288
        %13550 = vmatprep.subr.bf16.mxu0 %v13287
        %13551 = vmatpush2.bf16.msra.mxu0 %v13286
        %13552 = vmatprep.subr.bf16.mxu0 %v13285
        %13553 = vmatpush2.bf16.msra.mxu0 %v13284
        %13554 = vmatprep.subr.bf16.mxu0 %v13283
        %13555 = vmatpush2.bf16.msra.mxu0 %v13282
        %13556 = vmatprep.subr.bf16.mxu0 %v13281
        %13557 = vmatpush2.bf16.msra.mxu0 %v13280
        %13558 = vmatprep.subr.bf16.mxu0 %v13279
        %13559 = vmatpush2.bf16.msra.mxu0 %v13278
        %13560 = vmatprep.subr.bf16.mxu0 %v13277
        %13561 = vmatpush2.bf16.msra.mxu0 %v13276
        %13562 = vmatprep.subr.bf16.mxu0 %v13275
        %13563 = vmatpush2.bf16.msra.mxu0 %v13274
        %13564 = vmatprep.mubr.bf16.mxu0 %v12679
        %13565 = vmatmul.mubr.bf16.gmra.mxu0 %v12678
        %v13566 = vpop.f32.mrf.mxu0
        %v13567 = vadd.f32 %v13526, %v13566
        %v13568 = vpop.f32.mrf.mxu0
        %v13569 = vadd.f32 %v13528, %v13568
        %v13570 = vpop.f32.mrf.mxu0
        %v13571 = vpop.f32.mrf.mxu0
        %13572 = vdwg.mxu0
        %13573 = vmatprep.subr.bf16.mxu0 %v13305
        %13574 = vmatpush1.bf16.msra.mxu0 %v13304
        %13575 = vmatprep.subr.bf16.mxu0 %v13303
        %13576 = vmatpush1.bf16.msra.mxu0 %v13302
        %13577 = vmatprep.subr.bf16.mxu0 %v13301
        %13578 = vmatpush1.bf16.msra.mxu0 %v13300
        %13579 = vmatprep.subr.bf16.mxu0 %v13299
        %13580 = vmatpush1.bf16.msra.mxu0 %v13298
        %13581 = vmatprep.subr.bf16.mxu0 %v13297
        %13582 = vmatpush1.bf16.msra.mxu0 %v13296
        %13583 = vmatprep.subr.bf16.mxu0 %v13295
        %13584 = vmatpush1.bf16.msra.mxu0 %v13294
        %13585 = vmatprep.subr.bf16.mxu0 %v13293
        %13586 = vmatpush1.bf16.msra.mxu0 %v13292
        %13587 = vmatprep.subr.bf16.mxu0 %v13291
        %13588 = vmatpush1.bf16.msra.mxu0 %v13290
        %13589 = vmatprep.subr.bf16.mxu0 %v13321
        %13590 = vmatpush2.bf16.msra.mxu0 %v13320
        %13591 = vmatprep.subr.bf16.mxu0 %v13319
        %13592 = vmatpush2.bf16.msra.mxu0 %v13318
        %13593 = vmatprep.subr.bf16.mxu0 %v13317
        %13594 = vmatpush2.bf16.msra.mxu0 %v13316
        %13595 = vmatprep.subr.bf16.mxu0 %v13315
        %13596 = vmatpush2.bf16.msra.mxu0 %v13314
        %13597 = vmatprep.subr.bf16.mxu0 %v13313
        %13598 = vmatpush2.bf16.msra.mxu0 %v13312
        %13599 = vmatprep.subr.bf16.mxu0 %v13311
        %13600 = vmatpush2.bf16.msra.mxu0 %v13310
        %13601 = vmatprep.subr.bf16.mxu0 %v13309
        %13602 = vmatpush2.bf16.msra.mxu0 %v13308
        %13603 = vmatprep.subr.bf16.mxu0 %v13307
        %13604 = vmatpush2.bf16.msra.mxu0 %v13306
        %13605 = vmatprep.mubr.bf16.mxu0 %v12681
        %13606 = vmatmul.mubr.bf16.gmra.mxu0 %v12680
        %v13607 = vpop.f32.mrf.mxu0
        %v13608 = vadd.f32 %v13567, %v13607
        %v13609 = vpop.f32.mrf.mxu0
        %v13610 = vadd.f32 %v13569, %v13609
        %v13611 = vpop.f32.mrf.mxu0
        %v13612 = vpop.f32.mrf.mxu0
        %13613 = vdwg.mxu0
        %v13614 = vadd.f32 %v12672, %v13608
        %v13615 = vadd.f32 %v12673, %v13610
        %13616 = vst [vmem:[#allocation2] sm:$0xff] %v13614
        %13617 = vst [vmem:[#allocation2 + $0x8] sm:$0xff] %v13615
        %p13618 = scmp.eq.s32.totalorder %s34, 4
        // Predicated region
        $region97: #{tpu_custom_call.1} parent=55 // pred_check
          %p13619 = pneg %p13618
        $region98: #{tpu_custom_call.1} parent=55 // pred_check_branch
          %13621 = sbr.rel (%p13619) target = $region100
        $region99: #{tpu_custom_call.1} parent=55 // pred_region
          %v13622 = vld [vmem:[#allocation2] sm:$0xff]
          %v13623 = vld [vmem:[#allocation2 + $0x8] sm:$0xff]
          %v13624 = vld [vmem:[#allocation16] sm:$0x3]
          %v13626 = vlaneseq
          %v13627 = vshrl.u32 %v13626, 7
          %v13628 = vsub.s32 0, %v13627
          %v13629 = vrot.slane %v13624, %v13628
          %v13630 = vlaneseq
          %v13631 = vshrl.u32 %v13630, 7
          %v13632 = vsub.s32 1, %v13631
          %v13633 = vrot.slane %v13624, %v13632
          %v13636 = vadd.f32 %v13622, %v13629
          %v13637 = vadd.f32 %v13623, %v13633
          %v13638 = vmax.f32 %v13636, 0.0
          %v13639 = vmax.f32 %v13637, 0.0
          %v13640 = vpack.c.bf16 %v13638, %v13638
          %v13641 = vpack.c.bf16 %v13639, %v13639
          %v13642 = vld [vmem:[#allocation17] sm:$0xf]
          %v13643 = vld [vmem:[#allocation17 + $0x4] sm:$0xf]
          %v13644 = vld [vmem:[#allocation17 + $0x8] sm:$0xf]
          %v13645 = vld [vmem:[#allocation17 + $0xc] sm:$0xf]
          %v13646 = vld [vmem:[#allocation17 + $0x10] sm:$0xf]
          %v13647 = vld [vmem:[#allocation17 + $0x14] sm:$0xf]
          %v13648 = vld [vmem:[#allocation17 + $0x18] sm:$0xf]
          %v13649 = vld [vmem:[#allocation17 + $0x1c] sm:$0xf]
          %v13650 = vld [vmem:[#allocation17 + $0x20] sm:$0xf]
          %v13651 = vld [vmem:[#allocation17 + $0x24] sm:$0xf]
          %v13652 = vld [vmem:[#allocation17 + $0x28] sm:$0xf]
          %v13653 = vld [vmem:[#allocation17 + $0x2c] sm:$0xf]
          %v13654 = vld [vmem:[#allocation17 + $0x30] sm:$0xf]
          %v13655 = vld [vmem:[#allocation17 + $0x34] sm:$0xf]
          %v13656 = vld [vmem:[#allocation17 + $0x38] sm:$0xf]
          %v13657 = vld [vmem:[#allocation17 + $0x3c] sm:$0xf]
          %v13658 = vld [vmem:[#allocation17 + $0x40] sm:$0xf]
          %v13659 = vld [vmem:[#allocation17 + $0x44] sm:$0xf]
          %v13660 = vld [vmem:[#allocation17 + $0x48] sm:$0xf]
          %v13661 = vld [vmem:[#allocation17 + $0x4c] sm:$0xf]
          %v13662 = vld [vmem:[#allocation17 + $0x50] sm:$0xf]
          %v13663 = vld [vmem:[#allocation17 + $0x54] sm:$0xf]
          %v13664 = vld [vmem:[#allocation17 + $0x58] sm:$0xf]
          %v13665 = vld [vmem:[#allocation17 + $0x5c] sm:$0xf]
          %v13666 = vld [vmem:[#allocation17 + $0x60] sm:$0xf]
          %v13667 = vld [vmem:[#allocation17 + $0x64] sm:$0xf]
          %v13668 = vld [vmem:[#allocation17 + $0x68] sm:$0xf]
          %v13669 = vld [vmem:[#allocation17 + $0x6c] sm:$0xf]
          %v13670 = vld [vmem:[#allocation17 + $0x70] sm:$0xf]
          %v13671 = vld [vmem:[#allocation17 + $0x74] sm:$0xf]
          %v13672 = vld [vmem:[#allocation17 + $0x78] sm:$0xf]
          %v13673 = vld [vmem:[#allocation17 + $0x7c] sm:$0xf]
          %v13674 = vld [vmem:[#allocation19] sm:$0x1]
          %v13676 = vlaneseq
          %v13677 = vshrl.u32 %v13676, 7
          %v13678 = vsub.s32 0, %v13677
          %v13679 = vrot.slane %v13674, %v13678
          %v13713 = vunpack.c.l.b16 %v13642
          %v13714 = vunpack.c.l.b16 %v13643
          %v13715 = vunpack.c.l.b16 %v13644
          %v13716 = vunpack.c.l.b16 %v13645
          %v13717 = vunpack.c.l.b16 %v13646
          %v13718 = vunpack.c.l.b16 %v13647
          %v13719 = vunpack.c.l.b16 %v13648
          %v13720 = vunpack.c.l.b16 %v13649
          %v13721 = vunpack.c.l.b16 %v13650
          %v13722 = vunpack.c.l.b16 %v13651
          %v13723 = vunpack.c.l.b16 %v13652
          %v13724 = vunpack.c.l.b16 %v13653
          %v13725 = vunpack.c.l.b16 %v13654
          %v13726 = vunpack.c.l.b16 %v13655
          %v13727 = vunpack.c.l.b16 %v13656
          %v13728 = vunpack.c.l.b16 %v13657
          %v13729 = vunpack.c.l.b16 %v13658
          %v13730 = vunpack.c.l.b16 %v13659
          %v13731 = vunpack.c.l.b16 %v13660
          %v13732 = vunpack.c.l.b16 %v13661
          %v13733 = vunpack.c.l.b16 %v13662
          %v13734 = vunpack.c.l.b16 %v13663
          %v13735 = vunpack.c.l.b16 %v13664
          %v13736 = vunpack.c.l.b16 %v13665
          %v13737 = vunpack.c.l.b16 %v13666
          %v13738 = vunpack.c.l.b16 %v13667
          %v13739 = vunpack.c.l.b16 %v13668
          %v13740 = vunpack.c.l.b16 %v13669
          %v13741 = vunpack.c.l.b16 %v13670
          %v13742 = vunpack.c.l.b16 %v13671
          %v13743 = vunpack.c.l.b16 %v13672
          %v13744 = vunpack.c.l.b16 %v13673
          %v13745 = vpack.c.b16 %v13714, %v13713
          %v13746 = vpack.c.b16 %v13716, %v13715
          %v13747 = vpack.c.b16 %v13718, %v13717
          %v13748 = vpack.c.b16 %v13720, %v13719
          %v13749 = vpack.c.b16 %v13722, %v13721
          %v13750 = vpack.c.b16 %v13724, %v13723
          %v13751 = vpack.c.b16 %v13726, %v13725
          %v13752 = vpack.c.b16 %v13728, %v13727
          %v13753 = vpack.c.b16 %v13730, %v13729
          %v13754 = vpack.c.b16 %v13732, %v13731
          %v13755 = vpack.c.b16 %v13734, %v13733
          %v13756 = vpack.c.b16 %v13736, %v13735
          %v13757 = vpack.c.b16 %v13738, %v13737
          %v13758 = vpack.c.b16 %v13740, %v13739
          %v13759 = vpack.c.b16 %v13742, %v13741
          %v13760 = vpack.c.b16 %v13744, %v13743
          %13777 = vmatprep.subr.bf16.mxu0 0
          %13778 = vmatpush1.bf16.msra.mxu0 %v13752
          %13779 = vmatprep.subr.bf16.mxu0 0
          %13780 = vmatpush1.bf16.msra.mxu0 %v13751
          %13781 = vmatprep.subr.bf16.mxu0 0
          %13782 = vmatpush1.bf16.msra.mxu0 %v13750
          %13783 = vmatprep.subr.bf16.mxu0 0
          %13784 = vmatpush1.bf16.msra.mxu0 %v13749
          %13785 = vmatprep.subr.bf16.mxu0 0
          %13786 = vmatpush1.bf16.msra.mxu0 %v13748
          %13787 = vmatprep.subr.bf16.mxu0 0
          %13788 = vmatpush1.bf16.msra.mxu0 %v13747
          %13789 = vmatprep.subr.bf16.mxu0 0
          %13790 = vmatpush1.bf16.msra.mxu0 %v13746
          %13791 = vmatprep.subr.bf16.mxu0 0
          %13792 = vmatpush1.bf16.msra.mxu0 %v13745
          %13793 = vmatprep.subr.bf16.mxu0 0
          %13794 = vmatpush2.bf16.msra.mxu0 %v13760
          %13795 = vmatprep.subr.bf16.mxu0 0
          %13796 = vmatpush2.bf16.msra.mxu0 %v13759
          %13797 = vmatprep.subr.bf16.mxu0 0
          %13798 = vmatpush2.bf16.msra.mxu0 %v13758
          %13799 = vmatprep.subr.bf16.mxu0 0
          %13800 = vmatpush2.bf16.msra.mxu0 %v13757
          %13801 = vmatprep.subr.bf16.mxu0 0
          %13802 = vmatpush2.bf16.msra.mxu0 %v13756
          %13803 = vmatprep.subr.bf16.mxu0 0
          %13804 = vmatpush2.bf16.msra.mxu0 %v13755
          %13805 = vmatprep.subr.bf16.mxu0 0
          %13806 = vmatpush2.bf16.msra.mxu0 %v13754
          %13807 = vmatprep.subr.bf16.mxu0 0
          %13808 = vmatpush2.bf16.msra.mxu0 %v13753
          %13809 = vmatprep.mubr.bf16.mxu0 %v13641
          %13810 = vmatmul.mubr.bf16.gmra.mxu0 %v13640
          %v13811 = vpop.f32.mrf.mxu0
          %v13812 = vadd.f32 %v13679, %v13811
          %v13813 = vpop.f32.mrf.mxu0
          %v13814 = vpop.f32.mrf.mxu0
          %v13815 = vpop.f32.mrf.mxu0
          %13816 = vdwg.mxu0
          %v13817 = vxor.u32 %v13812, 2147483648
          %v13818 = vmul.f32 %v13817, 1.442695
          %v13819 = vpow.pop %v13818
          %v13820 = vadd.f32 %v13819, 1.0
          %v13821 = vrcp.pop %v13820
          %v13822 = vmul.f32 1.0, %v13821
          %13823 = vst [vmem:[#allocation20] sm:$0xff] %v13822
        $region100: #{tpu_custom_call.1} parent=55 // pred_fallthru
          _
        // Predicated region
        $region101: #{tpu_custom_call.1} parent=55 // pred_check
          %p13824 = pneg %p261
        $region102: #{tpu_custom_call.1} parent=55 // pred_check_branch
          %13826 = sbr.rel (%p13824) target = $region104
        $region103: #{tpu_custom_call.1} parent=55 // pred_region
          %s13828 = ssub.s32 128, 128
          %13829 = vsyncadd [#allocation7], %s13828
          %s13831 = sshll.u32 [#allocation20], 4
          %s13832 = int_to_ptr.vmem [resolvable:$true] %s13831
          %13834 = dma.vmem_to_hbm [thread:$0]  %s13832, 128, %s10, [#allocation7]
        $region104: #{tpu_custom_call.1} parent=55 // pred_fallthru
          _
        // Predicated region
        $region105: #{tpu_custom_call.1} parent=55 // pred_check
          %p13835 = pneg %p261
        $region106: #{tpu_custom_call.1} parent=55 // pred_check_branch
          %13837 = sbr.rel (%p13835) target = $region108
        $region107: #{tpu_custom_call.1} parent=55 // pred_region
          %13838 = dma.done [#allocation7], 128
        $region108: #{tpu_custom_call.1} parent=55 // pred_fallthru
          _
      $region56: #{tpu_custom_call.1} parent=5 // pred_fallthru
        _
      %p13839 = scmp.le.s32.totalorder 2, %s29
      // Predicated region
      $region109: #{tpu_custom_call.1} parent=5 // pred_check
        %p13840 = pneg %p13839
      $region110: #{tpu_custom_call.1} parent=5 // pred_check_branch
        %13842 = sbr.rel (%p13840) target = $region112
      $region111: #{tpu_custom_call.1} parent=5 // pred_region
        %s13843 = ssub.s32 %s29, 2
      $region112: #{tpu_custom_call.1} parent=5 // pred_fallthru
        _
    $region6: #{tpu_custom_call.1} parent=1 // loop_footer
      %s33 = sadd.s32 1, %s29
    $region7: #{tpu_custom_call.1} parent=1 // loop_footer_branch
      %28 = sbr.rel target = $region3
    $region8: #{tpu_custom_call.1} parent=1 // loop_exit
      _
    %13844 = vsyncpa [#allocation6], 1
    %s13845 = scalar_lea.sflag [#allocation6], 1
    %13846 = vsyncpa %s13845, 1
    %13847 = vsyncpa [#allocation9], 1
    %s13848 = scalar_lea.sflag [#allocation9], 1
    %13849 = vsyncpa %s13848, 1
    %13850 = vsyncpa [#allocation12], 1
    %s13851 = scalar_lea.sflag [#allocation12], 1
    %13852 = vsyncpa %s13851, 1
    %13853 = vsyncpa [#allocation15], 1
    %s13854 = scalar_lea.sflag [#allocation15], 1
    %13855 = vsyncpa %s13854, 1
    %13856 = vsyncpa [#allocation18], 1
    %13857 = vsyncpa [#allocation7], 1
    %s13858 = scalar_lea.sflag [#allocation7], 1
    %13859 = vsyncpa %s13858, 1

</llo_original>
